<compile_context>
chip_gen: v5e
topology: v5e:2x2
jax: 0.10.0
libtpu: 0.0.40
codegen_flags: <defaults>
</compile_context>

<pallas_src>
import functools
import math

import numpy as np
import jax
import jax.numpy as jnp
from jax.experimental import pallas as pl
from jax.experimental.pallas import tpu as pltpu


def _round_up(x, m):
    return ((x + m - 1) // m) * m


def _vmem_capacity_bytes():
    """Best-effort physical VMEM per TensorCore (v5e/v6e: 128 MiB, v7x: 64 MiB)."""
    try:
        info = pltpu.get_tpu_info()
        for attr in ("vmem_capacity_bytes", "vmem_bytes", "vmem_size_bytes"):
            v = getattr(info, attr, None)
            if v:
                return int(v)
    except Exception:
        pass
    return 64 * 2 ** 20   # conservative default (v7x-class)


# ----------------------------------------------------------------------------- kernel
def painn_kernel(q0_ref, gj_ref, git_ref, dir3_ref, filt_ref,
                 w1_ref, b1_ref, w2_ref, b2_ref,
                 wmix_ref, wc1q_ref, wc1m_ref, bc1_ref, wc2_ref, bc2_ref,
                 h_ref,
                 q_s, mu_s, xmu_b, acc_s,
                 *, F, epsilon):
    it = pl.program_id(0)          # interaction index
    k = pl.program_id(1)           # edge-block index
    n_it = pl.num_programs(0)
    n_k = pl.num_programs(1)
    bf16 = jnp.bfloat16
    f32 = jnp.float32
    F3 = 3 * F

    # ---- one-time state init ----------------------------------------------------
    @pl.when(jnp.logical_and(it == 0, k == 0))
    def _init_state():
        q_s[...] = q0_ref[...]
        mu_s[...] = jnp.zeros_like(mu_s)
        xmu_b[...] = jnp.zeros_like(xmu_b)       # bf16 gather mirror [x | mu]

    # ---- per-interaction prologue: interatomic context net + zero accumulator ----
    @pl.when(k == 0)
    def _start_interaction():
        q = q_s[...]
        h1 = jax.nn.silu(
            jnp.dot(q.astype(bf16), w1_ref[0], preferred_element_type=f32)
            + b1_ref[0])
        x = (jnp.dot(h1.astype(bf16), w2_ref[0], preferred_element_type=f32)
             + b2_ref[0])                         # (N, 3F) f32
        xmu_b[:, :F3] = x.astype(bf16)            # cast once per interaction, not per block
        acc_s[...] = jnp.zeros_like(acc_s)        # fused [dq | dmu] accumulator

    # ---- per-edge-block message passing ------------------------------------------
    gj = gj_ref[...]                                               # (tE, N)  bf16 one-hot
    git = git_ref[...]                                             # (N, tE)  bf16 one-hot
    # Single fused gather matmul: [xj | muj] = Gj @ [x | mu]   (wide 6F RHS)
    xmu_j = jnp.dot(gj, xmu_b[...], preferred_element_type=f32)    # (tE, 6F)
    xj = xmu_j[:, :F3]
    muj = xmu_j[:, F3:]
    wij = filt_ref[0].astype(f32)                                  # (tE, 3F)
    xe = wij * xj
    dq_e = xe[:, :F]
    dmuR3 = jnp.tile(xe[:, F:2 * F], (1, 3))                       # (tE, 3F)
    dmumu3 = jnp.tile(xe[:, 2 * F:], (1, 3))                       # (tE, 3F)
    dir3 = dir3_ref[...].astype(f32)                               # (tE, 3F)
    dmu_e = dmuR3 * dir3 + dmumu3 * muj                            # (tE, 3F)
    msg = jnp.concatenate([dq_e, dmu_e], axis=-1)                  # (tE, 4F)
    # Single fused scatter matmul: acc += GiT @ [dq_e | dmu_e]
    acc_s[...] += jnp.dot(git, msg.astype(bf16), preferred_element_type=f32)

    # ---- per-interaction epilogue: apply scatter result + PaiNNMixing -------------
    @pl.when(k == n_k - 1)
    def _finish_interaction():
        acc = acc_s[...]
        q = q_s[...] + acc[:, :F]
        mu = mu_s[...] + acc[:, F:]                                # (N, 3F)
        mub = mu.astype(bf16)
        wmix = wmix_ref[0]
        mm = [jnp.dot(mub[:, c * F:(c + 1) * F], wmix, preferred_element_type=f32)
              for c in range(3)]                                   # 3 x (N, 2F)
        mu_V = [m[:, :F] for m in mm]
        mu_W = [m[:, F:] for m in mm]
        mu_Vn = jnp.sqrt(mu_V[0] * mu_V[0] + mu_V[1] * mu_V[1]
                         + mu_V[2] * mu_V[2] + epsilon)
        # ctx @ Wc1 == q @ Wc1[:F] + mu_Vn @ Wc1[F:]  (avoids lane concat)
        pre = (jnp.dot(q.astype(bf16), wc1q_ref[0], preferred_element_type=f32)
               + jnp.dot(mu_Vn.astype(bf16), wc1m_ref[0], preferred_element_type=f32)
               + bc1_ref[0])
        hc = jax.nn.silu(pre)
        xc = (jnp.dot(hc.astype(bf16), wc2_ref[0], preferred_element_type=f32)
              + bc2_ref[0])
        dq_intra = xc[:, :F]
        dmu_intra = xc[:, F:2 * F]
        dqmu_intra = xc[:, 2 * F:]
        dotVW = mu_V[0] * mu_W[0] + mu_V[1] * mu_W[1] + mu_V[2] * mu_W[2]
        q_s[...] = q + dq_intra + dqmu_intra * dotVW
        mu_new = mu + jnp.concatenate(
            [dmu_intra * mu_W[0], dmu_intra * mu_W[1], dmu_intra * mu_W[2]], axis=-1)
        mu_s[...] = mu_new
        xmu_b[:, F3:] = mu_new.astype(bf16)        # refresh bf16 gather mirror of mu

    @pl.when(jnp.logical_and(it == n_it - 1, k == n_k - 1))
    def _write_output():
        h_ref[...] = q_s[...]


# ----------------------------------------------------------------------------- wrapper
def painn_forward(x, positions, radius_edge_index, params, *,
                  n_atom_basis, n_interactions, n_rbf, cutoff,
                  epsilon=1e-8, max_edge_block=None, pad_features=True):
    F = n_atom_basis
    atomic_numbers = x[:, 0] if x.ndim == 2 else x
    n_atoms = int(atomic_numbers.shape[0])
    idx_i = radius_edge_index[0]
    idx_j = radius_edge_index[1]
    E = int(idx_i.shape[0])

    # Feature padding to vreg width: free when F % 128 == 0 (typical production F);
    # for small F it trades extra MXU columns for removing all sub-vreg lane shuffles.
    Fp = _round_up(F, 128) if pad_features else F
    F3p = 3 * Fp

    # -- geometry + radial filter network in plain JAX (avoid width-3 MXU ops) ------
    pos = positions.astype(jnp.float32)
    r_ij = pos[idx_i] - pos[idx_j]
    d = jnp.sqrt(jnp.sum(r_ij * r_ij, axis=-1, keepdims=True))      # (E, 1)
    safe_d = jnp.where(d > 0.0, d, 1.0)                             # zero-distance guard
    dir_ij = r_ij / safe_d                                          # (E, 3)
    width = cutoff / (n_rbf - 1)
    rbf_coeff = -0.5 / (width * width)
    phi = jnp.exp(rbf_coeff * (d - params["rbf_offsets"]) ** 2)     # (E, n_rbf)
    fcut = 0.5 * (jnp.cos(d * (math.pi / cutoff)) + 1.0)
    fcut = jnp.where(d < cutoff, fcut, 0.0)
    filters = (phi @ params["Wf"] + params["bf"]) * fcut            # (E, n_int*3F)
    # chunk-pad each F-wide filter slab to Fp so kernel slices stay lane-aligned
    filters = filters.reshape(E, n_interactions, 3, F)
    filters = jnp.pad(filters, ((0, 0), (0, 0), (0, 0), (0, Fp - F)))
    filters = filters.transpose(1, 0, 2, 3).reshape(n_interactions, E, F3p)
    dir3 = jnp.repeat(dir_ij, Fp, axis=-1)                          # (E, 3*Fp)

    # -- pad atoms and pick edge-block size (generation aware) ----------------------
    N_pad = max(128, _round_up(n_atoms, 16))       # lane-dense Gj, bf16 sublane-aligned GiT

    vmem_cap = _vmem_capacity_bytes()
    if vmem_cap >= 100 * 2 ** 20:                  # v5e / v6e (128 MiB VMEM)
        vmem_budget, eb = 96 * 2 ** 20, 1024
    else:                                          # v7x (64 MiB per TensorCore)
        vmem_budget, eb = 40 * 2 ** 20, 512
    if max_edge_block is not None:
        eb = min(eb, int(max_edge_block))
    eb = max(128, _round_up(eb, 128))

    # resident: scratch (q 4 + mu 12 + acc 16 + bf16 mirror 12 = 44 B per N*Fp),
    #           q0/out blocks, double-buffered bf16 weights + f32 biases
    resident = (44 * N_pad * Fp
                + 4 * N_pad * Fp * 4
                + 2 * (11 * Fp * Fp * 2 + 8 * Fp * 4))

    def _stream(e):          # double-buffered bf16 edge blocks: Gj, GiT, dir3, filters
        return 2 * (2 * e * N_pad + 2 * e * F3p) * 2

    while eb > 128 and resident + _stream(eb) > vmem_budget:
        eb //= 2
    eb = max(128, _round_up(eb, 128))

    E0 = _round_up(max(E, 1), 128)
    eb = min(eb, E0)
    E_pad = _round_up(E0, eb)
    n_blocks = E_pad // eb
    pe = E_pad - E

    # Zero-padding invariant: padded edges must have zero filters AND zero dir3 rows so
    # they contribute nothing even though they index atom 0 through Gj/GiT.
    filters = jnp.pad(filters, ((0, 0), (0, pe), (0, 0))).astype(jnp.bfloat16)
    dir3 = jnp.pad(dir3, ((0, pe), (0, 0))).astype(jnp.bfloat16)
    idx_i_p = jnp.pad(idx_i, (0, pe))
    idx_j_p = jnp.pad(idx_j, (0, pe))

    # one-hot gather/scatter matrices in bf16 (0/1 exact, native MXU dtype)
    atom_range = jnp.arange(N_pad)
    Gj = (idx_j_p[:, None] == atom_range[None, :]).astype(jnp.bfloat16)      # (E_pad, N_pad)
    GiT = (idx_i_p[:, None] == atom_range[None, :]).astype(jnp.bfloat16).T   # (N_pad, E_pad)

    q0 = params["embedding"][atomic_numbers].astype(jnp.float32)
    q0 = jnp.pad(q0, ((0, N_pad - n_atoms), (0, Fp - F)))

    bf16 = jnp.bfloat16

    def pad_w(w, nchunk):    # (nI, F, nchunk*F) -> (nI, Fp, nchunk*Fp), chunk-wise pad
        nI = w.shape[0]
        w = w.reshape(nI, F, nchunk, F)
        w = jnp.pad(w, ((0, 0), (0, Fp - F), (0, 0), (0, Fp - F)))
        return w.reshape(nI, Fp, nchunk * Fp)

    def pad_b(b, nchunk):    # (nI, 1, nchunk*F) -> (nI, 1, nchunk*Fp)
        nI = b.shape[0]
        b = b.reshape(nI, 1, nchunk, F)
        b = jnp.pad(b, ((0, 0), (0, 0), (0, 0), (0, Fp - F)))
        return b.reshape(nI, 1, nchunk * Fp)

    W1 = pad_w(params["W1"], 1).astype(bf16)
    W2 = pad_w(params["W2"], 3).astype(bf16)
    Wmix = pad_w(params["Wmix"], 2).astype(bf16)
    Wc1q = pad_w(params["Wc1"][:, :F, :], 1).astype(bf16)
    Wc1m = pad_w(params["Wc1"][:, F:, :], 1).astype(bf16)
    Wc2 = pad_w(params["Wc2"], 3).astype(bf16)
    b1 = pad_b(params["b1"], 1).astype(jnp.float32)
    b2 = pad_b(params["b2"], 3).astype(jnp.float32)
    bc1 = pad_b(params["bc1"], 1).astype(jnp.float32)
    bc2 = pad_b(params["bc2"], 3).astype(jnp.float32)

    kernel = functools.partial(painn_kernel, F=Fp, epsilon=float(epsilon))

    per_it = lambda it, k: (it, 0, 0)
    in_specs = [
        pl.BlockSpec((N_pad, Fp), lambda it, k: (0, 0)),            # q0
        pl.BlockSpec((eb, N_pad), lambda it, k: (k, 0)),            # Gj   (edge-blocked)
        pl.BlockSpec((N_pad, eb), lambda it, k: (0, k)),            # GiT  (edge-blocked)
        pl.BlockSpec((eb, F3p), lambda it, k: (k, 0)),              # dir3 (edge-blocked, bf16)
        pl.BlockSpec((1, eb, F3p), lambda it, k: (it, k, 0)),       # filters per (it, block)
        pl.BlockSpec((1, Fp, Fp), per_it),                          # W1
        pl.BlockSpec((1, 1, Fp), per_it),                           # b1
        pl.BlockSpec((1, Fp, F3p), per_it),                         # W2
        pl.BlockSpec((1, 1, F3p), per_it),                          # b2
        pl.BlockSpec((1, Fp, 2 * Fp), per_it),                      # Wmix
        pl.BlockSpec((1, Fp, Fp), per_it),                          # Wc1 (q half)
        pl.BlockSpec((1, Fp, Fp), per_it),                          # Wc1 (mu_Vn half)
        pl.BlockSpec((1, 1, Fp), per_it),                           # bc1
        pl.BlockSpec((1, Fp, F3p), per_it),                         # Wc2
        pl.BlockSpec((1, 1, F3p), per_it),                          # bc2
    ]
    out_spec = pl.BlockSpec((N_pad, Fp), lambda it, k: (0, 0))
    scratch_shapes = [
        pltpu.VMEM((N_pad, Fp), jnp.float32),       # q  (resident state, f32)
        pltpu.VMEM((N_pad, 3 * Fp), jnp.float32),   # mu (3 xyz planes fused, f32)
        pltpu.VMEM((N_pad, 6 * Fp), jnp.bfloat16),  # [x | mu] bf16 gather mirror
        pltpu.VMEM((N_pad, 4 * Fp), jnp.float32),   # [dq | dmu] fused accumulator
    ]

    need = resident + _stream(eb)
    vmem_limit = int(min(max(2 * need, 16 * 2 ** 20), vmem_budget))

    flops = int(n_interactions * (2 * E_pad * N_pad * 10 * Fp     # fused gather + scatter
                                  + 2 * N_pad * Fp * Fp * 15))    # dense layers
    cost = pl.CostEstimate(
        flops=flops,
        transcendentals=int(n_interactions * 2 * N_pad * Fp),
        bytes_accessed=int(n_interactions * (2 * E_pad * N_pad * 2
                                             + 2 * E_pad * F3p * 2
                                             + 22 * Fp * Fp)
                           + 8 * N_pad * Fp))

    grid_spec = pltpu.PrefetchScalarGridSpec(
        num_scalar_prefetch=0,
        grid=(n_interactions, n_blocks),
        in_specs=in_specs,
        out_specs=out_spec,
        scratch_shapes=scratch_shapes,
    )

    h = pl.pallas_call(
        kernel,
        out_shape=jax.ShapeDtypeStruct((N_pad, Fp), jnp.float32),
        grid_spec=grid_spec,
        compiler_params=pltpu.CompilerParams(
            dimension_semantics=("arbitrary", "arbitrary"),
            vmem_limit_bytes=vmem_limit),
        cost_estimate=cost,
    )(q0, Gj, GiT, dir3, filters,
      W1, b1, W2, b2, Wmix, Wc1q, Wc1m, bc1, Wc2, bc2)

    return h[:n_atoms, :F]


# ----------------------------------------------------------------------------- params
def init_params(key, n_atom_basis, n_interactions, n_rbf, cutoff, max_z=100):
    F = n_atom_basis
    ks = jax.random.split(key, 16)

    def lin(k, fan_in, fan_out):
        std = math.sqrt(2.0 / (fan_in + fan_out))
        return std * jax.random.normal(k, (fan_in, fan_out), jnp.float32)

    def lin_stack(k, fan_in, fan_out):
        std = math.sqrt(2.0 / (fan_in + fan_out))
        return std * jax.random.normal(k, (n_interactions, fan_in, fan_out), jnp.float32)

    def bias_stack(k, fan_out):
        return 0.01 * jax.random.normal(k, (n_interactions, 1, fan_out), jnp.float32)

    emb = jax.random.normal(ks[0], (max_z, F), jnp.float32)
    emb = emb.at[0].set(0.0)   # padding_idx=0

    params = dict(
        embedding=emb,
        rbf_offsets=jnp.linspace(0.0, cutoff, n_rbf, dtype=jnp.float32)[None, :],
        Wf=lin(ks[1], n_rbf, n_interactions * 3 * F),
        bf=0.01 * jax.random.normal(ks[2], (1, n_interactions * 3 * F), jnp.float32),
        W1=lin_stack(ks[3], F, F), b1=bias_stack(ks[4], F),
        W2=lin_stack(ks[5], F, 3 * F), b2=bias_stack(ks[6], 3 * F),
        Wmix=lin_stack(ks[7], F, 2 * F),
        Wc1=lin_stack(ks[8], 2 * F, F), bc1=bias_stack(ks[9], F),
        Wc2=lin_stack(ks[10], F, 3 * F), bc2=bias_stack(ks[11], 3 * F),
    )
    return params


# ----------------------------------------------------------------------------- reference
def painn_reference(x, positions, radius_edge_index, params, *,
                    n_atom_basis, n_interactions, n_rbf, cutoff, epsilon=1e-8):
    """Pure-JAX (f32) re-implementation of the PyTorch forward, for correctness check."""
    F = n_atom_basis
    atomic_numbers = x[:, 0] if x.ndim == 2 else x
    n_atoms = atomic_numbers.shape[0]
    idx_i, idx_j = radius_edge_index[0], radius_edge_index[1]

    r_ij = positions[idx_i] - positions[idx_j]
    d = jnp.sqrt(jnp.sum(r_ij ** 2, axis=1, keepdims=True))
    dir_ij = r_ij / d

    width = cutoff / (n_rbf - 1)
    coeff = -0.5 / (width * width)
    phi = jnp.exp(coeff * (d - params["rbf_offsets"]) ** 2)
    fcut = 0.5 * (jnp.cos(d * math.pi / cutoff) + 1.0) * (d < cutoff)
    filters = (phi @ params["Wf"] + params["bf"]) * fcut                  # (E, nint*3F)

    q = params["embedding"][atomic_numbers][:, None, :]                   # (N,1,F)
    mu = jnp.zeros((n_atoms, 3, F), jnp.float32)

    silu = jax.nn.silu
    for it in range(n_interactions):
        Wij = filters[:, it * 3 * F:(it + 1) * 3 * F][:, None, :]         # (E,1,3F)
        xx = silu(q @ params["W1"][it] + params["b1"][it]) @ params["W2"][it] + params["b2"][it]
        xj = xx[idx_j]
        muj = mu[idx_j]
        xe = Wij * xj
        dq, dmuR, dmumu = jnp.split(xe, 3, axis=-1)
        dq = jnp.zeros_like(q).at[idx_i].add(dq)
        dmu = dmuR * dir_ij[..., None] + dmumu * muj
        dmu = jnp.zeros_like(mu).at[idx_i].add(dmu)
        q = q + dq
        mu = mu + dmu

        mu_mix = mu @ params["Wmix"][it]
        mu_V, mu_W = jnp.split(mu_mix, 2, axis=-1)
        mu_Vn = jnp.sqrt(jnp.sum(mu_V ** 2, axis=-2, keepdims=True) + epsilon)
        ctx = jnp.concatenate([q, mu_Vn], axis=-1)
        xc = silu(ctx @ params["Wc1"][it] + params["bc1"][it]) @ params["Wc2"][it] + params["bc2"][it]
        dq_intra, dmu_intra, dqmu_intra = jnp.split(xc, 3, axis=-1)
        dmu_intra = dmu_intra * mu_W
        dqmu_intra = dqmu_intra * jnp.sum(mu_V * mu_W, axis=1, keepdims=True)
        q = q + dq_intra + dqmu_intra
        mu = mu + dmu_intra

    return q.squeeze(1)


# ----------------------------------------------------------------------------- main
if __name__ == "__main__":
    n_atoms = 8
    n_atom_basis = 32
    n_rbf = 16
    n_interactions = 2
    cutoff = 5.0
    max_z = 100
    n_edges = 160            # padded to 256 -> two 128-row edge blocks in the grid

    key = jax.random.PRNGKey(0)
    k1, k2, k3, k4 = jax.random.split(key, 4)

    atomic_numbers = jax.random.randint(k1, (n_atoms,), 1, max_z)
    positions = 2.0 * jax.random.normal(k2, (n_atoms, 3), jnp.float32)
    idx_i = jax.random.randint(k3, (n_edges,), 0, n_atoms)
    off = jax.random.randint(k4, (n_edges,), 1, n_atoms)
    idx_j = (idx_i + off) % n_atoms          # avoid self-edges (d_ij == 0)
    radius_edge_index = jnp.stack([idx_i, idx_j], axis=0)

    params = init_params(jax.random.PRNGKey(42), n_atom_basis, n_interactions,
                         n_rbf, cutoff, max_z)

    h = painn_forward(atomic_numbers, positions, radius_edge_index, params,
                      n_atom_basis=n_atom_basis, n_interactions=n_interactions,
                      n_rbf=n_rbf, cutoff=cutoff, max_edge_block=128)
    h = jax.block_until_ready(h)

    h_ref = painn_reference(atomic_numbers, positions, radius_edge_index, params,
                            n_atom_basis=n_atom_basis, n_interactions=n_interactions,
                            n_rbf=n_rbf, cutoff=cutoff)
    # bf16 MXU operands + bf16-streamed filters/dir (f32 accumulation everywhere)
    # => ~1e-2 level agreement with the pure-f32 reference.
    np.testing.assert_allclose(np.asarray(h), np.asarray(h_ref), rtol=3e-2, atol=3e-2)

    print("KERNEL_OK")
</pallas_src>

<mosaic_0001>
module attributes {stable_mosaic.version = 11 : i64} {
  func.func @painn_kernel(%arg0: i32, %arg1: i32, %arg2: memref<128x128xf32, #tpu.memory_space<vmem>>, %arg3: memref<128x128xbf16, #tpu.memory_space<vmem>>, %arg4: memref<128x128xbf16, #tpu.memory_space<vmem>>, %arg5: memref<128x384xbf16, #tpu.memory_space<vmem>>, %arg6: memref<1x128x384xbf16, #tpu.memory_space<vmem>>, %arg7: memref<1x128x128xbf16, #tpu.memory_space<vmem>>, %arg8: memref<1x1x128xf32, #tpu.memory_space<vmem>>, %arg9: memref<1x128x384xbf16, #tpu.memory_space<vmem>>, %arg10: memref<1x1x384xf32, #tpu.memory_space<vmem>>, %arg11: memref<1x128x256xbf16, #tpu.memory_space<vmem>>, %arg12: memref<1x128x128xbf16, #tpu.memory_space<vmem>>, %arg13: memref<1x128x128xbf16, #tpu.memory_space<vmem>>, %arg14: memref<1x1x128xf32, #tpu.memory_space<vmem>>, %arg15: memref<1x128x384xbf16, #tpu.memory_space<vmem>>, %arg16: memref<1x1x384xf32, #tpu.memory_space<vmem>>, %arg17: memref<128x128xf32, #tpu.memory_space<vmem>>, %arg18: memref<128x128xf32, #tpu.memory_space<vmem>>, %arg19: memref<128x384xf32, #tpu.memory_space<vmem>>, %arg20: memref<128x768xbf16, #tpu.memory_space<vmem>>, %arg21: memref<128x512xf32, #tpu.memory_space<vmem>>) attributes {dimension_semantics = [#tpu.dimension_semantics<arbitrary>, #tpu.dimension_semantics<arbitrary>], iteration_bounds = array<i64: 2, 2>, scalar_prefetch = 0 : i64, scratch_operands = 4 : i64, tpu.core_type = #tpu.core_type<tc>, window_params = [{pipeline_mode = #tpu.pipeline_mode<synchronous>, transform_indices = @transform_0, window_bounds = array<i64: 128, 128>}, {transform_indices = @transform_1, window_bounds = array<i64: 128, 128>}, {transform_indices = @transform_2, window_bounds = array<i64: 128, 128>}, {transform_indices = @transform_3, window_bounds = array<i64: 128, 384>}, {transform_indices = @transform_4, window_bounds = array<i64: 1, 128, 384>}, {transform_indices = @transform_5, window_bounds = array<i64: 1, 128, 128>}, {transform_indices = @transform_6, window_bounds = array<i64: 1, 1, 128>}, {transform_indices = @transform_7, window_bounds = array<i64: 1, 128, 384>}, {transform_indices = @transform_8, window_bounds = array<i64: 1, 1, 384>}, {transform_indices = @transform_9, window_bounds = array<i64: 1, 128, 256>}, {transform_indices = @transform_10, window_bounds = array<i64: 1, 128, 128>}, {transform_indices = @transform_11, window_bounds = array<i64: 1, 128, 128>}, {transform_indices = @transform_12, window_bounds = array<i64: 1, 1, 128>}, {transform_indices = @transform_13, window_bounds = array<i64: 1, 128, 384>}, {transform_indices = @transform_14, window_bounds = array<i64: 1, 1, 384>}, {pipeline_mode = #tpu.pipeline_mode<synchronous>, transform_indices = @transform_15, window_bounds = array<i64: 128, 128>}]} {
    %c0_i32 = arith.constant 0 : i32
    %0 = arith.cmpi eq, %arg0, %c0_i32 : i32
    %c0_i32_0 = arith.constant 0 : i32
    %1 = arith.cmpi eq, %arg1, %c0_i32_0 : i32
    %2 = arith.andi %0, %1 : i1
    %3 = arith.extui %2 : i1 to i32
    %c0_i32_1 = arith.constant 0 : i32
    %4 = arith.cmpi ne, %3, %c0_i32_1 : i32
    scf.if %4 {
      %c0_23 = arith.constant 0 : index
      %c0_24 = arith.constant 0 : index
      %42 = vector.load %arg2[%c0_23, %c0_24] : memref<128x128xf32, #tpu.memory_space<vmem>>, vector<128x128xf32>
      %c0_25 = arith.constant 0 : index
      %c0_26 = arith.constant 0 : index
      %43 = vector.load %arg18[%c0_25, %c0_26] : memref<128x128xf32, #tpu.memory_space<vmem>>, vector<128x128xf32>
      tpu.vector_store %arg18[%c0_25, %c0_26], %42 {strides = array<i32>} : memref<128x128xf32, #tpu.memory_space<vmem>>, vector<128x128xf32>,
      %cst_27 = arith.constant 0.000000e+00 : f32
      %44 = vector.broadcast %cst_27 : f32 to vector<128x384xf32>
      %c0_28 = arith.constant 0 : index
      %c0_29 = arith.constant 0 : index
      %45 = vector.load %arg19[%c0_28, %c0_29] : memref<128x384xf32, #tpu.memory_space<vmem>>, vector<128x384xf32>
      tpu.vector_store %arg19[%c0_28, %c0_29], %44 {strides = array<i32>} : memref<128x384xf32, #tpu.memory_space<vmem>>, vector<128x384xf32>,
      %cst_30 = arith.constant 0.000000e+00 : bf16
      %46 = vector.broadcast %cst_30 : bf16 to vector<128x768xbf16>
      %c0_31 = arith.constant 0 : index
      %c0_32 = arith.constant 0 : index
      %47 = vector.load %arg20[%c0_31, %c0_32] : memref<128x768xbf16, #tpu.memory_space<vmem>>, vector<128x768xbf16>
      tpu.vector_store %arg20[%c0_31, %c0_32], %46 {strides = array<i32>} : memref<128x768xbf16, #tpu.memory_space<vmem>>, vector<128x768xbf16>,
    } else {
    }
    %c0_i32_2 = arith.constant 0 : i32
    %5 = arith.cmpi eq, %arg1, %c0_i32_2 : i32
    %6 = arith.extui %5 : i1 to i32
    %c0_i32_3 = arith.constant 0 : i32
    %7 = arith.cmpi ne, %6, %c0_i32_3 : i32
    scf.if %7 {
      %c0_23 = arith.constant 0 : index
      %c0_24 = arith.constant 0 : index
      %42 = vector.load %arg18[%c0_23, %c0_24] : memref<128x128xf32, #tpu.memory_space<vmem>>, vector<128x128xf32>
      %43 = arith.truncf %42 : vector<128x128xf32> to vector<128x128xbf16>
      %c0_25 = arith.constant 0 : index
      %c0_26 = arith.constant 0 : index
      %c0_27 = arith.constant 0 : index
      %44 = vector.load %arg7[%c0_25, %c0_26, %c0_27] : memref<1x128x128xbf16, #tpu.memory_space<vmem>>, vector<1x128x128xbf16>
      %45 = vector.shape_cast %44 : vector<1x128x128xbf16> to vector<128x128xbf16>
      %cst_28 = arith.constant dense<0.000000e+00> : vector<128x128xf32>
      %46 = tpu.matmul %43, %45, %cst_28 {dimension_numbers = #tpu.dot_dimension_numbers<[1], [0], [0], [1], [0, 0, 1, 1], [], []>} : vector<128x128xbf16>, vector<128x128xbf16>, vector<128x128xf32> -> vector<128x128xf32>
      %c0_29 = arith.constant 0 : index
      %c0_30 = arith.constant 0 : index
      %c0_31 = arith.constant 0 : index
      %47 = vector.load %arg8[%c0_29, %c0_30, %c0_31] : memref<1x1x128xf32, #tpu.memory_space<vmem>>, vector<1x1x128xf32>
      %48 = vector.shape_cast %47 : vector<1x1x128xf32> to vector<1x128xf32>
      %49 = vector.broadcast %48 : vector<1x128xf32> to vector<128x128xf32>
      %50 = arith.addf %46, %49 : vector<128x128xf32>
      %51 = arith.negf %50 : vector<128x128xf32>
      %52 = math.exp %51 : vector<128x128xf32>
      %cst_32 = arith.constant 1.000000e+00 : f32
      %53 = vector.broadcast %cst_32 : f32 to vector<128x128xf32>
      %54 = arith.addf %53, %52 : vector<128x128xf32>
      %55 = arith.divf %53, %54 : vector<128x128xf32>
      %56 = arith.mulf %50, %55 : vector<128x128xf32>
      %57 = arith.truncf %56 : vector<128x128xf32> to vector<128x128xbf16>
      %c0_33 = arith.constant 0 : index
      %c0_34 = arith.constant 0 : index
      %c0_35 = arith.constant 0 : index
      %58 = vector.load %arg9[%c0_33, %c0_34, %c0_35] : memref<1x128x384xbf16, #tpu.memory_space<vmem>>, vector<1x128x384xbf16>
      %59 = vector.shape_cast %58 : vector<1x128x384xbf16> to vector<128x384xbf16>
      %cst_36 = arith.constant dense<0.000000e+00> : vector<128x384xf32>
      %60 = tpu.matmul %57, %59, %cst_36 {dimension_numbers = #tpu.dot_dimension_numbers<[1], [0], [0], [1], [0, 0, 1, 1], [], []>} : vector<128x128xbf16>, vector<128x384xbf16>, vector<128x384xf32> -> vector<128x384xf32>
      %c0_37 = arith.constant 0 : index
      %c0_38 = arith.constant 0 : index
      %c0_39 = arith.constant 0 : index
      %61 = vector.load %arg10[%c0_37, %c0_38, %c0_39] : memref<1x1x384xf32, #tpu.memory_space<vmem>>, vector<1x1x384xf32>
      %62 = vector.shape_cast %61 : vector<1x1x384xf32> to vector<1x384xf32>
      %63 = vector.broadcast %62 : vector<1x384xf32> to vector<128x384xf32>
      %64 = arith.addf %60, %63 : vector<128x384xf32>
      %65 = arith.truncf %64 : vector<128x384xf32> to vector<128x384xbf16>
      %c0_40 = arith.constant 0 : index
      %c0_41 = arith.constant 0 : index
      %66 = vector.load %arg20[%c0_40, %c0_41] : memref<128x768xbf16, #tpu.memory_space<vmem>>, vector<128x384xbf16>
      tpu.vector_store %arg20[%c0_40, %c0_41], %65 {strides = array<i32>} : memref<128x768xbf16, #tpu.memory_space<vmem>>, vector<128x384xbf16>,
      %cst_42 = arith.constant 0.000000e+00 : f32
      %67 = vector.broadcast %cst_42 : f32 to vector<128x512xf32>
      %c0_43 = arith.constant 0 : index
      %c0_44 = arith.constant 0 : index
      %68 = vector.load %arg21[%c0_43, %c0_44] : memref<128x512xf32, #tpu.memory_space<vmem>>, vector<128x512xf32>
      tpu.vector_store %arg21[%c0_43, %c0_44], %67 {strides = array<i32>} : memref<128x512xf32, #tpu.memory_space<vmem>>, vector<128x512xf32>,
    } else {
    }
    %c0 = arith.constant 0 : index
    %c0_4 = arith.constant 0 : index
    %8 = vector.load %arg3[%c0, %c0_4] : memref<128x128xbf16, #tpu.memory_space<vmem>>, vector<128x128xbf16>
    %c0_5 = arith.constant 0 : index
    %c0_6 = arith.constant 0 : index
    %9 = vector.load %arg4[%c0_5, %c0_6] : memref<128x128xbf16, #tpu.memory_space<vmem>>, vector<128x128xbf16>
    %c0_7 = arith.constant 0 : index
    %c0_8 = arith.constant 0 : index
    %10 = vector.load %arg20[%c0_7, %c0_8] : memref<128x768xbf16, #tpu.memory_space<vmem>>, vector<128x768xbf16>
    %cst = arith.constant dense<0.000000e+00> : vector<128x768xf32>
    %11 = tpu.matmul %8, %10, %cst {dimension_numbers = #tpu.dot_dimension_numbers<[1], [0], [0], [1], [0, 0, 1, 1], [], []>} : vector<128x128xbf16>, vector<128x768xbf16>, vector<128x768xf32> -> vector<128x768xf32>
    %12 = vector.extract_strided_slice %11 {offsets = [0, 0], sizes = [128, 384], strides = [1, 1]} : vector<128x768xf32> to vector<128x384xf32>
    %13 = vector.extract_strided_slice %11 {offsets = [0, 384], sizes = [128, 384], strides = [1, 1]} : vector<128x768xf32> to vector<128x384xf32>
    %c0_9 = arith.constant 0 : index
    %c0_10 = arith.constant 0 : index
    %c0_11 = arith.constant 0 : index
    %14 = vector.load %arg6[%c0_9, %c0_10, %c0_11] : memref<1x128x384xbf16, #tpu.memory_space<vmem>>, vector<1x128x384xbf16>
    %15 = vector.shape_cast %14 : vector<1x128x384xbf16> to vector<128x384xbf16>
    %16 = arith.extf %15 : vector<128x384xbf16> to vector<128x384xf32>
    %17 = arith.mulf %16, %12 : vector<128x384xf32>
    %18 = vector.extract_strided_slice %17 {offsets = [0, 0], sizes = [128, 128], strides = [1, 1]} : vector<128x384xf32> to vector<128x128xf32>
    %19 = vector.extract_strided_slice %17 {offsets = [0, 128], sizes = [128, 128], strides = [1, 1]} : vector<128x384xf32> to vector<128x128xf32>
    %20 = tpu.concatenate %19, %19, %19 in 1 : vector<128x128xf32>, vector<128x128xf32>, vector<128x128xf32> -> vector<128x384xf32>
    %21 = vector.extract_strided_slice %17 {offsets = [0, 256], sizes = [128, 128], strides = [1, 1]} : vector<128x384xf32> to vector<128x128xf32>
    %22 = tpu.concatenate %21, %21, %21 in 1 : vector<128x128xf32>, vector<128x128xf32>, vector<128x128xf32> -> vector<128x384xf32>
    %c0_12 = arith.constant 0 : index
    %c0_13 = arith.constant 0 : index
    %23 = vector.load %arg5[%c0_12, %c0_13] : memref<128x384xbf16, #tpu.memory_space<vmem>>, vector<128x384xbf16>
    %24 = arith.extf %23 : vector<128x384xbf16> to vector<128x384xf32>
    %25 = arith.mulf %20, %24 : vector<128x384xf32>
    %26 = arith.mulf %22, %13 : vector<128x384xf32>
    %27 = arith.addf %25, %26 : vector<128x384xf32>
    %28 = tpu.concatenate %18, %27 in 1 : vector<128x128xf32>, vector<128x384xf32> -> vector<128x512xf32>
    %c0_14 = arith.constant 0 : index
    %c0_15 = arith.constant 0 : index
    %29 = vector.load %arg21[%c0_14, %c0_15] : memref<128x512xf32, #tpu.memory_space<vmem>>, vector<128x512xf32>
    %30 = arith.truncf %28 : vector<128x512xf32> to vector<128x512xbf16>
    %cst_16 = arith.constant dense<0.000000e+00> : vector<128x512xf32>
    %31 = tpu.matmul %9, %30, %cst_16 {dimension_numbers = #tpu.dot_dimension_numbers<[1], [0], [0], [1], [0, 0, 1, 1], [], []>} : vector<128x128xbf16>, vector<128x512xbf16>, vector<128x512xf32> -> vector<128x512xf32>
    %32 = arith.addf %29, %31 : vector<128x512xf32>
    %c0_17 = arith.constant 0 : index
    %c0_18 = arith.constant 0 : index
    %33 = vector.load %arg21[%c0_17, %c0_18] : memref<128x512xf32, #tpu.memory_space<vmem>>, vector<128x512xf32>
    tpu.vector_store %arg21[%c0_17, %c0_18], %32 {strides = array<i32>} : memref<128x512xf32, #tpu.memory_space<vmem>>, vector<128x512xf32>,
    %c1_i32 = arith.constant 1 : i32
    %34 = arith.cmpi eq, %arg1, %c1_i32 : i32
    %35 = arith.extui %34 : i1 to i32
    %c0_i32_19 = arith.constant 0 : i32
    %36 = arith.cmpi ne, %35, %c0_i32_19 : i32
    scf.if %36 {
      %c0_23 = arith.constant 0 : index
      %c0_24 = arith.constant 0 : index
      %42 = vector.load %arg21[%c0_23, %c0_24] : memref<128x512xf32, #tpu.memory_space<vmem>>, vector<128x512xf32>
      %c0_25 = arith.constant 0 : index
      %c0_26 = arith.constant 0 : index
      %43 = vector.load %arg18[%c0_25, %c0_26] : memref<128x128xf32, #tpu.memory_space<vmem>>, vector<128x128xf32>
      %44 = vector.extract_strided_slice %42 {offsets = [0, 0], sizes = [128, 128], strides = [1, 1]} : vector<128x512xf32> to vector<128x128xf32>
      %45 = arith.addf %43, %44 : vector<128x128xf32>
      %c0_27 = arith.constant 0 : index
      %c0_28 = arith.constant 0 : index
      %46 = vector.load %arg19[%c0_27, %c0_28] : memref<128x384xf32, #tpu.memory_space<vmem>>, vector<128x384xf32>
      %47 = vector.extract_strided_slice %42 {offsets = [0, 128], sizes = [128, 384], strides = [1, 1]} : vector<128x512xf32> to vector<128x384xf32>
      %48 = arith.addf %46, %47 : vector<128x384xf32>
      %49 = arith.truncf %48 : vector<128x384xf32> to vector<128x384xbf16>
      %c0_29 = arith.constant 0 : index
      %c0_30 = arith.constant 0 : index
      %c0_31 = arith.constant 0 : index
      %50 = vector.load %arg11[%c0_29, %c0_30, %c0_31] : memref<1x128x256xbf16, #tpu.memory_space<vmem>>, vector<1x128x256xbf16>
      %51 = vector.shape_cast %50 : vector<1x128x256xbf16> to vector<128x256xbf16>
      %52 = vector.extract_strided_slice %49 {offsets = [0, 0], sizes = [128, 128], strides = [1, 1]} : vector<128x384xbf16> to vector<128x128xbf16>
      %cst_32 = arith.constant dense<0.000000e+00> : vector<128x256xf32>
      %53 = tpu.matmul %52, %51, %cst_32 {dimension_numbers = #tpu.dot_dimension_numbers<[1], [0], [0], [1], [0, 0, 1, 1], [], []>} : vector<128x128xbf16>, vector<128x256xbf16>, vector<128x256xf32> -> vector<128x256xf32>
      %54 = vector.extract_strided_slice %49 {offsets = [0, 128], sizes = [128, 128], strides = [1, 1]} : vector<128x384xbf16> to vector<128x128xbf16>
      %cst_33 = arith.constant dense<0.000000e+00> : vector<128x256xf32>
      %55 = tpu.matmul %54, %51, %cst_33 {dimension_numbers = #tpu.dot_dimension_numbers<[1], [0], [0], [1], [0, 0, 1, 1], [], []>} : vector<128x128xbf16>, vector<128x256xbf16>, vector<128x256xf32> -> vector<128x256xf32>
      %56 = vector.extract_strided_slice %49 {offsets = [0, 256], sizes = [128, 128], strides = [1, 1]} : vector<128x384xbf16> to vector<128x128xbf16>
      %cst_34 = arith.constant dense<0.000000e+00> : vector<128x256xf32>
      %57 = tpu.matmul %56, %51, %cst_34 {dimension_numbers = #tpu.dot_dimension_numbers<[1], [0], [0], [1], [0, 0, 1, 1], [], []>} : vector<128x128xbf16>, vector<128x256xbf16>, vector<128x256xf32> -> vector<128x256xf32>
      %58 = vector.extract_strided_slice %53 {offsets = [0, 0], sizes = [128, 128], strides = [1, 1]} : vector<128x256xf32> to vector<128x128xf32>
      %59 = vector.extract_strided_slice %55 {offsets = [0, 0], sizes = [128, 128], strides = [1, 1]} : vector<128x256xf32> to vector<128x128xf32>
      %60 = vector.extract_strided_slice %57 {offsets = [0, 0], sizes = [128, 128], strides = [1, 1]} : vector<128x256xf32> to vector<128x128xf32>
      %61 = vector.extract_strided_slice %53 {offsets = [0, 128], sizes = [128, 128], strides = [1, 1]} : vector<128x256xf32> to vector<128x128xf32>
      %62 = vector.extract_strided_slice %55 {offsets = [0, 128], sizes = [128, 128], strides = [1, 1]} : vector<128x256xf32> to vector<128x128xf32>
      %63 = vector.extract_strided_slice %57 {offsets = [0, 128], sizes = [128, 128], strides = [1, 1]} : vector<128x256xf32> to vector<128x128xf32>
      %64 = arith.mulf %58, %58 : vector<128x128xf32>
      %65 = arith.mulf %59, %59 : vector<128x128xf32>
      %66 = arith.addf %64, %65 : vector<128x128xf32>
      %67 = arith.mulf %60, %60 : vector<128x128xf32>
      %68 = arith.addf %66, %67 : vector<128x128xf32>
      %cst_35 = arith.constant 9.99999993E-9 : f32
      %69 = vector.broadcast %cst_35 : f32 to vector<128x128xf32>
      %70 = arith.addf %68, %69 : vector<128x128xf32>
      %71 = math.sqrt %70 : vector<128x128xf32>
      %72 = arith.truncf %45 : vector<128x128xf32> to vector<128x128xbf16>
      %c0_36 = arith.constant 0 : index
      %c0_37 = arith.constant 0 : index
      %c0_38 = arith.constant 0 : index
      %73 = vector.load %arg12[%c0_36, %c0_37, %c0_38] : memref<1x128x128xbf16, #tpu.memory_space<vmem>>, vector<1x128x128xbf16>
      %74 = vector.shape_cast %73 : vector<1x128x128xbf16> to vector<128x128xbf16>
      %cst_39 = arith.constant dense<0.000000e+00> : vector<128x128xf32>
      %75 = tpu.matmul %72, %74, %cst_39 {dimension_numbers = #tpu.dot_dimension_numbers<[1], [0], [0], [1], [0, 0, 1, 1], [], []>} : vector<128x128xbf16>, vector<128x128xbf16>, vector<128x128xf32> -> vector<128x128xf32>
      %76 = arith.truncf %71 : vector<128x128xf32> to vector<128x128xbf16>
      %c0_40 = arith.constant 0 : index
      %c0_41 = arith.constant 0 : index
      %c0_42 = arith.constant 0 : index
      %77 = vector.load %arg13[%c0_40, %c0_41, %c0_42] : memref<1x128x128xbf16, #tpu.memory_space<vmem>>, vector<1x128x128xbf16>
      %78 = vector.shape_cast %77 : vector<1x128x128xbf16> to vector<128x128xbf16>
      %cst_43 = arith.constant dense<0.000000e+00> : vector<128x128xf32>
      %79 = tpu.matmul %76, %78, %cst_43 {dimension_numbers = #tpu.dot_dimension_numbers<[1], [0], [0], [1], [0, 0, 1, 1], [], []>} : vector<128x128xbf16>, vector<128x128xbf16>, vector<128x128xf32> -> vector<128x128xf32>
      %80 = arith.addf %75, %79 : vector<128x128xf32>
      %c0_44 = arith.constant 0 : index
      %c0_45 = arith.constant 0 : index
      %c0_46 = arith.constant 0 : index
      %81 = vector.load %arg14[%c0_44, %c0_45, %c0_46] : memref<1x1x128xf32, #tpu.memory_space<vmem>>, vector<1x1x128xf32>
      %82 = vector.shape_cast %81 : vector<1x1x128xf32> to vector<1x128xf32>
      %83 = vector.broadcast %82 : vector<1x128xf32> to vector<128x128xf32>
      %84 = arith.addf %80, %83 : vector<128x128xf32>
      %85 = arith.negf %84 : vector<128x128xf32>
      %86 = math.exp %85 : vector<128x128xf32>
      %cst_47 = arith.constant 1.000000e+00 : f32
      %87 = vector.broadcast %cst_47 : f32 to vector<128x128xf32>
      %88 = arith.addf %87, %86 : vector<128x128xf32>
      %89 = arith.divf %87, %88 : vector<128x128xf32>
      %90 = arith.mulf %84, %89 : vector<128x128xf32>
      %91 = arith.truncf %90 : vector<128x128xf32> to vector<128x128xbf16>
      %c0_48 = arith.constant 0 : index
      %c0_49 = arith.constant 0 : index
      %c0_50 = arith.constant 0 : index
      %92 = vector.load %arg15[%c0_48, %c0_49, %c0_50] : memref<1x128x384xbf16, #tpu.memory_space<vmem>>, vector<1x128x384xbf16>
      %93 = vector.shape_cast %92 : vector<1x128x384xbf16> to vector<128x384xbf16>
      %cst_51 = arith.constant dense<0.000000e+00> : vector<128x384xf32>
      %94 = tpu.matmul %91, %93, %cst_51 {dimension_numbers = #tpu.dot_dimension_numbers<[1], [0], [0], [1], [0, 0, 1, 1], [], []>} : vector<128x128xbf16>, vector<128x384xbf16>, vector<128x384xf32> -> vector<128x384xf32>
      %c0_52 = arith.constant 0 : index
      %c0_53 = arith.constant 0 : index
      %c0_54 = arith.constant 0 : index
      %95 = vector.load %arg16[%c0_52, %c0_53, %c0_54] : memref<1x1x384xf32, #tpu.memory_space<vmem>>, vector<1x1x384xf32>
      %96 = vector.shape_cast %95 : vector<1x1x384xf32> to vector<1x384xf32>
      %97 = vector.broadcast %96 : vector<1x384xf32> to vector<128x384xf32>
      %98 = arith.addf %94, %97 : vector<128x384xf32>
      %99 = vector.extract_strided_slice %98 {offsets = [0, 0], sizes = [128, 128], strides = [1, 1]} : vector<128x384xf32> to vector<128x128xf32>
      %100 = vector.extract_strided_slice %98 {offsets = [0, 128], sizes = [128, 128], strides = [1, 1]} : vector<128x384xf32> to vector<128x128xf32>
      %101 = vector.extract_strided_slice %98 {offsets = [0, 256], sizes = [128, 128], strides = [1, 1]} : vector<128x384xf32> to vector<128x128xf32>
      %102 = arith.mulf %58, %61 : vector<128x128xf32>
      %103 = arith.mulf %59, %62 : vector<128x128xf32>
      %104 = arith.addf %102, %103 : vector<128x128xf32>
      %105 = arith.mulf %60, %63 : vector<128x128xf32>
      %106 = arith.addf %104, %105 : vector<128x128xf32>
      %107 = arith.addf %45, %99 : vector<128x128xf32>
      %108 = arith.mulf %101, %106 : vector<128x128xf32>
      %109 = arith.addf %107, %108 : vector<128x128xf32>
      %c0_55 = arith.constant 0 : index
      %c0_56 = arith.constant 0 : index
      %110 = vector.load %arg18[%c0_55, %c0_56] : memref<128x128xf32, #tpu.memory_space<vmem>>, vector<128x128xf32>
      tpu.vector_store %arg18[%c0_55, %c0_56], %109 {strides = array<i32>} : memref<128x128xf32, #tpu.memory_space<vmem>>, vector<128x128xf32>,
      %111 = arith.mulf %100, %61 : vector<128x128xf32>
      %112 = arith.mulf %100, %62 : vector<128x128xf32>
      %113 = arith.mulf %100, %63 : vector<128x128xf32>
      %114 = tpu.concatenate %111, %112, %113 in 1 : vector<128x128xf32>, vector<128x128xf32>, vector<128x128xf32> -> vector<128x384xf32>
      %115 = arith.addf %48, %114 : vector<128x384xf32>
      %c0_57 = arith.constant 0 : index
      %c0_58 = arith.constant 0 : index
      %116 = vector.load %arg19[%c0_57, %c0_58] : memref<128x384xf32, #tpu.memory_space<vmem>>, vector<128x384xf32>
      tpu.vector_store %arg19[%c0_57, %c0_58], %115 {strides = array<i32>} : memref<128x384xf32, #tpu.memory_space<vmem>>, vector<128x384xf32>,
      %117 = arith.truncf %115 : vector<128x384xf32> to vector<128x384xbf16>
      %c0_59 = arith.constant 0 : index
      %c384 = arith.constant 384 : index
      %118 = vector.load %arg20[%c0_59, %c384] : memref<128x768xbf16, #tpu.memory_space<vmem>>, vector<128x384xbf16>
      tpu.vector_store %arg20[%c0_59, %c384], %117 {strides = array<i32>} : memref<128x768xbf16, #tpu.memory_space<vmem>>, vector<128x384xbf16>,
    } else {
    }
    %c1_i32_20 = arith.constant 1 : i32
    %37 = arith.cmpi eq, %arg0, %c1_i32_20 : i32
    %c1_i32_21 = arith.constant 1 : i32
    %38 = arith.cmpi eq, %arg1, %c1_i32_21 : i32
    %39 = arith.andi %37, %38 : i1
    %40 = arith.extui %39 : i1 to i32
    %c0_i32_22 = arith.constant 0 : i32
    %41 = arith.cmpi ne, %40, %c0_i32_22 : i32
    scf.if %41 {
      %c0_23 = arith.constant 0 : index
      %c0_24 = arith.constant 0 : index
      %42 = vector.load %arg18[%c0_23, %c0_24] : memref<128x128xf32, #tpu.memory_space<vmem>>, vector<128x128xf32>
      %c0_25 = arith.constant 0 : index
      %c0_26 = arith.constant 0 : index
      %43 = vector.load %arg17[%c0_25, %c0_26] : memref<128x128xf32, #tpu.memory_space<vmem>>, vector<128x128xf32>
      tpu.vector_store %arg17[%c0_25, %c0_26], %42 {strides = array<i32>} : memref<128x128xf32, #tpu.memory_space<vmem>>, vector<128x128xf32>,
    } else {
    }
    return
  }
  func.func @transform_0(%arg0: i32, %arg1: i32) -> (i32, i32) {
    %c0_i32 = arith.constant 0 : i32
    %c0_i32_0 = arith.constant 0 : i32
    %c0_i32_1 = arith.constant 0 : i32
    return %c0_i32, %c0_i32_0 : i32, i32
  }
  func.func @transform_1(%arg0: i32, %arg1: i32) -> (i32, i32) {
    %c0_i32 = arith.constant 0 : i32
    %c0_i32_0 = arith.constant 0 : i32
    return %arg1, %c0_i32 : i32, i32
  }
  func.func @transform_2(%arg0: i32, %arg1: i32) -> (i32, i32) {
    %c0_i32 = arith.constant 0 : i32
    %c0_i32_0 = arith.constant 0 : i32
    return %c0_i32, %arg1 : i32, i32
  }
  func.func @transform_3(%arg0: i32, %arg1: i32) -> (i32, i32) {
    %c0_i32 = arith.constant 0 : i32
    %c0_i32_0 = arith.constant 0 : i32
    return %arg1, %c0_i32 : i32, i32
  }
  func.func @transform_4(%arg0: i32, %arg1: i32) -> (i32, i32, i32) {
    %c0_i32 = arith.constant 0 : i32
    %c0_i32_0 = arith.constant 0 : i32
    return %arg0, %arg1, %c0_i32 : i32, i32, i32
  }
  func.func @transform_5(%arg0: i32, %arg1: i32) -> (i32, i32, i32) {
    %c0_i32 = arith.constant 0 : i32
    %c0_i32_0 = arith.constant 0 : i32
    %c0_i32_1 = arith.constant 0 : i32
    return %arg0, %c0_i32, %c0_i32_0 : i32, i32, i32
  }
  func.func @transform_6(%arg0: i32, %arg1: i32) -> (i32, i32, i32) {
    %c0_i32 = arith.constant 0 : i32
    %c0_i32_0 = arith.constant 0 : i32
    %c0_i32_1 = arith.constant 0 : i32
    return %arg0, %c0_i32, %c0_i32_0 : i32, i32, i32
  }
  func.func @transform_7(%arg0: i32, %arg1: i32) -> (i32, i32, i32) {
    %c0_i32 = arith.constant 0 : i32
    %c0_i32_0 = arith.constant 0 : i32
    %c0_i32_1 = arith.constant 0 : i32
    return %arg0, %c0_i32, %c0_i32_0 : i32, i32, i32
  }
  func.func @transform_8(%arg0: i32, %arg1: i32) -> (i32, i32, i32) {
    %c0_i32 = arith.constant 0 : i32
    %c0_i32_0 = arith.constant 0 : i32
    %c0_i32_1 = arith.constant 0 : i32
    return %arg0, %c0_i32, %c0_i32_0 : i32, i32, i32
  }
  func.func @transform_9(%arg0: i32, %arg1: i32) -> (i32, i32, i32) {
    %c0_i32 = arith.constant 0 : i32
    %c0_i32_0 = arith.constant 0 : i32
    %c0_i32_1 = arith.constant 0 : i32
    return %arg0, %c0_i32, %c0_i32_0 : i32, i32, i32
  }
  func.func @transform_10(%arg0: i32, %arg1: i32) -> (i32, i32, i32) {
    %c0_i32 = arith.constant 0 : i32
    %c0_i32_0 = arith.constant 0 : i32
    %c0_i32_1 = arith.constant 0 : i32
    return %arg0, %c0_i32, %c0_i32_0 : i32, i32, i32
  }
  func.func @transform_11(%arg0: i32, %arg1: i32) -> (i32, i32, i32) {
    %c0_i32 = arith.constant 0 : i32
    %c0_i32_0 = arith.constant 0 : i32
    %c0_i32_1 = arith.constant 0 : i32
    return %arg0, %c0_i32, %c0_i32_0 : i32, i32, i32
  }
  func.func @transform_12(%arg0: i32, %arg1: i32) -> (i32, i32, i32) {
    %c0_i32 = arith.constant 0 : i32
    %c0_i32_0 = arith.constant 0 : i32
    %c0_i32_1 = arith.constant 0 : i32
    return %arg0, %c0_i32, %c0_i32_0 : i32, i32, i32
  }
  func.func @transform_13(%arg0: i32, %arg1: i32) -> (i32, i32, i32) {
    %c0_i32 = arith.constant 0 : i32
    %c0_i32_0 = arith.constant 0 : i32
    %c0_i32_1 = arith.constant 0 : i32
    return %arg0, %c0_i32, %c0_i32_0 : i32, i32, i32
  }
  func.func @transform_14(%arg0: i32, %arg1: i32) -> (i32, i32, i32) {
    %c0_i32 = arith.constant 0 : i32
    %c0_i32_0 = arith.constant 0 : i32
    %c0_i32_1 = arith.constant 0 : i32
    return %arg0, %c0_i32, %c0_i32_0 : i32, i32, i32
  }
  func.func @transform_15(%arg0: i32, %arg1: i32) -> (i32, i32) {
    %c0_i32 = arith.constant 0 : i32
    %c0_i32_0 = arith.constant 0 : i32
    %c0_i32_1 = arith.constant 0 : i32
    return %c0_i32, %c0_i32_0 : i32, i32
  }
}

</mosaic_0001>

<llo_original>
// kernel: tpu_custom_call.1
$region0: #{tpu_custom_call.1}
  #allocation0 [shape = 'u32[]', space=smem, size = 0x4, offset = 0x4, fixed_abs, tag = 'smem constant byte address 0x4 - core index']
  #allocation1 [shape = 'u32[72,128]{1,0:T(1,128)}', space=vmem, size = 0x9000, scoped, tag = 'internal scratch']
  #allocation2 [shape = 'f32[128,128]{1,0:T(8,128)}', space=vmem, size = 0x10000, scoped, tag = 'scratch operand']
  #allocation3 [shape = 'f32[128,384]{1,0:T(8,128)}', space=vmem, size = 0x30000, scoped, tag = 'scratch operand']
  #allocation4 [shape = 'bf16[128,768]{1,0:T(8,128)(2,1)}', space=vmem, size = 0x30000, scoped, tag = 'scratch operand']
  #allocation5 [shape = 'f32[128,512]{1,0:T(8,128)}', space=vmem, size = 0x40000, scoped, tag = 'scratch operand']
  %s0 = inlined_call_operand.hbm [shape: f32[128,128], index: 0, kind: input, shape index: {}]
  %s1 = inlined_call_operand.hbm [shape: bf16[256,128], index: 1, kind: input, shape index: {}]
  %s2 = inlined_call_operand.hbm [shape: bf16[128,256], index: 2, kind: input, shape index: {}]
  %s3 = inlined_call_operand.hbm [shape: bf16[256,384], index: 3, kind: input, shape index: {}]
  %s4 = inlined_call_operand.hbm [shape: bf16[2,256,384], index: 4, kind: input, shape index: {}]
  %s5 = inlined_call_operand.hbm [shape: bf16[2,128,128], index: 5, kind: input, shape index: {}]
  %s6 = inlined_call_operand.hbm [shape: f32[2,1,128], index: 6, kind: input, shape index: {}]
  %s7 = inlined_call_operand.hbm [shape: bf16[2,128,384], index: 7, kind: input, shape index: {}]
  %s8 = inlined_call_operand.vmem [shape: f32[2,1,384], index: 8, kind: input, shape index: {}]
  %s9 = inlined_call_operand.hbm [shape: bf16[2,128,256], index: 9, kind: input, shape index: {}]
  %s10 = inlined_call_operand.hbm [shape: bf16[2,128,128], index: 10, kind: input, shape index: {}]
  %s11 = inlined_call_operand.hbm [shape: bf16[2,128,128], index: 11, kind: input, shape index: {}]
  %s12 = inlined_call_operand.hbm [shape: f32[2,1,128], index: 12, kind: input, shape index: {}]
  %s13 = inlined_call_operand.hbm [shape: bf16[2,128,384], index: 13, kind: input, shape index: {}]
  %s14 = inlined_call_operand.vmem [shape: f32[2,1,384], index: 14, kind: input, shape index: {}]
  %s15 = inlined_call_operand.hbm [shape: f32[128,128], index: 15, kind: output, shape index: {}]
  %s16 = sld [smem:[#allocation0]]
  $region161: #{tpu_custom_call.1} parent=0
    _
  %s18 = ssub.s32 1, %s16
  %s19 = scalar_select 0, %s18, %s16
  $region1: #{tpu_custom_call.1} parent=0
    #allocation6 [shape = 'u8[65536]{0}', space=vmem, size = 0x10000, scoped, tag = 'input window, operand 0, single buffered']
    #allocation7 [shape = 's32[2]{0}', space=sflag, size = 0x8, scoped, tag = 'scoped memory for tpu_custom_call.1']
    #allocation8 [shape = 's32[2]{0}', space=sflag, size = 0x8, scoped, tag = 'scoped memory for tpu_custom_call.1']
    #allocation9 [shape = 'u8[65536]{0}', space=vmem, size = 0x10000, scoped, tag = 'input window, operand 1']
    #allocation10 [shape = 's32[2]{0}', space=sflag, size = 0x8, scoped, tag = 'scoped memory for tpu_custom_call.1']
    #allocation11 [shape = 'u8[65536]{0}', space=vmem, size = 0x10000, scoped, tag = 'input window, operand 2']
    #allocation12 [shape = 'u8[196608]{0}', space=vmem, size = 0x30000, scoped, tag = 'input window, operand 3']
    #allocation13 [shape = 's32[2]{0}', space=sflag, size = 0x8, scoped, tag = 'scoped memory for tpu_custom_call.1']
    #allocation14 [shape = 'u8[196608]{0}', space=vmem, size = 0x30000, scoped, tag = 'input window, operand 4']
    #allocation15 [shape = 'u8[65536]{0}', space=vmem, size = 0x10000, scoped, tag = 'input window, operand 5']
    #allocation16 [shape = 's32[2]{0}', space=sflag, size = 0x8, scoped, tag = 'scoped memory for tpu_custom_call.1']
    #allocation17 [shape = 'u8[1024]{0}', space=vmem, size = 0x400, scoped, tag = 'input window, operand 6']
    #allocation18 [shape = 'u8[196608]{0}', space=vmem, size = 0x30000, scoped, tag = 'input window, operand 7']
    #allocation19 [shape = 's32[2]{0}', space=sflag, size = 0x8, scoped, tag = 'scoped memory for tpu_custom_call.1']
    #allocation20 [shape = 'u8[131072]{0}', space=vmem, size = 0x20000, scoped, tag = 'input window, operand 9']
    #allocation21 [shape = 'u8[65536]{0}', space=vmem, size = 0x10000, scoped, tag = 'input window, operand 10']
    #allocation22 [shape = 's32[2]{0}', space=sflag, size = 0x8, scoped, tag = 'scoped memory for tpu_custom_call.1']
    #allocation23 [shape = 'u8[65536]{0}', space=vmem, size = 0x10000, scoped, tag = 'input window, operand 11']
    #allocation24 [shape = 'u8[1024]{0}', space=vmem, size = 0x400, scoped, tag = 'input window, operand 12']
    #allocation25 [shape = 's32[2]{0}', space=sflag, size = 0x8, scoped, tag = 'scoped memory for tpu_custom_call.1']
    #allocation26 [shape = 'u8[196608]{0}', space=vmem, size = 0x30000, scoped, tag = 'input window, operand 13']
    #allocation27 [shape = 'u8[65536]{0}', space=vmem, size = 0x10000, scoped, tag = 'output window, operand 0, single buffered']
    %20 = vsyncpa [#allocation7], 0
    %21 = vsyncpa [#allocation10], 0
    %s22 = scalar_lea.sflag [#allocation10], 1
    %23 = vsyncpa %s22, 0
    %24 = vsyncpa [#allocation13], 0
    %s25 = scalar_lea.sflag [#allocation13], 1
    %26 = vsyncpa %s25, 0
    %27 = vsyncpa [#allocation16], 0
    %s28 = scalar_lea.sflag [#allocation16], 1
    %29 = vsyncpa %s28, 0
    %30 = vsyncpa [#allocation19], 0
    %s31 = scalar_lea.sflag [#allocation19], 1
    %32 = vsyncpa %s31, 0
    %33 = vsyncpa [#allocation22], 0
    %s34 = scalar_lea.sflag [#allocation22], 1
    %35 = vsyncpa %s34, 0
    %36 = vsyncpa [#allocation25], 0
    %s37 = scalar_lea.sflag [#allocation25], 1
    %38 = vsyncpa %s37, 0
    %39 = vsyncpa [#allocation8], 0
    loop: start=0, step=1, limit=6
    $region2: #{tpu_custom_call.1} parent=1 // loop_pre_header
      _
    $region3: #{tpu_custom_call.1} parent=1 // loop_header
      %s41 = sphi 0, %s45
      %p42 = scmp.ge.s32.totalorder %s41, 6
      %s48 = sphi 0, %s60
      %s49 = sphi 0, %s56
      %s50 = sphi 0, %s48
      %s51 = sphi 0, %s49
      %s52 = sphi 0, %s50
      %s53 = sphi 0, %s51
      %s61 = sphi 0, %s61
      %s63 = sphi 0, %s61
      %s64 = sphi 0, %s63
      %s78 = sphi 0, %s64
      %s84 = sphi 0, %s86
      %s87 = sphi 0, %s84
      %s88 = sphi 0, %s87
      %s104 = sphi 0, %s88
      %s110 = sphi 0, %s112
      %s113 = sphi 0, %s110
      %s114 = sphi 0, %s113
      %s130 = sphi 0, %s114
      %s136 = sphi 0, %s138
      %s139 = sphi 0, %s136
      %s140 = sphi 0, %s139
      %s156 = sphi 0, %s140
      %s164 = sphi 0, %s166
      %s167 = sphi 0, %s164
      %s168 = sphi 0, %s167
      %s184 = sphi 0, %s168
      %s190 = sphi 0, %s192
      %s193 = sphi 0, %s190
      %s194 = sphi 0, %s193
      %s210 = sphi 0, %s194
      %s216 = sphi 0, %s218
      %s219 = sphi 0, %s216
      %s220 = sphi 0, %s219
      %s236 = sphi 0, %s220
      %s242 = sphi 0, %s244
      %s245 = sphi 0, %s242
      %s246 = sphi 0, %s245
      %s262 = sphi 0, %s246
      %s268 = sphi 0, %s270
      %s271 = sphi 0, %s268
      %s272 = sphi 0, %s271
      %s288 = sphi 0, %s272
      %s294 = sphi 0, %s296
      %s297 = sphi 0, %s294
      %s298 = sphi 0, %s297
      %s314 = sphi 0, %s298
      %s320 = sphi 0, %s322
      %s323 = sphi 0, %s320
      %s324 = sphi 0, %s323
      %s340 = sphi 0, %s324
      %s346 = sphi 0, %s348
      %s349 = sphi 0, %s346
      %s350 = sphi 0, %s349
      %s366 = sphi 0, %s350
      %s372 = sphi 0, %s374
      %s375 = sphi 0, %s372
      %s376 = sphi 0, %s375
      %s392 = sphi 0, %s376
      %s398 = sphi 0, %s400
      %s401 = sphi 0, %s398
      %s402 = sphi 0, %s401
      %s418 = sphi 0, %s402
      %s424 = sphi 0, %s426
      %s427 = sphi 0, %s424
      %s428 = sphi 0, %s427
      %s444 = sphi 0, %s428
      %s448 = sphi 0, %s448
      %s450 = sphi 0, %s448
      %s451 = sphi 0, %s450
      %s465 = sphi 0, %s451
    $region4: #{tpu_custom_call.1} parent=1 // loop_header_branch
      %44 = sbr.rel (%p42) target = $region8
    $region5: #{tpu_custom_call.1} parent=1 // loop_body
      %s46 = ssub.s32 %s41, 1
      %s47 = ssub.s32 %s41, 2
      %s54 = sadd.s32 1, %s49
      %p55 = scmp.ge.s32.totalorder %s54, 2
      %s56 = scalar_select %p55, 0, %s54
      %s57 = sadd.s32 1, %s48
      %s58 = scalar_select %p55, %s57, %s48
      %p59 = scmp.ge.s32.totalorder %s58, 2
      %s60 = scalar_select %p59, 0, %s58
      %s62 = sadd.s32 %s61, 1
      %p65 = scmp.eq.s32.totalorder %s41, 3
      %p66 = scmp.ne.s32.totalorder %s61, %s63
      %p67 = scmp.eq.s32.totalorder %s41, 0
      %p68 = por %p66, %p67
      %p69 = scmp.ne.s32.totalorder %s61, %s63
      %p70 = scmp.eq.s32.totalorder %s46, 3
      %p71 = por %p69, %p70
      %p72 = scmp.ne.s32.totalorder %s63, %s64
      %p73 = scmp.eq.s32.totalorder %s46, 0
      %p74 = por %p72, %p73
      %p75 = scmp.ne.s32.totalorder %s63, %s64
      %p76 = scmp.eq.s32.totalorder %s47, 3
      %p77 = por %p75, %p76
      %p79 = scmp.ne.s32.totalorder %s64, %s78
      %p80 = scmp.eq.s32.totalorder %s47, 0
      %p81 = por %p79, %p80
      %s82 = ssub.s32 %s49, %s56
      %p83 = scmp.eq.s32.totalorder %s82, 0
      %s85 = sadd.s32 %s84, 1
      %s86 = scalar_select %p83, %s84, %s85
      %p89 = pneg %p83
      %p90 = scmp.eq.s32.totalorder %s41, 3
      %p91 = por %p89, %p90
      %p92 = scmp.ne.s32.totalorder %s84, %s87
      %p93 = scmp.eq.s32.totalorder %s41, 0
      %p94 = por %p92, %p93
      %p95 = scmp.ne.s32.totalorder %s84, %s87
      %p96 = scmp.eq.s32.totalorder %s46, 3
      %p97 = por %p95, %p96
      %p98 = scmp.ne.s32.totalorder %s87, %s88
      %p99 = scmp.eq.s32.totalorder %s46, 0
      %p100 = por %p98, %p99
      %p101 = scmp.ne.s32.totalorder %s87, %s88
      %p102 = scmp.eq.s32.totalorder %s47, 3
      %p103 = por %p101, %p102
      %p105 = scmp.ne.s32.totalorder %s88, %s104
      %p106 = scmp.eq.s32.totalorder %s47, 0
      %p107 = por %p105, %p106
      %s108 = ssub.s32 %s49, %s56
      %p109 = scmp.eq.s32.totalorder %s108, 0
      %s111 = sadd.s32 %s110, 1
      %s112 = scalar_select %p109, %s110, %s111
      %p115 = pneg %p109
      %p116 = scmp.eq.s32.totalorder %s41, 3
      %p117 = por %p115, %p116
      %p118 = scmp.ne.s32.totalorder %s110, %s113
      %p119 = scmp.eq.s32.totalorder %s41, 0
      %p120 = por %p118, %p119
      %p121 = scmp.ne.s32.totalorder %s110, %s113
      %p122 = scmp.eq.s32.totalorder %s46, 3
      %p123 = por %p121, %p122
      %p124 = scmp.ne.s32.totalorder %s113, %s114
      %p125 = scmp.eq.s32.totalorder %s46, 0
      %p126 = por %p124, %p125
      %p127 = scmp.ne.s32.totalorder %s113, %s114
      %p128 = scmp.eq.s32.totalorder %s47, 3
      %p129 = por %p127, %p128
      %p131 = scmp.ne.s32.totalorder %s114, %s130
      %p132 = scmp.eq.s32.totalorder %s47, 0
      %p133 = por %p131, %p132
      %s134 = ssub.s32 %s49, %s56
      %p135 = scmp.eq.s32.totalorder %s134, 0
      %s137 = sadd.s32 %s136, 1
      %s138 = scalar_select %p135, %s136, %s137
      %p141 = pneg %p135
      %p142 = scmp.eq.s32.totalorder %s41, 3
      %p143 = por %p141, %p142
      %p144 = scmp.ne.s32.totalorder %s136, %s139
      %p145 = scmp.eq.s32.totalorder %s41, 0
      %p146 = por %p144, %p145
      %p147 = scmp.ne.s32.totalorder %s136, %s139
      %p148 = scmp.eq.s32.totalorder %s46, 3
      %p149 = por %p147, %p148
      %p150 = scmp.ne.s32.totalorder %s139, %s140
      %p151 = scmp.eq.s32.totalorder %s46, 0
      %p152 = por %p150, %p151
      %p153 = scmp.ne.s32.totalorder %s139, %s140
      %p154 = scmp.eq.s32.totalorder %s47, 3
      %p155 = por %p153, %p154
      %p157 = scmp.ne.s32.totalorder %s140, %s156
      %p158 = scmp.eq.s32.totalorder %s47, 0
      %p159 = por %p157, %p158
      %s160 = ssub.s32 %s48, %s60
      %s161 = ssub.s32 %s49, %s56
      %s162 = sor.u32 %s160, %s161
      %p163 = scmp.eq.s32.totalorder %s162, 0
      %s165 = sadd.s32 %s164, 1
      %s166 = scalar_select %p163, %s164, %s165
      %p169 = pneg %p163
      %p170 = scmp.eq.s32.totalorder %s41, 3
      %p171 = por %p169, %p170
      %p172 = scmp.ne.s32.totalorder %s164, %s167
      %p173 = scmp.eq.s32.totalorder %s41, 0
      %p174 = por %p172, %p173
      %p175 = scmp.ne.s32.totalorder %s164, %s167
      %p176 = scmp.eq.s32.totalorder %s46, 3
      %p177 = por %p175, %p176
      %p178 = scmp.ne.s32.totalorder %s167, %s168
      %p179 = scmp.eq.s32.totalorder %s46, 0
      %p180 = por %p178, %p179
      %p181 = scmp.ne.s32.totalorder %s167, %s168
      %p182 = scmp.eq.s32.totalorder %s47, 3
      %p183 = por %p181, %p182
      %p185 = scmp.ne.s32.totalorder %s168, %s184
      %p186 = scmp.eq.s32.totalorder %s47, 0
      %p187 = por %p185, %p186
      %s188 = ssub.s32 %s48, %s60
      %p189 = scmp.eq.s32.totalorder %s188, 0
      %s191 = sadd.s32 %s190, 1
      %s192 = scalar_select %p189, %s190, %s191
      %p195 = pneg %p189
      %p196 = scmp.eq.s32.totalorder %s41, 3
      %p197 = por %p195, %p196
      %p198 = scmp.ne.s32.totalorder %s190, %s193
      %p199 = scmp.eq.s32.totalorder %s41, 0
      %p200 = por %p198, %p199
      %p201 = scmp.ne.s32.totalorder %s190, %s193
      %p202 = scmp.eq.s32.totalorder %s46, 3
      %p203 = por %p201, %p202
      %p204 = scmp.ne.s32.totalorder %s193, %s194
      %p205 = scmp.eq.s32.totalorder %s46, 0
      %p206 = por %p204, %p205
      %p207 = scmp.ne.s32.totalorder %s193, %s194
      %p208 = scmp.eq.s32.totalorder %s47, 3
      %p209 = por %p207, %p208
      %p211 = scmp.ne.s32.totalorder %s194, %s210
      %p212 = scmp.eq.s32.totalorder %s47, 0
      %p213 = por %p211, %p212
      %s214 = ssub.s32 %s48, %s60
      %p215 = scmp.eq.s32.totalorder %s214, 0
      %s217 = sadd.s32 %s216, 1
      %s218 = scalar_select %p215, %s216, %s217
      %p221 = pneg %p215
      %p222 = scmp.eq.s32.totalorder %s41, 3
      %p223 = por %p221, %p222
      %p224 = scmp.ne.s32.totalorder %s216, %s219
      %p225 = scmp.eq.s32.totalorder %s41, 0
      %p226 = por %p224, %p225
      %p227 = scmp.ne.s32.totalorder %s216, %s219
      %p228 = scmp.eq.s32.totalorder %s46, 3
      %p229 = por %p227, %p228
      %p230 = scmp.ne.s32.totalorder %s219, %s220
      %p231 = scmp.eq.s32.totalorder %s46, 0
      %p232 = por %p230, %p231
      %p233 = scmp.ne.s32.totalorder %s219, %s220
      %p234 = scmp.eq.s32.totalorder %s47, 3
      %p235 = por %p233, %p234
      %p237 = scmp.ne.s32.totalorder %s220, %s236
      %p238 = scmp.eq.s32.totalorder %s47, 0
      %p239 = por %p237, %p238
      %s240 = ssub.s32 %s48, %s60
      %p241 = scmp.eq.s32.totalorder %s240, 0
      %s243 = sadd.s32 %s242, 1
      %s244 = scalar_select %p241, %s242, %s243
      %p247 = pneg %p241
      %p248 = scmp.eq.s32.totalorder %s41, 3
      %p249 = por %p247, %p248
      %p250 = scmp.ne.s32.totalorder %s242, %s245
      %p251 = scmp.eq.s32.totalorder %s41, 0
      %p252 = por %p250, %p251
      %p253 = scmp.ne.s32.totalorder %s242, %s245
      %p254 = scmp.eq.s32.totalorder %s46, 3
      %p255 = por %p253, %p254
      %p256 = scmp.ne.s32.totalorder %s245, %s246
      %p257 = scmp.eq.s32.totalorder %s46, 0
      %p258 = por %p256, %p257
      %p259 = scmp.ne.s32.totalorder %s245, %s246
      %p260 = scmp.eq.s32.totalorder %s47, 3
      %p261 = por %p259, %p260
      %p263 = scmp.ne.s32.totalorder %s246, %s262
      %p264 = scmp.eq.s32.totalorder %s47, 0
      %p265 = por %p263, %p264
      %s266 = ssub.s32 %s48, %s60
      %p267 = scmp.eq.s32.totalorder %s266, 0
      %s269 = sadd.s32 %s268, 1
      %s270 = scalar_select %p267, %s268, %s269
      %p273 = pneg %p267
      %p274 = scmp.eq.s32.totalorder %s41, 3
      %p275 = por %p273, %p274
      %p276 = scmp.ne.s32.totalorder %s268, %s271
      %p277 = scmp.eq.s32.totalorder %s41, 0
      %p278 = por %p276, %p277
      %p279 = scmp.ne.s32.totalorder %s268, %s271
      %p280 = scmp.eq.s32.totalorder %s46, 3
      %p281 = por %p279, %p280
      %p282 = scmp.ne.s32.totalorder %s271, %s272
      %p283 = scmp.eq.s32.totalorder %s46, 0
      %p284 = por %p282, %p283
      %p285 = scmp.ne.s32.totalorder %s271, %s272
      %p286 = scmp.eq.s32.totalorder %s47, 3
      %p287 = por %p285, %p286
      %p289 = scmp.ne.s32.totalorder %s272, %s288
      %p290 = scmp.eq.s32.totalorder %s47, 0
      %p291 = por %p289, %p290
      %s292 = ssub.s32 %s48, %s60
      %p293 = scmp.eq.s32.totalorder %s292, 0
      %s295 = sadd.s32 %s294, 1
      %s296 = scalar_select %p293, %s294, %s295
      %p299 = pneg %p293
      %p300 = scmp.eq.s32.totalorder %s41, 3
      %p301 = por %p299, %p300
      %p302 = scmp.ne.s32.totalorder %s294, %s297
      %p303 = scmp.eq.s32.totalorder %s41, 0
      %p304 = por %p302, %p303
      %p305 = scmp.ne.s32.totalorder %s294, %s297
      %p306 = scmp.eq.s32.totalorder %s46, 3
      %p307 = por %p305, %p306
      %p308 = scmp.ne.s32.totalorder %s297, %s298
      %p309 = scmp.eq.s32.totalorder %s46, 0
      %p310 = por %p308, %p309
      %p311 = scmp.ne.s32.totalorder %s297, %s298
      %p312 = scmp.eq.s32.totalorder %s47, 3
      %p313 = por %p311, %p312
      %p315 = scmp.ne.s32.totalorder %s298, %s314
      %p316 = scmp.eq.s32.totalorder %s47, 0
      %p317 = por %p315, %p316
      %s318 = ssub.s32 %s48, %s60
      %p319 = scmp.eq.s32.totalorder %s318, 0
      %s321 = sadd.s32 %s320, 1
      %s322 = scalar_select %p319, %s320, %s321
      %p325 = pneg %p319
      %p326 = scmp.eq.s32.totalorder %s41, 3
      %p327 = por %p325, %p326
      %p328 = scmp.ne.s32.totalorder %s320, %s323
      %p329 = scmp.eq.s32.totalorder %s41, 0
      %p330 = por %p328, %p329
      %p331 = scmp.ne.s32.totalorder %s320, %s323
      %p332 = scmp.eq.s32.totalorder %s46, 3
      %p333 = por %p331, %p332
      %p334 = scmp.ne.s32.totalorder %s323, %s324
      %p335 = scmp.eq.s32.totalorder %s46, 0
      %p336 = por %p334, %p335
      %p337 = scmp.ne.s32.totalorder %s323, %s324
      %p338 = scmp.eq.s32.totalorder %s47, 3
      %p339 = por %p337, %p338
      %p341 = scmp.ne.s32.totalorder %s324, %s340
      %p342 = scmp.eq.s32.totalorder %s47, 0
      %p343 = por %p341, %p342
      %s344 = ssub.s32 %s48, %s60
      %p345 = scmp.eq.s32.totalorder %s344, 0
      %s347 = sadd.s32 %s346, 1
      %s348 = scalar_select %p345, %s346, %s347
      %p351 = pneg %p345
      %p352 = scmp.eq.s32.totalorder %s41, 3
      %p353 = por %p351, %p352
      %p354 = scmp.ne.s32.totalorder %s346, %s349
      %p355 = scmp.eq.s32.totalorder %s41, 0
      %p356 = por %p354, %p355
      %p357 = scmp.ne.s32.totalorder %s346, %s349
      %p358 = scmp.eq.s32.totalorder %s46, 3
      %p359 = por %p357, %p358
      %p360 = scmp.ne.s32.totalorder %s349, %s350
      %p361 = scmp.eq.s32.totalorder %s46, 0
      %p362 = por %p360, %p361
      %p363 = scmp.ne.s32.totalorder %s349, %s350
      %p364 = scmp.eq.s32.totalorder %s47, 3
      %p365 = por %p363, %p364
      %p367 = scmp.ne.s32.totalorder %s350, %s366
      %p368 = scmp.eq.s32.totalorder %s47, 0
      %p369 = por %p367, %p368
      %s370 = ssub.s32 %s48, %s60
      %p371 = scmp.eq.s32.totalorder %s370, 0
      %s373 = sadd.s32 %s372, 1
      %s374 = scalar_select %p371, %s372, %s373
      %p377 = pneg %p371
      %p378 = scmp.eq.s32.totalorder %s41, 3
      %p379 = por %p377, %p378
      %p380 = scmp.ne.s32.totalorder %s372, %s375
      %p381 = scmp.eq.s32.totalorder %s41, 0
      %p382 = por %p380, %p381
      %p383 = scmp.ne.s32.totalorder %s372, %s375
      %p384 = scmp.eq.s32.totalorder %s46, 3
      %p385 = por %p383, %p384
      %p386 = scmp.ne.s32.totalorder %s375, %s376
      %p387 = scmp.eq.s32.totalorder %s46, 0
      %p388 = por %p386, %p387
      %p389 = scmp.ne.s32.totalorder %s375, %s376
      %p390 = scmp.eq.s32.totalorder %s47, 3
      %p391 = por %p389, %p390
      %p393 = scmp.ne.s32.totalorder %s376, %s392
      %p394 = scmp.eq.s32.totalorder %s47, 0
      %p395 = por %p393, %p394
      %s396 = ssub.s32 %s48, %s60
      %p397 = scmp.eq.s32.totalorder %s396, 0
      %s399 = sadd.s32 %s398, 1
      %s400 = scalar_select %p397, %s398, %s399
      %p403 = pneg %p397
      %p404 = scmp.eq.s32.totalorder %s41, 3
      %p405 = por %p403, %p404
      %p406 = scmp.ne.s32.totalorder %s398, %s401
      %p407 = scmp.eq.s32.totalorder %s41, 0
      %p408 = por %p406, %p407
      %p409 = scmp.ne.s32.totalorder %s398, %s401
      %p410 = scmp.eq.s32.totalorder %s46, 3
      %p411 = por %p409, %p410
      %p412 = scmp.ne.s32.totalorder %s401, %s402
      %p413 = scmp.eq.s32.totalorder %s46, 0
      %p414 = por %p412, %p413
      %p415 = scmp.ne.s32.totalorder %s401, %s402
      %p416 = scmp.eq.s32.totalorder %s47, 3
      %p417 = por %p415, %p416
      %p419 = scmp.ne.s32.totalorder %s402, %s418
      %p420 = scmp.eq.s32.totalorder %s47, 0
      %p421 = por %p419, %p420
      %s422 = ssub.s32 %s48, %s60
      %p423 = scmp.eq.s32.totalorder %s422, 0
      %s425 = sadd.s32 %s424, 1
      %s426 = scalar_select %p423, %s424, %s425
      %p429 = pneg %p423
      %p430 = scmp.eq.s32.totalorder %s41, 3
      %p431 = por %p429, %p430
      %p432 = scmp.ne.s32.totalorder %s424, %s427
      %p433 = scmp.eq.s32.totalorder %s41, 0
      %p434 = por %p432, %p433
      %p435 = scmp.ne.s32.totalorder %s424, %s427
      %p436 = scmp.eq.s32.totalorder %s46, 3
      %p437 = por %p435, %p436
      %p438 = scmp.ne.s32.totalorder %s427, %s428
      %p439 = scmp.eq.s32.totalorder %s46, 0
      %p440 = por %p438, %p439
      %p441 = scmp.ne.s32.totalorder %s427, %s428
      %p442 = scmp.eq.s32.totalorder %s47, 3
      %p443 = por %p441, %p442
      %p445 = scmp.ne.s32.totalorder %s428, %s444
      %p446 = scmp.eq.s32.totalorder %s47, 0
      %p447 = por %p445, %p446
      %s449 = sadd.s32 %s448, 1
      %p452 = scmp.eq.s32.totalorder %s41, 3
      %p453 = scmp.ne.s32.totalorder %s448, %s450
      %p454 = scmp.eq.s32.totalorder %s41, 0
      %p455 = por %p453, %p454
      %p456 = scmp.ne.s32.totalorder %s448, %s450
      %p457 = scmp.eq.s32.totalorder %s46, 3
      %p458 = por %p456, %p457
      %p459 = scmp.ne.s32.totalorder %s450, %s451
      %p460 = scmp.eq.s32.totalorder %s46, 0
      %p461 = por %p459, %p460
      %p462 = scmp.ne.s32.totalorder %s450, %s451
      %p463 = scmp.eq.s32.totalorder %s47, 3
      %p464 = por %p462, %p463
      %p466 = scmp.ne.s32.totalorder %s451, %s465
      %p467 = scmp.eq.s32.totalorder %s47, 0
      %p468 = por %p466, %p467
      %p469 = scmp.le.s32.totalorder 1, %s41
      %p470 = scmp.lt.s32.totalorder %s41, 5
      %p471 = pnand %p469, %p470
      %p472 = pneg %p471
      // Predicated region
      $region9: #{tpu_custom_call.1} parent=5 // pred_check
        _
      $region10: #{tpu_custom_call.1} parent=5 // pred_check_branch
        %474 = sbr.rel (%p471) target = $region12
      $region11: #{tpu_custom_call.1} parent=5 // pred_region
        %s475 = ssub.s32 %s41, 1
        // Predicated region
        $region13: #{tpu_custom_call.1} parent=11 // pred_check
          %p476 = pneg %p74
        $region14: #{tpu_custom_call.1} parent=11 // pred_check_branch
          %478 = sbr.rel (%p476) target = $region16
        $region15: #{tpu_custom_call.1} parent=11 // pred_region
          %480 = vsyncadd [#allocation7], 0
          %s481 = sshll.u32 %s0, 4
          %s482 = int_to_ptr.hbm [resolvable:$true] %s481
          %s483 = sshll.u32 [#allocation6], 4
          %s484 = int_to_ptr.vmem [resolvable:$true] %s483
          %489 = dma.hbm_to_vmem [thread:$0]  %s482, 2048, %s484, [#allocation7], 128, 128, 8
        $region16: #{tpu_custom_call.1} parent=11 // pred_fallthru
          _
      $region12: #{tpu_custom_call.1} parent=5 // pred_fallthru
        _
      %p490 = scmp.lt.s32.totalorder %s41, 4
      // Predicated region
      $region17: #{tpu_custom_call.1} parent=5 // pred_check
        %p491 = pneg %p490
      $region18: #{tpu_custom_call.1} parent=5 // pred_check_branch
        %493 = sbr.rel (%p491) target = $region20
      $region19: #{tpu_custom_call.1} parent=5 // pred_region
        // Predicated region
        $region21: #{tpu_custom_call.1} parent=19 // pred_check
          %p494 = pneg %p94
        $region22: #{tpu_custom_call.1} parent=19 // pred_check_branch
          %496 = sbr.rel (%p494) target = $region24
        $region23: #{tpu_custom_call.1} parent=19 // pred_region
          %s497 = sand.u32 %s41, 1
          %s498 = scalar_lea.sflag [#allocation10], %s497
          %s499 = sand.u32 %s84, 1
          %s500 = smul.addr %s499, 64
          %s501 = scalar_lea.vmem [#allocation9], %s500
          %s502 = smul.u32 16, %s49
          %504 = vsyncadd %s498, 0
          %s505 = smul.addr %s502, 4
          %s506 = scalar_lea.hbm %s1, %s505
          %s507 = sshll.u32 %s506, 4
          %s508 = int_to_ptr.hbm [resolvable:$true] %s507
          %s509 = sshll.u32 %s501, 4
          %s510 = int_to_ptr.vmem [resolvable:$true] %s509
          %515 = dma.hbm_to_vmem [thread:$0]  %s508, 1024, %s510, %s498, 64, 64, 4
        $region24: #{tpu_custom_call.1} parent=19 // pred_fallthru
          _
        // Predicated region
        $region25: #{tpu_custom_call.1} parent=19 // pred_check
          %p516 = pneg %p120
        $region26: #{tpu_custom_call.1} parent=19 // pred_check_branch
          %518 = sbr.rel (%p516) target = $region28
        $region27: #{tpu_custom_call.1} parent=19 // pred_region
          %s519 = sand.u32 %s41, 1
          %s520 = scalar_lea.sflag [#allocation10], %s519
          %s521 = sand.u32 %s110, 1
          %s522 = smul.addr %s521, 64
          %s523 = scalar_lea.vmem [#allocation11], %s522
          %525 = vsyncadd %s520, 0
          %s526 = smul.addr %s49, 4
          %s527 = scalar_lea.hbm %s2, %s526
          %s528 = sshll.u32 %s527, 4
          %s529 = int_to_ptr.hbm [resolvable:$true] %s528
          %s530 = sshll.u32 %s523, 4
          %s531 = int_to_ptr.vmem [resolvable:$true] %s530
          %536 = dma.hbm_to_vmem [thread:$0]  %s529, 1024, %s531, %s520, 128, 64, 4
        $region28: #{tpu_custom_call.1} parent=19 // pred_fallthru
          _
        // Predicated region
        $region29: #{tpu_custom_call.1} parent=19 // pred_check
          %p537 = pneg %p146
        $region30: #{tpu_custom_call.1} parent=19 // pred_check_branch
          %539 = sbr.rel (%p537) target = $region32
        $region31: #{tpu_custom_call.1} parent=19 // pred_region
          %s540 = sand.u32 %s41, 1
          %s541 = scalar_lea.sflag [#allocation13], %s540
          %s542 = sand.u32 %s136, 1
          %s543 = smul.addr %s542, 192
          %s544 = scalar_lea.vmem [#allocation12], %s543
          %s545 = smul.u32 16, %s49
          %547 = vsyncadd %s541, 0
          %s548 = smul.addr %s545, 3
          %s549 = smul.addr %s548, 4
          %s550 = scalar_lea.hbm %s3, %s549
          %s551 = sshll.u32 %s550, 4
          %s552 = int_to_ptr.hbm [resolvable:$true] %s551
          %s553 = sshll.u32 %s544, 4
          %s554 = int_to_ptr.vmem [resolvable:$true] %s553
          %559 = dma.hbm_to_vmem [thread:$0]  %s552, 3072, %s554, %s541, 192, 192, 12
        $region32: #{tpu_custom_call.1} parent=19 // pred_fallthru
          _
        // Predicated region
        $region33: #{tpu_custom_call.1} parent=19 // pred_check
          %p560 = pneg %p174
        $region34: #{tpu_custom_call.1} parent=19 // pred_check_branch
          %562 = sbr.rel (%p560) target = $region36
        $region35: #{tpu_custom_call.1} parent=19 // pred_region
          %s563 = sand.u32 %s41, 1
          %s564 = scalar_lea.sflag [#allocation13], %s563
          %s565 = sand.u32 %s164, 1
          %s566 = smul.addr %s565, 192
          %s567 = scalar_lea.vmem [#allocation14], %s566
          %s568 = smul.u32 16, %s49
          %570 = vsyncadd %s564, 0
          %s571 = smul.addr %s568, 3
          %s572 = smul.addr %s48, 96
          %s573 = sadd.s32 %s571, %s572
          %s574 = smul.addr %s573, 4
          %s575 = scalar_lea.hbm %s4, %s574
          %s576 = sshll.u32 %s575, 4
          %s577 = int_to_ptr.hbm [resolvable:$true] %s576
          %s578 = sshll.u32 %s567, 4
          %s579 = int_to_ptr.vmem [resolvable:$true] %s578
          %584 = dma.hbm_to_vmem [thread:$0]  %s577, 3072, %s579, %s564, 192, 192, 12
        $region36: #{tpu_custom_call.1} parent=19 // pred_fallthru
          _
        // Predicated region
        $region37: #{tpu_custom_call.1} parent=19 // pred_check
          %p585 = pneg %p200
        $region38: #{tpu_custom_call.1} parent=19 // pred_check_branch
          %587 = sbr.rel (%p585) target = $region40
        $region39: #{tpu_custom_call.1} parent=19 // pred_region
          %s588 = sand.u32 %s41, 1
          %s589 = scalar_lea.sflag [#allocation16], %s588
          %s590 = sand.u32 %s190, 1
          %s591 = smul.addr %s590, 64
          %s592 = scalar_lea.vmem [#allocation15], %s591
          %594 = vsyncadd %s589, 0
          %s595 = smul.addr %s48, 16
          %s596 = smul.addr %s595, 4
          %s597 = scalar_lea.hbm %s5, %s596
          %s598 = sshll.u32 %s597, 4
          %s599 = int_to_ptr.hbm [resolvable:$true] %s598
          %s600 = sshll.u32 %s592, 4
          %s601 = int_to_ptr.vmem [resolvable:$true] %s600
          %606 = dma.hbm_to_vmem [thread:$0]  %s599, 1024, %s601, %s589, 64, 64, 4
        $region40: #{tpu_custom_call.1} parent=19 // pred_fallthru
          _
        // Predicated region
        $region41: #{tpu_custom_call.1} parent=19 // pred_check
          %p607 = pneg %p226
        $region42: #{tpu_custom_call.1} parent=19 // pred_check_branch
          %609 = sbr.rel (%p607) target = $region44
        $region43: #{tpu_custom_call.1} parent=19 // pred_region
          %s610 = sand.u32 %s41, 1
          %s611 = scalar_lea.sflag [#allocation16], %s610
          %s612 = sand.u32 %s216, 1
          %s613 = scalar_lea.vmem [#allocation17], %s612
          %615 = vsyncadd %s611, 0
          %s616 = scalar_lea.hbm %s6, %s48
          %s618 = sshll.u32 %s616, 4
          %s619 = int_to_ptr.hbm [resolvable:$true] %s618
          %s620 = sshll.u32 %s613, 4
          %s621 = int_to_ptr.vmem [resolvable:$true] %s620
          %623 = dma.hbm_to_vmem [thread:$0]  %s619, 16, %s621, %s611
        $region44: #{tpu_custom_call.1} parent=19 // pred_fallthru
          _
        // Predicated region
        $region45: #{tpu_custom_call.1} parent=19 // pred_check
          %p624 = pneg %p252
        $region46: #{tpu_custom_call.1} parent=19 // pred_check_branch
          %626 = sbr.rel (%p624) target = $region48
        $region47: #{tpu_custom_call.1} parent=19 // pred_region
          %s627 = sand.u32 %s41, 1
          %s628 = scalar_lea.sflag [#allocation19], %s627
          %s629 = sand.u32 %s242, 1
          %s630 = smul.addr %s629, 192
          %s631 = scalar_lea.vmem [#allocation18], %s630
          %633 = vsyncadd %s628, 0
          %s634 = smul.addr %s48, 48
          %s635 = smul.addr %s634, 4
          %s636 = scalar_lea.hbm %s7, %s635
          %s637 = sshll.u32 %s636, 4
          %s638 = int_to_ptr.hbm [resolvable:$true] %s637
          %s639 = sshll.u32 %s631, 4
          %s640 = int_to_ptr.vmem [resolvable:$true] %s639
          %645 = dma.hbm_to_vmem [thread:$0]  %s638, 3072, %s640, %s628, 192, 192, 12
        $region48: #{tpu_custom_call.1} parent=19 // pred_fallthru
          _
        // Predicated region
        $region49: #{tpu_custom_call.1} parent=19 // pred_check
          %p646 = pneg %p278
        $region50: #{tpu_custom_call.1} parent=19 // pred_check_branch
          %648 = sbr.rel (%p646) target = $region52
        $region51: #{tpu_custom_call.1} parent=19 // pred_region
          %p649 = scmp.lt.s32.totalorder %s48, 1
          %s650 = scalar_select %p649, %s48, 1
          %s651 = smul.addr %s650, 3
          %s652 = scalar_lea.vmem %s8, %s651
        $region52: #{tpu_custom_call.1} parent=19 // pred_fallthru
          _
        // Predicated region
        $region53: #{tpu_custom_call.1} parent=19 // pred_check
          %p653 = pneg %p304
        $region54: #{tpu_custom_call.1} parent=19 // pred_check_branch
          %655 = sbr.rel (%p653) target = $region56
        $region55: #{tpu_custom_call.1} parent=19 // pred_region
          %s656 = sand.u32 %s41, 1
          %s657 = scalar_lea.sflag [#allocation19], %s656
          %s658 = sand.u32 %s294, 1
          %s659 = smul.addr %s658, 128
          %s660 = scalar_lea.vmem [#allocation20], %s659
          %662 = vsyncadd %s657, 0
          %s663 = smul.addr %s48, 32
          %s664 = smul.addr %s663, 4
          %s665 = scalar_lea.hbm %s9, %s664
          %s666 = sshll.u32 %s665, 4
          %s667 = int_to_ptr.hbm [resolvable:$true] %s666
          %s668 = sshll.u32 %s660, 4
          %s669 = int_to_ptr.vmem [resolvable:$true] %s668
          %674 = dma.hbm_to_vmem [thread:$0]  %s667, 2048, %s669, %s657, 128, 128, 8
        $region56: #{tpu_custom_call.1} parent=19 // pred_fallthru
          _
        // Predicated region
        $region57: #{tpu_custom_call.1} parent=19 // pred_check
          %p675 = pneg %p330
        $region58: #{tpu_custom_call.1} parent=19 // pred_check_branch
          %677 = sbr.rel (%p675) target = $region60
        $region59: #{tpu_custom_call.1} parent=19 // pred_region
          %s678 = sand.u32 %s41, 1
          %s679 = scalar_lea.sflag [#allocation22], %s678
          %s680 = sand.u32 %s320, 1
          %s681 = smul.addr %s680, 64
          %s682 = scalar_lea.vmem [#allocation21], %s681
          %684 = vsyncadd %s679, 0
          %s685 = smul.addr %s48, 16
          %s686 = smul.addr %s685, 4
          %s687 = scalar_lea.hbm %s10, %s686
          %s688 = sshll.u32 %s687, 4
          %s689 = int_to_ptr.hbm [resolvable:$true] %s688
          %s690 = sshll.u32 %s682, 4
          %s691 = int_to_ptr.vmem [resolvable:$true] %s690
          %696 = dma.hbm_to_vmem [thread:$0]  %s689, 1024, %s691, %s679, 64, 64, 4
        $region60: #{tpu_custom_call.1} parent=19 // pred_fallthru
          _
        // Predicated region
        $region61: #{tpu_custom_call.1} parent=19 // pred_check
          %p697 = pneg %p356
        $region62: #{tpu_custom_call.1} parent=19 // pred_check_branch
          %699 = sbr.rel (%p697) target = $region64
        $region63: #{tpu_custom_call.1} parent=19 // pred_region
          %s700 = sand.u32 %s41, 1
          %s701 = scalar_lea.sflag [#allocation22], %s700
          %s702 = sand.u32 %s346, 1
          %s703 = smul.addr %s702, 64
          %s704 = scalar_lea.vmem [#allocation23], %s703
          %706 = vsyncadd %s701, 0
          %s707 = smul.addr %s48, 16
          %s708 = smul.addr %s707, 4
          %s709 = scalar_lea.hbm %s11, %s708
          %s710 = sshll.u32 %s709, 4
          %s711 = int_to_ptr.hbm [resolvable:$true] %s710
          %s712 = sshll.u32 %s704, 4
          %s713 = int_to_ptr.vmem [resolvable:$true] %s712
          %718 = dma.hbm_to_vmem [thread:$0]  %s711, 1024, %s713, %s701, 64, 64, 4
        $region64: #{tpu_custom_call.1} parent=19 // pred_fallthru
          _
        // Predicated region
        $region65: #{tpu_custom_call.1} parent=19 // pred_check
          %p719 = pneg %p382
        $region66: #{tpu_custom_call.1} parent=19 // pred_check_branch
          %721 = sbr.rel (%p719) target = $region68
        $region67: #{tpu_custom_call.1} parent=19 // pred_region
          %s722 = sand.u32 %s41, 1
          %s723 = scalar_lea.sflag [#allocation25], %s722
          %s724 = sand.u32 %s372, 1
          %s725 = scalar_lea.vmem [#allocation24], %s724
          %727 = vsyncadd %s723, 0
          %s728 = scalar_lea.hbm %s12, %s48
          %s730 = sshll.u32 %s728, 4
          %s731 = int_to_ptr.hbm [resolvable:$true] %s730
          %s732 = sshll.u32 %s725, 4
          %s733 = int_to_ptr.vmem [resolvable:$true] %s732
          %735 = dma.hbm_to_vmem [thread:$0]  %s731, 16, %s733, %s723
        $region68: #{tpu_custom_call.1} parent=19 // pred_fallthru
          _
        // Predicated region
        $region69: #{tpu_custom_call.1} parent=19 // pred_check
          %p736 = pneg %p408
        $region70: #{tpu_custom_call.1} parent=19 // pred_check_branch
          %738 = sbr.rel (%p736) target = $region72
        $region71: #{tpu_custom_call.1} parent=19 // pred_region
          %s739 = sand.u32 %s41, 1
          %s740 = scalar_lea.sflag [#allocation25], %s739
          %s741 = sand.u32 %s398, 1
          %s742 = smul.addr %s741, 192
          %s743 = scalar_lea.vmem [#allocation26], %s742
          %745 = vsyncadd %s740, 0
          %s746 = smul.addr %s48, 48
          %s747 = smul.addr %s746, 4
          %s748 = scalar_lea.hbm %s13, %s747
          %s749 = sshll.u32 %s748, 4
          %s750 = int_to_ptr.hbm [resolvable:$true] %s749
          %s751 = sshll.u32 %s743, 4
          %s752 = int_to_ptr.vmem [resolvable:$true] %s751
          %757 = dma.hbm_to_vmem [thread:$0]  %s750, 3072, %s752, %s740, 192, 192, 12
        $region72: #{tpu_custom_call.1} parent=19 // pred_fallthru
          _
        // Predicated region
        $region73: #{tpu_custom_call.1} parent=19 // pred_check
          %p758 = pneg %p434
        $region74: #{tpu_custom_call.1} parent=19 // pred_check_branch
          %760 = sbr.rel (%p758) target = $region76
        $region75: #{tpu_custom_call.1} parent=19 // pred_region
          %p761 = scmp.lt.s32.totalorder %s48, 1
          %s762 = scalar_select %p761, %s48, 1
          %s763 = smul.addr %s762, 3
          %s764 = scalar_lea.vmem %s14, %s763
        $region76: #{tpu_custom_call.1} parent=19 // pred_fallthru
          _
      $region20: #{tpu_custom_call.1} parent=5 // pred_fallthru
        _
      %p765 = scmp.le.s32.totalorder 1, %s41
      %p766 = scmp.lt.s32.totalorder %s41, 5
      %p767 = pnand %p765, %p766
      %p768 = pneg %p767
      // Predicated region
      $region77: #{tpu_custom_call.1} parent=5 // pred_check
        _
      $region78: #{tpu_custom_call.1} parent=5 // pred_check_branch
        %770 = sbr.rel (%p767) target = $region80
      $region79: #{tpu_custom_call.1} parent=5 // pred_region
        %s771 = ssub.s32 %s41, 1
        // Predicated region
        $region81: #{tpu_custom_call.1} parent=79 // pred_check
          %p772 = pneg %p74
        $region82: #{tpu_custom_call.1} parent=79 // pred_check_branch
          %774 = sbr.rel (%p772) target = $region84
        $region83: #{tpu_custom_call.1} parent=79 // pred_region
          %776 = dma.done [#allocation7], 2048
        $region84: #{tpu_custom_call.1} parent=79 // pred_fallthru
          _
        %s777 = sand.u32 %s46, 1
        %s778 = scalar_lea.sflag [#allocation10], %s777
        %s779 = sand.u32 %s87, 1
        %s780 = smul.addr %s779, 64
        %s781 = scalar_lea.vmem [#allocation9], %s780
        // Predicated region
        $region85: #{tpu_custom_call.1} parent=79 // pred_check
          %p782 = pneg %p100
        $region86: #{tpu_custom_call.1} parent=79 // pred_check_branch
          %784 = sbr.rel (%p782) target = $region88
        $region87: #{tpu_custom_call.1} parent=79 // pred_region
          %786 = dma.done %s778, 1024
        $region88: #{tpu_custom_call.1} parent=79 // pred_fallthru
          _
        %s787 = sand.u32 %s46, 1
        %s788 = scalar_lea.sflag [#allocation10], %s787
        %s789 = sand.u32 %s113, 1
        %s790 = smul.addr %s789, 64
        %s791 = scalar_lea.vmem [#allocation11], %s790
        // Predicated region
        $region89: #{tpu_custom_call.1} parent=79 // pred_check
          %p792 = pneg %p126
        $region90: #{tpu_custom_call.1} parent=79 // pred_check_branch
          %794 = sbr.rel (%p792) target = $region92
        $region91: #{tpu_custom_call.1} parent=79 // pred_region
          %796 = dma.done %s788, 1024
        $region92: #{tpu_custom_call.1} parent=79 // pred_fallthru
          _
        %s797 = sand.u32 %s46, 1
        %s798 = scalar_lea.sflag [#allocation13], %s797
        %s799 = sand.u32 %s139, 1
        %s800 = smul.addr %s799, 192
        %s801 = scalar_lea.vmem [#allocation12], %s800
        // Predicated region
        $region93: #{tpu_custom_call.1} parent=79 // pred_check
          %p802 = pneg %p152
        $region94: #{tpu_custom_call.1} parent=79 // pred_check_branch
          %804 = sbr.rel (%p802) target = $region96
        $region95: #{tpu_custom_call.1} parent=79 // pred_region
          %806 = dma.done %s798, 3072
        $region96: #{tpu_custom_call.1} parent=79 // pred_fallthru
          _
        %s807 = sand.u32 %s46, 1
        %s808 = scalar_lea.sflag [#allocation13], %s807
        %s809 = sand.u32 %s167, 1
        %s810 = smul.addr %s809, 192
        %s811 = scalar_lea.vmem [#allocation14], %s810
        // Predicated region
        $region97: #{tpu_custom_call.1} parent=79 // pred_check
          %p812 = pneg %p180
        $region98: #{tpu_custom_call.1} parent=79 // pred_check_branch
          %814 = sbr.rel (%p812) target = $region100
        $region99: #{tpu_custom_call.1} parent=79 // pred_region
          %816 = dma.done %s808, 3072
        $region100: #{tpu_custom_call.1} parent=79 // pred_fallthru
          _
        %s817 = sand.u32 %s46, 1
        %s818 = scalar_lea.sflag [#allocation16], %s817
        %s819 = sand.u32 %s193, 1
        %s820 = smul.addr %s819, 64
        %s821 = scalar_lea.vmem [#allocation15], %s820
        // Predicated region
        $region101: #{tpu_custom_call.1} parent=79 // pred_check
          %p822 = pneg %p206
        $region102: #{tpu_custom_call.1} parent=79 // pred_check_branch
          %824 = sbr.rel (%p822) target = $region104
        $region103: #{tpu_custom_call.1} parent=79 // pred_region
          %826 = dma.done %s818, 1024
        $region104: #{tpu_custom_call.1} parent=79 // pred_fallthru
          _
        %s827 = sand.u32 %s46, 1
        %s828 = scalar_lea.sflag [#allocation16], %s827
        %s829 = sand.u32 %s219, 1
        %s830 = scalar_lea.vmem [#allocation17], %s829
        // Predicated region
        $region105: #{tpu_custom_call.1} parent=79 // pred_check
          %p831 = pneg %p232
        $region106: #{tpu_custom_call.1} parent=79 // pred_check_branch
          %833 = sbr.rel (%p831) target = $region108
        $region107: #{tpu_custom_call.1} parent=79 // pred_region
          %835 = dma.done %s828, 16
        $region108: #{tpu_custom_call.1} parent=79 // pred_fallthru
          _
        %s836 = sand.u32 %s46, 1
        %s837 = scalar_lea.sflag [#allocation19], %s836
        %s838 = sand.u32 %s245, 1
        %s839 = smul.addr %s838, 192
        %s840 = scalar_lea.vmem [#allocation18], %s839
        // Predicated region
        $region109: #{tpu_custom_call.1} parent=79 // pred_check
          %p841 = pneg %p258
        $region110: #{tpu_custom_call.1} parent=79 // pred_check_branch
          %843 = sbr.rel (%p841) target = $region112
        $region111: #{tpu_custom_call.1} parent=79 // pred_region
          %845 = dma.done %s837, 3072
        $region112: #{tpu_custom_call.1} parent=79 // pred_fallthru
          _
        %s846 = sand.u32 %s46, 1
        %s847 = scalar_lea.sflag [#allocation19], %s846
        %s848 = sand.u32 %s297, 1
        %s849 = smul.addr %s848, 128
        %s850 = scalar_lea.vmem [#allocation20], %s849
        // Predicated region
        $region113: #{tpu_custom_call.1} parent=79 // pred_check
          %p851 = pneg %p310
        $region114: #{tpu_custom_call.1} parent=79 // pred_check_branch
          %853 = sbr.rel (%p851) target = $region116
        $region115: #{tpu_custom_call.1} parent=79 // pred_region
          %855 = dma.done %s847, 2048
        $region116: #{tpu_custom_call.1} parent=79 // pred_fallthru
          _
        %s856 = sand.u32 %s46, 1
        %s857 = scalar_lea.sflag [#allocation22], %s856
        %s858 = sand.u32 %s323, 1
        %s859 = smul.addr %s858, 64
        %s860 = scalar_lea.vmem [#allocation21], %s859
        // Predicated region
        $region117: #{tpu_custom_call.1} parent=79 // pred_check
          %p861 = pneg %p336
        $region118: #{tpu_custom_call.1} parent=79 // pred_check_branch
          %863 = sbr.rel (%p861) target = $region120
        $region119: #{tpu_custom_call.1} parent=79 // pred_region
          %865 = dma.done %s857, 1024
        $region120: #{tpu_custom_call.1} parent=79 // pred_fallthru
          _
        %s866 = sand.u32 %s46, 1
        %s867 = scalar_lea.sflag [#allocation22], %s866
        %s868 = sand.u32 %s349, 1
        %s869 = smul.addr %s868, 64
        %s870 = scalar_lea.vmem [#allocation23], %s869
        // Predicated region
        $region121: #{tpu_custom_call.1} parent=79 // pred_check
          %p871 = pneg %p362
        $region122: #{tpu_custom_call.1} parent=79 // pred_check_branch
          %873 = sbr.rel (%p871) target = $region124
        $region123: #{tpu_custom_call.1} parent=79 // pred_region
          %875 = dma.done %s867, 1024
        $region124: #{tpu_custom_call.1} parent=79 // pred_fallthru
          _
        %s876 = sand.u32 %s46, 1
        %s877 = scalar_lea.sflag [#allocation25], %s876
        %s878 = sand.u32 %s375, 1
        %s879 = scalar_lea.vmem [#allocation24], %s878
        // Predicated region
        $region125: #{tpu_custom_call.1} parent=79 // pred_check
          %p880 = pneg %p388
        $region126: #{tpu_custom_call.1} parent=79 // pred_check_branch
          %882 = sbr.rel (%p880) target = $region128
        $region127: #{tpu_custom_call.1} parent=79 // pred_region
          %884 = dma.done %s877, 16
        $region128: #{tpu_custom_call.1} parent=79 // pred_fallthru
          _
        %s885 = sand.u32 %s46, 1
        %s886 = scalar_lea.sflag [#allocation25], %s885
        %s887 = sand.u32 %s401, 1
        %s888 = smul.addr %s887, 192
        %s889 = scalar_lea.vmem [#allocation26], %s888
        // Predicated region
        $region129: #{tpu_custom_call.1} parent=79 // pred_check
          %p890 = pneg %p414
        $region130: #{tpu_custom_call.1} parent=79 // pred_check_branch
          %892 = sbr.rel (%p890) target = $region132
        $region131: #{tpu_custom_call.1} parent=79 // pred_region
          %894 = dma.done %s886, 3072
        $region132: #{tpu_custom_call.1} parent=79 // pred_fallthru
          _
        %p895 = pneg %p74
        %p896 = pneg %p71
        %s897 = sand.u32 %s46, 1
        %s898 = scalar_lea.sflag [#allocation10], %s897
        %s899 = sand.u32 %s87, 1
        %s900 = smul.addr %s899, 64
        %s901 = scalar_lea.vmem [#allocation9], %s900
        %p902 = pneg %p100
        %p903 = pneg %p97
        %s904 = sand.u32 %s46, 1
        %s905 = scalar_lea.sflag [#allocation10], %s904
        %s906 = sand.u32 %s113, 1
        %s907 = smul.addr %s906, 64
        %s908 = scalar_lea.vmem [#allocation11], %s907
        %p909 = pneg %p126
        %p910 = pneg %p123
        %s911 = sand.u32 %s46, 1
        %s912 = scalar_lea.sflag [#allocation13], %s911
        %s913 = sand.u32 %s139, 1
        %s914 = smul.addr %s913, 192
        %s915 = scalar_lea.vmem [#allocation12], %s914
        %p916 = pneg %p152
        %p917 = pneg %p149
        %s918 = sand.u32 %s46, 1
        %s919 = scalar_lea.sflag [#allocation13], %s918
        %s920 = sand.u32 %s167, 1
        %s921 = smul.addr %s920, 192
        %s922 = scalar_lea.vmem [#allocation14], %s921
        %p923 = pneg %p180
        %p924 = pneg %p177
        %s925 = sand.u32 %s46, 1
        %s926 = scalar_lea.sflag [#allocation16], %s925
        %s927 = sand.u32 %s193, 1
        %s928 = smul.addr %s927, 64
        %s929 = scalar_lea.vmem [#allocation15], %s928
        %p930 = pneg %p206
        %p931 = pneg %p203
        %s932 = sand.u32 %s46, 1
        %s933 = scalar_lea.sflag [#allocation16], %s932
        %s934 = sand.u32 %s219, 1
        %s935 = scalar_lea.vmem [#allocation17], %s934
        %p936 = pneg %p232
        %p937 = pneg %p229
        %s938 = sand.u32 %s46, 1
        %s939 = scalar_lea.sflag [#allocation19], %s938
        %s940 = sand.u32 %s245, 1
        %s941 = smul.addr %s940, 192
        %s942 = scalar_lea.vmem [#allocation18], %s941
        %p943 = pneg %p258
        %p944 = pneg %p255
        %p945 = scmp.lt.s32.totalorder %s50, 1
        %s946 = scalar_select %p945, %s50, 1
        %s947 = smul.addr %s946, 3
        %s948 = scalar_lea.vmem %s8, %s947
        %p949 = pneg %p284
        %p950 = pneg %p281
        %s951 = sand.u32 %s46, 1
        %s952 = scalar_lea.sflag [#allocation19], %s951
        %s953 = sand.u32 %s297, 1
        %s954 = smul.addr %s953, 128
        %s955 = scalar_lea.vmem [#allocation20], %s954
        %p956 = pneg %p310
        %p957 = pneg %p307
        %s958 = sand.u32 %s46, 1
        %s959 = scalar_lea.sflag [#allocation22], %s958
        %s960 = sand.u32 %s323, 1
        %s961 = smul.addr %s960, 64
        %s962 = scalar_lea.vmem [#allocation21], %s961
        %p963 = pneg %p336
        %p964 = pneg %p333
        %s965 = sand.u32 %s46, 1
        %s966 = scalar_lea.sflag [#allocation22], %s965
        %s967 = sand.u32 %s349, 1
        %s968 = smul.addr %s967, 64
        %s969 = scalar_lea.vmem [#allocation23], %s968
        %p970 = pneg %p362
        %p971 = pneg %p359
        %s972 = sand.u32 %s46, 1
        %s973 = scalar_lea.sflag [#allocation25], %s972
        %s974 = sand.u32 %s375, 1
        %s975 = scalar_lea.vmem [#allocation24], %s974
        %p976 = pneg %p388
        %p977 = pneg %p385
        %s978 = sand.u32 %s46, 1
        %s979 = scalar_lea.sflag [#allocation25], %s978
        %s980 = sand.u32 %s401, 1
        %s981 = smul.addr %s980, 192
        %s982 = scalar_lea.vmem [#allocation26], %s981
        %p983 = pneg %p414
        %p984 = pneg %p411
        %p985 = scmp.lt.s32.totalorder %s50, 1
        %s986 = scalar_select %p985, %s50, 1
        %s987 = smul.addr %s986, 3
        %s988 = scalar_lea.vmem %s14, %s987
        %p989 = pneg %p440
        %p990 = pneg %p437
        %p991 = pneg %p461
        %p992 = pneg %p458
        %s993 = smul.u32 16, %s51
        %s994 = smul.u32 16, %s51
        %s995 = smul.u32 16, %s51
        %p996 = scmp.lt.s32.totalorder %s50, 1
        %s997 = scalar_select %p996, %s50, 1
        %s998 = smul.addr %s997, 3
        %s999 = scalar_lea.vmem %s8, %s998
        %p1000 = scmp.lt.s32.totalorder %s50, 1
        %s1001 = scalar_select %p1000, %s50, 1
        %s1002 = smul.addr %s1001, 3
        %s1003 = scalar_lea.vmem %s14, %s1002
        %p1005 = scmp.eq.s32.totalorder %s50, 0
        %p1006 = scmp.eq.s32.totalorder %s51, 0
        %p1007 = pnand %p1005, %p1006
        %p1008 = pneg %p1007
        // Predicated region
        $region133: #{tpu_custom_call.1} parent=79 // pred_check
          _
        $region134: #{tpu_custom_call.1} parent=79 // pred_check_branch
          %1010 = sbr.rel (%p1007) target = $region136
        $region135: #{tpu_custom_call.1} parent=79 // pred_region
          %v1011 = vld [vmem:[#allocation6] sm:$0xff]
          %v1012 = vld [vmem:[#allocation6 + $0x8] sm:$0xff]
          %v1013 = vld [vmem:[#allocation6 + $0x10] sm:$0xff]
          %v1014 = vld [vmem:[#allocation6 + $0x18] sm:$0xff]
          %v1015 = vld [vmem:[#allocation6 + $0x20] sm:$0xff]
          %v1016 = vld [vmem:[#allocation6 + $0x28] sm:$0xff]
          %v1017 = vld [vmem:[#allocation6 + $0x30] sm:$0xff]
          %v1018 = vld [vmem:[#allocation6 + $0x38] sm:$0xff]
          %v1019 = vld [vmem:[#allocation6 + $0x40] sm:$0xff]
          %v1020 = vld [vmem:[#allocation6 + $0x48] sm:$0xff]
          %v1021 = vld [vmem:[#allocation6 + $0x50] sm:$0xff]
          %v1022 = vld [vmem:[#allocation6 + $0x58] sm:$0xff]
          %v1023 = vld [vmem:[#allocation6 + $0x60] sm:$0xff]
          %v1024 = vld [vmem:[#allocation6 + $0x68] sm:$0xff]
          %v1025 = vld [vmem:[#allocation6 + $0x70] sm:$0xff]
          %v1026 = vld [vmem:[#allocation6 + $0x78] sm:$0xff]
          %1027 = vst [vmem:[#allocation2] sm:$0xff] %v1011
          %1028 = vst [vmem:[#allocation2 + $0x8] sm:$0xff] %v1012
          %1029 = vst [vmem:[#allocation2 + $0x10] sm:$0xff] %v1013
          %1030 = vst [vmem:[#allocation2 + $0x18] sm:$0xff] %v1014
          %1031 = vst [vmem:[#allocation2 + $0x20] sm:$0xff] %v1015
          %1032 = vst [vmem:[#allocation2 + $0x28] sm:$0xff] %v1016
          %1033 = vst [vmem:[#allocation2 + $0x30] sm:$0xff] %v1017
          %1034 = vst [vmem:[#allocation2 + $0x38] sm:$0xff] %v1018
          %1035 = vst [vmem:[#allocation2 + $0x40] sm:$0xff] %v1019
          %1036 = vst [vmem:[#allocation2 + $0x48] sm:$0xff] %v1020
          %1037 = vst [vmem:[#allocation2 + $0x50] sm:$0xff] %v1021
          %1038 = vst [vmem:[#allocation2 + $0x58] sm:$0xff] %v1022
          %1039 = vst [vmem:[#allocation2 + $0x60] sm:$0xff] %v1023
          %1040 = vst [vmem:[#allocation2 + $0x68] sm:$0xff] %v1024
          %1041 = vst [vmem:[#allocation2 + $0x70] sm:$0xff] %v1025
          %1042 = vst [vmem:[#allocation2 + $0x78] sm:$0xff] %v1026
          %1043 = vst [vmem:[#allocation3] sm:$0xff] 0.0
          %1044 = vst [vmem:[#allocation3 + $0x8] sm:$0xff] 0.0
          %1045 = vst [vmem:[#allocation3 + $0x10] sm:$0xff] 0.0
          %1046 = vst [vmem:[#allocation3 + $0x18] sm:$0xff] 0.0
          %1047 = vst [vmem:[#allocation3 + $0x20] sm:$0xff] 0.0
          %1048 = vst [vmem:[#allocation3 + $0x28] sm:$0xff] 0.0
          %1049 = vst [vmem:[#allocation3 + $0x30] sm:$0xff] 0.0
          %1050 = vst [vmem:[#allocation3 + $0x38] sm:$0xff] 0.0
          %1051 = vst [vmem:[#allocation3 + $0x40] sm:$0xff] 0.0
          %1052 = vst [vmem:[#allocation3 + $0x48] sm:$0xff] 0.0
          %1053 = vst [vmem:[#allocation3 + $0x50] sm:$0xff] 0.0
          %1054 = vst [vmem:[#allocation3 + $0x58] sm:$0xff] 0.0
          %1055 = vst [vmem:[#allocation3 + $0x60] sm:$0xff] 0.0
          %1056 = vst [vmem:[#allocation3 + $0x68] sm:$0xff] 0.0
          %1057 = vst [vmem:[#allocation3 + $0x70] sm:$0xff] 0.0
          %1058 = vst [vmem:[#allocation3 + $0x78] sm:$0xff] 0.0
          %1059 = vst [vmem:[#allocation3 + $0x80] sm:$0xff] 0.0
          %1060 = vst [vmem:[#allocation3 + $0x88] sm:$0xff] 0.0
          %1061 = vst [vmem:[#allocation3 + $0x90] sm:$0xff] 0.0
          %1062 = vst [vmem:[#allocation3 + $0x98] sm:$0xff] 0.0
          %1063 = vst [vmem:[#allocation3 + $0xa0] sm:$0xff] 0.0
          %1064 = vst [vmem:[#allocation3 + $0xa8] sm:$0xff] 0.0
          %1065 = vst [vmem:[#allocation3 + $0xb0] sm:$0xff] 0.0
          %1066 = vst [vmem:[#allocation3 + $0xb8] sm:$0xff] 0.0
          %1067 = vst [vmem:[#allocation3 + $0xc0] sm:$0xff] 0.0
          %1068 = vst [vmem:[#allocation3 + $0xc8] sm:$0xff] 0.0
          %1069 = vst [vmem:[#allocation3 + $0xd0] sm:$0xff] 0.0
          %1070 = vst [vmem:[#allocation3 + $0xd8] sm:$0xff] 0.0
          %1071 = vst [vmem:[#allocation3 + $0xe0] sm:$0xff] 0.0
          %1072 = vst [vmem:[#allocation3 + $0xe8] sm:$0xff] 0.0
          %1073 = vst [vmem:[#allocation3 + $0xf0] sm:$0xff] 0.0
          %1074 = vst [vmem:[#allocation3 + $0xf8] sm:$0xff] 0.0
          %1075 = vst [vmem:[#allocation3 + $0x100] sm:$0xff] 0.0
          %1076 = vst [vmem:[#allocation3 + $0x108] sm:$0xff] 0.0
          %1077 = vst [vmem:[#allocation3 + $0x110] sm:$0xff] 0.0
          %1078 = vst [vmem:[#allocation3 + $0x118] sm:$0xff] 0.0
          %1079 = vst [vmem:[#allocation3 + $0x120] sm:$0xff] 0.0
          %1080 = vst [vmem:[#allocation3 + $0x128] sm:$0xff] 0.0
          %1081 = vst [vmem:[#allocation3 + $0x130] sm:$0xff] 0.0
          %1082 = vst [vmem:[#allocation3 + $0x138] sm:$0xff] 0.0
          %1083 = vst [vmem:[#allocation3 + $0x140] sm:$0xff] 0.0
          %1084 = vst [vmem:[#allocation3 + $0x148] sm:$0xff] 0.0
          %1085 = vst [vmem:[#allocation3 + $0x150] sm:$0xff] 0.0
          %1086 = vst [vmem:[#allocation3 + $0x158] sm:$0xff] 0.0
          %1087 = vst [vmem:[#allocation3 + $0x160] sm:$0xff] 0.0
          %1088 = vst [vmem:[#allocation3 + $0x168] sm:$0xff] 0.0
          %1089 = vst [vmem:[#allocation3 + $0x170] sm:$0xff] 0.0
          %1090 = vst [vmem:[#allocation3 + $0x178] sm:$0xff] 0.0
          %1091 = vst [vmem:[#allocation4] sm:$0xff] 0
          %1092 = vst [vmem:[#allocation4 + $0x8] sm:$0xff] 0
          %1093 = vst [vmem:[#allocation4 + $0x10] sm:$0xff] 0
          %1094 = vst [vmem:[#allocation4 + $0x18] sm:$0xff] 0
          %1095 = vst [vmem:[#allocation4 + $0x20] sm:$0xff] 0
          %1096 = vst [vmem:[#allocation4 + $0x28] sm:$0xff] 0
          %1097 = vst [vmem:[#allocation4 + $0x30] sm:$0xff] 0
          %1098 = vst [vmem:[#allocation4 + $0x38] sm:$0xff] 0
          %1099 = vst [vmem:[#allocation4 + $0x40] sm:$0xff] 0
          %1100 = vst [vmem:[#allocation4 + $0x48] sm:$0xff] 0
          %1101 = vst [vmem:[#allocation4 + $0x50] sm:$0xff] 0
          %1102 = vst [vmem:[#allocation4 + $0x58] sm:$0xff] 0
          %1103 = vst [vmem:[#allocation4 + $0x60] sm:$0xff] 0
          %1104 = vst [vmem:[#allocation4 + $0x68] sm:$0xff] 0
          %1105 = vst [vmem:[#allocation4 + $0x70] sm:$0xff] 0
          %1106 = vst [vmem:[#allocation4 + $0x78] sm:$0xff] 0
          %1107 = vst [vmem:[#allocation4 + $0x80] sm:$0xff] 0
          %1108 = vst [vmem:[#allocation4 + $0x88] sm:$0xff] 0
          %1109 = vst [vmem:[#allocation4 + $0x90] sm:$0xff] 0
          %1110 = vst [vmem:[#allocation4 + $0x98] sm:$0xff] 0
          %1111 = vst [vmem:[#allocation4 + $0xa0] sm:$0xff] 0
          %1112 = vst [vmem:[#allocation4 + $0xa8] sm:$0xff] 0
          %1113 = vst [vmem:[#allocation4 + $0xb0] sm:$0xff] 0
          %1114 = vst [vmem:[#allocation4 + $0xb8] sm:$0xff] 0
          %1115 = vst [vmem:[#allocation4 + $0xc0] sm:$0xff] 0
          %1116 = vst [vmem:[#allocation4 + $0xc8] sm:$0xff] 0
          %1117 = vst [vmem:[#allocation4 + $0xd0] sm:$0xff] 0
          %1118 = vst [vmem:[#allocation4 + $0xd8] sm:$0xff] 0
          %1119 = vst [vmem:[#allocation4 + $0xe0] sm:$0xff] 0
          %1120 = vst [vmem:[#allocation4 + $0xe8] sm:$0xff] 0
          %1121 = vst [vmem:[#allocation4 + $0xf0] sm:$0xff] 0
          %1122 = vst [vmem:[#allocation4 + $0xf8] sm:$0xff] 0
          %1123 = vst [vmem:[#allocation4 + $0x100] sm:$0xff] 0
          %1124 = vst [vmem:[#allocation4 + $0x108] sm:$0xff] 0
          %1125 = vst [vmem:[#allocation4 + $0x110] sm:$0xff] 0
          %1126 = vst [vmem:[#allocation4 + $0x118] sm:$0xff] 0
          %1127 = vst [vmem:[#allocation4 + $0x120] sm:$0xff] 0
          %1128 = vst [vmem:[#allocation4 + $0x128] sm:$0xff] 0
          %1129 = vst [vmem:[#allocation4 + $0x130] sm:$0xff] 0
          %1130 = vst [vmem:[#allocation4 + $0x138] sm:$0xff] 0
          %1131 = vst [vmem:[#allocation4 + $0x140] sm:$0xff] 0
          %1132 = vst [vmem:[#allocation4 + $0x148] sm:$0xff] 0
          %1133 = vst [vmem:[#allocation4 + $0x150] sm:$0xff] 0
          %1134 = vst [vmem:[#allocation4 + $0x158] sm:$0xff] 0
          %1135 = vst [vmem:[#allocation4 + $0x160] sm:$0xff] 0
          %1136 = vst [vmem:[#allocation4 + $0x168] sm:$0xff] 0
          %1137 = vst [vmem:[#allocation4 + $0x170] sm:$0xff] 0
          %1138 = vst [vmem:[#allocation4 + $0x178] sm:$0xff] 0
        $region136: #{tpu_custom_call.1} parent=79 // pred_fallthru
          _
        // Predicated region
        $region137: #{tpu_custom_call.1} parent=79 // pred_check
          %p1139 = pneg %p1006
        $region138: #{tpu_custom_call.1} parent=79 // pred_check_branch
          %1141 = sbr.rel (%p1139) target = $region140
        $region139: #{tpu_custom_call.1} parent=79 // pred_region
          %v1142 = vld [vmem:[#allocation2] sm:$0xff]
          %v1143 = vld [vmem:[#allocation2 + $0x8] sm:$0xff]
          %v1144 = vld [vmem:[#allocation2 + $0x10] sm:$0xff]
          %v1145 = vld [vmem:[#allocation2 + $0x18] sm:$0xff]
          %v1146 = vld [vmem:[#allocation2 + $0x20] sm:$0xff]
          %v1147 = vld [vmem:[#allocation2 + $0x28] sm:$0xff]
          %v1148 = vld [vmem:[#allocation2 + $0x30] sm:$0xff]
          %v1149 = vld [vmem:[#allocation2 + $0x38] sm:$0xff]
          %v1150 = vld [vmem:[#allocation2 + $0x40] sm:$0xff]
          %v1151 = vld [vmem:[#allocation2 + $0x48] sm:$0xff]
          %v1152 = vld [vmem:[#allocation2 + $0x50] sm:$0xff]
          %v1153 = vld [vmem:[#allocation2 + $0x58] sm:$0xff]
          %v1154 = vld [vmem:[#allocation2 + $0x60] sm:$0xff]
          %v1155 = vld [vmem:[#allocation2 + $0x68] sm:$0xff]
          %v1156 = vld [vmem:[#allocation2 + $0x70] sm:$0xff]
          %v1157 = vld [vmem:[#allocation2 + $0x78] sm:$0xff]
          %v1158 = vpack.c.bf16 %v1143, %v1142
          %v1159 = vpack.c.bf16 %v1145, %v1144
          %v1160 = vpack.c.bf16 %v1147, %v1146
          %v1161 = vpack.c.bf16 %v1149, %v1148
          %v1162 = vpack.c.bf16 %v1151, %v1150
          %v1163 = vpack.c.bf16 %v1153, %v1152
          %v1164 = vpack.c.bf16 %v1155, %v1154
          %v1165 = vpack.c.bf16 %v1157, %v1156
          %v1166 = vld [vmem:[%s821] sm:$0xf]
          %v1167 = vld [vmem:[%s821 + $0x4] sm:$0xf]
          %v1168 = vld [vmem:[%s821 + $0x8] sm:$0xf]
          %v1169 = vld [vmem:[%s821 + $0xc] sm:$0xf]
          %v1170 = vld [vmem:[%s821 + $0x10] sm:$0xf]
          %v1171 = vld [vmem:[%s821 + $0x14] sm:$0xf]
          %v1172 = vld [vmem:[%s821 + $0x18] sm:$0xf]
          %v1173 = vld [vmem:[%s821 + $0x1c] sm:$0xf]
          %v1174 = vld [vmem:[%s821 + $0x20] sm:$0xf]
          %v1175 = vld [vmem:[%s821 + $0x24] sm:$0xf]
          %v1176 = vld [vmem:[%s821 + $0x28] sm:$0xf]
          %v1177 = vld [vmem:[%s821 + $0x2c] sm:$0xf]
          %v1178 = vld [vmem:[%s821 + $0x30] sm:$0xf]
          %v1179 = vld [vmem:[%s821 + $0x34] sm:$0xf]
          %v1180 = vld [vmem:[%s821 + $0x38] sm:$0xf]
          %v1181 = vld [vmem:[%s821 + $0x3c] sm:$0xf]
          %v1182 = vld [vmem:[%s830] sm:$0x1]
          %v1184 = vperm.slane %v1182, 0
          %v1202 = vunpack.c.l.b16 %v1166
          %v1203 = vunpack.c.l.b16 %v1167
          %v1204 = vunpack.c.l.b16 %v1168
          %v1205 = vunpack.c.l.b16 %v1169
          %v1206 = vunpack.c.l.b16 %v1170
          %v1207 = vunpack.c.l.b16 %v1171
          %v1208 = vunpack.c.l.b16 %v1172
          %v1209 = vunpack.c.l.b16 %v1173
          %v1210 = vunpack.c.l.b16 %v1174
          %v1211 = vunpack.c.l.b16 %v1175
          %v1212 = vunpack.c.l.b16 %v1176
          %v1213 = vunpack.c.l.b16 %v1177
          %v1214 = vunpack.c.l.b16 %v1178
          %v1215 = vunpack.c.l.b16 %v1179
          %v1216 = vunpack.c.l.b16 %v1180
          %v1217 = vunpack.c.l.b16 %v1181
          %v1218 = vpack.c.b16 %v1203, %v1202
          %v1219 = vpack.c.b16 %v1205, %v1204
          %v1220 = vpack.c.b16 %v1207, %v1206
          %v1221 = vpack.c.b16 %v1209, %v1208
          %v1222 = vpack.c.b16 %v1211, %v1210
          %v1223 = vpack.c.b16 %v1213, %v1212
          %v1224 = vpack.c.b16 %v1215, %v1214
          %v1225 = vpack.c.b16 %v1217, %v1216
          %1234 = vmatpush.bf16.msra.mxu0 %v1225
          %1235 = vmatpush.bf16.msra.mxu0 %v1224
          %1236 = vmatpush.bf16.msra.mxu0 %v1223
          %1237 = vmatpush.bf16.msra.mxu0 %v1222
          %1238 = vmatpush.bf16.msra.mxu0 %v1221
          %1239 = vmatpush.bf16.msra.mxu0 %v1220
          %1240 = vmatpush.bf16.msra.mxu0 %v1219
          %1241 = vmatpush.bf16.msra.mxu0 %v1218
          %1242 = vmatmul.bf16.gmra.mxu0 %v1158
          %v1243 = vpop.f32.mrf.mxu0
          %v1244 = vadd.f32 %v1184, %v1243
          %v1245 = vpop.f32.mrf.mxu0
          %v1246 = vadd.f32 %v1184, %v1245
          %1247 = vmatmul.bf16.gmra.mxu0 %v1159
          %v1248 = vpop.f32.mrf.mxu0
          %v1249 = vadd.f32 %v1184, %v1248
          %v1250 = vpop.f32.mrf.mxu0
          %v1251 = vadd.f32 %v1184, %v1250
          %1252 = vmatmul.bf16.gmra.mxu0 %v1160
          %v1253 = vpop.f32.mrf.mxu0
          %v1254 = vadd.f32 %v1184, %v1253
          %v1255 = vpop.f32.mrf.mxu0
          %v1256 = vadd.f32 %v1184, %v1255
          %1257 = vmatmul.bf16.gmra.mxu0 %v1161
          %v1258 = vpop.f32.mrf.mxu0
          %v1259 = vadd.f32 %v1184, %v1258
          %v1260 = vpop.f32.mrf.mxu0
          %v1261 = vadd.f32 %v1184, %v1260
          %1262 = vmatmul.bf16.gmra.mxu0 %v1162
          %v1263 = vpop.f32.mrf.mxu0
          %v1264 = vadd.f32 %v1184, %v1263
          %v1265 = vpop.f32.mrf.mxu0
          %v1266 = vadd.f32 %v1184, %v1265
          %1267 = vmatmul.bf16.gmra.mxu0 %v1163
          %v1268 = vpop.f32.mrf.mxu0
          %v1269 = vadd.f32 %v1184, %v1268
          %v1270 = vpop.f32.mrf.mxu0
          %v1271 = vadd.f32 %v1184, %v1270
          %1272 = vmatmul.bf16.gmra.mxu0 %v1164
          %v1273 = vpop.f32.mrf.mxu0
          %v1274 = vadd.f32 %v1184, %v1273
          %v1275 = vpop.f32.mrf.mxu0
          %v1276 = vadd.f32 %v1184, %v1275
          %1277 = vmatmul.bf16.gmra.mxu0 %v1165
          %v1278 = vpop.f32.mrf.mxu0
          %v1279 = vadd.f32 %v1184, %v1278
          %v1280 = vpop.f32.mrf.mxu0
          %v1281 = vadd.f32 %v1184, %v1280
          %1282 = vdwg.mxu0
          %v1283 = vxor.u32 %v1244, 2147483648
          %v1284 = vxor.u32 %v1246, 2147483648
          %v1285 = vxor.u32 %v1249, 2147483648
          %v1286 = vxor.u32 %v1251, 2147483648
          %v1287 = vxor.u32 %v1254, 2147483648
          %v1288 = vxor.u32 %v1256, 2147483648
          %v1289 = vxor.u32 %v1259, 2147483648
          %v1290 = vxor.u32 %v1261, 2147483648
          %v1291 = vxor.u32 %v1264, 2147483648
          %v1292 = vxor.u32 %v1266, 2147483648
          %v1293 = vxor.u32 %v1269, 2147483648
          %v1294 = vxor.u32 %v1271, 2147483648
          %v1295 = vxor.u32 %v1274, 2147483648
          %v1296 = vxor.u32 %v1276, 2147483648
          %v1297 = vxor.u32 %v1279, 2147483648
          %v1298 = vxor.u32 %v1281, 2147483648
          %v1299 = vmul.f32 %v1283, 1.442695
          %v1300 = vpow.pop %v1299
          %v1301 = vmul.f32 %v1284, 1.442695
          %v1302 = vpow.pop %v1301
          %v1303 = vmul.f32 %v1285, 1.442695
          %v1304 = vpow.pop %v1303
          %v1305 = vmul.f32 %v1286, 1.442695
          %v1306 = vpow.pop %v1305
          %v1307 = vmul.f32 %v1287, 1.442695
          %v1308 = vpow.pop %v1307
          %v1309 = vmul.f32 %v1288, 1.442695
          %v1310 = vpow.pop %v1309
          %v1311 = vmul.f32 %v1289, 1.442695
          %v1312 = vpow.pop %v1311
          %v1313 = vmul.f32 %v1290, 1.442695
          %v1314 = vpow.pop %v1313
          %v1315 = vmul.f32 %v1291, 1.442695
          %v1316 = vpow.pop %v1315
          %v1317 = vmul.f32 %v1292, 1.442695
          %v1318 = vpow.pop %v1317
          %v1319 = vmul.f32 %v1293, 1.442695
          %v1320 = vpow.pop %v1319
          %v1321 = vmul.f32 %v1294, 1.442695
          %v1322 = vpow.pop %v1321
          %v1323 = vmul.f32 %v1295, 1.442695
          %v1324 = vpow.pop %v1323
          %v1325 = vmul.f32 %v1296, 1.442695
          %v1326 = vpow.pop %v1325
          %v1327 = vmul.f32 %v1297, 1.442695
          %v1328 = vpow.pop %v1327
          %v1329 = vmul.f32 %v1298, 1.442695
          %v1330 = vpow.pop %v1329
          %v1331 = vadd.f32 %v1300, 1.0
          %v1332 = vadd.f32 %v1302, 1.0
          %v1333 = vadd.f32 %v1304, 1.0
          %v1334 = vadd.f32 %v1306, 1.0
          %v1335 = vadd.f32 %v1308, 1.0
          %v1336 = vadd.f32 %v1310, 1.0
          %v1337 = vadd.f32 %v1312, 1.0
          %v1338 = vadd.f32 %v1314, 1.0
          %v1339 = vadd.f32 %v1316, 1.0
          %v1340 = vadd.f32 %v1318, 1.0
          %v1341 = vadd.f32 %v1320, 1.0
          %v1342 = vadd.f32 %v1322, 1.0
          %v1343 = vadd.f32 %v1324, 1.0
          %v1344 = vadd.f32 %v1326, 1.0
          %v1345 = vadd.f32 %v1328, 1.0
          %v1346 = vadd.f32 %v1330, 1.0
          %v1347 = vrcp.pop %v1331
          %v1348 = vmul.f32 %v1331, %v1347
          %v1349 = vsub.f32 1.0, %v1348
          %v1350 = vmul.f32 %v1347, %v1349
          %v1351 = vadd.f32 %v1347, %v1350
          %vm1352 = vweird.f32 %v1331
          %vm1353 = vweird.f32 %v1347
          %vm1354 = vmor %vm1352, %vm1353
          %v1355 = vsel %vm1354, %v1347, %v1351
          %v1356 = vand.u32 2147483647, %v1331
          %vm1357 = vcmp.eq.f32.partialorder %v1356, 8.507059e+37
          %v1358 = vand.u32 %v1331, 2147483648
          %v1359 = vor.u32 1.1754944e-38, %v1358
          %v1360 = vsel %vm1357, %v1359, %v1355
          %v1361 = vmul.f32 1.0, %v1360
          %v1362 = vrcp.pop %v1332
          %v1363 = vmul.f32 %v1332, %v1362
          %v1364 = vsub.f32 1.0, %v1363
          %v1365 = vmul.f32 %v1362, %v1364
          %v1366 = vadd.f32 %v1362, %v1365
          %vm1367 = vweird.f32 %v1332
          %vm1368 = vweird.f32 %v1362
          %vm1369 = vmor %vm1367, %vm1368
          %v1370 = vsel %vm1369, %v1362, %v1366
          %v1371 = vand.u32 2147483647, %v1332
          %vm1372 = vcmp.eq.f32.partialorder %v1371, 8.507059e+37
          %v1373 = vand.u32 %v1332, 2147483648
          %v1374 = vor.u32 1.1754944e-38, %v1373
          %v1375 = vsel %vm1372, %v1374, %v1370
          %v1376 = vmul.f32 1.0, %v1375
          %v1377 = vrcp.pop %v1333
          %v1378 = vmul.f32 %v1333, %v1377
          %v1379 = vsub.f32 1.0, %v1378
          %v1380 = vmul.f32 %v1377, %v1379
          %v1381 = vadd.f32 %v1377, %v1380
          %vm1382 = vweird.f32 %v1333
          %vm1383 = vweird.f32 %v1377
          %vm1384 = vmor %vm1382, %vm1383
          %v1385 = vsel %vm1384, %v1377, %v1381
          %v1386 = vand.u32 2147483647, %v1333
          %vm1387 = vcmp.eq.f32.partialorder %v1386, 8.507059e+37
          %v1388 = vand.u32 %v1333, 2147483648
          %v1389 = vor.u32 1.1754944e-38, %v1388
          %v1390 = vsel %vm1387, %v1389, %v1385
          %v1391 = vmul.f32 1.0, %v1390
          %v1392 = vrcp.pop %v1334
          %v1393 = vmul.f32 %v1334, %v1392
          %v1394 = vsub.f32 1.0, %v1393
          %v1395 = vmul.f32 %v1392, %v1394
          %v1396 = vadd.f32 %v1392, %v1395
          %vm1397 = vweird.f32 %v1334
          %vm1398 = vweird.f32 %v1392
          %vm1399 = vmor %vm1397, %vm1398
          %v1400 = vsel %vm1399, %v1392, %v1396
          %v1401 = vand.u32 2147483647, %v1334
          %vm1402 = vcmp.eq.f32.partialorder %v1401, 8.507059e+37
          %v1403 = vand.u32 %v1334, 2147483648
          %v1404 = vor.u32 1.1754944e-38, %v1403
          %v1405 = vsel %vm1402, %v1404, %v1400
          %v1406 = vmul.f32 1.0, %v1405
          %v1407 = vrcp.pop %v1335
          %v1408 = vmul.f32 %v1335, %v1407
          %v1409 = vsub.f32 1.0, %v1408
          %v1410 = vmul.f32 %v1407, %v1409
          %v1411 = vadd.f32 %v1407, %v1410
          %vm1412 = vweird.f32 %v1335
          %vm1413 = vweird.f32 %v1407
          %vm1414 = vmor %vm1412, %vm1413
          %v1415 = vsel %vm1414, %v1407, %v1411
          %v1416 = vand.u32 2147483647, %v1335
          %vm1417 = vcmp.eq.f32.partialorder %v1416, 8.507059e+37
          %v1418 = vand.u32 %v1335, 2147483648
          %v1419 = vor.u32 1.1754944e-38, %v1418
          %v1420 = vsel %vm1417, %v1419, %v1415
          %v1421 = vmul.f32 1.0, %v1420
          %v1422 = vrcp.pop %v1336
          %v1423 = vmul.f32 %v1336, %v1422
          %v1424 = vsub.f32 1.0, %v1423
          %v1425 = vmul.f32 %v1422, %v1424
          %v1426 = vadd.f32 %v1422, %v1425
          %vm1427 = vweird.f32 %v1336
          %vm1428 = vweird.f32 %v1422
          %vm1429 = vmor %vm1427, %vm1428
          %v1430 = vsel %vm1429, %v1422, %v1426
          %v1431 = vand.u32 2147483647, %v1336
          %vm1432 = vcmp.eq.f32.partialorder %v1431, 8.507059e+37
          %v1433 = vand.u32 %v1336, 2147483648
          %v1434 = vor.u32 1.1754944e-38, %v1433
          %v1435 = vsel %vm1432, %v1434, %v1430
          %v1436 = vmul.f32 1.0, %v1435
          %v1437 = vrcp.pop %v1337
          %v1438 = vmul.f32 %v1337, %v1437
          %v1439 = vsub.f32 1.0, %v1438
          %v1440 = vmul.f32 %v1437, %v1439
          %v1441 = vadd.f32 %v1437, %v1440
          %vm1442 = vweird.f32 %v1337
          %vm1443 = vweird.f32 %v1437
          %vm1444 = vmor %vm1442, %vm1443
          %v1445 = vsel %vm1444, %v1437, %v1441
          %v1446 = vand.u32 2147483647, %v1337
          %vm1447 = vcmp.eq.f32.partialorder %v1446, 8.507059e+37
          %v1448 = vand.u32 %v1337, 2147483648
          %v1449 = vor.u32 1.1754944e-38, %v1448
          %v1450 = vsel %vm1447, %v1449, %v1445
          %v1451 = vmul.f32 1.0, %v1450
          %v1452 = vrcp.pop %v1338
          %v1453 = vmul.f32 %v1338, %v1452
          %v1454 = vsub.f32 1.0, %v1453
          %v1455 = vmul.f32 %v1452, %v1454
          %v1456 = vadd.f32 %v1452, %v1455
          %vm1457 = vweird.f32 %v1338
          %vm1458 = vweird.f32 %v1452
          %vm1459 = vmor %vm1457, %vm1458
          %v1460 = vsel %vm1459, %v1452, %v1456
          %v1461 = vand.u32 2147483647, %v1338
          %vm1462 = vcmp.eq.f32.partialorder %v1461, 8.507059e+37
          %v1463 = vand.u32 %v1338, 2147483648
          %v1464 = vor.u32 1.1754944e-38, %v1463
          %v1465 = vsel %vm1462, %v1464, %v1460
          %v1466 = vmul.f32 1.0, %v1465
          %v1467 = vrcp.pop %v1339
          %v1468 = vmul.f32 %v1339, %v1467
          %v1469 = vsub.f32 1.0, %v1468
          %v1470 = vmul.f32 %v1467, %v1469
          %v1471 = vadd.f32 %v1467, %v1470
          %vm1472 = vweird.f32 %v1339
          %vm1473 = vweird.f32 %v1467
          %vm1474 = vmor %vm1472, %vm1473
          %v1475 = vsel %vm1474, %v1467, %v1471
          %v1476 = vand.u32 2147483647, %v1339
          %vm1477 = vcmp.eq.f32.partialorder %v1476, 8.507059e+37
          %v1478 = vand.u32 %v1339, 2147483648
          %v1479 = vor.u32 1.1754944e-38, %v1478
          %v1480 = vsel %vm1477, %v1479, %v1475
          %v1481 = vmul.f32 1.0, %v1480
          %v1482 = vrcp.pop %v1340
          %v1483 = vmul.f32 %v1340, %v1482
          %v1484 = vsub.f32 1.0, %v1483
          %v1485 = vmul.f32 %v1482, %v1484
          %v1486 = vadd.f32 %v1482, %v1485
          %vm1487 = vweird.f32 %v1340
          %vm1488 = vweird.f32 %v1482
          %vm1489 = vmor %vm1487, %vm1488
          %v1490 = vsel %vm1489, %v1482, %v1486
          %v1491 = vand.u32 2147483647, %v1340
          %vm1492 = vcmp.eq.f32.partialorder %v1491, 8.507059e+37
          %v1493 = vand.u32 %v1340, 2147483648
          %v1494 = vor.u32 1.1754944e-38, %v1493
          %v1495 = vsel %vm1492, %v1494, %v1490
          %v1496 = vmul.f32 1.0, %v1495
          %v1497 = vrcp.pop %v1341
          %v1498 = vmul.f32 %v1341, %v1497
          %v1499 = vsub.f32 1.0, %v1498
          %v1500 = vmul.f32 %v1497, %v1499
          %v1501 = vadd.f32 %v1497, %v1500
          %vm1502 = vweird.f32 %v1341
          %vm1503 = vweird.f32 %v1497
          %vm1504 = vmor %vm1502, %vm1503
          %v1505 = vsel %vm1504, %v1497, %v1501
          %v1506 = vand.u32 2147483647, %v1341
          %vm1507 = vcmp.eq.f32.partialorder %v1506, 8.507059e+37
          %v1508 = vand.u32 %v1341, 2147483648
          %v1509 = vor.u32 1.1754944e-38, %v1508
          %v1510 = vsel %vm1507, %v1509, %v1505
          %v1511 = vmul.f32 1.0, %v1510
          %v1512 = vrcp.pop %v1342
          %v1513 = vmul.f32 %v1342, %v1512
          %v1514 = vsub.f32 1.0, %v1513
          %v1515 = vmul.f32 %v1512, %v1514
          %v1516 = vadd.f32 %v1512, %v1515
          %vm1517 = vweird.f32 %v1342
          %vm1518 = vweird.f32 %v1512
          %vm1519 = vmor %vm1517, %vm1518
          %v1520 = vsel %vm1519, %v1512, %v1516
          %v1521 = vand.u32 2147483647, %v1342
          %vm1522 = vcmp.eq.f32.partialorder %v1521, 8.507059e+37
          %v1523 = vand.u32 %v1342, 2147483648
          %v1524 = vor.u32 1.1754944e-38, %v1523
          %v1525 = vsel %vm1522, %v1524, %v1520
          %v1526 = vmul.f32 1.0, %v1525
          %v1527 = vrcp.pop %v1343
          %v1528 = vmul.f32 %v1343, %v1527
          %v1529 = vsub.f32 1.0, %v1528
          %v1530 = vmul.f32 %v1527, %v1529
          %v1531 = vadd.f32 %v1527, %v1530
          %vm1532 = vweird.f32 %v1343
          %vm1533 = vweird.f32 %v1527
          %vm1534 = vmor %vm1532, %vm1533
          %v1535 = vsel %vm1534, %v1527, %v1531
          %v1536 = vand.u32 2147483647, %v1343
          %vm1537 = vcmp.eq.f32.partialorder %v1536, 8.507059e+37
          %v1538 = vand.u32 %v1343, 2147483648
          %v1539 = vor.u32 1.1754944e-38, %v1538
          %v1540 = vsel %vm1537, %v1539, %v1535
          %v1541 = vmul.f32 1.0, %v1540
          %v1542 = vrcp.pop %v1344
          %v1543 = vmul.f32 %v1344, %v1542
          %v1544 = vsub.f32 1.0, %v1543
          %v1545 = vmul.f32 %v1542, %v1544
          %v1546 = vadd.f32 %v1542, %v1545
          %vm1547 = vweird.f32 %v1344
          %vm1548 = vweird.f32 %v1542
          %vm1549 = vmor %vm1547, %vm1548
          %v1550 = vsel %vm1549, %v1542, %v1546
          %v1551 = vand.u32 2147483647, %v1344
          %vm1552 = vcmp.eq.f32.partialorder %v1551, 8.507059e+37
          %v1553 = vand.u32 %v1344, 2147483648
          %v1554 = vor.u32 1.1754944e-38, %v1553
          %v1555 = vsel %vm1552, %v1554, %v1550
          %v1556 = vmul.f32 1.0, %v1555
          %v1557 = vrcp.pop %v1345
          %v1558 = vmul.f32 %v1345, %v1557
          %v1559 = vsub.f32 1.0, %v1558
          %v1560 = vmul.f32 %v1557, %v1559
          %v1561 = vadd.f32 %v1557, %v1560
          %vm1562 = vweird.f32 %v1345
          %vm1563 = vweird.f32 %v1557
          %vm1564 = vmor %vm1562, %vm1563
          %v1565 = vsel %vm1564, %v1557, %v1561
          %v1566 = vand.u32 2147483647, %v1345
          %vm1567 = vcmp.eq.f32.partialorder %v1566, 8.507059e+37
          %v1568 = vand.u32 %v1345, 2147483648
          %v1569 = vor.u32 1.1754944e-38, %v1568
          %v1570 = vsel %vm1567, %v1569, %v1565
          %v1571 = vmul.f32 1.0, %v1570
          %v1572 = vrcp.pop %v1346
          %v1573 = vmul.f32 %v1346, %v1572
          %v1574 = vsub.f32 1.0, %v1573
          %v1575 = vmul.f32 %v1572, %v1574
          %v1576 = vadd.f32 %v1572, %v1575
          %vm1577 = vweird.f32 %v1346
          %vm1578 = vweird.f32 %v1572
          %vm1579 = vmor %vm1577, %vm1578
          %v1580 = vsel %vm1579, %v1572, %v1576
          %v1581 = vand.u32 2147483647, %v1346
          %vm1582 = vcmp.eq.f32.partialorder %v1581, 8.507059e+37
          %v1583 = vand.u32 %v1346, 2147483648
          %v1584 = vor.u32 1.1754944e-38, %v1583
          %v1585 = vsel %vm1582, %v1584, %v1580
          %v1586 = vmul.f32 1.0, %v1585
          %v1587 = vmul.f32 %v1244, %v1361
          %v1588 = vmul.f32 %v1246, %v1376
          %v1589 = vmul.f32 %v1249, %v1391
          %v1590 = vmul.f32 %v1251, %v1406
          %v1591 = vmul.f32 %v1254, %v1421
          %v1592 = vmul.f32 %v1256, %v1436
          %v1593 = vmul.f32 %v1259, %v1451
          %v1594 = vmul.f32 %v1261, %v1466
          %v1595 = vmul.f32 %v1264, %v1481
          %v1596 = vmul.f32 %v1266, %v1496
          %v1597 = vmul.f32 %v1269, %v1511
          %v1598 = vmul.f32 %v1271, %v1526
          %v1599 = vmul.f32 %v1274, %v1541
          %v1600 = vmul.f32 %v1276, %v1556
          %v1601 = vmul.f32 %v1279, %v1571
          %v1602 = vmul.f32 %v1281, %v1586
          %v1603 = vpack.c.bf16 %v1588, %v1587
          %v1604 = vpack.c.bf16 %v1590, %v1589
          %v1605 = vpack.c.bf16 %v1592, %v1591
          %v1606 = vpack.c.bf16 %v1594, %v1593
          %v1607 = vpack.c.bf16 %v1596, %v1595
          %v1608 = vpack.c.bf16 %v1598, %v1597
          %v1609 = vpack.c.bf16 %v1600, %v1599
          %v1610 = vpack.c.bf16 %v1602, %v1601
          %v1611 = vld [vmem:[%s840] sm:$0xff]
          %v1612 = vld [vmem:[%s840 + $0x8] sm:$0xf]
          %v1613 = vld [vmem:[%s840 + $0xc] sm:$0xff]
          %v1614 = vld [vmem:[%s840 + $0x14] sm:$0xf]
          %v1615 = vld [vmem:[%s840 + $0x18] sm:$0xff]
          %v1616 = vld [vmem:[%s840 + $0x20] sm:$0xf]
          %v1617 = vld [vmem:[%s840 + $0x24] sm:$0xff]
          %v1618 = vld [vmem:[%s840 + $0x2c] sm:$0xf]
          %v1619 = vld [vmem:[%s840 + $0x30] sm:$0xff]
          %v1620 = vld [vmem:[%s840 + $0x38] sm:$0xf]
          %v1621 = vld [vmem:[%s840 + $0x3c] sm:$0xff]
          %v1622 = vld [vmem:[%s840 + $0x44] sm:$0xf]
          %v1623 = vld [vmem:[%s840 + $0x48] sm:$0xff]
          %v1624 = vld [vmem:[%s840 + $0x50] sm:$0xf]
          %v1625 = vld [vmem:[%s840 + $0x54] sm:$0xff]
          %v1626 = vld [vmem:[%s840 + $0x5c] sm:$0xf]
          %v1627 = vld [vmem:[%s840 + $0x60] sm:$0xff]
          %v1628 = vld [vmem:[%s840 + $0x68] sm:$0xf]
          %v1629 = vld [vmem:[%s840 + $0x6c] sm:$0xff]
          %v1630 = vld [vmem:[%s840 + $0x74] sm:$0xf]
          %v1631 = vld [vmem:[%s840 + $0x78] sm:$0xff]
          %v1632 = vld [vmem:[%s840 + $0x80] sm:$0xf]
          %v1633 = vld [vmem:[%s840 + $0x84] sm:$0xff]
          %v1634 = vld [vmem:[%s840 + $0x8c] sm:$0xf]
          %v1635 = vld [vmem:[%s840 + $0x90] sm:$0xff]
          %v1636 = vld [vmem:[%s840 + $0x98] sm:$0xf]
          %v1637 = vld [vmem:[%s840 + $0x9c] sm:$0xff]
          %v1638 = vld [vmem:[%s840 + $0xa4] sm:$0xf]
          %v1639 = vld [vmem:[%s840 + $0xa8] sm:$0xff]
          %v1640 = vld [vmem:[%s840 + $0xb0] sm:$0xf]
          %v1641 = vld [vmem:[%s840 + $0xb4] sm:$0xff]
          %v1642 = vld [vmem:[%s840 + $0xbc] sm:$0xf]
          %v1643 = vld [vmem:[%s999] sm:$0x7]
          %v1645 = vperm.slane %v1643, 0
          %v1646 = vperm.slane %v1643, 1
          %v1647 = vperm.slane %v1643, 2
          %v1683 = vunpack.c.l.b16 %v1611
          %v1684 = vunpack.c.h.b16 %v1611
          %v1685 = vunpack.c.l.b16 %v1612
          %v1686 = vunpack.c.l.b16 %v1613
          %v1687 = vunpack.c.h.b16 %v1613
          %v1688 = vunpack.c.l.b16 %v1614
          %v1689 = vunpack.c.l.b16 %v1615
          %v1690 = vunpack.c.h.b16 %v1615
          %v1691 = vunpack.c.l.b16 %v1616
          %v1692 = vunpack.c.l.b16 %v1617
          %v1693 = vunpack.c.h.b16 %v1617
          %v1694 = vunpack.c.l.b16 %v1618
          %v1695 = vunpack.c.l.b16 %v1619
          %v1696 = vunpack.c.h.b16 %v1619
          %v1697 = vunpack.c.l.b16 %v1620
          %v1698 = vunpack.c.l.b16 %v1621
          %v1699 = vunpack.c.h.b16 %v1621
          %v1700 = vunpack.c.l.b16 %v1622
          %v1701 = vunpack.c.l.b16 %v1623
          %v1702 = vunpack.c.h.b16 %v1623
          %v1703 = vunpack.c.l.b16 %v1624
          %v1704 = vunpack.c.l.b16 %v1625
          %v1705 = vunpack.c.h.b16 %v1625
          %v1706 = vunpack.c.l.b16 %v1626
          %v1707 = vunpack.c.l.b16 %v1627
          %v1708 = vunpack.c.h.b16 %v1627
          %v1709 = vunpack.c.l.b16 %v1628
          %v1710 = vunpack.c.l.b16 %v1629
          %v1711 = vunpack.c.h.b16 %v1629
          %v1712 = vunpack.c.l.b16 %v1630
          %v1713 = vunpack.c.l.b16 %v1631
          %v1714 = vunpack.c.h.b16 %v1631
          %v1715 = vunpack.c.l.b16 %v1632
          %v1716 = vunpack.c.l.b16 %v1633
          %v1717 = vunpack.c.h.b16 %v1633
          %v1718 = vunpack.c.l.b16 %v1634
          %v1719 = vunpack.c.l.b16 %v1635
          %v1720 = vunpack.c.h.b16 %v1635
          %v1721 = vunpack.c.l.b16 %v1636
          %v1722 = vunpack.c.l.b16 %v1637
          %v1723 = vunpack.c.h.b16 %v1637
          %v1724 = vunpack.c.l.b16 %v1638
          %v1725 = vunpack.c.l.b16 %v1639
          %v1726 = vunpack.c.h.b16 %v1639
          %v1727 = vunpack.c.l.b16 %v1640
          %v1728 = vunpack.c.l.b16 %v1641
          %v1729 = vunpack.c.h.b16 %v1641
          %v1730 = vunpack.c.l.b16 %v1642
          %v1731 = vpack.c.b16 %v1686, %v1683
          %v1732 = vpack.c.b16 %v1687, %v1684
          %v1733 = vpack.c.b16 %v1688, %v1685
          %v1734 = vpack.c.b16 %v1692, %v1689
          %v1735 = vpack.c.b16 %v1693, %v1690
          %v1736 = vpack.c.b16 %v1694, %v1691
          %v1737 = vpack.c.b16 %v1698, %v1695
          %v1738 = vpack.c.b16 %v1699, %v1696
          %v1739 = vpack.c.b16 %v1700, %v1697
          %v1740 = vpack.c.b16 %v1704, %v1701
          %v1741 = vpack.c.b16 %v1705, %v1702
          %v1742 = vpack.c.b16 %v1706, %v1703
          %v1743 = vpack.c.b16 %v1710, %v1707
          %v1744 = vpack.c.b16 %v1711, %v1708
          %v1745 = vpack.c.b16 %v1712, %v1709
          %v1746 = vpack.c.b16 %v1716, %v1713
          %v1747 = vpack.c.b16 %v1717, %v1714
          %v1748 = vpack.c.b16 %v1718, %v1715
          %v1749 = vpack.c.b16 %v1722, %v1719
          %v1750 = vpack.c.b16 %v1723, %v1720
          %v1751 = vpack.c.b16 %v1724, %v1721
          %v1752 = vpack.c.b16 %v1728, %v1725
          %v1753 = vpack.c.b16 %v1729, %v1726
          %v1754 = vpack.c.b16 %v1730, %v1727
          %1779 = vmatpush.bf16.msra.mxu0 %v1752
          %1780 = vmatpush.bf16.msra.mxu0 %v1749
          %1781 = vmatpush.bf16.msra.mxu0 %v1746
          %1782 = vmatpush.bf16.msra.mxu0 %v1743
          %1783 = vmatpush.bf16.msra.mxu0 %v1740
          %1784 = vmatpush.bf16.msra.mxu0 %v1737
          %1785 = vmatpush.bf16.msra.mxu0 %v1734
          %1786 = vmatpush.bf16.msra.mxu0 %v1731
          %1787 = vmatmul.bf16.gmra.mxu0 %v1603
          %v1788 = vpop.f32.mrf.mxu0
          %v1789 = vadd.f32 %v1645, %v1788
          %v1790 = vpop.f32.mrf.mxu0
          %v1791 = vadd.f32 %v1645, %v1790
          %1792 = vmatmul.bf16.gmra.mxu0 %v1604
          %v1793 = vpop.f32.mrf.mxu0
          %v1794 = vadd.f32 %v1645, %v1793
          %v1795 = vpop.f32.mrf.mxu0
          %v1796 = vadd.f32 %v1645, %v1795
          %1797 = vmatmul.bf16.gmra.mxu0 %v1605
          %v1798 = vpop.f32.mrf.mxu0
          %v1799 = vadd.f32 %v1645, %v1798
          %v1800 = vpop.f32.mrf.mxu0
          %v1801 = vadd.f32 %v1645, %v1800
          %1802 = vmatmul.bf16.gmra.mxu0 %v1606
          %v1803 = vpop.f32.mrf.mxu0
          %v1804 = vadd.f32 %v1645, %v1803
          %v1805 = vpop.f32.mrf.mxu0
          %v1806 = vadd.f32 %v1645, %v1805
          %1807 = vmatmul.bf16.gmra.mxu0 %v1607
          %v1808 = vpop.f32.mrf.mxu0
          %v1809 = vadd.f32 %v1645, %v1808
          %v1810 = vpop.f32.mrf.mxu0
          %v1811 = vadd.f32 %v1645, %v1810
          %1812 = vmatmul.bf16.gmra.mxu0 %v1608
          %v1813 = vpop.f32.mrf.mxu0
          %v1814 = vadd.f32 %v1645, %v1813
          %v1815 = vpop.f32.mrf.mxu0
          %v1816 = vadd.f32 %v1645, %v1815
          %1817 = vmatmul.bf16.gmra.mxu0 %v1609
          %v1818 = vpop.f32.mrf.mxu0
          %v1819 = vadd.f32 %v1645, %v1818
          %v1820 = vpop.f32.mrf.mxu0
          %v1821 = vadd.f32 %v1645, %v1820
          %1822 = vmatmul.bf16.gmra.mxu0 %v1610
          %v1823 = vpop.f32.mrf.mxu0
          %v1824 = vadd.f32 %v1645, %v1823
          %v1825 = vpop.f32.mrf.mxu0
          %v1826 = vadd.f32 %v1645, %v1825
          %1827 = vdwg.mxu0
          %1828 = vmatpush.bf16.msra.mxu0 %v1753
          %1829 = vmatpush.bf16.msra.mxu0 %v1750
          %1830 = vmatpush.bf16.msra.mxu0 %v1747
          %1831 = vmatpush.bf16.msra.mxu0 %v1744
          %1832 = vmatpush.bf16.msra.mxu0 %v1741
          %1833 = vmatpush.bf16.msra.mxu0 %v1738
          %1834 = vmatpush.bf16.msra.mxu0 %v1735
          %1835 = vmatpush.bf16.msra.mxu0 %v1732
          %1836 = vmatmul.bf16.gmra.mxu0 %v1603
          %v1837 = vpop.f32.mrf.mxu0
          %v1838 = vadd.f32 %v1646, %v1837
          %v1839 = vpop.f32.mrf.mxu0
          %v1840 = vadd.f32 %v1646, %v1839
          %1841 = vmatmul.bf16.gmra.mxu0 %v1604
          %v1842 = vpop.f32.mrf.mxu0
          %v1843 = vadd.f32 %v1646, %v1842
          %v1844 = vpop.f32.mrf.mxu0
          %v1845 = vadd.f32 %v1646, %v1844
          %1846 = vmatmul.bf16.gmra.mxu0 %v1605
          %v1847 = vpop.f32.mrf.mxu0
          %v1848 = vadd.f32 %v1646, %v1847
          %v1849 = vpop.f32.mrf.mxu0
          %v1850 = vadd.f32 %v1646, %v1849
          %1851 = vmatmul.bf16.gmra.mxu0 %v1606
          %v1852 = vpop.f32.mrf.mxu0
          %v1853 = vadd.f32 %v1646, %v1852
          %v1854 = vpop.f32.mrf.mxu0
          %v1855 = vadd.f32 %v1646, %v1854
          %1856 = vmatmul.bf16.gmra.mxu0 %v1607
          %v1857 = vpop.f32.mrf.mxu0
          %v1858 = vadd.f32 %v1646, %v1857
          %v1859 = vpop.f32.mrf.mxu0
          %v1860 = vadd.f32 %v1646, %v1859
          %1861 = vmatmul.bf16.gmra.mxu0 %v1608
          %v1862 = vpop.f32.mrf.mxu0
          %v1863 = vadd.f32 %v1646, %v1862
          %v1864 = vpop.f32.mrf.mxu0
          %v1865 = vadd.f32 %v1646, %v1864
          %1866 = vmatmul.bf16.gmra.mxu0 %v1609
          %v1867 = vpop.f32.mrf.mxu0
          %v1868 = vadd.f32 %v1646, %v1867
          %v1869 = vpop.f32.mrf.mxu0
          %v1870 = vadd.f32 %v1646, %v1869
          %1871 = vmatmul.bf16.gmra.mxu0 %v1610
          %v1872 = vpop.f32.mrf.mxu0
          %v1873 = vadd.f32 %v1646, %v1872
          %v1874 = vpop.f32.mrf.mxu0
          %v1875 = vadd.f32 %v1646, %v1874
          %1876 = vdwg.mxu0
          %1877 = vmatpush.bf16.msra.mxu0 %v1754
          %1878 = vmatpush.bf16.msra.mxu0 %v1751
          %1879 = vmatpush.bf16.msra.mxu0 %v1748
          %1880 = vmatpush.bf16.msra.mxu0 %v1745
          %1881 = vmatpush.bf16.msra.mxu0 %v1742
          %1882 = vmatpush.bf16.msra.mxu0 %v1739
          %1883 = vmatpush.bf16.msra.mxu0 %v1736
          %1884 = vmatpush.bf16.msra.mxu0 %v1733
          %1885 = vmatmul.bf16.gmra.mxu0 %v1603
          %v1886 = vpop.f32.mrf.mxu0
          %v1887 = vadd.f32 %v1647, %v1886
          %v1888 = vpop.f32.mrf.mxu0
          %v1889 = vadd.f32 %v1647, %v1888
          %1890 = vmatmul.bf16.gmra.mxu0 %v1604
          %v1891 = vpop.f32.mrf.mxu0
          %v1892 = vadd.f32 %v1647, %v1891
          %v1893 = vpop.f32.mrf.mxu0
          %v1894 = vadd.f32 %v1647, %v1893
          %1895 = vmatmul.bf16.gmra.mxu0 %v1605
          %v1896 = vpop.f32.mrf.mxu0
          %v1897 = vadd.f32 %v1647, %v1896
          %v1898 = vpop.f32.mrf.mxu0
          %v1899 = vadd.f32 %v1647, %v1898
          %1900 = vmatmul.bf16.gmra.mxu0 %v1606
          %v1901 = vpop.f32.mrf.mxu0
          %v1902 = vadd.f32 %v1647, %v1901
          %v1903 = vpop.f32.mrf.mxu0
          %v1904 = vadd.f32 %v1647, %v1903
          %1905 = vmatmul.bf16.gmra.mxu0 %v1607
          %v1906 = vpop.f32.mrf.mxu0
          %v1907 = vadd.f32 %v1647, %v1906
          %v1908 = vpop.f32.mrf.mxu0
          %v1909 = vadd.f32 %v1647, %v1908
          %1910 = vmatmul.bf16.gmra.mxu0 %v1608
          %v1911 = vpop.f32.mrf.mxu0
          %v1912 = vadd.f32 %v1647, %v1911
          %v1913 = vpop.f32.mrf.mxu0
          %v1914 = vadd.f32 %v1647, %v1913
          %1915 = vmatmul.bf16.gmra.mxu0 %v1609
          %v1916 = vpop.f32.mrf.mxu0
          %v1917 = vadd.f32 %v1647, %v1916
          %v1918 = vpop.f32.mrf.mxu0
          %v1919 = vadd.f32 %v1647, %v1918
          %1920 = vmatmul.bf16.gmra.mxu0 %v1610
          %v1921 = vpop.f32.mrf.mxu0
          %v1922 = vadd.f32 %v1647, %v1921
          %v1923 = vpop.f32.mrf.mxu0
          %v1924 = vadd.f32 %v1647, %v1923
          %1925 = vdwg.mxu0
          %v1926 = vpack.c.bf16 %v1838, %v1789
          %v1927 = vpack.c.bf16 %v1887, %v1887
          %v1928 = vpack.c.bf16 %v1840, %v1791
          %v1929 = vpack.c.bf16 %v1889, %v1889
          %v1930 = vpack.c.bf16 %v1843, %v1794
          %v1931 = vpack.c.bf16 %v1892, %v1892
          %v1932 = vpack.c.bf16 %v1845, %v1796
          %v1933 = vpack.c.bf16 %v1894, %v1894
          %v1934 = vpack.c.bf16 %v1848, %v1799
          %v1935 = vpack.c.bf16 %v1897, %v1897
          %v1936 = vpack.c.bf16 %v1850, %v1801
          %v1937 = vpack.c.bf16 %v1899, %v1899
          %v1938 = vpack.c.bf16 %v1853, %v1804
          %v1939 = vpack.c.bf16 %v1902, %v1902
          %v1940 = vpack.c.bf16 %v1855, %v1806
          %v1941 = vpack.c.bf16 %v1904, %v1904
          %v1942 = vpack.c.bf16 %v1858, %v1809
          %v1943 = vpack.c.bf16 %v1907, %v1907
          %v1944 = vpack.c.bf16 %v1860, %v1811
          %v1945 = vpack.c.bf16 %v1909, %v1909
          %v1946 = vpack.c.bf16 %v1863, %v1814
          %v1947 = vpack.c.bf16 %v1912, %v1912
          %v1948 = vpack.c.bf16 %v1865, %v1816
          %v1949 = vpack.c.bf16 %v1914, %v1914
          %v1950 = vpack.c.bf16 %v1868, %v1819
          %v1951 = vpack.c.bf16 %v1917, %v1917
          %v1952 = vpack.c.bf16 %v1870, %v1821
          %v1953 = vpack.c.bf16 %v1919, %v1919
          %v1954 = vpack.c.bf16 %v1873, %v1824
          %v1955 = vpack.c.bf16 %v1922, %v1922
          %v1956 = vpack.c.bf16 %v1875, %v1826
          %v1957 = vpack.c.bf16 %v1924, %v1924
          %1958 = vst [vmem:[#allocation4] sm:$0xff] %v1926
          %1959 = vst [vmem:[#allocation4 + $0x8] sm:$0xf] %v1927
          %1960 = vst [vmem:[#allocation4 + $0x18] sm:$0xff] %v1928
          %1961 = vst [vmem:[#allocation4 + $0x20] sm:$0xf] %v1929
          %1962 = vst [vmem:[#allocation4 + $0x30] sm:$0xff] %v1930
          %1963 = vst [vmem:[#allocation4 + $0x38] sm:$0xf] %v1931
          %1964 = vst [vmem:[#allocation4 + $0x48] sm:$0xff] %v1932
          %1965 = vst [vmem:[#allocation4 + $0x50] sm:$0xf] %v1933
          %1966 = vst [vmem:[#allocation4 + $0x60] sm:$0xff] %v1934
          %1967 = vst [vmem:[#allocation4 + $0x68] sm:$0xf] %v1935
          %1968 = vst [vmem:[#allocation4 + $0x78] sm:$0xff] %v1936
          %1969 = vst [vmem:[#allocation4 + $0x80] sm:$0xf] %v1937
          %1970 = vst [vmem:[#allocation4 + $0x90] sm:$0xff] %v1938
          %1971 = vst [vmem:[#allocation4 + $0x98] sm:$0xf] %v1939
          %1972 = vst [vmem:[#allocation4 + $0xa8] sm:$0xff] %v1940
          %1973 = vst [vmem:[#allocation4 + $0xb0] sm:$0xf] %v1941
          %1974 = vst [vmem:[#allocation4 + $0xc0] sm:$0xff] %v1942
          %1975 = vst [vmem:[#allocation4 + $0xc8] sm:$0xf] %v1943
          %1976 = vst [vmem:[#allocation4 + $0xd8] sm:$0xff] %v1944
          %1977 = vst [vmem:[#allocation4 + $0xe0] sm:$0xf] %v1945
          %1978 = vst [vmem:[#allocation4 + $0xf0] sm:$0xff] %v1946
          %1979 = vst [vmem:[#allocation4 + $0xf8] sm:$0xf] %v1947
          %1980 = vst [vmem:[#allocation4 + $0x108] sm:$0xff] %v1948
          %1981 = vst [vmem:[#allocation4 + $0x110] sm:$0xf] %v1949
          %1982 = vst [vmem:[#allocation4 + $0x120] sm:$0xff] %v1950
          %1983 = vst [vmem:[#allocation4 + $0x128] sm:$0xf] %v1951
          %1984 = vst [vmem:[#allocation4 + $0x138] sm:$0xff] %v1952
          %1985 = vst [vmem:[#allocation4 + $0x140] sm:$0xf] %v1953
          %1986 = vst [vmem:[#allocation4 + $0x150] sm:$0xff] %v1954
          %1987 = vst [vmem:[#allocation4 + $0x158] sm:$0xf] %v1955
          %1988 = vst [vmem:[#allocation4 + $0x168] sm:$0xff] %v1956
          %1989 = vst [vmem:[#allocation4 + $0x170] sm:$0xf] %v1957
          %1990 = vst [vmem:[#allocation5] sm:$0xff] 0.0
          %1991 = vst [vmem:[#allocation5 + $0x8] sm:$0xff] 0.0
          %1992 = vst [vmem:[#allocation5 + $0x10] sm:$0xff] 0.0
          %1993 = vst [vmem:[#allocation5 + $0x18] sm:$0xff] 0.0
          %1994 = vst [vmem:[#allocation5 + $0x20] sm:$0xff] 0.0
          %1995 = vst [vmem:[#allocation5 + $0x28] sm:$0xff] 0.0
          %1996 = vst [vmem:[#allocation5 + $0x30] sm:$0xff] 0.0
          %1997 = vst [vmem:[#allocation5 + $0x38] sm:$0xff] 0.0
          %1998 = vst [vmem:[#allocation5 + $0x40] sm:$0xff] 0.0
          %1999 = vst [vmem:[#allocation5 + $0x48] sm:$0xff] 0.0
          %2000 = vst [vmem:[#allocation5 + $0x50] sm:$0xff] 0.0
          %2001 = vst [vmem:[#allocation5 + $0x58] sm:$0xff] 0.0
          %2002 = vst [vmem:[#allocation5 + $0x60] sm:$0xff] 0.0
          %2003 = vst [vmem:[#allocation5 + $0x68] sm:$0xff] 0.0
          %2004 = vst [vmem:[#allocation5 + $0x70] sm:$0xff] 0.0
          %2005 = vst [vmem:[#allocation5 + $0x78] sm:$0xff] 0.0
          %2006 = vst [vmem:[#allocation5 + $0x80] sm:$0xff] 0.0
          %2007 = vst [vmem:[#allocation5 + $0x88] sm:$0xff] 0.0
          %2008 = vst [vmem:[#allocation5 + $0x90] sm:$0xff] 0.0
          %2009 = vst [vmem:[#allocation5 + $0x98] sm:$0xff] 0.0
          %2010 = vst [vmem:[#allocation5 + $0xa0] sm:$0xff] 0.0
          %2011 = vst [vmem:[#allocation5 + $0xa8] sm:$0xff] 0.0
          %2012 = vst [vmem:[#allocation5 + $0xb0] sm:$0xff] 0.0
          %2013 = vst [vmem:[#allocation5 + $0xb8] sm:$0xff] 0.0
          %2014 = vst [vmem:[#allocation5 + $0xc0] sm:$0xff] 0.0
          %2015 = vst [vmem:[#allocation5 + $0xc8] sm:$0xff] 0.0
          %2016 = vst [vmem:[#allocation5 + $0xd0] sm:$0xff] 0.0
          %2017 = vst [vmem:[#allocation5 + $0xd8] sm:$0xff] 0.0
          %2018 = vst [vmem:[#allocation5 + $0xe0] sm:$0xff] 0.0
          %2019 = vst [vmem:[#allocation5 + $0xe8] sm:$0xff] 0.0
          %2020 = vst [vmem:[#allocation5 + $0xf0] sm:$0xff] 0.0
          %2021 = vst [vmem:[#allocation5 + $0xf8] sm:$0xff] 0.0
          %2022 = vst [vmem:[#allocation5 + $0x100] sm:$0xff] 0.0
          %2023 = vst [vmem:[#allocation5 + $0x108] sm:$0xff] 0.0
          %2024 = vst [vmem:[#allocation5 + $0x110] sm:$0xff] 0.0
          %2025 = vst [vmem:[#allocation5 + $0x118] sm:$0xff] 0.0
          %2026 = vst [vmem:[#allocation5 + $0x120] sm:$0xff] 0.0
          %2027 = vst [vmem:[#allocation5 + $0x128] sm:$0xff] 0.0
          %2028 = vst [vmem:[#allocation5 + $0x130] sm:$0xff] 0.0
          %2029 = vst [vmem:[#allocation5 + $0x138] sm:$0xff] 0.0
          %2030 = vst [vmem:[#allocation5 + $0x140] sm:$0xff] 0.0
          %2031 = vst [vmem:[#allocation5 + $0x148] sm:$0xff] 0.0
          %2032 = vst [vmem:[#allocation5 + $0x150] sm:$0xff] 0.0
          %2033 = vst [vmem:[#allocation5 + $0x158] sm:$0xff] 0.0
          %2034 = vst [vmem:[#allocation5 + $0x160] sm:$0xff] 0.0
          %2035 = vst [vmem:[#allocation5 + $0x168] sm:$0xff] 0.0
          %2036 = vst [vmem:[#allocation5 + $0x170] sm:$0xff] 0.0
          %2037 = vst [vmem:[#allocation5 + $0x178] sm:$0xff] 0.0
          %2038 = vst [vmem:[#allocation5 + $0x180] sm:$0xff] 0.0
          %2039 = vst [vmem:[#allocation5 + $0x188] sm:$0xff] 0.0
          %2040 = vst [vmem:[#allocation5 + $0x190] sm:$0xff] 0.0
          %2041 = vst [vmem:[#allocation5 + $0x198] sm:$0xff] 0.0
          %2042 = vst [vmem:[#allocation5 + $0x1a0] sm:$0xff] 0.0
          %2043 = vst [vmem:[#allocation5 + $0x1a8] sm:$0xff] 0.0
          %2044 = vst [vmem:[#allocation5 + $0x1b0] sm:$0xff] 0.0
          %2045 = vst [vmem:[#allocation5 + $0x1b8] sm:$0xff] 0.0
          %2046 = vst [vmem:[#allocation5 + $0x1c0] sm:$0xff] 0.0
          %2047 = vst [vmem:[#allocation5 + $0x1c8] sm:$0xff] 0.0
          %2048 = vst [vmem:[#allocation5 + $0x1d0] sm:$0xff] 0.0
          %2049 = vst [vmem:[#allocation5 + $0x1d8] sm:$0xff] 0.0
          %2050 = vst [vmem:[#allocation5 + $0x1e0] sm:$0xff] 0.0
          %2051 = vst [vmem:[#allocation5 + $0x1e8] sm:$0xff] 0.0
          %2052 = vst [vmem:[#allocation5 + $0x1f0] sm:$0xff] 0.0
          %2053 = vst [vmem:[#allocation5 + $0x1f8] sm:$0xff] 0.0
        $region140: #{tpu_custom_call.1} parent=79 // pred_fallthru
          _
        %v2054 = vld [vmem:[%s781] sm:$0xf]
        %v2055 = vld [vmem:[%s781 + $0x4] sm:$0xf]
        %v2056 = vld [vmem:[%s781 + $0x8] sm:$0xf]
        %v2057 = vld [vmem:[%s781 + $0xc] sm:$0xf]
        %v2058 = vld [vmem:[%s781 + $0x10] sm:$0xf]
        %v2059 = vld [vmem:[%s781 + $0x14] sm:$0xf]
        %v2060 = vld [vmem:[%s781 + $0x18] sm:$0xf]
        %v2061 = vld [vmem:[%s781 + $0x1c] sm:$0xf]
        %v2062 = vld [vmem:[%s781 + $0x20] sm:$0xf]
        %v2063 = vld [vmem:[%s781 + $0x24] sm:$0xf]
        %v2064 = vld [vmem:[%s781 + $0x28] sm:$0xf]
        %v2065 = vld [vmem:[%s781 + $0x2c] sm:$0xf]
        %v2066 = vld [vmem:[%s781 + $0x30] sm:$0xf]
        %v2067 = vld [vmem:[%s781 + $0x34] sm:$0xf]
        %v2068 = vld [vmem:[%s781 + $0x38] sm:$0xf]
        %v2069 = vld [vmem:[%s781 + $0x3c] sm:$0xf]
        %v2070 = vld [vmem:[%s791] sm:$0xf]
        %v2071 = vld [vmem:[%s791 + $0x4] sm:$0xf]
        %v2072 = vld [vmem:[%s791 + $0x8] sm:$0xf]
        %v2073 = vld [vmem:[%s791 + $0xc] sm:$0xf]
        %v2074 = vld [vmem:[%s791 + $0x10] sm:$0xf]
        %v2075 = vld [vmem:[%s791 + $0x14] sm:$0xf]
        %v2076 = vld [vmem:[%s791 + $0x18] sm:$0xf]
        %v2077 = vld [vmem:[%s791 + $0x1c] sm:$0xf]
        %v2078 = vld [vmem:[%s791 + $0x20] sm:$0xf]
        %v2079 = vld [vmem:[%s791 + $0x24] sm:$0xf]
        %v2080 = vld [vmem:[%s791 + $0x28] sm:$0xf]
        %v2081 = vld [vmem:[%s791 + $0x2c] sm:$0xf]
        %v2082 = vld [vmem:[%s791 + $0x30] sm:$0xf]
        %v2083 = vld [vmem:[%s791 + $0x34] sm:$0xf]
        %v2084 = vld [vmem:[%s791 + $0x38] sm:$0xf]
        %v2085 = vld [vmem:[%s791 + $0x3c] sm:$0xf]
        %v2086 = vld [vmem:[#allocation4] sm:$0xff]
        %v2087 = vld [vmem:[#allocation4 + $0x8] sm:$0xff]
        %v2088 = vld [vmem:[#allocation4 + $0x10] sm:$0xff]
        %v2089 = vld [vmem:[#allocation4 + $0x18] sm:$0xff]
        %v2090 = vld [vmem:[#allocation4 + $0x20] sm:$0xff]
        %v2091 = vld [vmem:[#allocation4 + $0x28] sm:$0xff]
        %v2092 = vld [vmem:[#allocation4 + $0x30] sm:$0xff]
        %v2093 = vld [vmem:[#allocation4 + $0x38] sm:$0xff]
        %v2094 = vld [vmem:[#allocation4 + $0x40] sm:$0xff]
        %v2095 = vld [vmem:[#allocation4 + $0x48] sm:$0xff]
        %v2096 = vld [vmem:[#allocation4 + $0x50] sm:$0xff]
        %v2097 = vld [vmem:[#allocation4 + $0x58] sm:$0xff]
        %v2098 = vld [vmem:[#allocation4 + $0x60] sm:$0xff]
        %v2099 = vld [vmem:[#allocation4 + $0x68] sm:$0xff]
        %v2100 = vld [vmem:[#allocation4 + $0x70] sm:$0xff]
        %v2101 = vld [vmem:[#allocation4 + $0x78] sm:$0xff]
        %v2102 = vld [vmem:[#allocation4 + $0x80] sm:$0xff]
        %v2103 = vld [vmem:[#allocation4 + $0x88] sm:$0xff]
        %v2104 = vld [vmem:[#allocation4 + $0x90] sm:$0xff]
        %v2105 = vld [vmem:[#allocation4 + $0x98] sm:$0xff]
        %v2106 = vld [vmem:[#allocation4 + $0xa0] sm:$0xff]
        %v2107 = vld [vmem:[#allocation4 + $0xa8] sm:$0xff]
        %v2108 = vld [vmem:[#allocation4 + $0xb0] sm:$0xff]
        %v2109 = vld [vmem:[#allocation4 + $0xb8] sm:$0xff]
        %v2110 = vld [vmem:[#allocation4 + $0xc0] sm:$0xff]
        %v2111 = vld [vmem:[#allocation4 + $0xc8] sm:$0xff]
        %v2112 = vld [vmem:[#allocation4 + $0xd0] sm:$0xff]
        %v2113 = vld [vmem:[#allocation4 + $0xd8] sm:$0xff]
        %v2114 = vld [vmem:[#allocation4 + $0xe0] sm:$0xff]
        %v2115 = vld [vmem:[#allocation4 + $0xe8] sm:$0xff]
        %v2116 = vld [vmem:[#allocation4 + $0xf0] sm:$0xff]
        %v2117 = vld [vmem:[#allocation4 + $0xf8] sm:$0xff]
        %v2118 = vld [vmem:[#allocation4 + $0x100] sm:$0xff]
        %v2119 = vld [vmem:[#allocation4 + $0x108] sm:$0xff]
        %v2120 = vld [vmem:[#allocation4 + $0x110] sm:$0xff]
        %v2121 = vld [vmem:[#allocation4 + $0x118] sm:$0xff]
        %v2122 = vld [vmem:[#allocation4 + $0x120] sm:$0xff]
        %v2123 = vld [vmem:[#allocation4 + $0x128] sm:$0xff]
        %v2124 = vld [vmem:[#allocation4 + $0x130] sm:$0xff]
        %v2125 = vld [vmem:[#allocation4 + $0x138] sm:$0xff]
        %v2126 = vld [vmem:[#allocation4 + $0x140] sm:$0xff]
        %v2127 = vld [vmem:[#allocation4 + $0x148] sm:$0xff]
        %v2128 = vld [vmem:[#allocation4 + $0x150] sm:$0xff]
        %v2129 = vld [vmem:[#allocation4 + $0x158] sm:$0xff]
        %v2130 = vld [vmem:[#allocation4 + $0x160] sm:$0xff]
        %v2131 = vld [vmem:[#allocation4 + $0x168] sm:$0xff]
        %v2132 = vld [vmem:[#allocation4 + $0x170] sm:$0xff]
        %v2133 = vld [vmem:[#allocation4 + $0x178] sm:$0xff]
        %v2150 = vunpack.c.l.b16 %v2054
        %v2151 = vunpack.c.l.b16 %v2055
        %v2152 = vunpack.c.l.b16 %v2056
        %v2153 = vunpack.c.l.b16 %v2057
        %v2154 = vunpack.c.l.b16 %v2058
        %v2155 = vunpack.c.l.b16 %v2059
        %v2156 = vunpack.c.l.b16 %v2060
        %v2157 = vunpack.c.l.b16 %v2061
        %v2158 = vunpack.c.l.b16 %v2062
        %v2159 = vunpack.c.l.b16 %v2063
        %v2160 = vunpack.c.l.b16 %v2064
        %v2161 = vunpack.c.l.b16 %v2065
        %v2162 = vunpack.c.l.b16 %v2066
        %v2163 = vunpack.c.l.b16 %v2067
        %v2164 = vunpack.c.l.b16 %v2068
        %v2165 = vunpack.c.l.b16 %v2069
        %v2166 = vpack.c.b16 %v2151, %v2150
        %v2167 = vpack.c.b16 %v2153, %v2152
        %v2168 = vpack.c.b16 %v2155, %v2154
        %v2169 = vpack.c.b16 %v2157, %v2156
        %v2170 = vpack.c.b16 %v2159, %v2158
        %v2171 = vpack.c.b16 %v2161, %v2160
        %v2172 = vpack.c.b16 %v2163, %v2162
        %v2173 = vpack.c.b16 %v2165, %v2164
        %v2230 = vunpack.c.l.b16 %v2086
        %v2231 = vunpack.c.h.b16 %v2086
        %v2232 = vunpack.c.l.b16 %v2087
        %v2233 = vunpack.c.h.b16 %v2087
        %v2234 = vunpack.c.l.b16 %v2088
        %v2235 = vunpack.c.h.b16 %v2088
        %v2236 = vunpack.c.l.b16 %v2089
        %v2237 = vunpack.c.h.b16 %v2089
        %v2238 = vunpack.c.l.b16 %v2090
        %v2239 = vunpack.c.h.b16 %v2090
        %v2240 = vunpack.c.l.b16 %v2091
        %v2241 = vunpack.c.h.b16 %v2091
        %v2242 = vunpack.c.l.b16 %v2092
        %v2243 = vunpack.c.h.b16 %v2092
        %v2244 = vunpack.c.l.b16 %v2093
        %v2245 = vunpack.c.h.b16 %v2093
        %v2246 = vunpack.c.l.b16 %v2094
        %v2247 = vunpack.c.h.b16 %v2094
        %v2248 = vunpack.c.l.b16 %v2095
        %v2249 = vunpack.c.h.b16 %v2095
        %v2250 = vunpack.c.l.b16 %v2096
        %v2251 = vunpack.c.h.b16 %v2096
        %v2252 = vunpack.c.l.b16 %v2097
        %v2253 = vunpack.c.h.b16 %v2097
        %v2254 = vunpack.c.l.b16 %v2098
        %v2255 = vunpack.c.h.b16 %v2098
        %v2256 = vunpack.c.l.b16 %v2099
        %v2257 = vunpack.c.h.b16 %v2099
        %v2258 = vunpack.c.l.b16 %v2100
        %v2259 = vunpack.c.h.b16 %v2100
        %v2260 = vunpack.c.l.b16 %v2101
        %v2261 = vunpack.c.h.b16 %v2101
        %v2262 = vunpack.c.l.b16 %v2102
        %v2263 = vunpack.c.h.b16 %v2102
        %v2264 = vunpack.c.l.b16 %v2103
        %v2265 = vunpack.c.h.b16 %v2103
        %v2266 = vunpack.c.l.b16 %v2104
        %v2267 = vunpack.c.h.b16 %v2104
        %v2268 = vunpack.c.l.b16 %v2105
        %v2269 = vunpack.c.h.b16 %v2105
        %v2270 = vunpack.c.l.b16 %v2106
        %v2271 = vunpack.c.h.b16 %v2106
        %v2272 = vunpack.c.l.b16 %v2107
        %v2273 = vunpack.c.h.b16 %v2107
        %v2274 = vunpack.c.l.b16 %v2108
        %v2275 = vunpack.c.h.b16 %v2108
        %v2276 = vunpack.c.l.b16 %v2109
        %v2277 = vunpack.c.h.b16 %v2109
        %v2278 = vunpack.c.l.b16 %v2110
        %v2279 = vunpack.c.h.b16 %v2110
        %v2280 = vunpack.c.l.b16 %v2111
        %v2281 = vunpack.c.h.b16 %v2111
        %v2282 = vunpack.c.l.b16 %v2112
        %v2283 = vunpack.c.h.b16 %v2112
        %v2284 = vunpack.c.l.b16 %v2113
        %v2285 = vunpack.c.h.b16 %v2113
        %v2286 = vunpack.c.l.b16 %v2114
        %v2287 = vunpack.c.h.b16 %v2114
        %v2288 = vunpack.c.l.b16 %v2115
        %v2289 = vunpack.c.h.b16 %v2115
        %v2290 = vunpack.c.l.b16 %v2116
        %v2291 = vunpack.c.h.b16 %v2116
        %v2292 = vunpack.c.l.b16 %v2117
        %v2293 = vunpack.c.h.b16 %v2117
        %v2294 = vunpack.c.l.b16 %v2118
        %v2295 = vunpack.c.h.b16 %v2118
        %v2296 = vunpack.c.l.b16 %v2119
        %v2297 = vunpack.c.h.b16 %v2119
        %v2298 = vunpack.c.l.b16 %v2120
        %v2299 = vunpack.c.h.b16 %v2120
        %v2300 = vunpack.c.l.b16 %v2121
        %v2301 = vunpack.c.h.b16 %v2121
        %v2302 = vunpack.c.l.b16 %v2122
        %v2303 = vunpack.c.h.b16 %v2122
        %v2304 = vunpack.c.l.b16 %v2123
        %v2305 = vunpack.c.h.b16 %v2123
        %v2306 = vunpack.c.l.b16 %v2124
        %v2307 = vunpack.c.h.b16 %v2124
        %v2308 = vunpack.c.l.b16 %v2125
        %v2309 = vunpack.c.h.b16 %v2125
        %v2310 = vunpack.c.l.b16 %v2126
        %v2311 = vunpack.c.h.b16 %v2126
        %v2312 = vunpack.c.l.b16 %v2127
        %v2313 = vunpack.c.h.b16 %v2127
        %v2314 = vunpack.c.l.b16 %v2128
        %v2315 = vunpack.c.h.b16 %v2128
        %v2316 = vunpack.c.l.b16 %v2129
        %v2317 = vunpack.c.h.b16 %v2129
        %v2318 = vunpack.c.l.b16 %v2130
        %v2319 = vunpack.c.h.b16 %v2130
        %v2320 = vunpack.c.l.b16 %v2131
        %v2321 = vunpack.c.h.b16 %v2131
        %v2322 = vunpack.c.l.b16 %v2132
        %v2323 = vunpack.c.h.b16 %v2132
        %v2324 = vunpack.c.l.b16 %v2133
        %v2325 = vunpack.c.h.b16 %v2133
        %v2326 = vpack.c.b16 %v2236, %v2230
        %v2327 = vpack.c.b16 %v2237, %v2231
        %v2328 = vpack.c.b16 %v2238, %v2232
        %v2329 = vpack.c.b16 %v2239, %v2233
        %v2330 = vpack.c.b16 %v2240, %v2234
        %v2331 = vpack.c.b16 %v2241, %v2235
        %v2332 = vpack.c.b16 %v2248, %v2242
        %v2333 = vpack.c.b16 %v2249, %v2243
        %v2334 = vpack.c.b16 %v2250, %v2244
        %v2335 = vpack.c.b16 %v2251, %v2245
        %v2336 = vpack.c.b16 %v2252, %v2246
        %v2337 = vpack.c.b16 %v2253, %v2247
        %v2338 = vpack.c.b16 %v2260, %v2254
        %v2339 = vpack.c.b16 %v2261, %v2255
        %v2340 = vpack.c.b16 %v2262, %v2256
        %v2341 = vpack.c.b16 %v2263, %v2257
        %v2342 = vpack.c.b16 %v2264, %v2258
        %v2343 = vpack.c.b16 %v2265, %v2259
        %v2344 = vpack.c.b16 %v2272, %v2266
        %v2345 = vpack.c.b16 %v2273, %v2267
        %v2346 = vpack.c.b16 %v2274, %v2268
        %v2347 = vpack.c.b16 %v2275, %v2269
        %v2348 = vpack.c.b16 %v2276, %v2270
        %v2349 = vpack.c.b16 %v2277, %v2271
        %v2350 = vpack.c.b16 %v2284, %v2278
        %v2351 = vpack.c.b16 %v2285, %v2279
        %v2352 = vpack.c.b16 %v2286, %v2280
        %v2353 = vpack.c.b16 %v2287, %v2281
        %v2354 = vpack.c.b16 %v2288, %v2282
        %v2355 = vpack.c.b16 %v2289, %v2283
        %v2356 = vpack.c.b16 %v2296, %v2290
        %v2357 = vpack.c.b16 %v2297, %v2291
        %v2358 = vpack.c.b16 %v2298, %v2292
        %v2359 = vpack.c.b16 %v2299, %v2293
        %v2360 = vpack.c.b16 %v2300, %v2294
        %v2361 = vpack.c.b16 %v2301, %v2295
        %v2362 = vpack.c.b16 %v2308, %v2302
        %v2363 = vpack.c.b16 %v2309, %v2303
        %v2364 = vpack.c.b16 %v2310, %v2304
        %v2365 = vpack.c.b16 %v2311, %v2305
        %v2366 = vpack.c.b16 %v2312, %v2306
        %v2367 = vpack.c.b16 %v2313, %v2307
        %v2368 = vpack.c.b16 %v2320, %v2314
        %v2369 = vpack.c.b16 %v2321, %v2315
        %v2370 = vpack.c.b16 %v2322, %v2316
        %v2371 = vpack.c.b16 %v2323, %v2317
        %v2372 = vpack.c.b16 %v2324, %v2318
        %v2373 = vpack.c.b16 %v2325, %v2319
        %2422 = vmatpush.bf16.msra.mxu0 %v2368
        %2423 = vmatpush.bf16.msra.mxu0 %v2362
        %2424 = vmatpush.bf16.msra.mxu0 %v2356
        %2425 = vmatpush.bf16.msra.mxu0 %v2350
        %2426 = vmatpush.bf16.msra.mxu0 %v2344
        %2427 = vmatpush.bf16.msra.mxu0 %v2338
        %2428 = vmatpush.bf16.msra.mxu0 %v2332
        %2429 = vmatpush.bf16.msra.mxu0 %v2326
        %2430 = vmatmul.bf16.gmra.mxu0 %v2166
        %v2431 = vpop.f32.mrf.mxu0
        %v2432 = vadd.f32 0.0, %v2431
        %v2433 = vpop.f32.mrf.mxu0
        %v2434 = vadd.f32 0.0, %v2433
        %2435 = vmatmul.bf16.gmra.mxu0 %v2167
        %v2436 = vpop.f32.mrf.mxu0
        %v2437 = vadd.f32 0.0, %v2436
        %v2438 = vpop.f32.mrf.mxu0
        %v2439 = vadd.f32 0.0, %v2438
        %2440 = vmatmul.bf16.gmra.mxu0 %v2168
        %v2441 = vpop.f32.mrf.mxu0
        %v2442 = vadd.f32 0.0, %v2441
        %v2443 = vpop.f32.mrf.mxu0
        %v2444 = vadd.f32 0.0, %v2443
        %2445 = vmatmul.bf16.gmra.mxu0 %v2169
        %v2446 = vpop.f32.mrf.mxu0
        %v2447 = vadd.f32 0.0, %v2446
        %v2448 = vpop.f32.mrf.mxu0
        %v2449 = vadd.f32 0.0, %v2448
        %2450 = vmatmul.bf16.gmra.mxu0 %v2170
        %v2451 = vpop.f32.mrf.mxu0
        %v2452 = vadd.f32 0.0, %v2451
        %v2453 = vpop.f32.mrf.mxu0
        %v2454 = vadd.f32 0.0, %v2453
        %2455 = vmatmul.bf16.gmra.mxu0 %v2171
        %v2456 = vpop.f32.mrf.mxu0
        %v2457 = vadd.f32 0.0, %v2456
        %v2458 = vpop.f32.mrf.mxu0
        %v2459 = vadd.f32 0.0, %v2458
        %2460 = vmatmul.bf16.gmra.mxu0 %v2172
        %v2461 = vpop.f32.mrf.mxu0
        %v2462 = vadd.f32 0.0, %v2461
        %v2463 = vpop.f32.mrf.mxu0
        %v2464 = vadd.f32 0.0, %v2463
        %2465 = vmatmul.bf16.gmra.mxu0 %v2173
        %v2466 = vpop.f32.mrf.mxu0
        %v2467 = vadd.f32 0.0, %v2466
        %v2468 = vpop.f32.mrf.mxu0
        %v2469 = vadd.f32 0.0, %v2468
        %2470 = vdwg.mxu0
        %2471 = vmatpush.bf16.msra.mxu0 %v2369
        %2472 = vmatpush.bf16.msra.mxu0 %v2363
        %2473 = vmatpush.bf16.msra.mxu0 %v2357
        %2474 = vmatpush.bf16.msra.mxu0 %v2351
        %2475 = vmatpush.bf16.msra.mxu0 %v2345
        %2476 = vmatpush.bf16.msra.mxu0 %v2339
        %2477 = vmatpush.bf16.msra.mxu0 %v2333
        %2478 = vmatpush.bf16.msra.mxu0 %v2327
        %2479 = vmatmul.bf16.gmra.mxu0 %v2166
        %v2480 = vpop.f32.mrf.mxu0
        %v2481 = vadd.f32 0.0, %v2480
        %v2482 = vpop.f32.mrf.mxu0
        %v2483 = vadd.f32 0.0, %v2482
        %2484 = vmatmul.bf16.gmra.mxu0 %v2167
        %v2485 = vpop.f32.mrf.mxu0
        %v2486 = vadd.f32 0.0, %v2485
        %v2487 = vpop.f32.mrf.mxu0
        %v2488 = vadd.f32 0.0, %v2487
        %2489 = vmatmul.bf16.gmra.mxu0 %v2168
        %v2490 = vpop.f32.mrf.mxu0
        %v2491 = vadd.f32 0.0, %v2490
        %v2492 = vpop.f32.mrf.mxu0
        %v2493 = vadd.f32 0.0, %v2492
        %2494 = vmatmul.bf16.gmra.mxu0 %v2169
        %v2495 = vpop.f32.mrf.mxu0
        %v2496 = vadd.f32 0.0, %v2495
        %v2497 = vpop.f32.mrf.mxu0
        %v2498 = vadd.f32 0.0, %v2497
        %2499 = vmatmul.bf16.gmra.mxu0 %v2170
        %v2500 = vpop.f32.mrf.mxu0
        %v2501 = vadd.f32 0.0, %v2500
        %v2502 = vpop.f32.mrf.mxu0
        %v2503 = vadd.f32 0.0, %v2502
        %2504 = vmatmul.bf16.gmra.mxu0 %v2171
        %v2505 = vpop.f32.mrf.mxu0
        %v2506 = vadd.f32 0.0, %v2505
        %v2507 = vpop.f32.mrf.mxu0
        %v2508 = vadd.f32 0.0, %v2507
        %2509 = vmatmul.bf16.gmra.mxu0 %v2172
        %v2510 = vpop.f32.mrf.mxu0
        %v2511 = vadd.f32 0.0, %v2510
        %v2512 = vpop.f32.mrf.mxu0
        %v2513 = vadd.f32 0.0, %v2512
        %2514 = vmatmul.bf16.gmra.mxu0 %v2173
        %v2515 = vpop.f32.mrf.mxu0
        %v2516 = vadd.f32 0.0, %v2515
        %v2517 = vpop.f32.mrf.mxu0
        %v2518 = vadd.f32 0.0, %v2517
        %2519 = vdwg.mxu0
        %2520 = vmatpush.bf16.msra.mxu0 %v2370
        %2521 = vmatpush.bf16.msra.mxu0 %v2364
        %2522 = vmatpush.bf16.msra.mxu0 %v2358
        %2523 = vmatpush.bf16.msra.mxu0 %v2352
        %2524 = vmatpush.bf16.msra.mxu0 %v2346
        %2525 = vmatpush.bf16.msra.mxu0 %v2340
        %2526 = vmatpush.bf16.msra.mxu0 %v2334
        %2527 = vmatpush.bf16.msra.mxu0 %v2328
        %2528 = vmatmul.bf16.gmra.mxu0 %v2166
        %v2529 = vpop.f32.mrf.mxu0
        %v2530 = vadd.f32 0.0, %v2529
        %v2531 = vpop.f32.mrf.mxu0
        %v2532 = vadd.f32 0.0, %v2531
        %2533 = vmatmul.bf16.gmra.mxu0 %v2167
        %v2534 = vpop.f32.mrf.mxu0
        %v2535 = vadd.f32 0.0, %v2534
        %v2536 = vpop.f32.mrf.mxu0
        %v2537 = vadd.f32 0.0, %v2536
        %2538 = vmatmul.bf16.gmra.mxu0 %v2168
        %v2539 = vpop.f32.mrf.mxu0
        %v2540 = vadd.f32 0.0, %v2539
        %v2541 = vpop.f32.mrf.mxu0
        %v2542 = vadd.f32 0.0, %v2541
        %2543 = vmatmul.bf16.gmra.mxu0 %v2169
        %v2544 = vpop.f32.mrf.mxu0
        %v2545 = vadd.f32 0.0, %v2544
        %v2546 = vpop.f32.mrf.mxu0
        %v2547 = vadd.f32 0.0, %v2546
        %2548 = vmatmul.bf16.gmra.mxu0 %v2170
        %v2549 = vpop.f32.mrf.mxu0
        %v2550 = vadd.f32 0.0, %v2549
        %v2551 = vpop.f32.mrf.mxu0
        %v2552 = vadd.f32 0.0, %v2551
        %2553 = vmatmul.bf16.gmra.mxu0 %v2171
        %v2554 = vpop.f32.mrf.mxu0
        %v2555 = vadd.f32 0.0, %v2554
        %v2556 = vpop.f32.mrf.mxu0
        %v2557 = vadd.f32 0.0, %v2556
        %2558 = vmatmul.bf16.gmra.mxu0 %v2172
        %v2559 = vpop.f32.mrf.mxu0
        %v2560 = vadd.f32 0.0, %v2559
        %v2561 = vpop.f32.mrf.mxu0
        %v2562 = vadd.f32 0.0, %v2561
        %2563 = vmatmul.bf16.gmra.mxu0 %v2173
        %v2564 = vpop.f32.mrf.mxu0
        %v2565 = vadd.f32 0.0, %v2564
        %v2566 = vpop.f32.mrf.mxu0
        %v2567 = vadd.f32 0.0, %v2566
        %2568 = vdwg.mxu0
        %2569 = vmatpush.bf16.msra.mxu0 %v2371
        %2570 = vmatpush.bf16.msra.mxu0 %v2365
        %2571 = vmatpush.bf16.msra.mxu0 %v2359
        %2572 = vmatpush.bf16.msra.mxu0 %v2353
        %2573 = vmatpush.bf16.msra.mxu0 %v2347
        %2574 = vmatpush.bf16.msra.mxu0 %v2341
        %2575 = vmatpush.bf16.msra.mxu0 %v2335
        %2576 = vmatpush.bf16.msra.mxu0 %v2329
        %2577 = vmatmul.bf16.gmra.mxu0 %v2166
        %v2578 = vpop.f32.mrf.mxu0
        %v2579 = vadd.f32 0.0, %v2578
        %v2580 = vpop.f32.mrf.mxu0
        %v2581 = vadd.f32 0.0, %v2580
        %2582 = vmatmul.bf16.gmra.mxu0 %v2167
        %v2583 = vpop.f32.mrf.mxu0
        %v2584 = vadd.f32 0.0, %v2583
        %v2585 = vpop.f32.mrf.mxu0
        %v2586 = vadd.f32 0.0, %v2585
        %2587 = vmatmul.bf16.gmra.mxu0 %v2168
        %v2588 = vpop.f32.mrf.mxu0
        %v2589 = vadd.f32 0.0, %v2588
        %v2590 = vpop.f32.mrf.mxu0
        %v2591 = vadd.f32 0.0, %v2590
        %2592 = vmatmul.bf16.gmra.mxu0 %v2169
        %v2593 = vpop.f32.mrf.mxu0
        %v2594 = vadd.f32 0.0, %v2593
        %v2595 = vpop.f32.mrf.mxu0
        %v2596 = vadd.f32 0.0, %v2595
        %2597 = vmatmul.bf16.gmra.mxu0 %v2170
        %v2598 = vpop.f32.mrf.mxu0
        %v2599 = vadd.f32 0.0, %v2598
        %v2600 = vpop.f32.mrf.mxu0
        %v2601 = vadd.f32 0.0, %v2600
        %2602 = vmatmul.bf16.gmra.mxu0 %v2171
        %v2603 = vpop.f32.mrf.mxu0
        %v2604 = vadd.f32 0.0, %v2603
        %v2605 = vpop.f32.mrf.mxu0
        %v2606 = vadd.f32 0.0, %v2605
        %2607 = vmatmul.bf16.gmra.mxu0 %v2172
        %v2608 = vpop.f32.mrf.mxu0
        %v2609 = vadd.f32 0.0, %v2608
        %v2610 = vpop.f32.mrf.mxu0
        %v2611 = vadd.f32 0.0, %v2610
        %2612 = vmatmul.bf16.gmra.mxu0 %v2173
        %v2613 = vpop.f32.mrf.mxu0
        %v2614 = vadd.f32 0.0, %v2613
        %v2615 = vpop.f32.mrf.mxu0
        %v2616 = vadd.f32 0.0, %v2615
        %2617 = vdwg.mxu0
        %2618 = vmatpush.bf16.msra.mxu0 %v2372
        %2619 = vmatpush.bf16.msra.mxu0 %v2366
        %2620 = vmatpush.bf16.msra.mxu0 %v2360
        %2621 = vmatpush.bf16.msra.mxu0 %v2354
        %2622 = vmatpush.bf16.msra.mxu0 %v2348
        %2623 = vmatpush.bf16.msra.mxu0 %v2342
        %2624 = vmatpush.bf16.msra.mxu0 %v2336
        %2625 = vmatpush.bf16.msra.mxu0 %v2330
        %2626 = vmatmul.bf16.gmra.mxu0 %v2166
        %v2627 = vpop.f32.mrf.mxu0
        %v2628 = vadd.f32 0.0, %v2627
        %v2629 = vpop.f32.mrf.mxu0
        %v2630 = vadd.f32 0.0, %v2629
        %2631 = vmatmul.bf16.gmra.mxu0 %v2167
        %v2632 = vpop.f32.mrf.mxu0
        %v2633 = vadd.f32 0.0, %v2632
        %v2634 = vpop.f32.mrf.mxu0
        %v2635 = vadd.f32 0.0, %v2634
        %2636 = vmatmul.bf16.gmra.mxu0 %v2168
        %v2637 = vpop.f32.mrf.mxu0
        %v2638 = vadd.f32 0.0, %v2637
        %v2639 = vpop.f32.mrf.mxu0
        %v2640 = vadd.f32 0.0, %v2639
        %2641 = vmatmul.bf16.gmra.mxu0 %v2169
        %v2642 = vpop.f32.mrf.mxu0
        %v2643 = vadd.f32 0.0, %v2642
        %v2644 = vpop.f32.mrf.mxu0
        %v2645 = vadd.f32 0.0, %v2644
        %2646 = vmatmul.bf16.gmra.mxu0 %v2170
        %v2647 = vpop.f32.mrf.mxu0
        %v2648 = vadd.f32 0.0, %v2647
        %v2649 = vpop.f32.mrf.mxu0
        %v2650 = vadd.f32 0.0, %v2649
        %2651 = vmatmul.bf16.gmra.mxu0 %v2171
        %v2652 = vpop.f32.mrf.mxu0
        %v2653 = vadd.f32 0.0, %v2652
        %v2654 = vpop.f32.mrf.mxu0
        %v2655 = vadd.f32 0.0, %v2654
        %2656 = vmatmul.bf16.gmra.mxu0 %v2172
        %v2657 = vpop.f32.mrf.mxu0
        %v2658 = vadd.f32 0.0, %v2657
        %v2659 = vpop.f32.mrf.mxu0
        %v2660 = vadd.f32 0.0, %v2659
        %2661 = vmatmul.bf16.gmra.mxu0 %v2173
        %v2662 = vpop.f32.mrf.mxu0
        %v2663 = vadd.f32 0.0, %v2662
        %v2664 = vpop.f32.mrf.mxu0
        %v2665 = vadd.f32 0.0, %v2664
        %2666 = vdwg.mxu0
        %2667 = vmatpush.bf16.msra.mxu0 %v2373
        %2668 = vmatpush.bf16.msra.mxu0 %v2367
        %2669 = vmatpush.bf16.msra.mxu0 %v2361
        %2670 = vmatpush.bf16.msra.mxu0 %v2355
        %2671 = vmatpush.bf16.msra.mxu0 %v2349
        %2672 = vmatpush.bf16.msra.mxu0 %v2343
        %2673 = vmatpush.bf16.msra.mxu0 %v2337
        %2674 = vmatpush.bf16.msra.mxu0 %v2331
        %2675 = vmatmul.bf16.gmra.mxu0 %v2166
        %v2676 = vpop.f32.mrf.mxu0
        %v2677 = vadd.f32 0.0, %v2676
        %v2678 = vpop.f32.mrf.mxu0
        %v2679 = vadd.f32 0.0, %v2678
        %2680 = vmatmul.bf16.gmra.mxu0 %v2167
        %v2681 = vpop.f32.mrf.mxu0
        %v2682 = vadd.f32 0.0, %v2681
        %v2683 = vpop.f32.mrf.mxu0
        %v2684 = vadd.f32 0.0, %v2683
        %2685 = vmatmul.bf16.gmra.mxu0 %v2168
        %v2686 = vpop.f32.mrf.mxu0
        %v2687 = vadd.f32 0.0, %v2686
        %v2688 = vpop.f32.mrf.mxu0
        %v2689 = vadd.f32 0.0, %v2688
        %2690 = vmatmul.bf16.gmra.mxu0 %v2169
        %v2691 = vpop.f32.mrf.mxu0
        %v2692 = vadd.f32 0.0, %v2691
        %v2693 = vpop.f32.mrf.mxu0
        %v2694 = vadd.f32 0.0, %v2693
        %2695 = vmatmul.bf16.gmra.mxu0 %v2170
        %v2696 = vpop.f32.mrf.mxu0
        %v2697 = vadd.f32 0.0, %v2696
        %v2698 = vpop.f32.mrf.mxu0
        %v2699 = vadd.f32 0.0, %v2698
        %2700 = vmatmul.bf16.gmra.mxu0 %v2171
        %v2701 = vpop.f32.mrf.mxu0
        %v2702 = vadd.f32 0.0, %v2701
        %v2703 = vpop.f32.mrf.mxu0
        %v2704 = vadd.f32 0.0, %v2703
        %2705 = vmatmul.bf16.gmra.mxu0 %v2172
        %v2706 = vpop.f32.mrf.mxu0
        %v2707 = vadd.f32 0.0, %v2706
        %v2708 = vpop.f32.mrf.mxu0
        %v2709 = vadd.f32 0.0, %v2708
        %2710 = vmatmul.bf16.gmra.mxu0 %v2173
        %v2711 = vpop.f32.mrf.mxu0
        %v2712 = vadd.f32 0.0, %v2711
        %v2713 = vpop.f32.mrf.mxu0
        %v2714 = vadd.f32 0.0, %v2713
        %2715 = vdwg.mxu0
        %v2716 = vld [vmem:[%s811] sm:$0xff]
        %v2717 = vld [vmem:[%s811 + $0x8] sm:$0xf]
        %v2718 = vld [vmem:[%s811 + $0xc] sm:$0xff]
        %v2719 = vld [vmem:[%s811 + $0x14] sm:$0xf]
        %v2720 = vld [vmem:[%s811 + $0x18] sm:$0xff]
        %v2721 = vld [vmem:[%s811 + $0x20] sm:$0xf]
        %v2722 = vld [vmem:[%s811 + $0x24] sm:$0xff]
        %v2723 = vld [vmem:[%s811 + $0x2c] sm:$0xf]
        %v2724 = vld [vmem:[%s811 + $0x30] sm:$0xff]
        %v2725 = vld [vmem:[%s811 + $0x38] sm:$0xf]
        %v2726 = vld [vmem:[%s811 + $0x3c] sm:$0xff]
        %v2727 = vld [vmem:[%s811 + $0x44] sm:$0xf]
        %v2728 = vld [vmem:[%s811 + $0x48] sm:$0xff]
        %v2729 = vld [vmem:[%s811 + $0x50] sm:$0xf]
        %v2730 = vld [vmem:[%s811 + $0x54] sm:$0xff]
        %v2731 = vld [vmem:[%s811 + $0x5c] sm:$0xf]
        %v2732 = vld [vmem:[%s811 + $0x60] sm:$0xff]
        %v2733 = vld [vmem:[%s811 + $0x68] sm:$0xf]
        %v2734 = vld [vmem:[%s811 + $0x6c] sm:$0xff]
        %v2735 = vld [vmem:[%s811 + $0x74] sm:$0xf]
        %v2736 = vld [vmem:[%s811 + $0x78] sm:$0xff]
        %v2737 = vld [vmem:[%s811 + $0x80] sm:$0xf]
        %v2738 = vld [vmem:[%s811 + $0x84] sm:$0xff]
        %v2739 = vld [vmem:[%s811 + $0x8c] sm:$0xf]
        %v2740 = vld [vmem:[%s811 + $0x90] sm:$0xff]
        %v2741 = vld [vmem:[%s811 + $0x98] sm:$0xf]
        %v2742 = vld [vmem:[%s811 + $0x9c] sm:$0xff]
        %v2743 = vld [vmem:[%s811 + $0xa4] sm:$0xf]
        %v2744 = vld [vmem:[%s811 + $0xa8] sm:$0xff]
        %v2745 = vld [vmem:[%s811 + $0xb0] sm:$0xf]
        %v2746 = vld [vmem:[%s811 + $0xb4] sm:$0xff]
        %v2747 = vld [vmem:[%s811 + $0xbc] sm:$0xf]
        %v2748 = vunpack.c.l.bf16 %v2716
        %v2749 = vunpack.c.h.bf16 %v2716
        %v2750 = vunpack.c.l.bf16 %v2717
        %v2751 = vunpack.c.l.bf16 %v2718
        %v2752 = vunpack.c.h.bf16 %v2718
        %v2753 = vunpack.c.l.bf16 %v2719
        %v2754 = vunpack.c.l.bf16 %v2720
        %v2755 = vunpack.c.h.bf16 %v2720
        %v2756 = vunpack.c.l.bf16 %v2721
        %v2757 = vunpack.c.l.bf16 %v2722
        %v2758 = vunpack.c.h.bf16 %v2722
        %v2759 = vunpack.c.l.bf16 %v2723
        %v2760 = vunpack.c.l.bf16 %v2724
        %v2761 = vunpack.c.h.bf16 %v2724
        %v2762 = vunpack.c.l.bf16 %v2725
        %v2763 = vunpack.c.l.bf16 %v2726
        %v2764 = vunpack.c.h.bf16 %v2726
        %v2765 = vunpack.c.l.bf16 %v2727
        %v2766 = vunpack.c.l.bf16 %v2728
        %v2767 = vunpack.c.h.bf16 %v2728
        %v2768 = vunpack.c.l.bf16 %v2729
        %v2769 = vunpack.c.l.bf16 %v2730
        %v2770 = vunpack.c.h.bf16 %v2730
        %v2771 = vunpack.c.l.bf16 %v2731
        %v2772 = vunpack.c.l.bf16 %v2732
        %v2773 = vunpack.c.h.bf16 %v2732
        %v2774 = vunpack.c.l.bf16 %v2733
        %v2775 = vunpack.c.l.bf16 %v2734
        %v2776 = vunpack.c.h.bf16 %v2734
        %v2777 = vunpack.c.l.bf16 %v2735
        %v2778 = vunpack.c.l.bf16 %v2736
        %v2779 = vunpack.c.h.bf16 %v2736
        %v2780 = vunpack.c.l.bf16 %v2737
        %v2781 = vunpack.c.l.bf16 %v2738
        %v2782 = vunpack.c.h.bf16 %v2738
        %v2783 = vunpack.c.l.bf16 %v2739
        %v2784 = vunpack.c.l.bf16 %v2740
        %v2785 = vunpack.c.h.bf16 %v2740
        %v2786 = vunpack.c.l.bf16 %v2741
        %v2787 = vunpack.c.l.bf16 %v2742
        %v2788 = vunpack.c.h.bf16 %v2742
        %v2789 = vunpack.c.l.bf16 %v2743
        %v2790 = vunpack.c.l.bf16 %v2744
        %v2791 = vunpack.c.h.bf16 %v2744
        %v2792 = vunpack.c.l.bf16 %v2745
        %v2793 = vunpack.c.l.bf16 %v2746
        %v2794 = vunpack.c.h.bf16 %v2746
        %v2795 = vunpack.c.l.bf16 %v2747
        %v2796 = vmul.f32 %v2748, %v2432
        %v2797 = vmul.f32 %v2749, %v2481
        %v2798 = vmul.f32 %v2750, %v2530
        %v2799 = vmul.f32 %v2751, %v2434
        %v2800 = vmul.f32 %v2752, %v2483
        %v2801 = vmul.f32 %v2753, %v2532
        %v2802 = vmul.f32 %v2754, %v2437
        %v2803 = vmul.f32 %v2755, %v2486
        %v2804 = vmul.f32 %v2756, %v2535
        %v2805 = vmul.f32 %v2757, %v2439
        %v2806 = vmul.f32 %v2758, %v2488
        %v2807 = vmul.f32 %v2759, %v2537
        %v2808 = vmul.f32 %v2760, %v2442
        %v2809 = vmul.f32 %v2761, %v2491
        %v2810 = vmul.f32 %v2762, %v2540
        %v2811 = vmul.f32 %v2763, %v2444
        %v2812 = vmul.f32 %v2764, %v2493
        %v2813 = vmul.f32 %v2765, %v2542
        %v2814 = vmul.f32 %v2766, %v2447
        %v2815 = vmul.f32 %v2767, %v2496
        %v2816 = vmul.f32 %v2768, %v2545
        %v2817 = vmul.f32 %v2769, %v2449
        %v2818 = vmul.f32 %v2770, %v2498
        %v2819 = vmul.f32 %v2771, %v2547
        %v2820 = vmul.f32 %v2772, %v2452
        %v2821 = vmul.f32 %v2773, %v2501
        %v2822 = vmul.f32 %v2774, %v2550
        %v2823 = vmul.f32 %v2775, %v2454
        %v2824 = vmul.f32 %v2776, %v2503
        %v2825 = vmul.f32 %v2777, %v2552
        %v2826 = vmul.f32 %v2778, %v2457
        %v2827 = vmul.f32 %v2779, %v2506
        %v2828 = vmul.f32 %v2780, %v2555
        %v2829 = vmul.f32 %v2781, %v2459
        %v2830 = vmul.f32 %v2782, %v2508
        %v2831 = vmul.f32 %v2783, %v2557
        %v2832 = vmul.f32 %v2784, %v2462
        %v2833 = vmul.f32 %v2785, %v2511
        %v2834 = vmul.f32 %v2786, %v2560
        %v2835 = vmul.f32 %v2787, %v2464
        %v2836 = vmul.f32 %v2788, %v2513
        %v2837 = vmul.f32 %v2789, %v2562
        %v2838 = vmul.f32 %v2790, %v2467
        %v2839 = vmul.f32 %v2791, %v2516
        %v2840 = vmul.f32 %v2792, %v2565
        %v2841 = vmul.f32 %v2793, %v2469
        %v2842 = vmul.f32 %v2794, %v2518
        %v2843 = vmul.f32 %v2795, %v2567
        %v2844 = vld [vmem:[%s801] sm:$0xff]
        %v2845 = vld [vmem:[%s801 + $0x8] sm:$0xf]
        %v2846 = vld [vmem:[%s801 + $0xc] sm:$0xff]
        %v2847 = vld [vmem:[%s801 + $0x14] sm:$0xf]
        %v2848 = vld [vmem:[%s801 + $0x18] sm:$0xff]
        %v2849 = vld [vmem:[%s801 + $0x20] sm:$0xf]
        %v2850 = vld [vmem:[%s801 + $0x24] sm:$0xff]
        %v2851 = vld [vmem:[%s801 + $0x2c] sm:$0xf]
        %v2852 = vld [vmem:[%s801 + $0x30] sm:$0xff]
        %v2853 = vld [vmem:[%s801 + $0x38] sm:$0xf]
        %v2854 = vld [vmem:[%s801 + $0x3c] sm:$0xff]
        %v2855 = vld [vmem:[%s801 + $0x44] sm:$0xf]
        %v2856 = vld [vmem:[%s801 + $0x48] sm:$0xff]
        %v2857 = vld [vmem:[%s801 + $0x50] sm:$0xf]
        %v2858 = vld [vmem:[%s801 + $0x54] sm:$0xff]
        %v2859 = vld [vmem:[%s801 + $0x5c] sm:$0xf]
        %v2860 = vld [vmem:[%s801 + $0x60] sm:$0xff]
        %v2861 = vld [vmem:[%s801 + $0x68] sm:$0xf]
        %v2862 = vld [vmem:[%s801 + $0x6c] sm:$0xff]
        %v2863 = vld [vmem:[%s801 + $0x74] sm:$0xf]
        %v2864 = vld [vmem:[%s801 + $0x78] sm:$0xff]
        %v2865 = vld [vmem:[%s801 + $0x80] sm:$0xf]
        %v2866 = vld [vmem:[%s801 + $0x84] sm:$0xff]
        %v2867 = vld [vmem:[%s801 + $0x8c] sm:$0xf]
        %v2868 = vld [vmem:[%s801 + $0x90] sm:$0xff]
        %v2869 = vld [vmem:[%s801 + $0x98] sm:$0xf]
        %v2870 = vld [vmem:[%s801 + $0x9c] sm:$0xff]
        %v2871 = vld [vmem:[%s801 + $0xa4] sm:$0xf]
        %v2872 = vld [vmem:[%s801 + $0xa8] sm:$0xff]
        %v2873 = vld [vmem:[%s801 + $0xb0] sm:$0xf]
        %v2874 = vld [vmem:[%s801 + $0xb4] sm:$0xff]
        %v2875 = vld [vmem:[%s801 + $0xbc] sm:$0xf]
        %v2876 = vunpack.c.l.bf16 %v2844
        %v2877 = vunpack.c.h.bf16 %v2844
        %v2878 = vunpack.c.l.bf16 %v2845
        %v2879 = vunpack.c.l.bf16 %v2846
        %v2880 = vunpack.c.h.bf16 %v2846
        %v2881 = vunpack.c.l.bf16 %v2847
        %v2882 = vunpack.c.l.bf16 %v2848
        %v2883 = vunpack.c.h.bf16 %v2848
        %v2884 = vunpack.c.l.bf16 %v2849
        %v2885 = vunpack.c.l.bf16 %v2850
        %v2886 = vunpack.c.h.bf16 %v2850
        %v2887 = vunpack.c.l.bf16 %v2851
        %v2888 = vunpack.c.l.bf16 %v2852
        %v2889 = vunpack.c.h.bf16 %v2852
        %v2890 = vunpack.c.l.bf16 %v2853
        %v2891 = vunpack.c.l.bf16 %v2854
        %v2892 = vunpack.c.h.bf16 %v2854
        %v2893 = vunpack.c.l.bf16 %v2855
        %v2894 = vunpack.c.l.bf16 %v2856
        %v2895 = vunpack.c.h.bf16 %v2856
        %v2896 = vunpack.c.l.bf16 %v2857
        %v2897 = vunpack.c.l.bf16 %v2858
        %v2898 = vunpack.c.h.bf16 %v2858
        %v2899 = vunpack.c.l.bf16 %v2859
        %v2900 = vunpack.c.l.bf16 %v2860
        %v2901 = vunpack.c.h.bf16 %v2860
        %v2902 = vunpack.c.l.bf16 %v2861
        %v2903 = vunpack.c.l.bf16 %v2862
        %v2904 = vunpack.c.h.bf16 %v2862
        %v2905 = vunpack.c.l.bf16 %v2863
        %v2906 = vunpack.c.l.bf16 %v2864
        %v2907 = vunpack.c.h.bf16 %v2864
        %v2908 = vunpack.c.l.bf16 %v2865
        %v2909 = vunpack.c.l.bf16 %v2866
        %v2910 = vunpack.c.h.bf16 %v2866
        %v2911 = vunpack.c.l.bf16 %v2867
        %v2912 = vunpack.c.l.bf16 %v2868
        %v2913 = vunpack.c.h.bf16 %v2868
        %v2914 = vunpack.c.l.bf16 %v2869
        %v2915 = vunpack.c.l.bf16 %v2870
        %v2916 = vunpack.c.h.bf16 %v2870
        %v2917 = vunpack.c.l.bf16 %v2871
        %v2918 = vunpack.c.l.bf16 %v2872
        %v2919 = vunpack.c.h.bf16 %v2872
        %v2920 = vunpack.c.l.bf16 %v2873
        %v2921 = vunpack.c.l.bf16 %v2874
        %v2922 = vunpack.c.h.bf16 %v2874
        %v2923 = vunpack.c.l.bf16 %v2875
        %v2924 = vmul.f32 %v2797, %v2876
        %v2925 = vmul.f32 %v2797, %v2877
        %v2926 = vmul.f32 %v2797, %v2878
        %v2927 = vmul.f32 %v2800, %v2879
        %v2928 = vmul.f32 %v2800, %v2880
        %v2929 = vmul.f32 %v2800, %v2881
        %v2930 = vmul.f32 %v2803, %v2882
        %v2931 = vmul.f32 %v2803, %v2883
        %v2932 = vmul.f32 %v2803, %v2884
        %v2933 = vmul.f32 %v2806, %v2885
        %v2934 = vmul.f32 %v2806, %v2886
        %v2935 = vmul.f32 %v2806, %v2887
        %v2936 = vmul.f32 %v2809, %v2888
        %v2937 = vmul.f32 %v2809, %v2889
        %v2938 = vmul.f32 %v2809, %v2890
        %v2939 = vmul.f32 %v2812, %v2891
        %v2940 = vmul.f32 %v2812, %v2892
        %v2941 = vmul.f32 %v2812, %v2893
        %v2942 = vmul.f32 %v2815, %v2894
        %v2943 = vmul.f32 %v2815, %v2895
        %v2944 = vmul.f32 %v2815, %v2896
        %v2945 = vmul.f32 %v2818, %v2897
        %v2946 = vmul.f32 %v2818, %v2898
        %v2947 = vmul.f32 %v2818, %v2899
        %v2948 = vmul.f32 %v2821, %v2900
        %v2949 = vmul.f32 %v2821, %v2901
        %v2950 = vmul.f32 %v2821, %v2902
        %v2951 = vmul.f32 %v2824, %v2903
        %v2952 = vmul.f32 %v2824, %v2904
        %v2953 = vmul.f32 %v2824, %v2905
        %v2954 = vmul.f32 %v2827, %v2906
        %v2955 = vmul.f32 %v2827, %v2907
        %v2956 = vmul.f32 %v2827, %v2908
        %v2957 = vmul.f32 %v2830, %v2909
        %v2958 = vmul.f32 %v2830, %v2910
        %v2959 = vmul.f32 %v2830, %v2911
        %v2960 = vmul.f32 %v2833, %v2912
        %v2961 = vmul.f32 %v2833, %v2913
        %v2962 = vmul.f32 %v2833, %v2914
        %v2963 = vmul.f32 %v2836, %v2915
        %v2964 = vmul.f32 %v2836, %v2916
        %v2965 = vmul.f32 %v2836, %v2917
        %v2966 = vmul.f32 %v2839, %v2918
        %v2967 = vmul.f32 %v2839, %v2919
        %v2968 = vmul.f32 %v2839, %v2920
        %v2969 = vmul.f32 %v2842, %v2921
        %v2970 = vmul.f32 %v2842, %v2922
        %v2971 = vmul.f32 %v2842, %v2923
        %v2972 = vmul.f32 %v2798, %v2579
        %v2973 = vmul.f32 %v2798, %v2628
        %v2974 = vmul.f32 %v2798, %v2677
        %v2975 = vmul.f32 %v2801, %v2581
        %v2976 = vmul.f32 %v2801, %v2630
        %v2977 = vmul.f32 %v2801, %v2679
        %v2978 = vmul.f32 %v2804, %v2584
        %v2979 = vmul.f32 %v2804, %v2633
        %v2980 = vmul.f32 %v2804, %v2682
        %v2981 = vmul.f32 %v2807, %v2586
        %v2982 = vmul.f32 %v2807, %v2635
        %v2983 = vmul.f32 %v2807, %v2684
        %v2984 = vmul.f32 %v2810, %v2589
        %v2985 = vmul.f32 %v2810, %v2638
        %v2986 = vmul.f32 %v2810, %v2687
        %v2987 = vmul.f32 %v2813, %v2591
        %v2988 = vmul.f32 %v2813, %v2640
        %v2989 = vmul.f32 %v2813, %v2689
        %v2990 = vmul.f32 %v2816, %v2594
        %v2991 = vmul.f32 %v2816, %v2643
        %v2992 = vmul.f32 %v2816, %v2692
        %v2993 = vmul.f32 %v2819, %v2596
        %v2994 = vmul.f32 %v2819, %v2645
        %v2995 = vmul.f32 %v2819, %v2694
        %v2996 = vmul.f32 %v2822, %v2599
        %v2997 = vmul.f32 %v2822, %v2648
        %v2998 = vmul.f32 %v2822, %v2697
        %v2999 = vmul.f32 %v2825, %v2601
        %v3000 = vmul.f32 %v2825, %v2650
        %v3001 = vmul.f32 %v2825, %v2699
        %v3002 = vmul.f32 %v2828, %v2604
        %v3003 = vmul.f32 %v2828, %v2653
        %v3004 = vmul.f32 %v2828, %v2702
        %v3005 = vmul.f32 %v2831, %v2606
        %v3006 = vmul.f32 %v2831, %v2655
        %v3007 = vmul.f32 %v2831, %v2704
        %v3008 = vmul.f32 %v2834, %v2609
        %v3009 = vmul.f32 %v2834, %v2658
        %v3010 = vmul.f32 %v2834, %v2707
        %v3011 = vmul.f32 %v2837, %v2611
        %v3012 = vmul.f32 %v2837, %v2660
        %v3013 = vmul.f32 %v2837, %v2709
        %v3014 = vmul.f32 %v2840, %v2614
        %v3015 = vmul.f32 %v2840, %v2663
        %v3016 = vmul.f32 %v2840, %v2712
        %v3017 = vmul.f32 %v2843, %v2616
        %v3018 = vmul.f32 %v2843, %v2665
        %v3019 = vmul.f32 %v2843, %v2714
        %v3020 = vadd.f32 %v2924, %v2972
        %v3021 = vadd.f32 %v2925, %v2973
        %v3022 = vadd.f32 %v2926, %v2974
        %v3023 = vadd.f32 %v2927, %v2975
        %v3024 = vadd.f32 %v2928, %v2976
        %v3025 = vadd.f32 %v2929, %v2977
        %v3026 = vadd.f32 %v2930, %v2978
        %v3027 = vadd.f32 %v2931, %v2979
        %v3028 = vadd.f32 %v2932, %v2980
        %v3029 = vadd.f32 %v2933, %v2981
        %v3030 = vadd.f32 %v2934, %v2982
        %v3031 = vadd.f32 %v2935, %v2983
        %v3032 = vadd.f32 %v2936, %v2984
        %v3033 = vadd.f32 %v2937, %v2985
        %v3034 = vadd.f32 %v2938, %v2986
        %v3035 = vadd.f32 %v2939, %v2987
        %v3036 = vadd.f32 %v2940, %v2988
        %v3037 = vadd.f32 %v2941, %v2989
        %v3038 = vadd.f32 %v2942, %v2990
        %v3039 = vadd.f32 %v2943, %v2991
        %v3040 = vadd.f32 %v2944, %v2992
        %v3041 = vadd.f32 %v2945, %v2993
        %v3042 = vadd.f32 %v2946, %v2994
        %v3043 = vadd.f32 %v2947, %v2995
        %v3044 = vadd.f32 %v2948, %v2996
        %v3045 = vadd.f32 %v2949, %v2997
        %v3046 = vadd.f32 %v2950, %v2998
        %v3047 = vadd.f32 %v2951, %v2999
        %v3048 = vadd.f32 %v2952, %v3000
        %v3049 = vadd.f32 %v2953, %v3001
        %v3050 = vadd.f32 %v2954, %v3002
        %v3051 = vadd.f32 %v2955, %v3003
        %v3052 = vadd.f32 %v2956, %v3004
        %v3053 = vadd.f32 %v2957, %v3005
        %v3054 = vadd.f32 %v2958, %v3006
        %v3055 = vadd.f32 %v2959, %v3007
        %v3056 = vadd.f32 %v2960, %v3008
        %v3057 = vadd.f32 %v2961, %v3009
        %v3058 = vadd.f32 %v2962, %v3010
        %v3059 = vadd.f32 %v2963, %v3011
        %v3060 = vadd.f32 %v2964, %v3012
        %v3061 = vadd.f32 %v2965, %v3013
        %v3062 = vadd.f32 %v2966, %v3014
        %v3063 = vadd.f32 %v2967, %v3015
        %v3064 = vadd.f32 %v2968, %v3016
        %v3065 = vadd.f32 %v2969, %v3017
        %v3066 = vadd.f32 %v2970, %v3018
        %v3067 = vadd.f32 %v2971, %v3019
        %v3068 = vld [vmem:[#allocation5] sm:$0xff]
        %v3069 = vld [vmem:[#allocation5 + $0x8] sm:$0xff]
        %v3070 = vld [vmem:[#allocation5 + $0x10] sm:$0xff]
        %v3071 = vld [vmem:[#allocation5 + $0x18] sm:$0xff]
        %v3072 = vld [vmem:[#allocation5 + $0x20] sm:$0xff]
        %v3073 = vld [vmem:[#allocation5 + $0x28] sm:$0xff]
        %v3074 = vld [vmem:[#allocation5 + $0x30] sm:$0xff]
        %v3075 = vld [vmem:[#allocation5 + $0x38] sm:$0xff]
        %v3076 = vld [vmem:[#allocation5 + $0x40] sm:$0xff]
        %v3077 = vld [vmem:[#allocation5 + $0x48] sm:$0xff]
        %v3078 = vld [vmem:[#allocation5 + $0x50] sm:$0xff]
        %v3079 = vld [vmem:[#allocation5 + $0x58] sm:$0xff]
        %v3080 = vld [vmem:[#allocation5 + $0x60] sm:$0xff]
        %v3081 = vld [vmem:[#allocation5 + $0x68] sm:$0xff]
        %v3082 = vld [vmem:[#allocation5 + $0x70] sm:$0xff]
        %v3083 = vld [vmem:[#allocation5 + $0x78] sm:$0xff]
        %v3084 = vld [vmem:[#allocation5 + $0x80] sm:$0xff]
        %v3085 = vld [vmem:[#allocation5 + $0x88] sm:$0xff]
        %v3086 = vld [vmem:[#allocation5 + $0x90] sm:$0xff]
        %v3087 = vld [vmem:[#allocation5 + $0x98] sm:$0xff]
        %v3088 = vld [vmem:[#allocation5 + $0xa0] sm:$0xff]
        %v3089 = vld [vmem:[#allocation5 + $0xa8] sm:$0xff]
        %v3090 = vld [vmem:[#allocation5 + $0xb0] sm:$0xff]
        %v3091 = vld [vmem:[#allocation5 + $0xb8] sm:$0xff]
        %v3092 = vld [vmem:[#allocation5 + $0xc0] sm:$0xff]
        %v3093 = vld [vmem:[#allocation5 + $0xc8] sm:$0xff]
        %v3094 = vld [vmem:[#allocation5 + $0xd0] sm:$0xff]
        %v3095 = vld [vmem:[#allocation5 + $0xd8] sm:$0xff]
        %v3096 = vld [vmem:[#allocation5 + $0xe0] sm:$0xff]
        %v3097 = vld [vmem:[#allocation5 + $0xe8] sm:$0xff]
        %v3098 = vld [vmem:[#allocation5 + $0xf0] sm:$0xff]
        %v3099 = vld [vmem:[#allocation5 + $0xf8] sm:$0xff]
        %v3100 = vld [vmem:[#allocation5 + $0x100] sm:$0xff]
        %v3101 = vld [vmem:[#allocation5 + $0x108] sm:$0xff]
        %v3102 = vld [vmem:[#allocation5 + $0x110] sm:$0xff]
        %v3103 = vld [vmem:[#allocation5 + $0x118] sm:$0xff]
        %v3104 = vld [vmem:[#allocation5 + $0x120] sm:$0xff]
        %v3105 = vld [vmem:[#allocation5 + $0x128] sm:$0xff]
        %v3106 = vld [vmem:[#allocation5 + $0x130] sm:$0xff]
        %v3107 = vld [vmem:[#allocation5 + $0x138] sm:$0xff]
        %v3108 = vld [vmem:[#allocation5 + $0x140] sm:$0xff]
        %v3109 = vld [vmem:[#allocation5 + $0x148] sm:$0xff]
        %v3110 = vld [vmem:[#allocation5 + $0x150] sm:$0xff]
        %v3111 = vld [vmem:[#allocation5 + $0x158] sm:$0xff]
        %v3112 = vld [vmem:[#allocation5 + $0x160] sm:$0xff]
        %v3113 = vld [vmem:[#allocation5 + $0x168] sm:$0xff]
        %v3114 = vld [vmem:[#allocation5 + $0x170] sm:$0xff]
        %v3115 = vld [vmem:[#allocation5 + $0x178] sm:$0xff]
        %v3116 = vld [vmem:[#allocation5 + $0x180] sm:$0xff]
        %v3117 = vld [vmem:[#allocation5 + $0x188] sm:$0xff]
        %v3118 = vld [vmem:[#allocation5 + $0x190] sm:$0xff]
        %v3119 = vld [vmem:[#allocation5 + $0x198] sm:$0xff]
        %v3120 = vld [vmem:[#allocation5 + $0x1a0] sm:$0xff]
        %v3121 = vld [vmem:[#allocation5 + $0x1a8] sm:$0xff]
        %v3122 = vld [vmem:[#allocation5 + $0x1b0] sm:$0xff]
        %v3123 = vld [vmem:[#allocation5 + $0x1b8] sm:$0xff]
        %v3124 = vld [vmem:[#allocation5 + $0x1c0] sm:$0xff]
        %v3125 = vld [vmem:[#allocation5 + $0x1c8] sm:$0xff]
        %v3126 = vld [vmem:[#allocation5 + $0x1d0] sm:$0xff]
        %v3127 = vld [vmem:[#allocation5 + $0x1d8] sm:$0xff]
        %v3128 = vld [vmem:[#allocation5 + $0x1e0] sm:$0xff]
        %v3129 = vld [vmem:[#allocation5 + $0x1e8] sm:$0xff]
        %v3130 = vld [vmem:[#allocation5 + $0x1f0] sm:$0xff]
        %v3131 = vld [vmem:[#allocation5 + $0x1f8] sm:$0xff]
        %v3132 = vpack.c.bf16 %v2799, %v2796
        %v3133 = vpack.c.bf16 %v3023, %v3020
        %v3134 = vpack.c.bf16 %v3024, %v3021
        %v3135 = vpack.c.bf16 %v3025, %v3022
        %v3136 = vpack.c.bf16 %v2805, %v2802
        %v3137 = vpack.c.bf16 %v3029, %v3026
        %v3138 = vpack.c.bf16 %v3030, %v3027
        %v3139 = vpack.c.bf16 %v3031, %v3028
        %v3140 = vpack.c.bf16 %v2811, %v2808
        %v3141 = vpack.c.bf16 %v3035, %v3032
        %v3142 = vpack.c.bf16 %v3036, %v3033
        %v3143 = vpack.c.bf16 %v3037, %v3034
        %v3144 = vpack.c.bf16 %v2817, %v2814
        %v3145 = vpack.c.bf16 %v3041, %v3038
        %v3146 = vpack.c.bf16 %v3042, %v3039
        %v3147 = vpack.c.bf16 %v3043, %v3040
        %v3148 = vpack.c.bf16 %v2823, %v2820
        %v3149 = vpack.c.bf16 %v3047, %v3044
        %v3150 = vpack.c.bf16 %v3048, %v3045
        %v3151 = vpack.c.bf16 %v3049, %v3046
        %v3152 = vpack.c.bf16 %v2829, %v2826
        %v3153 = vpack.c.bf16 %v3053, %v3050
        %v3154 = vpack.c.bf16 %v3054, %v3051
        %v3155 = vpack.c.bf16 %v3055, %v3052
        %v3156 = vpack.c.bf16 %v2835, %v2832
        %v3157 = vpack.c.bf16 %v3059, %v3056
        %v3158 = vpack.c.bf16 %v3060, %v3057
        %v3159 = vpack.c.bf16 %v3061, %v3058
        %v3160 = vpack.c.bf16 %v2841, %v2838
        %v3161 = vpack.c.bf16 %v3065, %v3062
        %v3162 = vpack.c.bf16 %v3066, %v3063
        %v3163 = vpack.c.bf16 %v3067, %v3064
        %v3180 = vunpack.c.l.b16 %v2070
        %v3181 = vunpack.c.l.b16 %v2071
        %v3182 = vunpack.c.l.b16 %v2072
        %v3183 = vunpack.c.l.b16 %v2073
        %v3184 = vunpack.c.l.b16 %v2074
        %v3185 = vunpack.c.l.b16 %v2075
        %v3186 = vunpack.c.l.b16 %v2076
        %v3187 = vunpack.c.l.b16 %v2077
        %v3188 = vunpack.c.l.b16 %v2078
        %v3189 = vunpack.c.l.b16 %v2079
        %v3190 = vunpack.c.l.b16 %v2080
        %v3191 = vunpack.c.l.b16 %v2081
        %v3192 = vunpack.c.l.b16 %v2082
        %v3193 = vunpack.c.l.b16 %v2083
        %v3194 = vunpack.c.l.b16 %v2084
        %v3195 = vunpack.c.l.b16 %v2085
        %v3196 = vpack.c.b16 %v3181, %v3180
        %v3197 = vpack.c.b16 %v3183, %v3182
        %v3198 = vpack.c.b16 %v3185, %v3184
        %v3199 = vpack.c.b16 %v3187, %v3186
        %v3200 = vpack.c.b16 %v3189, %v3188
        %v3201 = vpack.c.b16 %v3191, %v3190
        %v3202 = vpack.c.b16 %v3193, %v3192
        %v3203 = vpack.c.b16 %v3195, %v3194
        %3212 = vmatpush.bf16.msra.mxu0 %v3160
        %3213 = vmatpush.bf16.msra.mxu0 %v3156
        %3214 = vmatpush.bf16.msra.mxu0 %v3152
        %3215 = vmatpush.bf16.msra.mxu0 %v3148
        %3216 = vmatpush.bf16.msra.mxu0 %v3144
        %3217 = vmatpush.bf16.msra.mxu0 %v3140
        %3218 = vmatpush.bf16.msra.mxu0 %v3136
        %3219 = vmatpush.bf16.msra.mxu0 %v3132
        %3220 = vmatmul.bf16.gmra.mxu0 %v3196
        %v3221 = vpop.f32.mrf.mxu0
        %v3222 = vadd.f32 0.0, %v3221
        %v3223 = vpop.f32.mrf.mxu0
        %v3224 = vadd.f32 0.0, %v3223
        %3225 = vmatmul.bf16.gmra.mxu0 %v3197
        %v3226 = vpop.f32.mrf.mxu0
        %v3227 = vadd.f32 0.0, %v3226
        %v3228 = vpop.f32.mrf.mxu0
        %v3229 = vadd.f32 0.0, %v3228
        %3230 = vmatmul.bf16.gmra.mxu0 %v3198
        %v3231 = vpop.f32.mrf.mxu0
        %v3232 = vadd.f32 0.0, %v3231
        %v3233 = vpop.f32.mrf.mxu0
        %v3234 = vadd.f32 0.0, %v3233
        %3235 = vmatmul.bf16.gmra.mxu0 %v3199
        %v3236 = vpop.f32.mrf.mxu0
        %v3237 = vadd.f32 0.0, %v3236
        %v3238 = vpop.f32.mrf.mxu0
        %v3239 = vadd.f32 0.0, %v3238
        %3240 = vmatmul.bf16.gmra.mxu0 %v3200
        %v3241 = vpop.f32.mrf.mxu0
        %v3242 = vadd.f32 0.0, %v3241
        %v3243 = vpop.f32.mrf.mxu0
        %v3244 = vadd.f32 0.0, %v3243
        %3245 = vmatmul.bf16.gmra.mxu0 %v3201
        %v3246 = vpop.f32.mrf.mxu0
        %v3247 = vadd.f32 0.0, %v3246
        %v3248 = vpop.f32.mrf.mxu0
        %v3249 = vadd.f32 0.0, %v3248
        %3250 = vmatmul.bf16.gmra.mxu0 %v3202
        %v3251 = vpop.f32.mrf.mxu0
        %v3252 = vadd.f32 0.0, %v3251
        %v3253 = vpop.f32.mrf.mxu0
        %v3254 = vadd.f32 0.0, %v3253
        %3255 = vmatmul.bf16.gmra.mxu0 %v3203
        %v3256 = vpop.f32.mrf.mxu0
        %v3257 = vadd.f32 0.0, %v3256
        %v3258 = vpop.f32.mrf.mxu0
        %v3259 = vadd.f32 0.0, %v3258
        %3260 = vdwg.mxu0
        %3261 = vmatpush.bf16.msra.mxu0 %v3161
        %3262 = vmatpush.bf16.msra.mxu0 %v3157
        %3263 = vmatpush.bf16.msra.mxu0 %v3153
        %3264 = vmatpush.bf16.msra.mxu0 %v3149
        %3265 = vmatpush.bf16.msra.mxu0 %v3145
        %3266 = vmatpush.bf16.msra.mxu0 %v3141
        %3267 = vmatpush.bf16.msra.mxu0 %v3137
        %3268 = vmatpush.bf16.msra.mxu0 %v3133
        %3269 = vmatmul.bf16.gmra.mxu0 %v3196
        %v3270 = vpop.f32.mrf.mxu0
        %v3271 = vadd.f32 0.0, %v3270
        %v3272 = vpop.f32.mrf.mxu0
        %v3273 = vadd.f32 0.0, %v3272
        %3274 = vmatmul.bf16.gmra.mxu0 %v3197
        %v3275 = vpop.f32.mrf.mxu0
        %v3276 = vadd.f32 0.0, %v3275
        %v3277 = vpop.f32.mrf.mxu0
        %v3278 = vadd.f32 0.0, %v3277
        %3279 = vmatmul.bf16.gmra.mxu0 %v3198
        %v3280 = vpop.f32.mrf.mxu0
        %v3281 = vadd.f32 0.0, %v3280
        %v3282 = vpop.f32.mrf.mxu0
        %v3283 = vadd.f32 0.0, %v3282
        %3284 = vmatmul.bf16.gmra.mxu0 %v3199
        %v3285 = vpop.f32.mrf.mxu0
        %v3286 = vadd.f32 0.0, %v3285
        %v3287 = vpop.f32.mrf.mxu0
        %v3288 = vadd.f32 0.0, %v3287
        %3289 = vmatmul.bf16.gmra.mxu0 %v3200
        %v3290 = vpop.f32.mrf.mxu0
        %v3291 = vadd.f32 0.0, %v3290
        %v3292 = vpop.f32.mrf.mxu0
        %v3293 = vadd.f32 0.0, %v3292
        %3294 = vmatmul.bf16.gmra.mxu0 %v3201
        %v3295 = vpop.f32.mrf.mxu0
        %v3296 = vadd.f32 0.0, %v3295
        %v3297 = vpop.f32.mrf.mxu0
        %v3298 = vadd.f32 0.0, %v3297
        %3299 = vmatmul.bf16.gmra.mxu0 %v3202
        %v3300 = vpop.f32.mrf.mxu0
        %v3301 = vadd.f32 0.0, %v3300
        %v3302 = vpop.f32.mrf.mxu0
        %v3303 = vadd.f32 0.0, %v3302
        %3304 = vmatmul.bf16.gmra.mxu0 %v3203
        %v3305 = vpop.f32.mrf.mxu0
        %v3306 = vadd.f32 0.0, %v3305
        %v3307 = vpop.f32.mrf.mxu0
        %v3308 = vadd.f32 0.0, %v3307
        %3309 = vdwg.mxu0
        %3310 = vmatpush.bf16.msra.mxu0 %v3162
        %3311 = vmatpush.bf16.msra.mxu0 %v3158
        %3312 = vmatpush.bf16.msra.mxu0 %v3154
        %3313 = vmatpush.bf16.msra.mxu0 %v3150
        %3314 = vmatpush.bf16.msra.mxu0 %v3146
        %3315 = vmatpush.bf16.msra.mxu0 %v3142
        %3316 = vmatpush.bf16.msra.mxu0 %v3138
        %3317 = vmatpush.bf16.msra.mxu0 %v3134
        %3318 = vmatmul.bf16.gmra.mxu0 %v3196
        %v3319 = vpop.f32.mrf.mxu0
        %v3320 = vadd.f32 0.0, %v3319
        %v3321 = vpop.f32.mrf.mxu0
        %v3322 = vadd.f32 0.0, %v3321
        %3323 = vmatmul.bf16.gmra.mxu0 %v3197
        %v3324 = vpop.f32.mrf.mxu0
        %v3325 = vadd.f32 0.0, %v3324
        %v3326 = vpop.f32.mrf.mxu0
        %v3327 = vadd.f32 0.0, %v3326
        %3328 = vmatmul.bf16.gmra.mxu0 %v3198
        %v3329 = vpop.f32.mrf.mxu0
        %v3330 = vadd.f32 0.0, %v3329
        %v3331 = vpop.f32.mrf.mxu0
        %v3332 = vadd.f32 0.0, %v3331
        %3333 = vmatmul.bf16.gmra.mxu0 %v3199
        %v3334 = vpop.f32.mrf.mxu0
        %v3335 = vadd.f32 0.0, %v3334
        %v3336 = vpop.f32.mrf.mxu0
        %v3337 = vadd.f32 0.0, %v3336
        %3338 = vmatmul.bf16.gmra.mxu0 %v3200
        %v3339 = vpop.f32.mrf.mxu0
        %v3340 = vadd.f32 0.0, %v3339
        %v3341 = vpop.f32.mrf.mxu0
        %v3342 = vadd.f32 0.0, %v3341
        %3343 = vmatmul.bf16.gmra.mxu0 %v3201
        %v3344 = vpop.f32.mrf.mxu0
        %v3345 = vadd.f32 0.0, %v3344
        %v3346 = vpop.f32.mrf.mxu0
        %v3347 = vadd.f32 0.0, %v3346
        %3348 = vmatmul.bf16.gmra.mxu0 %v3202
        %v3349 = vpop.f32.mrf.mxu0
        %v3350 = vadd.f32 0.0, %v3349
        %v3351 = vpop.f32.mrf.mxu0
        %v3352 = vadd.f32 0.0, %v3351
        %3353 = vmatmul.bf16.gmra.mxu0 %v3203
        %v3354 = vpop.f32.mrf.mxu0
        %v3355 = vadd.f32 0.0, %v3354
        %v3356 = vpop.f32.mrf.mxu0
        %v3357 = vadd.f32 0.0, %v3356
        %3358 = vdwg.mxu0
        %3359 = vmatpush.bf16.msra.mxu0 %v3163
        %3360 = vmatpush.bf16.msra.mxu0 %v3159
        %3361 = vmatpush.bf16.msra.mxu0 %v3155
        %3362 = vmatpush.bf16.msra.mxu0 %v3151
        %3363 = vmatpush.bf16.msra.mxu0 %v3147
        %3364 = vmatpush.bf16.msra.mxu0 %v3143
        %3365 = vmatpush.bf16.msra.mxu0 %v3139
        %3366 = vmatpush.bf16.msra.mxu0 %v3135
        %3367 = vmatmul.bf16.gmra.mxu0 %v3196
        %v3368 = vpop.f32.mrf.mxu0
        %v3369 = vadd.f32 0.0, %v3368
        %v3370 = vpop.f32.mrf.mxu0
        %v3371 = vadd.f32 0.0, %v3370
        %3372 = vmatmul.bf16.gmra.mxu0 %v3197
        %v3373 = vpop.f32.mrf.mxu0
        %v3374 = vadd.f32 0.0, %v3373
        %v3375 = vpop.f32.mrf.mxu0
        %v3376 = vadd.f32 0.0, %v3375
        %3377 = vmatmul.bf16.gmra.mxu0 %v3198
        %v3378 = vpop.f32.mrf.mxu0
        %v3379 = vadd.f32 0.0, %v3378
        %v3380 = vpop.f32.mrf.mxu0
        %v3381 = vadd.f32 0.0, %v3380
        %3382 = vmatmul.bf16.gmra.mxu0 %v3199
        %v3383 = vpop.f32.mrf.mxu0
        %v3384 = vadd.f32 0.0, %v3383
        %v3385 = vpop.f32.mrf.mxu0
        %v3386 = vadd.f32 0.0, %v3385
        %3387 = vmatmul.bf16.gmra.mxu0 %v3200
        %v3388 = vpop.f32.mrf.mxu0
        %v3389 = vadd.f32 0.0, %v3388
        %v3390 = vpop.f32.mrf.mxu0
        %v3391 = vadd.f32 0.0, %v3390
        %3392 = vmatmul.bf16.gmra.mxu0 %v3201
        %v3393 = vpop.f32.mrf.mxu0
        %v3394 = vadd.f32 0.0, %v3393
        %v3395 = vpop.f32.mrf.mxu0
        %v3396 = vadd.f32 0.0, %v3395
        %3397 = vmatmul.bf16.gmra.mxu0 %v3202
        %v3398 = vpop.f32.mrf.mxu0
        %v3399 = vadd.f32 0.0, %v3398
        %v3400 = vpop.f32.mrf.mxu0
        %v3401 = vadd.f32 0.0, %v3400
        %3402 = vmatmul.bf16.gmra.mxu0 %v3203
        %v3403 = vpop.f32.mrf.mxu0
        %v3404 = vadd.f32 0.0, %v3403
        %v3405 = vpop.f32.mrf.mxu0
        %v3406 = vadd.f32 0.0, %v3405
        %3407 = vdwg.mxu0
        %v3408 = vadd.f32 %v3068, %v3222
        %v3409 = vadd.f32 %v3069, %v3271
        %v3410 = vadd.f32 %v3070, %v3320
        %v3411 = vadd.f32 %v3071, %v3369
        %v3412 = vadd.f32 %v3072, %v3224
        %v3413 = vadd.f32 %v3073, %v3273
        %v3414 = vadd.f32 %v3074, %v3322
        %v3415 = vadd.f32 %v3075, %v3371
        %v3416 = vadd.f32 %v3076, %v3227
        %v3417 = vadd.f32 %v3077, %v3276
        %v3418 = vadd.f32 %v3078, %v3325
        %v3419 = vadd.f32 %v3079, %v3374
        %v3420 = vadd.f32 %v3080, %v3229
        %v3421 = vadd.f32 %v3081, %v3278
        %v3422 = vadd.f32 %v3082, %v3327
        %v3423 = vadd.f32 %v3083, %v3376
        %v3424 = vadd.f32 %v3084, %v3232
        %v3425 = vadd.f32 %v3085, %v3281
        %v3426 = vadd.f32 %v3086, %v3330
        %v3427 = vadd.f32 %v3087, %v3379
        %v3428 = vadd.f32 %v3088, %v3234
        %v3429 = vadd.f32 %v3089, %v3283
        %v3430 = vadd.f32 %v3090, %v3332
        %v3431 = vadd.f32 %v3091, %v3381
        %v3432 = vadd.f32 %v3092, %v3237
        %v3433 = vadd.f32 %v3093, %v3286
        %v3434 = vadd.f32 %v3094, %v3335
        %v3435 = vadd.f32 %v3095, %v3384
        %v3436 = vadd.f32 %v3096, %v3239
        %v3437 = vadd.f32 %v3097, %v3288
        %v3438 = vadd.f32 %v3098, %v3337
        %v3439 = vadd.f32 %v3099, %v3386
        %v3440 = vadd.f32 %v3100, %v3242
        %v3441 = vadd.f32 %v3101, %v3291
        %v3442 = vadd.f32 %v3102, %v3340
        %v3443 = vadd.f32 %v3103, %v3389
        %v3444 = vadd.f32 %v3104, %v3244
        %v3445 = vadd.f32 %v3105, %v3293
        %v3446 = vadd.f32 %v3106, %v3342
        %v3447 = vadd.f32 %v3107, %v3391
        %v3448 = vadd.f32 %v3108, %v3247
        %v3449 = vadd.f32 %v3109, %v3296
        %v3450 = vadd.f32 %v3110, %v3345
        %v3451 = vadd.f32 %v3111, %v3394
        %v3452 = vadd.f32 %v3112, %v3249
        %v3453 = vadd.f32 %v3113, %v3298
        %v3454 = vadd.f32 %v3114, %v3347
        %v3455 = vadd.f32 %v3115, %v3396
        %v3456 = vadd.f32 %v3116, %v3252
        %v3457 = vadd.f32 %v3117, %v3301
        %v3458 = vadd.f32 %v3118, %v3350
        %v3459 = vadd.f32 %v3119, %v3399
        %v3460 = vadd.f32 %v3120, %v3254
        %v3461 = vadd.f32 %v3121, %v3303
        %v3462 = vadd.f32 %v3122, %v3352
        %v3463 = vadd.f32 %v3123, %v3401
        %v3464 = vadd.f32 %v3124, %v3257
        %v3465 = vadd.f32 %v3125, %v3306
        %v3466 = vadd.f32 %v3126, %v3355
        %v3467 = vadd.f32 %v3127, %v3404
        %v3468 = vadd.f32 %v3128, %v3259
        %v3469 = vadd.f32 %v3129, %v3308
        %v3470 = vadd.f32 %v3130, %v3357
        %v3471 = vadd.f32 %v3131, %v3406
        %3472 = vst [vmem:[#allocation5] sm:$0xff] %v3408
        %3473 = vst [vmem:[#allocation5 + $0x8] sm:$0xff] %v3409
        %3474 = vst [vmem:[#allocation5 + $0x10] sm:$0xff] %v3410
        %3475 = vst [vmem:[#allocation5 + $0x18] sm:$0xff] %v3411
        %3476 = vst [vmem:[#allocation5 + $0x20] sm:$0xff] %v3412
        %3477 = vst [vmem:[#allocation5 + $0x28] sm:$0xff] %v3413
        %3478 = vst [vmem:[#allocation5 + $0x30] sm:$0xff] %v3414
        %3479 = vst [vmem:[#allocation5 + $0x38] sm:$0xff] %v3415
        %3480 = vst [vmem:[#allocation5 + $0x40] sm:$0xff] %v3416
        %3481 = vst [vmem:[#allocation5 + $0x48] sm:$0xff] %v3417
        %3482 = vst [vmem:[#allocation5 + $0x50] sm:$0xff] %v3418
        %3483 = vst [vmem:[#allocation5 + $0x58] sm:$0xff] %v3419
        %3484 = vst [vmem:[#allocation5 + $0x60] sm:$0xff] %v3420
        %3485 = vst [vmem:[#allocation5 + $0x68] sm:$0xff] %v3421
        %3486 = vst [vmem:[#allocation5 + $0x70] sm:$0xff] %v3422
        %3487 = vst [vmem:[#allocation5 + $0x78] sm:$0xff] %v3423
        %3488 = vst [vmem:[#allocation5 + $0x80] sm:$0xff] %v3424
        %3489 = vst [vmem:[#allocation5 + $0x88] sm:$0xff] %v3425
        %3490 = vst [vmem:[#allocation5 + $0x90] sm:$0xff] %v3426
        %3491 = vst [vmem:[#allocation5 + $0x98] sm:$0xff] %v3427
        %3492 = vst [vmem:[#allocation5 + $0xa0] sm:$0xff] %v3428
        %3493 = vst [vmem:[#allocation5 + $0xa8] sm:$0xff] %v3429
        %3494 = vst [vmem:[#allocation5 + $0xb0] sm:$0xff] %v3430
        %3495 = vst [vmem:[#allocation5 + $0xb8] sm:$0xff] %v3431
        %3496 = vst [vmem:[#allocation5 + $0xc0] sm:$0xff] %v3432
        %3497 = vst [vmem:[#allocation5 + $0xc8] sm:$0xff] %v3433
        %3498 = vst [vmem:[#allocation5 + $0xd0] sm:$0xff] %v3434
        %3499 = vst [vmem:[#allocation5 + $0xd8] sm:$0xff] %v3435
        %3500 = vst [vmem:[#allocation5 + $0xe0] sm:$0xff] %v3436
        %3501 = vst [vmem:[#allocation5 + $0xe8] sm:$0xff] %v3437
        %3502 = vst [vmem:[#allocation5 + $0xf0] sm:$0xff] %v3438
        %3503 = vst [vmem:[#allocation5 + $0xf8] sm:$0xff] %v3439
        %3504 = vst [vmem:[#allocation5 + $0x100] sm:$0xff] %v3440
        %3505 = vst [vmem:[#allocation5 + $0x108] sm:$0xff] %v3441
        %3506 = vst [vmem:[#allocation5 + $0x110] sm:$0xff] %v3442
        %3507 = vst [vmem:[#allocation5 + $0x118] sm:$0xff] %v3443
        %3508 = vst [vmem:[#allocation5 + $0x120] sm:$0xff] %v3444
        %3509 = vst [vmem:[#allocation5 + $0x128] sm:$0xff] %v3445
        %3510 = vst [vmem:[#allocation5 + $0x130] sm:$0xff] %v3446
        %3511 = vst [vmem:[#allocation5 + $0x138] sm:$0xff] %v3447
        %3512 = vst [vmem:[#allocation5 + $0x140] sm:$0xff] %v3448
        %3513 = vst [vmem:[#allocation5 + $0x148] sm:$0xff] %v3449
        %3514 = vst [vmem:[#allocation5 + $0x150] sm:$0xff] %v3450
        %3515 = vst [vmem:[#allocation5 + $0x158] sm:$0xff] %v3451
        %3516 = vst [vmem:[#allocation5 + $0x160] sm:$0xff] %v3452
        %3517 = vst [vmem:[#allocation5 + $0x168] sm:$0xff] %v3453
        %3518 = vst [vmem:[#allocation5 + $0x170] sm:$0xff] %v3454
        %3519 = vst [vmem:[#allocation5 + $0x178] sm:$0xff] %v3455
        %3520 = vst [vmem:[#allocation5 + $0x180] sm:$0xff] %v3456
        %3521 = vst [vmem:[#allocation5 + $0x188] sm:$0xff] %v3457
        %3522 = vst [vmem:[#allocation5 + $0x190] sm:$0xff] %v3458
        %3523 = vst [vmem:[#allocation5 + $0x198] sm:$0xff] %v3459
        %3524 = vst [vmem:[#allocation5 + $0x1a0] sm:$0xff] %v3460
        %3525 = vst [vmem:[#allocation5 + $0x1a8] sm:$0xff] %v3461
        %3526 = vst [vmem:[#allocation5 + $0x1b0] sm:$0xff] %v3462
        %3527 = vst [vmem:[#allocation5 + $0x1b8] sm:$0xff] %v3463
        %3528 = vst [vmem:[#allocation5 + $0x1c0] sm:$0xff] %v3464
        %3529 = vst [vmem:[#allocation5 + $0x1c8] sm:$0xff] %v3465
        %3530 = vst [vmem:[#allocation5 + $0x1d0] sm:$0xff] %v3466
        %3531 = vst [vmem:[#allocation5 + $0x1d8] sm:$0xff] %v3467
        %3532 = vst [vmem:[#allocation5 + $0x1e0] sm:$0xff] %v3468
        %3533 = vst [vmem:[#allocation5 + $0x1e8] sm:$0xff] %v3469
        %3534 = vst [vmem:[#allocation5 + $0x1f0] sm:$0xff] %v3470
        %3535 = vst [vmem:[#allocation5 + $0x1f8] sm:$0xff] %v3471
        %p3536 = scmp.eq.s32.totalorder %s51, 1
        // Predicated region
        $region141: #{tpu_custom_call.1} parent=79 // pred_check
          %p3537 = pneg %p3536
        $region142: #{tpu_custom_call.1} parent=79 // pred_check_branch
          %3539 = sbr.rel (%p3537) target = $region144
        $region143: #{tpu_custom_call.1} parent=79 // pred_region
          %v3540 = vld [vmem:[#allocation5] sm:$0xff]
          %v3541 = vld [vmem:[#allocation5 + $0x8] sm:$0xff]
          %v3542 = vld [vmem:[#allocation5 + $0x10] sm:$0xff]
          %v3543 = vld [vmem:[#allocation5 + $0x18] sm:$0xff]
          %v3544 = vld [vmem:[#allocation5 + $0x20] sm:$0xff]
          %v3545 = vld [vmem:[#allocation5 + $0x28] sm:$0xff]
          %v3546 = vld [vmem:[#allocation5 + $0x30] sm:$0xff]
          %v3547 = vld [vmem:[#allocation5 + $0x38] sm:$0xff]
          %v3548 = vld [vmem:[#allocation5 + $0x40] sm:$0xff]
          %v3549 = vld [vmem:[#allocation5 + $0x48] sm:$0xff]
          %v3550 = vld [vmem:[#allocation5 + $0x50] sm:$0xff]
          %v3551 = vld [vmem:[#allocation5 + $0x58] sm:$0xff]
          %v3552 = vld [vmem:[#allocation5 + $0x60] sm:$0xff]
          %v3553 = vld [vmem:[#allocation5 + $0x68] sm:$0xff]
          %v3554 = vld [vmem:[#allocation5 + $0x70] sm:$0xff]
          %v3555 = vld [vmem:[#allocation5 + $0x78] sm:$0xff]
          %v3556 = vld [vmem:[#allocation5 + $0x80] sm:$0xff]
          %v3557 = vld [vmem:[#allocation5 + $0x88] sm:$0xff]
          %v3558 = vld [vmem:[#allocation5 + $0x90] sm:$0xff]
          %v3559 = vld [vmem:[#allocation5 + $0x98] sm:$0xff]
          %v3560 = vld [vmem:[#allocation5 + $0xa0] sm:$0xff]
          %v3561 = vld [vmem:[#allocation5 + $0xa8] sm:$0xff]
          %v3562 = vld [vmem:[#allocation5 + $0xb0] sm:$0xff]
          %v3563 = vld [vmem:[#allocation5 + $0xb8] sm:$0xff]
          %v3564 = vld [vmem:[#allocation5 + $0xc0] sm:$0xff]
          %v3565 = vld [vmem:[#allocation5 + $0xc8] sm:$0xff]
          %v3566 = vld [vmem:[#allocation5 + $0xd0] sm:$0xff]
          %v3567 = vld [vmem:[#allocation5 + $0xd8] sm:$0xff]
          %v3568 = vld [vmem:[#allocation5 + $0xe0] sm:$0xff]
          %v3569 = vld [vmem:[#allocation5 + $0xe8] sm:$0xff]
          %v3570 = vld [vmem:[#allocation5 + $0xf0] sm:$0xff]
          %v3571 = vld [vmem:[#allocation5 + $0xf8] sm:$0xff]
          %v3572 = vld [vmem:[#allocation5 + $0x100] sm:$0xff]
          %v3573 = vld [vmem:[#allocation5 + $0x108] sm:$0xff]
          %v3574 = vld [vmem:[#allocation5 + $0x110] sm:$0xff]
          %v3575 = vld [vmem:[#allocation5 + $0x118] sm:$0xff]
          %v3576 = vld [vmem:[#allocation5 + $0x120] sm:$0xff]
          %v3577 = vld [vmem:[#allocation5 + $0x128] sm:$0xff]
          %v3578 = vld [vmem:[#allocation5 + $0x130] sm:$0xff]
          %v3579 = vld [vmem:[#allocation5 + $0x138] sm:$0xff]
          %v3580 = vld [vmem:[#allocation5 + $0x140] sm:$0xff]
          %v3581 = vld [vmem:[#allocation5 + $0x148] sm:$0xff]
          %v3582 = vld [vmem:[#allocation5 + $0x150] sm:$0xff]
          %v3583 = vld [vmem:[#allocation5 + $0x158] sm:$0xff]
          %v3584 = vld [vmem:[#allocation5 + $0x160] sm:$0xff]
          %v3585 = vld [vmem:[#allocation5 + $0x168] sm:$0xff]
          %v3586 = vld [vmem:[#allocation5 + $0x170] sm:$0xff]
          %v3587 = vld [vmem:[#allocation5 + $0x178] sm:$0xff]
          %v3588 = vld [vmem:[#allocation5 + $0x180] sm:$0xff]
          %v3589 = vld [vmem:[#allocation5 + $0x188] sm:$0xff]
          %v3590 = vld [vmem:[#allocation5 + $0x190] sm:$0xff]
          %v3591 = vld [vmem:[#allocation5 + $0x198] sm:$0xff]
          %v3592 = vld [vmem:[#allocation5 + $0x1a0] sm:$0xff]
          %v3593 = vld [vmem:[#allocation5 + $0x1a8] sm:$0xff]
          %v3594 = vld [vmem:[#allocation5 + $0x1b0] sm:$0xff]
          %v3595 = vld [vmem:[#allocation5 + $0x1b8] sm:$0xff]
          %v3596 = vld [vmem:[#allocation5 + $0x1c0] sm:$0xff]
          %v3597 = vld [vmem:[#allocation5 + $0x1c8] sm:$0xff]
          %v3598 = vld [vmem:[#allocation5 + $0x1d0] sm:$0xff]
          %v3599 = vld [vmem:[#allocation5 + $0x1d8] sm:$0xff]
          %v3600 = vld [vmem:[#allocation5 + $0x1e0] sm:$0xff]
          %v3601 = vld [vmem:[#allocation5 + $0x1e8] sm:$0xff]
          %v3602 = vld [vmem:[#allocation5 + $0x1f0] sm:$0xff]
          %v3603 = vld [vmem:[#allocation5 + $0x1f8] sm:$0xff]
          %v3604 = vld [vmem:[#allocation2] sm:$0xff]
          %v3605 = vld [vmem:[#allocation2 + $0x8] sm:$0xff]
          %v3606 = vld [vmem:[#allocation2 + $0x10] sm:$0xff]
          %v3607 = vld [vmem:[#allocation2 + $0x18] sm:$0xff]
          %v3608 = vld [vmem:[#allocation2 + $0x20] sm:$0xff]
          %v3609 = vld [vmem:[#allocation2 + $0x28] sm:$0xff]
          %v3610 = vld [vmem:[#allocation2 + $0x30] sm:$0xff]
          %v3611 = vld [vmem:[#allocation2 + $0x38] sm:$0xff]
          %v3612 = vld [vmem:[#allocation2 + $0x40] sm:$0xff]
          %v3613 = vld [vmem:[#allocation2 + $0x48] sm:$0xff]
          %v3614 = vld [vmem:[#allocation2 + $0x50] sm:$0xff]
          %v3615 = vld [vmem:[#allocation2 + $0x58] sm:$0xff]
          %v3616 = vld [vmem:[#allocation2 + $0x60] sm:$0xff]
          %v3617 = vld [vmem:[#allocation2 + $0x68] sm:$0xff]
          %v3618 = vld [vmem:[#allocation2 + $0x70] sm:$0xff]
          %v3619 = vld [vmem:[#allocation2 + $0x78] sm:$0xff]
          %v3620 = vadd.f32 %v3604, %v3540
          %v3621 = vadd.f32 %v3605, %v3544
          %v3622 = vadd.f32 %v3606, %v3548
          %v3623 = vadd.f32 %v3607, %v3552
          %v3624 = vadd.f32 %v3608, %v3556
          %v3625 = vadd.f32 %v3609, %v3560
          %v3626 = vadd.f32 %v3610, %v3564
          %v3627 = vadd.f32 %v3611, %v3568
          %v3628 = vadd.f32 %v3612, %v3572
          %v3629 = vadd.f32 %v3613, %v3576
          %v3630 = vadd.f32 %v3614, %v3580
          %v3631 = vadd.f32 %v3615, %v3584
          %v3632 = vadd.f32 %v3616, %v3588
          %v3633 = vadd.f32 %v3617, %v3592
          %v3634 = vadd.f32 %v3618, %v3596
          %v3635 = vadd.f32 %v3619, %v3600
          %v3636 = vld [vmem:[#allocation3] sm:$0xff]
          %v3637 = vld [vmem:[#allocation3 + $0x8] sm:$0xff]
          %v3638 = vld [vmem:[#allocation3 + $0x10] sm:$0xff]
          %v3639 = vld [vmem:[#allocation3 + $0x18] sm:$0xff]
          %v3640 = vld [vmem:[#allocation3 + $0x20] sm:$0xff]
          %v3641 = vld [vmem:[#allocation3 + $0x28] sm:$0xff]
          %v3642 = vld [vmem:[#allocation3 + $0x30] sm:$0xff]
          %v3643 = vld [vmem:[#allocation3 + $0x38] sm:$0xff]
          %v3644 = vld [vmem:[#allocation3 + $0x40] sm:$0xff]
          %v3645 = vld [vmem:[#allocation3 + $0x48] sm:$0xff]
          %v3646 = vld [vmem:[#allocation3 + $0x50] sm:$0xff]
          %v3647 = vld [vmem:[#allocation3 + $0x58] sm:$0xff]
          %v3648 = vld [vmem:[#allocation3 + $0x60] sm:$0xff]
          %v3649 = vld [vmem:[#allocation3 + $0x68] sm:$0xff]
          %v3650 = vld [vmem:[#allocation3 + $0x70] sm:$0xff]
          %v3651 = vld [vmem:[#allocation3 + $0x78] sm:$0xff]
          %v3652 = vld [vmem:[#allocation3 + $0x80] sm:$0xff]
          %v3653 = vld [vmem:[#allocation3 + $0x88] sm:$0xff]
          %v3654 = vld [vmem:[#allocation3 + $0x90] sm:$0xff]
          %v3655 = vld [vmem:[#allocation3 + $0x98] sm:$0xff]
          %v3656 = vld [vmem:[#allocation3 + $0xa0] sm:$0xff]
          %v3657 = vld [vmem:[#allocation3 + $0xa8] sm:$0xff]
          %v3658 = vld [vmem:[#allocation3 + $0xb0] sm:$0xff]
          %v3659 = vld [vmem:[#allocation3 + $0xb8] sm:$0xff]
          %v3660 = vld [vmem:[#allocation3 + $0xc0] sm:$0xff]
          %v3661 = vld [vmem:[#allocation3 + $0xc8] sm:$0xff]
          %v3662 = vld [vmem:[#allocation3 + $0xd0] sm:$0xff]
          %v3663 = vld [vmem:[#allocation3 + $0xd8] sm:$0xff]
          %v3664 = vld [vmem:[#allocation3 + $0xe0] sm:$0xff]
          %v3665 = vld [vmem:[#allocation3 + $0xe8] sm:$0xff]
          %v3666 = vld [vmem:[#allocation3 + $0xf0] sm:$0xff]
          %v3667 = vld [vmem:[#allocation3 + $0xf8] sm:$0xff]
          %v3668 = vld [vmem:[#allocation3 + $0x100] sm:$0xff]
          %v3669 = vld [vmem:[#allocation3 + $0x108] sm:$0xff]
          %v3670 = vld [vmem:[#allocation3 + $0x110] sm:$0xff]
          %v3671 = vld [vmem:[#allocation3 + $0x118] sm:$0xff]
          %v3672 = vld [vmem:[#allocation3 + $0x120] sm:$0xff]
          %v3673 = vld [vmem:[#allocation3 + $0x128] sm:$0xff]
          %v3674 = vld [vmem:[#allocation3 + $0x130] sm:$0xff]
          %v3675 = vld [vmem:[#allocation3 + $0x138] sm:$0xff]
          %v3676 = vld [vmem:[#allocation3 + $0x140] sm:$0xff]
          %v3677 = vld [vmem:[#allocation3 + $0x148] sm:$0xff]
          %v3678 = vld [vmem:[#allocation3 + $0x150] sm:$0xff]
          %v3679 = vld [vmem:[#allocation3 + $0x158] sm:$0xff]
          %v3680 = vld [vmem:[#allocation3 + $0x160] sm:$0xff]
          %v3681 = vld [vmem:[#allocation3 + $0x168] sm:$0xff]
          %v3682 = vld [vmem:[#allocation3 + $0x170] sm:$0xff]
          %v3683 = vld [vmem:[#allocation3 + $0x178] sm:$0xff]
          %v3684 = vadd.f32 %v3636, %v3541
          %v3685 = vadd.f32 %v3637, %v3542
          %v3686 = vadd.f32 %v3638, %v3543
          %v3687 = vadd.f32 %v3639, %v3545
          %v3688 = vadd.f32 %v3640, %v3546
          %v3689 = vadd.f32 %v3641, %v3547
          %v3690 = vadd.f32 %v3642, %v3549
          %v3691 = vadd.f32 %v3643, %v3550
          %v3692 = vadd.f32 %v3644, %v3551
          %v3693 = vadd.f32 %v3645, %v3553
          %v3694 = vadd.f32 %v3646, %v3554
          %v3695 = vadd.f32 %v3647, %v3555
          %v3696 = vadd.f32 %v3648, %v3557
          %v3697 = vadd.f32 %v3649, %v3558
          %v3698 = vadd.f32 %v3650, %v3559
          %v3699 = vadd.f32 %v3651, %v3561
          %v3700 = vadd.f32 %v3652, %v3562
          %v3701 = vadd.f32 %v3653, %v3563
          %v3702 = vadd.f32 %v3654, %v3565
          %v3703 = vadd.f32 %v3655, %v3566
          %v3704 = vadd.f32 %v3656, %v3567
          %v3705 = vadd.f32 %v3657, %v3569
          %v3706 = vadd.f32 %v3658, %v3570
          %v3707 = vadd.f32 %v3659, %v3571
          %v3708 = vadd.f32 %v3660, %v3573
          %v3709 = vadd.f32 %v3661, %v3574
          %v3710 = vadd.f32 %v3662, %v3575
          %v3711 = vadd.f32 %v3663, %v3577
          %v3712 = vadd.f32 %v3664, %v3578
          %v3713 = vadd.f32 %v3665, %v3579
          %v3714 = vadd.f32 %v3666, %v3581
          %v3715 = vadd.f32 %v3667, %v3582
          %v3716 = vadd.f32 %v3668, %v3583
          %v3717 = vadd.f32 %v3669, %v3585
          %v3718 = vadd.f32 %v3670, %v3586
          %v3719 = vadd.f32 %v3671, %v3587
          %v3720 = vadd.f32 %v3672, %v3589
          %v3721 = vadd.f32 %v3673, %v3590
          %v3722 = vadd.f32 %v3674, %v3591
          %v3723 = vadd.f32 %v3675, %v3593
          %v3724 = vadd.f32 %v3676, %v3594
          %v3725 = vadd.f32 %v3677, %v3595
          %v3726 = vadd.f32 %v3678, %v3597
          %v3727 = vadd.f32 %v3679, %v3598
          %v3728 = vadd.f32 %v3680, %v3599
          %v3729 = vadd.f32 %v3681, %v3601
          %v3730 = vadd.f32 %v3682, %v3602
          %v3731 = vadd.f32 %v3683, %v3603
          %v3732 = vpack.c.bf16 %v3685, %v3684
          %v3733 = vpack.c.bf16 %v3686, %v3686
          %v3734 = vpack.c.bf16 %v3688, %v3687
          %v3735 = vpack.c.bf16 %v3689, %v3689
          %v3736 = vpack.c.bf16 %v3691, %v3690
          %v3737 = vpack.c.bf16 %v3692, %v3692
          %v3738 = vpack.c.bf16 %v3694, %v3693
          %v3739 = vpack.c.bf16 %v3695, %v3695
          %v3740 = vpack.c.bf16 %v3697, %v3696
          %v3741 = vpack.c.bf16 %v3698, %v3698
          %v3742 = vpack.c.bf16 %v3700, %v3699
          %v3743 = vpack.c.bf16 %v3701, %v3701
          %v3744 = vpack.c.bf16 %v3703, %v3702
          %v3745 = vpack.c.bf16 %v3704, %v3704
          %v3746 = vpack.c.bf16 %v3706, %v3705
          %v3747 = vpack.c.bf16 %v3707, %v3707
          %v3748 = vpack.c.bf16 %v3709, %v3708
          %v3749 = vpack.c.bf16 %v3710, %v3710
          %v3750 = vpack.c.bf16 %v3712, %v3711
          %v3751 = vpack.c.bf16 %v3713, %v3713
          %v3752 = vpack.c.bf16 %v3715, %v3714
          %v3753 = vpack.c.bf16 %v3716, %v3716
          %v3754 = vpack.c.bf16 %v3718, %v3717
          %v3755 = vpack.c.bf16 %v3719, %v3719
          %v3756 = vpack.c.bf16 %v3721, %v3720
          %v3757 = vpack.c.bf16 %v3722, %v3722
          %v3758 = vpack.c.bf16 %v3724, %v3723
          %v3759 = vpack.c.bf16 %v3725, %v3725
          %v3760 = vpack.c.bf16 %v3727, %v3726
          %v3761 = vpack.c.bf16 %v3728, %v3728
          %v3762 = vpack.c.bf16 %v3730, %v3729
          %v3763 = vpack.c.bf16 %v3731, %v3731
          %v3764 = vld [vmem:[%s850] sm:$0xff]
          %v3765 = vld [vmem:[%s850 + $0x8] sm:$0xff]
          %v3766 = vld [vmem:[%s850 + $0x10] sm:$0xff]
          %v3767 = vld [vmem:[%s850 + $0x18] sm:$0xff]
          %v3768 = vld [vmem:[%s850 + $0x20] sm:$0xff]
          %v3769 = vld [vmem:[%s850 + $0x28] sm:$0xff]
          %v3770 = vld [vmem:[%s850 + $0x30] sm:$0xff]
          %v3771 = vld [vmem:[%s850 + $0x38] sm:$0xff]
          %v3772 = vld [vmem:[%s850 + $0x40] sm:$0xff]
          %v3773 = vld [vmem:[%s850 + $0x48] sm:$0xff]
          %v3774 = vld [vmem:[%s850 + $0x50] sm:$0xff]
          %v3775 = vld [vmem:[%s850 + $0x58] sm:$0xff]
          %v3776 = vld [vmem:[%s850 + $0x60] sm:$0xff]
          %v3777 = vld [vmem:[%s850 + $0x68] sm:$0xff]
          %v3778 = vld [vmem:[%s850 + $0x70] sm:$0xff]
          %v3779 = vld [vmem:[%s850 + $0x78] sm:$0xff]
          %v3796 = vunpack.c.l.b16 %v3732
          %v3797 = vunpack.c.l.b16 %v3734
          %v3798 = vunpack.c.l.b16 %v3736
          %v3799 = vunpack.c.l.b16 %v3738
          %v3800 = vunpack.c.l.b16 %v3740
          %v3801 = vunpack.c.l.b16 %v3742
          %v3802 = vunpack.c.l.b16 %v3744
          %v3803 = vunpack.c.l.b16 %v3746
          %v3804 = vunpack.c.l.b16 %v3748
          %v3805 = vunpack.c.l.b16 %v3750
          %v3806 = vunpack.c.l.b16 %v3752
          %v3807 = vunpack.c.l.b16 %v3754
          %v3808 = vunpack.c.l.b16 %v3756
          %v3809 = vunpack.c.l.b16 %v3758
          %v3810 = vunpack.c.l.b16 %v3760
          %v3811 = vunpack.c.l.b16 %v3762
          %v3812 = vpack.c.b16 %v3797, %v3796
          %v3813 = vpack.c.b16 %v3799, %v3798
          %v3814 = vpack.c.b16 %v3801, %v3800
          %v3815 = vpack.c.b16 %v3803, %v3802
          %v3816 = vpack.c.b16 %v3805, %v3804
          %v3817 = vpack.c.b16 %v3807, %v3806
          %v3818 = vpack.c.b16 %v3809, %v3808
          %v3819 = vpack.c.b16 %v3811, %v3810
          %v3844 = vunpack.c.l.b16 %v3764
          %v3845 = vunpack.c.h.b16 %v3764
          %v3846 = vunpack.c.l.b16 %v3765
          %v3847 = vunpack.c.h.b16 %v3765
          %v3848 = vunpack.c.l.b16 %v3766
          %v3849 = vunpack.c.h.b16 %v3766
          %v3850 = vunpack.c.l.b16 %v3767
          %v3851 = vunpack.c.h.b16 %v3767
          %v3852 = vunpack.c.l.b16 %v3768
          %v3853 = vunpack.c.h.b16 %v3768
          %v3854 = vunpack.c.l.b16 %v3769
          %v3855 = vunpack.c.h.b16 %v3769
          %v3856 = vunpack.c.l.b16 %v3770
          %v3857 = vunpack.c.h.b16 %v3770
          %v3858 = vunpack.c.l.b16 %v3771
          %v3859 = vunpack.c.h.b16 %v3771
          %v3860 = vunpack.c.l.b16 %v3772
          %v3861 = vunpack.c.h.b16 %v3772
          %v3862 = vunpack.c.l.b16 %v3773
          %v3863 = vunpack.c.h.b16 %v3773
          %v3864 = vunpack.c.l.b16 %v3774
          %v3865 = vunpack.c.h.b16 %v3774
          %v3866 = vunpack.c.l.b16 %v3775
          %v3867 = vunpack.c.h.b16 %v3775
          %v3868 = vunpack.c.l.b16 %v3776
          %v3869 = vunpack.c.h.b16 %v3776
          %v3870 = vunpack.c.l.b16 %v3777
          %v3871 = vunpack.c.h.b16 %v3777
          %v3872 = vunpack.c.l.b16 %v3778
          %v3873 = vunpack.c.h.b16 %v3778
          %v3874 = vunpack.c.l.b16 %v3779
          %v3875 = vunpack.c.h.b16 %v3779
          %v3876 = vpack.c.b16 %v3846, %v3844
          %v3877 = vpack.c.b16 %v3847, %v3845
          %v3878 = vpack.c.b16 %v3850, %v3848
          %v3879 = vpack.c.b16 %v3851, %v3849
          %v3880 = vpack.c.b16 %v3854, %v3852
          %v3881 = vpack.c.b16 %v3855, %v3853
          %v3882 = vpack.c.b16 %v3858, %v3856
          %v3883 = vpack.c.b16 %v3859, %v3857
          %v3884 = vpack.c.b16 %v3862, %v3860
          %v3885 = vpack.c.b16 %v3863, %v3861
          %v3886 = vpack.c.b16 %v3866, %v3864
          %v3887 = vpack.c.b16 %v3867, %v3865
          %v3888 = vpack.c.b16 %v3870, %v3868
          %v3889 = vpack.c.b16 %v3871, %v3869
          %v3890 = vpack.c.b16 %v3874, %v3872
          %v3891 = vpack.c.b16 %v3875, %v3873
          %3908 = vmatpush.bf16.msra.mxu0 %v3890
          %3909 = vmatpush.bf16.msra.mxu0 %v3888
          %3910 = vmatpush.bf16.msra.mxu0 %v3886
          %3911 = vmatpush.bf16.msra.mxu0 %v3884
          %3912 = vmatpush.bf16.msra.mxu0 %v3882
          %3913 = vmatpush.bf16.msra.mxu0 %v3880
          %3914 = vmatpush.bf16.msra.mxu0 %v3878
          %3915 = vmatpush.bf16.msra.mxu0 %v3876
          %3916 = vmatmul.bf16.gmra.mxu0 %v3812
          %v3917 = vpop.f32.mrf.mxu0
          %v3918 = vadd.f32 0.0, %v3917
          %v3919 = vpop.f32.mrf.mxu0
          %v3920 = vadd.f32 0.0, %v3919
          %3921 = vmatmul.bf16.gmra.mxu0 %v3813
          %v3922 = vpop.f32.mrf.mxu0
          %v3923 = vadd.f32 0.0, %v3922
          %v3924 = vpop.f32.mrf.mxu0
          %v3925 = vadd.f32 0.0, %v3924
          %3926 = vmatmul.bf16.gmra.mxu0 %v3814
          %v3927 = vpop.f32.mrf.mxu0
          %v3928 = vadd.f32 0.0, %v3927
          %v3929 = vpop.f32.mrf.mxu0
          %v3930 = vadd.f32 0.0, %v3929
          %3931 = vmatmul.bf16.gmra.mxu0 %v3815
          %v3932 = vpop.f32.mrf.mxu0
          %v3933 = vadd.f32 0.0, %v3932
          %v3934 = vpop.f32.mrf.mxu0
          %v3935 = vadd.f32 0.0, %v3934
          %3936 = vmatmul.bf16.gmra.mxu0 %v3816
          %v3937 = vpop.f32.mrf.mxu0
          %v3938 = vadd.f32 0.0, %v3937
          %v3939 = vpop.f32.mrf.mxu0
          %v3940 = vadd.f32 0.0, %v3939
          %3941 = vmatmul.bf16.gmra.mxu0 %v3817
          %v3942 = vpop.f32.mrf.mxu0
          %v3943 = vadd.f32 0.0, %v3942
          %v3944 = vpop.f32.mrf.mxu0
          %v3945 = vadd.f32 0.0, %v3944
          %3946 = vmatmul.bf16.gmra.mxu0 %v3818
          %v3947 = vpop.f32.mrf.mxu0
          %v3948 = vadd.f32 0.0, %v3947
          %v3949 = vpop.f32.mrf.mxu0
          %v3950 = vadd.f32 0.0, %v3949
          %3951 = vmatmul.bf16.gmra.mxu0 %v3819
          %v3952 = vpop.f32.mrf.mxu0
          %v3953 = vadd.f32 0.0, %v3952
          %v3954 = vpop.f32.mrf.mxu0
          %v3955 = vadd.f32 0.0, %v3954
          %3956 = vdwg.mxu0
          %3957 = vmatpush.bf16.msra.mxu0 %v3891
          %3958 = vmatpush.bf16.msra.mxu0 %v3889
          %3959 = vmatpush.bf16.msra.mxu0 %v3887
          %3960 = vmatpush.bf16.msra.mxu0 %v3885
          %3961 = vmatpush.bf16.msra.mxu0 %v3883
          %3962 = vmatpush.bf16.msra.mxu0 %v3881
          %3963 = vmatpush.bf16.msra.mxu0 %v3879
          %3964 = vmatpush.bf16.msra.mxu0 %v3877
          %3965 = vmatmul.bf16.gmra.mxu0 %v3812
          %v3966 = vpop.f32.mrf.mxu0
          %v3967 = vadd.f32 0.0, %v3966
          %v3968 = vpop.f32.mrf.mxu0
          %v3969 = vadd.f32 0.0, %v3968
          %3970 = vmatmul.bf16.gmra.mxu0 %v3813
          %v3971 = vpop.f32.mrf.mxu0
          %v3972 = vadd.f32 0.0, %v3971
          %v3973 = vpop.f32.mrf.mxu0
          %v3974 = vadd.f32 0.0, %v3973
          %3975 = vmatmul.bf16.gmra.mxu0 %v3814
          %v3976 = vpop.f32.mrf.mxu0
          %v3977 = vadd.f32 0.0, %v3976
          %v3978 = vpop.f32.mrf.mxu0
          %v3979 = vadd.f32 0.0, %v3978
          %3980 = vmatmul.bf16.gmra.mxu0 %v3815
          %v3981 = vpop.f32.mrf.mxu0
          %v3982 = vadd.f32 0.0, %v3981
          %v3983 = vpop.f32.mrf.mxu0
          %v3984 = vadd.f32 0.0, %v3983
          %3985 = vmatmul.bf16.gmra.mxu0 %v3816
          %v3986 = vpop.f32.mrf.mxu0
          %v3987 = vadd.f32 0.0, %v3986
          %v3988 = vpop.f32.mrf.mxu0
          %v3989 = vadd.f32 0.0, %v3988
          %3990 = vmatmul.bf16.gmra.mxu0 %v3817
          %v3991 = vpop.f32.mrf.mxu0
          %v3992 = vadd.f32 0.0, %v3991
          %v3993 = vpop.f32.mrf.mxu0
          %v3994 = vadd.f32 0.0, %v3993
          %3995 = vmatmul.bf16.gmra.mxu0 %v3818
          %v3996 = vpop.f32.mrf.mxu0
          %v3997 = vadd.f32 0.0, %v3996
          %v3998 = vpop.f32.mrf.mxu0
          %v3999 = vadd.f32 0.0, %v3998
          %4000 = vmatmul.bf16.gmra.mxu0 %v3819
          %v4001 = vpop.f32.mrf.mxu0
          %v4002 = vadd.f32 0.0, %v4001
          %v4003 = vpop.f32.mrf.mxu0
          %v4004 = vadd.f32 0.0, %v4003
          %4005 = vdwg.mxu0
          %v4006 = vunpack.c.h.b16 %v3732
          %v4007 = vunpack.c.h.b16 %v3734
          %v4008 = vunpack.c.h.b16 %v3736
          %v4009 = vunpack.c.h.b16 %v3738
          %v4010 = vunpack.c.h.b16 %v3740
          %v4011 = vunpack.c.h.b16 %v3742
          %v4012 = vunpack.c.h.b16 %v3744
          %v4013 = vunpack.c.h.b16 %v3746
          %v4014 = vunpack.c.h.b16 %v3748
          %v4015 = vunpack.c.h.b16 %v3750
          %v4016 = vunpack.c.h.b16 %v3752
          %v4017 = vunpack.c.h.b16 %v3754
          %v4018 = vunpack.c.h.b16 %v3756
          %v4019 = vunpack.c.h.b16 %v3758
          %v4020 = vunpack.c.h.b16 %v3760
          %v4021 = vunpack.c.h.b16 %v3762
          %v4022 = vpack.c.b16 %v4007, %v4006
          %v4023 = vpack.c.b16 %v4009, %v4008
          %v4024 = vpack.c.b16 %v4011, %v4010
          %v4025 = vpack.c.b16 %v4013, %v4012
          %v4026 = vpack.c.b16 %v4015, %v4014
          %v4027 = vpack.c.b16 %v4017, %v4016
          %v4028 = vpack.c.b16 %v4019, %v4018
          %v4029 = vpack.c.b16 %v4021, %v4020
          %4038 = vmatpush.bf16.msra.mxu0 %v3890
          %4039 = vmatpush.bf16.msra.mxu0 %v3888
          %4040 = vmatpush.bf16.msra.mxu0 %v3886
          %4041 = vmatpush.bf16.msra.mxu0 %v3884
          %4042 = vmatpush.bf16.msra.mxu0 %v3882
          %4043 = vmatpush.bf16.msra.mxu0 %v3880
          %4044 = vmatpush.bf16.msra.mxu0 %v3878
          %4045 = vmatpush.bf16.msra.mxu0 %v3876
          %4046 = vmatmul.bf16.gmra.mxu0 %v4022
          %v4047 = vpop.f32.mrf.mxu0
          %v4048 = vadd.f32 0.0, %v4047
          %v4049 = vpop.f32.mrf.mxu0
          %v4050 = vadd.f32 0.0, %v4049
          %4051 = vmatmul.bf16.gmra.mxu0 %v4023
          %v4052 = vpop.f32.mrf.mxu0
          %v4053 = vadd.f32 0.0, %v4052
          %v4054 = vpop.f32.mrf.mxu0
          %v4055 = vadd.f32 0.0, %v4054
          %4056 = vmatmul.bf16.gmra.mxu0 %v4024
          %v4057 = vpop.f32.mrf.mxu0
          %v4058 = vadd.f32 0.0, %v4057
          %v4059 = vpop.f32.mrf.mxu0
          %v4060 = vadd.f32 0.0, %v4059
          %4061 = vmatmul.bf16.gmra.mxu0 %v4025
          %v4062 = vpop.f32.mrf.mxu0
          %v4063 = vadd.f32 0.0, %v4062
          %v4064 = vpop.f32.mrf.mxu0
          %v4065 = vadd.f32 0.0, %v4064
          %4066 = vmatmul.bf16.gmra.mxu0 %v4026
          %v4067 = vpop.f32.mrf.mxu0
          %v4068 = vadd.f32 0.0, %v4067
          %v4069 = vpop.f32.mrf.mxu0
          %v4070 = vadd.f32 0.0, %v4069
          %4071 = vmatmul.bf16.gmra.mxu0 %v4027
          %v4072 = vpop.f32.mrf.mxu0
          %v4073 = vadd.f32 0.0, %v4072
          %v4074 = vpop.f32.mrf.mxu0
          %v4075 = vadd.f32 0.0, %v4074
          %4076 = vmatmul.bf16.gmra.mxu0 %v4028
          %v4077 = vpop.f32.mrf.mxu0
          %v4078 = vadd.f32 0.0, %v4077
          %v4079 = vpop.f32.mrf.mxu0
          %v4080 = vadd.f32 0.0, %v4079
          %4081 = vmatmul.bf16.gmra.mxu0 %v4029
          %v4082 = vpop.f32.mrf.mxu0
          %v4083 = vadd.f32 0.0, %v4082
          %v4084 = vpop.f32.mrf.mxu0
          %v4085 = vadd.f32 0.0, %v4084
          %4086 = vdwg.mxu0
          %4087 = vmatpush.bf16.msra.mxu0 %v3891
          %4088 = vmatpush.bf16.msra.mxu0 %v3889
          %4089 = vmatpush.bf16.msra.mxu0 %v3887
          %4090 = vmatpush.bf16.msra.mxu0 %v3885
          %4091 = vmatpush.bf16.msra.mxu0 %v3883
          %4092 = vmatpush.bf16.msra.mxu0 %v3881
          %4093 = vmatpush.bf16.msra.mxu0 %v3879
          %4094 = vmatpush.bf16.msra.mxu0 %v3877
          %4095 = vmatmul.bf16.gmra.mxu0 %v4022
          %v4096 = vpop.f32.mrf.mxu0
          %v4097 = vadd.f32 0.0, %v4096
          %v4098 = vpop.f32.mrf.mxu0
          %v4099 = vadd.f32 0.0, %v4098
          %4100 = vmatmul.bf16.gmra.mxu0 %v4023
          %v4101 = vpop.f32.mrf.mxu0
          %v4102 = vadd.f32 0.0, %v4101
          %v4103 = vpop.f32.mrf.mxu0
          %v4104 = vadd.f32 0.0, %v4103
          %4105 = vmatmul.bf16.gmra.mxu0 %v4024
          %v4106 = vpop.f32.mrf.mxu0
          %v4107 = vadd.f32 0.0, %v4106
          %v4108 = vpop.f32.mrf.mxu0
          %v4109 = vadd.f32 0.0, %v4108
          %4110 = vmatmul.bf16.gmra.mxu0 %v4025
          %v4111 = vpop.f32.mrf.mxu0
          %v4112 = vadd.f32 0.0, %v4111
          %v4113 = vpop.f32.mrf.mxu0
          %v4114 = vadd.f32 0.0, %v4113
          %4115 = vmatmul.bf16.gmra.mxu0 %v4026
          %v4116 = vpop.f32.mrf.mxu0
          %v4117 = vadd.f32 0.0, %v4116
          %v4118 = vpop.f32.mrf.mxu0
          %v4119 = vadd.f32 0.0, %v4118
          %4120 = vmatmul.bf16.gmra.mxu0 %v4027
          %v4121 = vpop.f32.mrf.mxu0
          %v4122 = vadd.f32 0.0, %v4121
          %v4123 = vpop.f32.mrf.mxu0
          %v4124 = vadd.f32 0.0, %v4123
          %4125 = vmatmul.bf16.gmra.mxu0 %v4028
          %v4126 = vpop.f32.mrf.mxu0
          %v4127 = vadd.f32 0.0, %v4126
          %v4128 = vpop.f32.mrf.mxu0
          %v4129 = vadd.f32 0.0, %v4128
          %4130 = vmatmul.bf16.gmra.mxu0 %v4029
          %v4131 = vpop.f32.mrf.mxu0
          %v4132 = vadd.f32 0.0, %v4131
          %v4133 = vpop.f32.mrf.mxu0
          %v4134 = vadd.f32 0.0, %v4133
          %4135 = vdwg.mxu0
          %v4152 = vunpack.c.l.b16 %v3733
          %v4153 = vunpack.c.l.b16 %v3735
          %v4154 = vunpack.c.l.b16 %v3737
          %v4155 = vunpack.c.l.b16 %v3739
          %v4156 = vunpack.c.l.b16 %v3741
          %v4157 = vunpack.c.l.b16 %v3743
          %v4158 = vunpack.c.l.b16 %v3745
          %v4159 = vunpack.c.l.b16 %v3747
          %v4160 = vunpack.c.l.b16 %v3749
          %v4161 = vunpack.c.l.b16 %v3751
          %v4162 = vunpack.c.l.b16 %v3753
          %v4163 = vunpack.c.l.b16 %v3755
          %v4164 = vunpack.c.l.b16 %v3757
          %v4165 = vunpack.c.l.b16 %v3759
          %v4166 = vunpack.c.l.b16 %v3761
          %v4167 = vunpack.c.l.b16 %v3763
          %v4168 = vpack.c.b16 %v4153, %v4152
          %v4169 = vpack.c.b16 %v4155, %v4154
          %v4170 = vpack.c.b16 %v4157, %v4156
          %v4171 = vpack.c.b16 %v4159, %v4158
          %v4172 = vpack.c.b16 %v4161, %v4160
          %v4173 = vpack.c.b16 %v4163, %v4162
          %v4174 = vpack.c.b16 %v4165, %v4164
          %v4175 = vpack.c.b16 %v4167, %v4166
          %4184 = vmatpush.bf16.msra.mxu0 %v3890
          %4185 = vmatpush.bf16.msra.mxu0 %v3888
          %4186 = vmatpush.bf16.msra.mxu0 %v3886
          %4187 = vmatpush.bf16.msra.mxu0 %v3884
          %4188 = vmatpush.bf16.msra.mxu0 %v3882
          %4189 = vmatpush.bf16.msra.mxu0 %v3880
          %4190 = vmatpush.bf16.msra.mxu0 %v3878
          %4191 = vmatpush.bf16.msra.mxu0 %v3876
          %4192 = vmatmul.bf16.gmra.mxu0 %v4168
          %v4193 = vpop.f32.mrf.mxu0
          %v4194 = vadd.f32 0.0, %v4193
          %v4195 = vpop.f32.mrf.mxu0
          %v4196 = vadd.f32 0.0, %v4195
          %4197 = vmatmul.bf16.gmra.mxu0 %v4169
          %v4198 = vpop.f32.mrf.mxu0
          %v4199 = vadd.f32 0.0, %v4198
          %v4200 = vpop.f32.mrf.mxu0
          %v4201 = vadd.f32 0.0, %v4200
          %4202 = vmatmul.bf16.gmra.mxu0 %v4170
          %v4203 = vpop.f32.mrf.mxu0
          %v4204 = vadd.f32 0.0, %v4203
          %v4205 = vpop.f32.mrf.mxu0
          %v4206 = vadd.f32 0.0, %v4205
          %4207 = vmatmul.bf16.gmra.mxu0 %v4171
          %v4208 = vpop.f32.mrf.mxu0
          %v4209 = vadd.f32 0.0, %v4208
          %v4210 = vpop.f32.mrf.mxu0
          %v4211 = vadd.f32 0.0, %v4210
          %4212 = vmatmul.bf16.gmra.mxu0 %v4172
          %v4213 = vpop.f32.mrf.mxu0
          %v4214 = vadd.f32 0.0, %v4213
          %v4215 = vpop.f32.mrf.mxu0
          %v4216 = vadd.f32 0.0, %v4215
          %4217 = vmatmul.bf16.gmra.mxu0 %v4173
          %v4218 = vpop.f32.mrf.mxu0
          %v4219 = vadd.f32 0.0, %v4218
          %v4220 = vpop.f32.mrf.mxu0
          %v4221 = vadd.f32 0.0, %v4220
          %4222 = vmatmul.bf16.gmra.mxu0 %v4174
          %v4223 = vpop.f32.mrf.mxu0
          %v4224 = vadd.f32 0.0, %v4223
          %v4225 = vpop.f32.mrf.mxu0
          %v4226 = vadd.f32 0.0, %v4225
          %4227 = vmatmul.bf16.gmra.mxu0 %v4175
          %v4228 = vpop.f32.mrf.mxu0
          %v4229 = vadd.f32 0.0, %v4228
          %v4230 = vpop.f32.mrf.mxu0
          %v4231 = vadd.f32 0.0, %v4230
          %4232 = vdwg.mxu0
          %4233 = vmatpush.bf16.msra.mxu0 %v3891
          %4234 = vmatpush.bf16.msra.mxu0 %v3889
          %4235 = vmatpush.bf16.msra.mxu0 %v3887
          %4236 = vmatpush.bf16.msra.mxu0 %v3885
          %4237 = vmatpush.bf16.msra.mxu0 %v3883
          %4238 = vmatpush.bf16.msra.mxu0 %v3881
          %4239 = vmatpush.bf16.msra.mxu0 %v3879
          %4240 = vmatpush.bf16.msra.mxu0 %v3877
          %4241 = vmatmul.bf16.gmra.mxu0 %v4168
          %v4242 = vpop.f32.mrf.mxu0
          %v4243 = vadd.f32 0.0, %v4242
          %v4244 = vpop.f32.mrf.mxu0
          %v4245 = vadd.f32 0.0, %v4244
          %4246 = vmatmul.bf16.gmra.mxu0 %v4169
          %v4247 = vpop.f32.mrf.mxu0
          %v4248 = vadd.f32 0.0, %v4247
          %v4249 = vpop.f32.mrf.mxu0
          %v4250 = vadd.f32 0.0, %v4249
          %4251 = vmatmul.bf16.gmra.mxu0 %v4170
          %v4252 = vpop.f32.mrf.mxu0
          %v4253 = vadd.f32 0.0, %v4252
          %v4254 = vpop.f32.mrf.mxu0
          %v4255 = vadd.f32 0.0, %v4254
          %4256 = vmatmul.bf16.gmra.mxu0 %v4171
          %v4257 = vpop.f32.mrf.mxu0
          %v4258 = vadd.f32 0.0, %v4257
          %v4259 = vpop.f32.mrf.mxu0
          %v4260 = vadd.f32 0.0, %v4259
          %4261 = vmatmul.bf16.gmra.mxu0 %v4172
          %v4262 = vpop.f32.mrf.mxu0
          %v4263 = vadd.f32 0.0, %v4262
          %v4264 = vpop.f32.mrf.mxu0
          %v4265 = vadd.f32 0.0, %v4264
          %4266 = vmatmul.bf16.gmra.mxu0 %v4173
          %v4267 = vpop.f32.mrf.mxu0
          %v4268 = vadd.f32 0.0, %v4267
          %v4269 = vpop.f32.mrf.mxu0
          %v4270 = vadd.f32 0.0, %v4269
          %4271 = vmatmul.bf16.gmra.mxu0 %v4174
          %v4272 = vpop.f32.mrf.mxu0
          %v4273 = vadd.f32 0.0, %v4272
          %v4274 = vpop.f32.mrf.mxu0
          %v4275 = vadd.f32 0.0, %v4274
          %4276 = vmatmul.bf16.gmra.mxu0 %v4175
          %v4277 = vpop.f32.mrf.mxu0
          %v4278 = vadd.f32 0.0, %v4277
          %v4279 = vpop.f32.mrf.mxu0
          %v4280 = vadd.f32 0.0, %v4279
          %4281 = vdwg.mxu0
          %v4282 = vmul.f32 %v3918, %v3918
          %v4283 = vmul.f32 %v3920, %v3920
          %v4284 = vmul.f32 %v3923, %v3923
          %v4285 = vmul.f32 %v3925, %v3925
          %v4286 = vmul.f32 %v3928, %v3928
          %v4287 = vmul.f32 %v3930, %v3930
          %v4288 = vmul.f32 %v3933, %v3933
          %v4289 = vmul.f32 %v3935, %v3935
          %v4290 = vmul.f32 %v3938, %v3938
          %v4291 = vmul.f32 %v3940, %v3940
          %v4292 = vmul.f32 %v3943, %v3943
          %v4293 = vmul.f32 %v3945, %v3945
          %v4294 = vmul.f32 %v3948, %v3948
          %v4295 = vmul.f32 %v3950, %v3950
          %v4296 = vmul.f32 %v3953, %v3953
          %v4297 = vmul.f32 %v3955, %v3955
          %v4298 = vmul.f32 %v4048, %v4048
          %v4299 = vmul.f32 %v4050, %v4050
          %v4300 = vmul.f32 %v4053, %v4053
          %v4301 = vmul.f32 %v4055, %v4055
          %v4302 = vmul.f32 %v4058, %v4058
          %v4303 = vmul.f32 %v4060, %v4060
          %v4304 = vmul.f32 %v4063, %v4063
          %v4305 = vmul.f32 %v4065, %v4065
          %v4306 = vmul.f32 %v4068, %v4068
          %v4307 = vmul.f32 %v4070, %v4070
          %v4308 = vmul.f32 %v4073, %v4073
          %v4309 = vmul.f32 %v4075, %v4075
          %v4310 = vmul.f32 %v4078, %v4078
          %v4311 = vmul.f32 %v4080, %v4080
          %v4312 = vmul.f32 %v4083, %v4083
          %v4313 = vmul.f32 %v4085, %v4085
          %v4314 = vadd.f32 %v4282, %v4298
          %v4315 = vadd.f32 %v4283, %v4299
          %v4316 = vadd.f32 %v4284, %v4300
          %v4317 = vadd.f32 %v4285, %v4301
          %v4318 = vadd.f32 %v4286, %v4302
          %v4319 = vadd.f32 %v4287, %v4303
          %v4320 = vadd.f32 %v4288, %v4304
          %v4321 = vadd.f32 %v4289, %v4305
          %v4322 = vadd.f32 %v4290, %v4306
          %v4323 = vadd.f32 %v4291, %v4307
          %v4324 = vadd.f32 %v4292, %v4308
          %v4325 = vadd.f32 %v4293, %v4309
          %v4326 = vadd.f32 %v4294, %v4310
          %v4327 = vadd.f32 %v4295, %v4311
          %v4328 = vadd.f32 %v4296, %v4312
          %v4329 = vadd.f32 %v4297, %v4313
          %v4330 = vmul.f32 %v4194, %v4194
          %v4331 = vmul.f32 %v4196, %v4196
          %v4332 = vmul.f32 %v4199, %v4199
          %v4333 = vmul.f32 %v4201, %v4201
          %v4334 = vmul.f32 %v4204, %v4204
          %v4335 = vmul.f32 %v4206, %v4206
          %v4336 = vmul.f32 %v4209, %v4209
          %v4337 = vmul.f32 %v4211, %v4211
          %v4338 = vmul.f32 %v4214, %v4214
          %v4339 = vmul.f32 %v4216, %v4216
          %v4340 = vmul.f32 %v4219, %v4219
          %v4341 = vmul.f32 %v4221, %v4221
          %v4342 = vmul.f32 %v4224, %v4224
          %v4343 = vmul.f32 %v4226, %v4226
          %v4344 = vmul.f32 %v4229, %v4229
          %v4345 = vmul.f32 %v4231, %v4231
          %v4346 = vadd.f32 %v4314, %v4330
          %v4347 = vadd.f32 %v4315, %v4331
          %v4348 = vadd.f32 %v4316, %v4332
          %v4349 = vadd.f32 %v4317, %v4333
          %v4350 = vadd.f32 %v4318, %v4334
          %v4351 = vadd.f32 %v4319, %v4335
          %v4352 = vadd.f32 %v4320, %v4336
          %v4353 = vadd.f32 %v4321, %v4337
          %v4354 = vadd.f32 %v4322, %v4338
          %v4355 = vadd.f32 %v4323, %v4339
          %v4356 = vadd.f32 %v4324, %v4340
          %v4357 = vadd.f32 %v4325, %v4341
          %v4358 = vadd.f32 %v4326, %v4342
          %v4359 = vadd.f32 %v4327, %v4343
          %v4360 = vadd.f32 %v4328, %v4344
          %v4361 = vadd.f32 %v4329, %v4345
          %v4362 = vadd.f32 %v4346, 1e-08
          %v4363 = vadd.f32 %v4347, 1e-08
          %v4364 = vadd.f32 %v4348, 1e-08
          %v4365 = vadd.f32 %v4349, 1e-08
          %v4366 = vadd.f32 %v4350, 1e-08
          %v4367 = vadd.f32 %v4351, 1e-08
          %v4368 = vadd.f32 %v4352, 1e-08
          %v4369 = vadd.f32 %v4353, 1e-08
          %v4370 = vadd.f32 %v4354, 1e-08
          %v4371 = vadd.f32 %v4355, 1e-08
          %v4372 = vadd.f32 %v4356, 1e-08
          %v4373 = vadd.f32 %v4357, 1e-08
          %v4374 = vadd.f32 %v4358, 1e-08
          %v4375 = vadd.f32 %v4359, 1e-08
          %v4376 = vadd.f32 %v4360, 1e-08
          %v4377 = vadd.f32 %v4361, 1e-08
          %v4378 = vrsqrt.pop %v4362
          %v4379 = vmul.f32 %v4378, %v4362
          %v4380 = vmul.f32 %v4379, %v4378
          %v4381 = vmul.f32 0.5, %v4380
          %v4382 = vsub.f32 1.5, %v4381
          %v4383 = vmul.f32 %v4378, %v4382
          %v4384 = vmul.f32 %v4362, %v4383
          %vm4385 = vcmp.eq.f32.partialorder %v4362, inf
          %v4386 = vsel %vm4385, %v4362, %v4384
          %vm4387 = vcmp.eq.f32.partialorder %v4362, 0.0
          %v4388 = vand.u32 %v4362, 2147483648
          %v4389 = vsel %vm4387, %v4388, %v4386
          %v4390 = vrsqrt.pop %v4363
          %v4391 = vmul.f32 %v4390, %v4363
          %v4392 = vmul.f32 %v4391, %v4390
          %v4393 = vmul.f32 0.5, %v4392
          %v4394 = vsub.f32 1.5, %v4393
          %v4395 = vmul.f32 %v4390, %v4394
          %v4396 = vmul.f32 %v4363, %v4395
          %vm4397 = vcmp.eq.f32.partialorder %v4363, inf
          %v4398 = vsel %vm4397, %v4363, %v4396
          %vm4399 = vcmp.eq.f32.partialorder %v4363, 0.0
          %v4400 = vand.u32 %v4363, 2147483648
          %v4401 = vsel %vm4399, %v4400, %v4398
          %v4402 = vrsqrt.pop %v4364
          %v4403 = vmul.f32 %v4402, %v4364
          %v4404 = vmul.f32 %v4403, %v4402
          %v4405 = vmul.f32 0.5, %v4404
          %v4406 = vsub.f32 1.5, %v4405
          %v4407 = vmul.f32 %v4402, %v4406
          %v4408 = vmul.f32 %v4364, %v4407
          %vm4409 = vcmp.eq.f32.partialorder %v4364, inf
          %v4410 = vsel %vm4409, %v4364, %v4408
          %vm4411 = vcmp.eq.f32.partialorder %v4364, 0.0
          %v4412 = vand.u32 %v4364, 2147483648
          %v4413 = vsel %vm4411, %v4412, %v4410
          %v4414 = vrsqrt.pop %v4365
          %v4415 = vmul.f32 %v4414, %v4365
          %v4416 = vmul.f32 %v4415, %v4414
          %v4417 = vmul.f32 0.5, %v4416
          %v4418 = vsub.f32 1.5, %v4417
          %v4419 = vmul.f32 %v4414, %v4418
          %v4420 = vmul.f32 %v4365, %v4419
          %vm4421 = vcmp.eq.f32.partialorder %v4365, inf
          %v4422 = vsel %vm4421, %v4365, %v4420
          %vm4423 = vcmp.eq.f32.partialorder %v4365, 0.0
          %v4424 = vand.u32 %v4365, 2147483648
          %v4425 = vsel %vm4423, %v4424, %v4422
          %v4426 = vrsqrt.pop %v4366
          %v4427 = vmul.f32 %v4426, %v4366
          %v4428 = vmul.f32 %v4427, %v4426
          %v4429 = vmul.f32 0.5, %v4428
          %v4430 = vsub.f32 1.5, %v4429
          %v4431 = vmul.f32 %v4426, %v4430
          %v4432 = vmul.f32 %v4366, %v4431
          %vm4433 = vcmp.eq.f32.partialorder %v4366, inf
          %v4434 = vsel %vm4433, %v4366, %v4432
          %vm4435 = vcmp.eq.f32.partialorder %v4366, 0.0
          %v4436 = vand.u32 %v4366, 2147483648
          %v4437 = vsel %vm4435, %v4436, %v4434
          %v4438 = vrsqrt.pop %v4367
          %v4439 = vmul.f32 %v4438, %v4367
          %v4440 = vmul.f32 %v4439, %v4438
          %v4441 = vmul.f32 0.5, %v4440
          %v4442 = vsub.f32 1.5, %v4441
          %v4443 = vmul.f32 %v4438, %v4442
          %v4444 = vmul.f32 %v4367, %v4443
          %vm4445 = vcmp.eq.f32.partialorder %v4367, inf
          %v4446 = vsel %vm4445, %v4367, %v4444
          %vm4447 = vcmp.eq.f32.partialorder %v4367, 0.0
          %v4448 = vand.u32 %v4367, 2147483648
          %v4449 = vsel %vm4447, %v4448, %v4446
          %v4450 = vrsqrt.pop %v4368
          %v4451 = vmul.f32 %v4450, %v4368
          %v4452 = vmul.f32 %v4451, %v4450
          %v4453 = vmul.f32 0.5, %v4452
          %v4454 = vsub.f32 1.5, %v4453
          %v4455 = vmul.f32 %v4450, %v4454
          %v4456 = vmul.f32 %v4368, %v4455
          %vm4457 = vcmp.eq.f32.partialorder %v4368, inf
          %v4458 = vsel %vm4457, %v4368, %v4456
          %vm4459 = vcmp.eq.f32.partialorder %v4368, 0.0
          %v4460 = vand.u32 %v4368, 2147483648
          %v4461 = vsel %vm4459, %v4460, %v4458
          %v4462 = vrsqrt.pop %v4369
          %v4463 = vmul.f32 %v4462, %v4369
          %v4464 = vmul.f32 %v4463, %v4462
          %v4465 = vmul.f32 0.5, %v4464
          %v4466 = vsub.f32 1.5, %v4465
          %v4467 = vmul.f32 %v4462, %v4466
          %v4468 = vmul.f32 %v4369, %v4467
          %vm4469 = vcmp.eq.f32.partialorder %v4369, inf
          %v4470 = vsel %vm4469, %v4369, %v4468
          %vm4471 = vcmp.eq.f32.partialorder %v4369, 0.0
          %v4472 = vand.u32 %v4369, 2147483648
          %v4473 = vsel %vm4471, %v4472, %v4470
          %v4474 = vrsqrt.pop %v4370
          %v4475 = vmul.f32 %v4474, %v4370
          %v4476 = vmul.f32 %v4475, %v4474
          %v4477 = vmul.f32 0.5, %v4476
          %v4478 = vsub.f32 1.5, %v4477
          %v4479 = vmul.f32 %v4474, %v4478
          %v4480 = vmul.f32 %v4370, %v4479
          %vm4481 = vcmp.eq.f32.partialorder %v4370, inf
          %v4482 = vsel %vm4481, %v4370, %v4480
          %vm4483 = vcmp.eq.f32.partialorder %v4370, 0.0
          %v4484 = vand.u32 %v4370, 2147483648
          %v4485 = vsel %vm4483, %v4484, %v4482
          %v4486 = vrsqrt.pop %v4371
          %v4487 = vmul.f32 %v4486, %v4371
          %v4488 = vmul.f32 %v4487, %v4486
          %v4489 = vmul.f32 0.5, %v4488
          %v4490 = vsub.f32 1.5, %v4489
          %v4491 = vmul.f32 %v4486, %v4490
          %v4492 = vmul.f32 %v4371, %v4491
          %vm4493 = vcmp.eq.f32.partialorder %v4371, inf
          %v4494 = vsel %vm4493, %v4371, %v4492
          %vm4495 = vcmp.eq.f32.partialorder %v4371, 0.0
          %v4496 = vand.u32 %v4371, 2147483648
          %v4497 = vsel %vm4495, %v4496, %v4494
          %v4498 = vrsqrt.pop %v4372
          %v4499 = vmul.f32 %v4498, %v4372
          %v4500 = vmul.f32 %v4499, %v4498
          %v4501 = vmul.f32 0.5, %v4500
          %v4502 = vsub.f32 1.5, %v4501
          %v4503 = vmul.f32 %v4498, %v4502
          %v4504 = vmul.f32 %v4372, %v4503
          %vm4505 = vcmp.eq.f32.partialorder %v4372, inf
          %v4506 = vsel %vm4505, %v4372, %v4504
          %vm4507 = vcmp.eq.f32.partialorder %v4372, 0.0
          %v4508 = vand.u32 %v4372, 2147483648
          %v4509 = vsel %vm4507, %v4508, %v4506
          %v4510 = vrsqrt.pop %v4373
          %v4511 = vmul.f32 %v4510, %v4373
          %v4512 = vmul.f32 %v4511, %v4510
          %v4513 = vmul.f32 0.5, %v4512
          %v4514 = vsub.f32 1.5, %v4513
          %v4515 = vmul.f32 %v4510, %v4514
          %v4516 = vmul.f32 %v4373, %v4515
          %vm4517 = vcmp.eq.f32.partialorder %v4373, inf
          %v4518 = vsel %vm4517, %v4373, %v4516
          %vm4519 = vcmp.eq.f32.partialorder %v4373, 0.0
          %v4520 = vand.u32 %v4373, 2147483648
          %v4521 = vsel %vm4519, %v4520, %v4518
          %v4522 = vrsqrt.pop %v4374
          %v4523 = vmul.f32 %v4522, %v4374
          %v4524 = vmul.f32 %v4523, %v4522
          %v4525 = vmul.f32 0.5, %v4524
          %v4526 = vsub.f32 1.5, %v4525
          %v4527 = vmul.f32 %v4522, %v4526
          %v4528 = vmul.f32 %v4374, %v4527
          %vm4529 = vcmp.eq.f32.partialorder %v4374, inf
          %v4530 = vsel %vm4529, %v4374, %v4528
          %vm4531 = vcmp.eq.f32.partialorder %v4374, 0.0
          %v4532 = vand.u32 %v4374, 2147483648
          %v4533 = vsel %vm4531, %v4532, %v4530
          %v4534 = vrsqrt.pop %v4375
          %v4535 = vmul.f32 %v4534, %v4375
          %v4536 = vmul.f32 %v4535, %v4534
          %v4537 = vmul.f32 0.5, %v4536
          %v4538 = vsub.f32 1.5, %v4537
          %v4539 = vmul.f32 %v4534, %v4538
          %v4540 = vmul.f32 %v4375, %v4539
          %vm4541 = vcmp.eq.f32.partialorder %v4375, inf
          %v4542 = vsel %vm4541, %v4375, %v4540
          %vm4543 = vcmp.eq.f32.partialorder %v4375, 0.0
          %v4544 = vand.u32 %v4375, 2147483648
          %v4545 = vsel %vm4543, %v4544, %v4542
          %v4546 = vrsqrt.pop %v4376
          %v4547 = vmul.f32 %v4546, %v4376
          %v4548 = vmul.f32 %v4547, %v4546
          %v4549 = vmul.f32 0.5, %v4548
          %v4550 = vsub.f32 1.5, %v4549
          %v4551 = vmul.f32 %v4546, %v4550
          %v4552 = vmul.f32 %v4376, %v4551
          %vm4553 = vcmp.eq.f32.partialorder %v4376, inf
          %v4554 = vsel %vm4553, %v4376, %v4552
          %vm4555 = vcmp.eq.f32.partialorder %v4376, 0.0
          %v4556 = vand.u32 %v4376, 2147483648
          %v4557 = vsel %vm4555, %v4556, %v4554
          %v4558 = vrsqrt.pop %v4377
          %v4559 = vmul.f32 %v4558, %v4377
          %v4560 = vmul.f32 %v4559, %v4558
          %v4561 = vmul.f32 0.5, %v4560
          %v4562 = vsub.f32 1.5, %v4561
          %v4563 = vmul.f32 %v4558, %v4562
          %v4564 = vmul.f32 %v4377, %v4563
          %vm4565 = vcmp.eq.f32.partialorder %v4377, inf
          %v4566 = vsel %vm4565, %v4377, %v4564
          %vm4567 = vcmp.eq.f32.partialorder %v4377, 0.0
          %v4568 = vand.u32 %v4377, 2147483648
          %v4569 = vsel %vm4567, %v4568, %v4566
          %v4570 = vpack.c.bf16 %v3621, %v3620
          %v4571 = vpack.c.bf16 %v3623, %v3622
          %v4572 = vpack.c.bf16 %v3625, %v3624
          %v4573 = vpack.c.bf16 %v3627, %v3626
          %v4574 = vpack.c.bf16 %v3629, %v3628
          %v4575 = vpack.c.bf16 %v3631, %v3630
          %v4576 = vpack.c.bf16 %v3633, %v3632
          %v4577 = vpack.c.bf16 %v3635, %v3634
          %v4578 = vld [vmem:[%s860] sm:$0xf]
          %v4579 = vld [vmem:[%s860 + $0x4] sm:$0xf]
          %v4580 = vld [vmem:[%s860 + $0x8] sm:$0xf]
          %v4581 = vld [vmem:[%s860 + $0xc] sm:$0xf]
          %v4582 = vld [vmem:[%s860 + $0x10] sm:$0xf]
          %v4583 = vld [vmem:[%s860 + $0x14] sm:$0xf]
          %v4584 = vld [vmem:[%s860 + $0x18] sm:$0xf]
          %v4585 = vld [vmem:[%s860 + $0x1c] sm:$0xf]
          %v4586 = vld [vmem:[%s860 + $0x20] sm:$0xf]
          %v4587 = vld [vmem:[%s860 + $0x24] sm:$0xf]
          %v4588 = vld [vmem:[%s860 + $0x28] sm:$0xf]
          %v4589 = vld [vmem:[%s860 + $0x2c] sm:$0xf]
          %v4590 = vld [vmem:[%s860 + $0x30] sm:$0xf]
          %v4591 = vld [vmem:[%s860 + $0x34] sm:$0xf]
          %v4592 = vld [vmem:[%s860 + $0x38] sm:$0xf]
          %v4593 = vld [vmem:[%s860 + $0x3c] sm:$0xf]
          %v4594 = vpack.c.bf16 %v4401, %v4389
          %v4595 = vpack.c.bf16 %v4425, %v4413
          %v4596 = vpack.c.bf16 %v4449, %v4437
          %v4597 = vpack.c.bf16 %v4473, %v4461
          %v4598 = vpack.c.bf16 %v4497, %v4485
          %v4599 = vpack.c.bf16 %v4521, %v4509
          %v4600 = vpack.c.bf16 %v4545, %v4533
          %v4601 = vpack.c.bf16 %v4569, %v4557
          %v4602 = vld [vmem:[%s870] sm:$0xf]
          %v4603 = vld [vmem:[%s870 + $0x4] sm:$0xf]
          %v4604 = vld [vmem:[%s870 + $0x8] sm:$0xf]
          %v4605 = vld [vmem:[%s870 + $0xc] sm:$0xf]
          %v4606 = vld [vmem:[%s870 + $0x10] sm:$0xf]
          %v4607 = vld [vmem:[%s870 + $0x14] sm:$0xf]
          %v4608 = vld [vmem:[%s870 + $0x18] sm:$0xf]
          %v4609 = vld [vmem:[%s870 + $0x1c] sm:$0xf]
          %v4610 = vld [vmem:[%s870 + $0x20] sm:$0xf]
          %v4611 = vld [vmem:[%s870 + $0x24] sm:$0xf]
          %v4612 = vld [vmem:[%s870 + $0x28] sm:$0xf]
          %v4613 = vld [vmem:[%s870 + $0x2c] sm:$0xf]
          %v4614 = vld [vmem:[%s870 + $0x30] sm:$0xf]
          %v4615 = vld [vmem:[%s870 + $0x34] sm:$0xf]
          %v4616 = vld [vmem:[%s870 + $0x38] sm:$0xf]
          %v4617 = vld [vmem:[%s870 + $0x3c] sm:$0xf]
          %v4634 = vunpack.c.l.b16 %v4602
          %v4635 = vunpack.c.l.b16 %v4603
          %v4636 = vunpack.c.l.b16 %v4604
          %v4637 = vunpack.c.l.b16 %v4605
          %v4638 = vunpack.c.l.b16 %v4606
          %v4639 = vunpack.c.l.b16 %v4607
          %v4640 = vunpack.c.l.b16 %v4608
          %v4641 = vunpack.c.l.b16 %v4609
          %v4642 = vunpack.c.l.b16 %v4610
          %v4643 = vunpack.c.l.b16 %v4611
          %v4644 = vunpack.c.l.b16 %v4612
          %v4645 = vunpack.c.l.b16 %v4613
          %v4646 = vunpack.c.l.b16 %v4614
          %v4647 = vunpack.c.l.b16 %v4615
          %v4648 = vunpack.c.l.b16 %v4616
          %v4649 = vunpack.c.l.b16 %v4617
          %v4650 = vpack.c.b16 %v4635, %v4634
          %v4651 = vpack.c.b16 %v4637, %v4636
          %v4652 = vpack.c.b16 %v4639, %v4638
          %v4653 = vpack.c.b16 %v4641, %v4640
          %v4654 = vpack.c.b16 %v4643, %v4642
          %v4655 = vpack.c.b16 %v4645, %v4644
          %v4656 = vpack.c.b16 %v4647, %v4646
          %v4657 = vpack.c.b16 %v4649, %v4648
          %4666 = vmatpush.bf16.msra.mxu0 %v4657
          %4667 = vmatpush.bf16.msra.mxu0 %v4656
          %4668 = vmatpush.bf16.msra.mxu0 %v4655
          %4669 = vmatpush.bf16.msra.mxu0 %v4654
          %4670 = vmatpush.bf16.msra.mxu0 %v4653
          %4671 = vmatpush.bf16.msra.mxu0 %v4652
          %4672 = vmatpush.bf16.msra.mxu0 %v4651
          %4673 = vmatpush.bf16.msra.mxu0 %v4650
          %4674 = vmatmul.bf16.gmra.mxu0 %v4594
          %v4675 = vpop.f32.mrf.mxu0
          %v4676 = vadd.f32 0.0, %v4675
          %v4677 = vpop.f32.mrf.mxu0
          %v4678 = vadd.f32 0.0, %v4677
          %4679 = vmatmul.bf16.gmra.mxu0 %v4595
          %v4680 = vpop.f32.mrf.mxu0
          %v4681 = vadd.f32 0.0, %v4680
          %v4682 = vpop.f32.mrf.mxu0
          %v4683 = vadd.f32 0.0, %v4682
          %4684 = vmatmul.bf16.gmra.mxu0 %v4596
          %v4685 = vpop.f32.mrf.mxu0
          %v4686 = vadd.f32 0.0, %v4685
          %v4687 = vpop.f32.mrf.mxu0
          %v4688 = vadd.f32 0.0, %v4687
          %4689 = vmatmul.bf16.gmra.mxu0 %v4597
          %v4690 = vpop.f32.mrf.mxu0
          %v4691 = vadd.f32 0.0, %v4690
          %v4692 = vpop.f32.mrf.mxu0
          %v4693 = vadd.f32 0.0, %v4692
          %4694 = vmatmul.bf16.gmra.mxu0 %v4598
          %v4695 = vpop.f32.mrf.mxu0
          %v4696 = vadd.f32 0.0, %v4695
          %v4697 = vpop.f32.mrf.mxu0
          %v4698 = vadd.f32 0.0, %v4697
          %4699 = vmatmul.bf16.gmra.mxu0 %v4599
          %v4700 = vpop.f32.mrf.mxu0
          %v4701 = vadd.f32 0.0, %v4700
          %v4702 = vpop.f32.mrf.mxu0
          %v4703 = vadd.f32 0.0, %v4702
          %4704 = vmatmul.bf16.gmra.mxu0 %v4600
          %v4705 = vpop.f32.mrf.mxu0
          %v4706 = vadd.f32 0.0, %v4705
          %v4707 = vpop.f32.mrf.mxu0
          %v4708 = vadd.f32 0.0, %v4707
          %4709 = vmatmul.bf16.gmra.mxu0 %v4601
          %v4710 = vpop.f32.mrf.mxu0
          %v4711 = vadd.f32 0.0, %v4710
          %v4712 = vpop.f32.mrf.mxu0
          %v4713 = vadd.f32 0.0, %v4712
          %4714 = vdwg.mxu0
          %v4731 = vunpack.c.l.b16 %v4578
          %v4732 = vunpack.c.l.b16 %v4579
          %v4733 = vunpack.c.l.b16 %v4580
          %v4734 = vunpack.c.l.b16 %v4581
          %v4735 = vunpack.c.l.b16 %v4582
          %v4736 = vunpack.c.l.b16 %v4583
          %v4737 = vunpack.c.l.b16 %v4584
          %v4738 = vunpack.c.l.b16 %v4585
          %v4739 = vunpack.c.l.b16 %v4586
          %v4740 = vunpack.c.l.b16 %v4587
          %v4741 = vunpack.c.l.b16 %v4588
          %v4742 = vunpack.c.l.b16 %v4589
          %v4743 = vunpack.c.l.b16 %v4590
          %v4744 = vunpack.c.l.b16 %v4591
          %v4745 = vunpack.c.l.b16 %v4592
          %v4746 = vunpack.c.l.b16 %v4593
          %v4747 = vpack.c.b16 %v4732, %v4731
          %v4748 = vpack.c.b16 %v4734, %v4733
          %v4749 = vpack.c.b16 %v4736, %v4735
          %v4750 = vpack.c.b16 %v4738, %v4737
          %v4751 = vpack.c.b16 %v4740, %v4739
          %v4752 = vpack.c.b16 %v4742, %v4741
          %v4753 = vpack.c.b16 %v4744, %v4743
          %v4754 = vpack.c.b16 %v4746, %v4745
          %4763 = vmatpush.bf16.msra.mxu0 %v4754
          %4764 = vmatpush.bf16.msra.mxu0 %v4753
          %4765 = vmatpush.bf16.msra.mxu0 %v4752
          %4766 = vmatpush.bf16.msra.mxu0 %v4751
          %4767 = vmatpush.bf16.msra.mxu0 %v4750
          %4768 = vmatpush.bf16.msra.mxu0 %v4749
          %4769 = vmatpush.bf16.msra.mxu0 %v4748
          %4770 = vmatpush.bf16.msra.mxu0 %v4747
          %4771 = vmatmul.bf16.gmra.mxu0 %v4570
          %v4772 = vpop.f32.mrf.mxu0
          %v4773 = vadd.f32 %v4676, %v4772
          %v4774 = vpop.f32.mrf.mxu0
          %v4775 = vadd.f32 %v4678, %v4774
          %4776 = vmatmul.bf16.gmra.mxu0 %v4571
          %v4777 = vpop.f32.mrf.mxu0
          %v4778 = vadd.f32 %v4681, %v4777
          %v4779 = vpop.f32.mrf.mxu0
          %v4780 = vadd.f32 %v4683, %v4779
          %4781 = vmatmul.bf16.gmra.mxu0 %v4572
          %v4782 = vpop.f32.mrf.mxu0
          %v4783 = vadd.f32 %v4686, %v4782
          %v4784 = vpop.f32.mrf.mxu0
          %v4785 = vadd.f32 %v4688, %v4784
          %4786 = vmatmul.bf16.gmra.mxu0 %v4573
          %v4787 = vpop.f32.mrf.mxu0
          %v4788 = vadd.f32 %v4691, %v4787
          %v4789 = vpop.f32.mrf.mxu0
          %v4790 = vadd.f32 %v4693, %v4789
          %4791 = vmatmul.bf16.gmra.mxu0 %v4574
          %v4792 = vpop.f32.mrf.mxu0
          %v4793 = vadd.f32 %v4696, %v4792
          %v4794 = vpop.f32.mrf.mxu0
          %v4795 = vadd.f32 %v4698, %v4794
          %4796 = vmatmul.bf16.gmra.mxu0 %v4575
          %v4797 = vpop.f32.mrf.mxu0
          %v4798 = vadd.f32 %v4701, %v4797
          %v4799 = vpop.f32.mrf.mxu0
          %v4800 = vadd.f32 %v4703, %v4799
          %4801 = vmatmul.bf16.gmra.mxu0 %v4576
          %v4802 = vpop.f32.mrf.mxu0
          %v4803 = vadd.f32 %v4706, %v4802
          %v4804 = vpop.f32.mrf.mxu0
          %v4805 = vadd.f32 %v4708, %v4804
          %4806 = vmatmul.bf16.gmra.mxu0 %v4577
          %v4807 = vpop.f32.mrf.mxu0
          %v4808 = vadd.f32 %v4711, %v4807
          %v4809 = vpop.f32.mrf.mxu0
          %v4810 = vadd.f32 %v4713, %v4809
          %4811 = vdwg.mxu0
          %v4812 = vld [vmem:[%s879] sm:$0x1]
          %v4814 = vperm.slane %v4812, 0
          %v4816 = vadd.f32 %v4773, %v4814
          %v4817 = vadd.f32 %v4775, %v4814
          %v4818 = vadd.f32 %v4778, %v4814
          %v4819 = vadd.f32 %v4780, %v4814
          %v4820 = vadd.f32 %v4783, %v4814
          %v4821 = vadd.f32 %v4785, %v4814
          %v4822 = vadd.f32 %v4788, %v4814
          %v4823 = vadd.f32 %v4790, %v4814
          %v4824 = vadd.f32 %v4793, %v4814
          %v4825 = vadd.f32 %v4795, %v4814
          %v4826 = vadd.f32 %v4798, %v4814
          %v4827 = vadd.f32 %v4800, %v4814
          %v4828 = vadd.f32 %v4803, %v4814
          %v4829 = vadd.f32 %v4805, %v4814
          %v4830 = vadd.f32 %v4808, %v4814
          %v4831 = vadd.f32 %v4810, %v4814
          %v4832 = vxor.u32 %v4816, 2147483648
          %v4833 = vxor.u32 %v4817, 2147483648
          %v4834 = vxor.u32 %v4818, 2147483648
          %v4835 = vxor.u32 %v4819, 2147483648
          %v4836 = vxor.u32 %v4820, 2147483648
          %v4837 = vxor.u32 %v4821, 2147483648
          %v4838 = vxor.u32 %v4822, 2147483648
          %v4839 = vxor.u32 %v4823, 2147483648
          %v4840 = vxor.u32 %v4824, 2147483648
          %v4841 = vxor.u32 %v4825, 2147483648
          %v4842 = vxor.u32 %v4826, 2147483648
          %v4843 = vxor.u32 %v4827, 2147483648
          %v4844 = vxor.u32 %v4828, 2147483648
          %v4845 = vxor.u32 %v4829, 2147483648
          %v4846 = vxor.u32 %v4830, 2147483648
          %v4847 = vxor.u32 %v4831, 2147483648
          %v4848 = vmul.f32 %v4832, 1.442695
          %v4849 = vpow.pop %v4848
          %v4850 = vmul.f32 %v4833, 1.442695
          %v4851 = vpow.pop %v4850
          %v4852 = vmul.f32 %v4834, 1.442695
          %v4853 = vpow.pop %v4852
          %v4854 = vmul.f32 %v4835, 1.442695
          %v4855 = vpow.pop %v4854
          %v4856 = vmul.f32 %v4836, 1.442695
          %v4857 = vpow.pop %v4856
          %v4858 = vmul.f32 %v4837, 1.442695
          %v4859 = vpow.pop %v4858
          %v4860 = vmul.f32 %v4838, 1.442695
          %v4861 = vpow.pop %v4860
          %v4862 = vmul.f32 %v4839, 1.442695
          %v4863 = vpow.pop %v4862
          %v4864 = vmul.f32 %v4840, 1.442695
          %v4865 = vpow.pop %v4864
          %v4866 = vmul.f32 %v4841, 1.442695
          %v4867 = vpow.pop %v4866
          %v4868 = vmul.f32 %v4842, 1.442695
          %v4869 = vpow.pop %v4868
          %v4870 = vmul.f32 %v4843, 1.442695
          %v4871 = vpow.pop %v4870
          %v4872 = vmul.f32 %v4844, 1.442695
          %v4873 = vpow.pop %v4872
          %v4874 = vmul.f32 %v4845, 1.442695
          %v4875 = vpow.pop %v4874
          %v4876 = vmul.f32 %v4846, 1.442695
          %v4877 = vpow.pop %v4876
          %v4878 = vmul.f32 %v4847, 1.442695
          %v4879 = vpow.pop %v4878
          %v4880 = vadd.f32 %v4849, 1.0
          %v4881 = vadd.f32 %v4851, 1.0
          %v4882 = vadd.f32 %v4853, 1.0
          %v4883 = vadd.f32 %v4855, 1.0
          %v4884 = vadd.f32 %v4857, 1.0
          %v4885 = vadd.f32 %v4859, 1.0
          %v4886 = vadd.f32 %v4861, 1.0
          %v4887 = vadd.f32 %v4863, 1.0
          %v4888 = vadd.f32 %v4865, 1.0
          %v4889 = vadd.f32 %v4867, 1.0
          %v4890 = vadd.f32 %v4869, 1.0
          %v4891 = vadd.f32 %v4871, 1.0
          %v4892 = vadd.f32 %v4873, 1.0
          %v4893 = vadd.f32 %v4875, 1.0
          %v4894 = vadd.f32 %v4877, 1.0
          %v4895 = vadd.f32 %v4879, 1.0
          %v4896 = vrcp.pop %v4880
          %v4897 = vmul.f32 %v4880, %v4896
          %v4898 = vsub.f32 1.0, %v4897
          %v4899 = vmul.f32 %v4896, %v4898
          %v4900 = vadd.f32 %v4896, %v4899
          %vm4901 = vweird.f32 %v4880
          %vm4902 = vweird.f32 %v4896
          %vm4903 = vmor %vm4901, %vm4902
          %v4904 = vsel %vm4903, %v4896, %v4900
          %v4905 = vand.u32 2147483647, %v4880
          %vm4906 = vcmp.eq.f32.partialorder %v4905, 8.507059e+37
          %v4907 = vand.u32 %v4880, 2147483648
          %v4908 = vor.u32 1.1754944e-38, %v4907
          %v4909 = vsel %vm4906, %v4908, %v4904
          %v4910 = vmul.f32 1.0, %v4909
          %v4911 = vrcp.pop %v4881
          %v4912 = vmul.f32 %v4881, %v4911
          %v4913 = vsub.f32 1.0, %v4912
          %v4914 = vmul.f32 %v4911, %v4913
          %v4915 = vadd.f32 %v4911, %v4914
          %vm4916 = vweird.f32 %v4881
          %vm4917 = vweird.f32 %v4911
          %vm4918 = vmor %vm4916, %vm4917
          %v4919 = vsel %vm4918, %v4911, %v4915
          %v4920 = vand.u32 2147483647, %v4881
          %vm4921 = vcmp.eq.f32.partialorder %v4920, 8.507059e+37
          %v4922 = vand.u32 %v4881, 2147483648
          %v4923 = vor.u32 1.1754944e-38, %v4922
          %v4924 = vsel %vm4921, %v4923, %v4919
          %v4925 = vmul.f32 1.0, %v4924
          %v4926 = vrcp.pop %v4882
          %v4927 = vmul.f32 %v4882, %v4926
          %v4928 = vsub.f32 1.0, %v4927
          %v4929 = vmul.f32 %v4926, %v4928
          %v4930 = vadd.f32 %v4926, %v4929
          %vm4931 = vweird.f32 %v4882
          %vm4932 = vweird.f32 %v4926
          %vm4933 = vmor %vm4931, %vm4932
          %v4934 = vsel %vm4933, %v4926, %v4930
          %v4935 = vand.u32 2147483647, %v4882
          %vm4936 = vcmp.eq.f32.partialorder %v4935, 8.507059e+37
          %v4937 = vand.u32 %v4882, 2147483648
          %v4938 = vor.u32 1.1754944e-38, %v4937
          %v4939 = vsel %vm4936, %v4938, %v4934
          %v4940 = vmul.f32 1.0, %v4939
          %v4941 = vrcp.pop %v4883
          %v4942 = vmul.f32 %v4883, %v4941
          %v4943 = vsub.f32 1.0, %v4942
          %v4944 = vmul.f32 %v4941, %v4943
          %v4945 = vadd.f32 %v4941, %v4944
          %vm4946 = vweird.f32 %v4883
          %vm4947 = vweird.f32 %v4941
          %vm4948 = vmor %vm4946, %vm4947
          %v4949 = vsel %vm4948, %v4941, %v4945
          %v4950 = vand.u32 2147483647, %v4883
          %vm4951 = vcmp.eq.f32.partialorder %v4950, 8.507059e+37
          %v4952 = vand.u32 %v4883, 2147483648
          %v4953 = vor.u32 1.1754944e-38, %v4952
          %v4954 = vsel %vm4951, %v4953, %v4949
          %v4955 = vmul.f32 1.0, %v4954
          %v4956 = vrcp.pop %v4884
          %v4957 = vmul.f32 %v4884, %v4956
          %v4958 = vsub.f32 1.0, %v4957
          %v4959 = vmul.f32 %v4956, %v4958
          %v4960 = vadd.f32 %v4956, %v4959
          %vm4961 = vweird.f32 %v4884
          %vm4962 = vweird.f32 %v4956
          %vm4963 = vmor %vm4961, %vm4962
          %v4964 = vsel %vm4963, %v4956, %v4960
          %v4965 = vand.u32 2147483647, %v4884
          %vm4966 = vcmp.eq.f32.partialorder %v4965, 8.507059e+37
          %v4967 = vand.u32 %v4884, 2147483648
          %v4968 = vor.u32 1.1754944e-38, %v4967
          %v4969 = vsel %vm4966, %v4968, %v4964
          %v4970 = vmul.f32 1.0, %v4969
          %v4971 = vrcp.pop %v4885
          %v4972 = vmul.f32 %v4885, %v4971
          %v4973 = vsub.f32 1.0, %v4972
          %v4974 = vmul.f32 %v4971, %v4973
          %v4975 = vadd.f32 %v4971, %v4974
          %vm4976 = vweird.f32 %v4885
          %vm4977 = vweird.f32 %v4971
          %vm4978 = vmor %vm4976, %vm4977
          %v4979 = vsel %vm4978, %v4971, %v4975
          %v4980 = vand.u32 2147483647, %v4885
          %vm4981 = vcmp.eq.f32.partialorder %v4980, 8.507059e+37
          %v4982 = vand.u32 %v4885, 2147483648
          %v4983 = vor.u32 1.1754944e-38, %v4982
          %v4984 = vsel %vm4981, %v4983, %v4979
          %v4985 = vmul.f32 1.0, %v4984
          %v4986 = vrcp.pop %v4886
          %v4987 = vmul.f32 %v4886, %v4986
          %v4988 = vsub.f32 1.0, %v4987
          %v4989 = vmul.f32 %v4986, %v4988
          %v4990 = vadd.f32 %v4986, %v4989
          %vm4991 = vweird.f32 %v4886
          %vm4992 = vweird.f32 %v4986
          %vm4993 = vmor %vm4991, %vm4992
          %v4994 = vsel %vm4993, %v4986, %v4990
          %v4995 = vand.u32 2147483647, %v4886
          %vm4996 = vcmp.eq.f32.partialorder %v4995, 8.507059e+37
          %v4997 = vand.u32 %v4886, 2147483648
          %v4998 = vor.u32 1.1754944e-38, %v4997
          %v4999 = vsel %vm4996, %v4998, %v4994
          %v5000 = vmul.f32 1.0, %v4999
          %v5001 = vrcp.pop %v4887
          %v5002 = vmul.f32 %v4887, %v5001
          %v5003 = vsub.f32 1.0, %v5002
          %v5004 = vmul.f32 %v5001, %v5003
          %v5005 = vadd.f32 %v5001, %v5004
          %vm5006 = vweird.f32 %v4887
          %vm5007 = vweird.f32 %v5001
          %vm5008 = vmor %vm5006, %vm5007
          %v5009 = vsel %vm5008, %v5001, %v5005
          %v5010 = vand.u32 2147483647, %v4887
          %vm5011 = vcmp.eq.f32.partialorder %v5010, 8.507059e+37
          %v5012 = vand.u32 %v4887, 2147483648
          %v5013 = vor.u32 1.1754944e-38, %v5012
          %v5014 = vsel %vm5011, %v5013, %v5009
          %v5015 = vmul.f32 1.0, %v5014
          %v5016 = vrcp.pop %v4888
          %v5017 = vmul.f32 %v4888, %v5016
          %v5018 = vsub.f32 1.0, %v5017
          %v5019 = vmul.f32 %v5016, %v5018
          %v5020 = vadd.f32 %v5016, %v5019
          %vm5021 = vweird.f32 %v4888
          %vm5022 = vweird.f32 %v5016
          %vm5023 = vmor %vm5021, %vm5022
          %v5024 = vsel %vm5023, %v5016, %v5020
          %v5025 = vand.u32 2147483647, %v4888
          %vm5026 = vcmp.eq.f32.partialorder %v5025, 8.507059e+37
          %v5027 = vand.u32 %v4888, 2147483648
          %v5028 = vor.u32 1.1754944e-38, %v5027
          %v5029 = vsel %vm5026, %v5028, %v5024
          %v5030 = vmul.f32 1.0, %v5029
          %v5031 = vrcp.pop %v4889
          %v5032 = vmul.f32 %v4889, %v5031
          %v5033 = vsub.f32 1.0, %v5032
          %v5034 = vmul.f32 %v5031, %v5033
          %v5035 = vadd.f32 %v5031, %v5034
          %vm5036 = vweird.f32 %v4889
          %vm5037 = vweird.f32 %v5031
          %vm5038 = vmor %vm5036, %vm5037
          %v5039 = vsel %vm5038, %v5031, %v5035
          %v5040 = vand.u32 2147483647, %v4889
          %vm5041 = vcmp.eq.f32.partialorder %v5040, 8.507059e+37
          %v5042 = vand.u32 %v4889, 2147483648
          %v5043 = vor.u32 1.1754944e-38, %v5042
          %v5044 = vsel %vm5041, %v5043, %v5039
          %v5045 = vmul.f32 1.0, %v5044
          %v5046 = vrcp.pop %v4890
          %v5047 = vmul.f32 %v4890, %v5046
          %v5048 = vsub.f32 1.0, %v5047
          %v5049 = vmul.f32 %v5046, %v5048
          %v5050 = vadd.f32 %v5046, %v5049
          %vm5051 = vweird.f32 %v4890
          %vm5052 = vweird.f32 %v5046
          %vm5053 = vmor %vm5051, %vm5052
          %v5054 = vsel %vm5053, %v5046, %v5050
          %v5055 = vand.u32 2147483647, %v4890
          %vm5056 = vcmp.eq.f32.partialorder %v5055, 8.507059e+37
          %v5057 = vand.u32 %v4890, 2147483648
          %v5058 = vor.u32 1.1754944e-38, %v5057
          %v5059 = vsel %vm5056, %v5058, %v5054
          %v5060 = vmul.f32 1.0, %v5059
          %v5061 = vrcp.pop %v4891
          %v5062 = vmul.f32 %v4891, %v5061
          %v5063 = vsub.f32 1.0, %v5062
          %v5064 = vmul.f32 %v5061, %v5063
          %v5065 = vadd.f32 %v5061, %v5064
          %vm5066 = vweird.f32 %v4891
          %vm5067 = vweird.f32 %v5061
          %vm5068 = vmor %vm5066, %vm5067
          %v5069 = vsel %vm5068, %v5061, %v5065
          %v5070 = vand.u32 2147483647, %v4891
          %vm5071 = vcmp.eq.f32.partialorder %v5070, 8.507059e+37
          %v5072 = vand.u32 %v4891, 2147483648
          %v5073 = vor.u32 1.1754944e-38, %v5072
          %v5074 = vsel %vm5071, %v5073, %v5069
          %v5075 = vmul.f32 1.0, %v5074
          %v5076 = vrcp.pop %v4892
          %v5077 = vmul.f32 %v4892, %v5076
          %v5078 = vsub.f32 1.0, %v5077
          %v5079 = vmul.f32 %v5076, %v5078
          %v5080 = vadd.f32 %v5076, %v5079
          %vm5081 = vweird.f32 %v4892
          %vm5082 = vweird.f32 %v5076
          %vm5083 = vmor %vm5081, %vm5082
          %v5084 = vsel %vm5083, %v5076, %v5080
          %v5085 = vand.u32 2147483647, %v4892
          %vm5086 = vcmp.eq.f32.partialorder %v5085, 8.507059e+37
          %v5087 = vand.u32 %v4892, 2147483648
          %v5088 = vor.u32 1.1754944e-38, %v5087
          %v5089 = vsel %vm5086, %v5088, %v5084
          %v5090 = vmul.f32 1.0, %v5089
          %v5091 = vrcp.pop %v4893
          %v5092 = vmul.f32 %v4893, %v5091
          %v5093 = vsub.f32 1.0, %v5092
          %v5094 = vmul.f32 %v5091, %v5093
          %v5095 = vadd.f32 %v5091, %v5094
          %vm5096 = vweird.f32 %v4893
          %vm5097 = vweird.f32 %v5091
          %vm5098 = vmor %vm5096, %vm5097
          %v5099 = vsel %vm5098, %v5091, %v5095
          %v5100 = vand.u32 2147483647, %v4893
          %vm5101 = vcmp.eq.f32.partialorder %v5100, 8.507059e+37
          %v5102 = vand.u32 %v4893, 2147483648
          %v5103 = vor.u32 1.1754944e-38, %v5102
          %v5104 = vsel %vm5101, %v5103, %v5099
          %v5105 = vmul.f32 1.0, %v5104
          %v5106 = vrcp.pop %v4894
          %v5107 = vmul.f32 %v4894, %v5106
          %v5108 = vsub.f32 1.0, %v5107
          %v5109 = vmul.f32 %v5106, %v5108
          %v5110 = vadd.f32 %v5106, %v5109
          %vm5111 = vweird.f32 %v4894
          %vm5112 = vweird.f32 %v5106
          %vm5113 = vmor %vm5111, %vm5112
          %v5114 = vsel %vm5113, %v5106, %v5110
          %v5115 = vand.u32 2147483647, %v4894
          %vm5116 = vcmp.eq.f32.partialorder %v5115, 8.507059e+37
          %v5117 = vand.u32 %v4894, 2147483648
          %v5118 = vor.u32 1.1754944e-38, %v5117
          %v5119 = vsel %vm5116, %v5118, %v5114
          %v5120 = vmul.f32 1.0, %v5119
          %v5121 = vrcp.pop %v4895
          %v5122 = vmul.f32 %v4895, %v5121
          %v5123 = vsub.f32 1.0, %v5122
          %v5124 = vmul.f32 %v5121, %v5123
          %v5125 = vadd.f32 %v5121, %v5124
          %vm5126 = vweird.f32 %v4895
          %vm5127 = vweird.f32 %v5121
          %vm5128 = vmor %vm5126, %vm5127
          %v5129 = vsel %vm5128, %v5121, %v5125
          %v5130 = vand.u32 2147483647, %v4895
          %vm5131 = vcmp.eq.f32.partialorder %v5130, 8.507059e+37
          %v5132 = vand.u32 %v4895, 2147483648
          %v5133 = vor.u32 1.1754944e-38, %v5132
          %v5134 = vsel %vm5131, %v5133, %v5129
          %v5135 = vmul.f32 1.0, %v5134
          %v5136 = vmul.f32 %v4816, %v4910
          %v5137 = vmul.f32 %v4817, %v4925
          %v5138 = vmul.f32 %v4818, %v4940
          %v5139 = vmul.f32 %v4819, %v4955
          %v5140 = vmul.f32 %v4820, %v4970
          %v5141 = vmul.f32 %v4821, %v4985
          %v5142 = vmul.f32 %v4822, %v5000
          %v5143 = vmul.f32 %v4823, %v5015
          %v5144 = vmul.f32 %v4824, %v5030
          %v5145 = vmul.f32 %v4825, %v5045
          %v5146 = vmul.f32 %v4826, %v5060
          %v5147 = vmul.f32 %v4827, %v5075
          %v5148 = vmul.f32 %v4828, %v5090
          %v5149 = vmul.f32 %v4829, %v5105
          %v5150 = vmul.f32 %v4830, %v5120
          %v5151 = vmul.f32 %v4831, %v5135
          %v5152 = vpack.c.bf16 %v5137, %v5136
          %v5153 = vpack.c.bf16 %v5139, %v5138
          %v5154 = vpack.c.bf16 %v5141, %v5140
          %v5155 = vpack.c.bf16 %v5143, %v5142
          %v5156 = vpack.c.bf16 %v5145, %v5144
          %v5157 = vpack.c.bf16 %v5147, %v5146
          %v5158 = vpack.c.bf16 %v5149, %v5148
          %v5159 = vpack.c.bf16 %v5151, %v5150
          %v5160 = vld [vmem:[%s889] sm:$0xff]
          %v5161 = vld [vmem:[%s889 + $0x8] sm:$0xf]
          %v5162 = vld [vmem:[%s889 + $0xc] sm:$0xff]
          %v5163 = vld [vmem:[%s889 + $0x14] sm:$0xf]
          %v5164 = vld [vmem:[%s889 + $0x18] sm:$0xff]
          %v5165 = vld [vmem:[%s889 + $0x20] sm:$0xf]
          %v5166 = vld [vmem:[%s889 + $0x24] sm:$0xff]
          %v5167 = vld [vmem:[%s889 + $0x2c] sm:$0xf]
          %v5168 = vld [vmem:[%s889 + $0x30] sm:$0xff]
          %v5169 = vld [vmem:[%s889 + $0x38] sm:$0xf]
          %v5170 = vld [vmem:[%s889 + $0x3c] sm:$0xff]
          %v5171 = vld [vmem:[%s889 + $0x44] sm:$0xf]
          %v5172 = vld [vmem:[%s889 + $0x48] sm:$0xff]
          %v5173 = vld [vmem:[%s889 + $0x50] sm:$0xf]
          %v5174 = vld [vmem:[%s889 + $0x54] sm:$0xff]
          %v5175 = vld [vmem:[%s889 + $0x5c] sm:$0xf]
          %v5176 = vld [vmem:[%s889 + $0x60] sm:$0xff]
          %v5177 = vld [vmem:[%s889 + $0x68] sm:$0xf]
          %v5178 = vld [vmem:[%s889 + $0x6c] sm:$0xff]
          %v5179 = vld [vmem:[%s889 + $0x74] sm:$0xf]
          %v5180 = vld [vmem:[%s889 + $0x78] sm:$0xff]
          %v5181 = vld [vmem:[%s889 + $0x80] sm:$0xf]
          %v5182 = vld [vmem:[%s889 + $0x84] sm:$0xff]
          %v5183 = vld [vmem:[%s889 + $0x8c] sm:$0xf]
          %v5184 = vld [vmem:[%s889 + $0x90] sm:$0xff]
          %v5185 = vld [vmem:[%s889 + $0x98] sm:$0xf]
          %v5186 = vld [vmem:[%s889 + $0x9c] sm:$0xff]
          %v5187 = vld [vmem:[%s889 + $0xa4] sm:$0xf]
          %v5188 = vld [vmem:[%s889 + $0xa8] sm:$0xff]
          %v5189 = vld [vmem:[%s889 + $0xb0] sm:$0xf]
          %v5190 = vld [vmem:[%s889 + $0xb4] sm:$0xff]
          %v5191 = vld [vmem:[%s889 + $0xbc] sm:$0xf]
          %v5192 = vld [vmem:[%s1003] sm:$0x7]
          %v5194 = vperm.slane %v5192, 0
          %v5195 = vperm.slane %v5192, 1
          %v5196 = vperm.slane %v5192, 2
          %v5232 = vunpack.c.l.b16 %v5160
          %v5233 = vunpack.c.h.b16 %v5160
          %v5234 = vunpack.c.l.b16 %v5161
          %v5235 = vunpack.c.l.b16 %v5162
          %v5236 = vunpack.c.h.b16 %v5162
          %v5237 = vunpack.c.l.b16 %v5163
          %v5238 = vunpack.c.l.b16 %v5164
          %v5239 = vunpack.c.h.b16 %v5164
          %v5240 = vunpack.c.l.b16 %v5165
          %v5241 = vunpack.c.l.b16 %v5166
          %v5242 = vunpack.c.h.b16 %v5166
          %v5243 = vunpack.c.l.b16 %v5167
          %v5244 = vunpack.c.l.b16 %v5168
          %v5245 = vunpack.c.h.b16 %v5168
          %v5246 = vunpack.c.l.b16 %v5169
          %v5247 = vunpack.c.l.b16 %v5170
          %v5248 = vunpack.c.h.b16 %v5170
          %v5249 = vunpack.c.l.b16 %v5171
          %v5250 = vunpack.c.l.b16 %v5172
          %v5251 = vunpack.c.h.b16 %v5172
          %v5252 = vunpack.c.l.b16 %v5173
          %v5253 = vunpack.c.l.b16 %v5174
          %v5254 = vunpack.c.h.b16 %v5174
          %v5255 = vunpack.c.l.b16 %v5175
          %v5256 = vunpack.c.l.b16 %v5176
          %v5257 = vunpack.c.h.b16 %v5176
          %v5258 = vunpack.c.l.b16 %v5177
          %v5259 = vunpack.c.l.b16 %v5178
          %v5260 = vunpack.c.h.b16 %v5178
          %v5261 = vunpack.c.l.b16 %v5179
          %v5262 = vunpack.c.l.b16 %v5180
          %v5263 = vunpack.c.h.b16 %v5180
          %v5264 = vunpack.c.l.b16 %v5181
          %v5265 = vunpack.c.l.b16 %v5182
          %v5266 = vunpack.c.h.b16 %v5182
          %v5267 = vunpack.c.l.b16 %v5183
          %v5268 = vunpack.c.l.b16 %v5184
          %v5269 = vunpack.c.h.b16 %v5184
          %v5270 = vunpack.c.l.b16 %v5185
          %v5271 = vunpack.c.l.b16 %v5186
          %v5272 = vunpack.c.h.b16 %v5186
          %v5273 = vunpack.c.l.b16 %v5187
          %v5274 = vunpack.c.l.b16 %v5188
          %v5275 = vunpack.c.h.b16 %v5188
          %v5276 = vunpack.c.l.b16 %v5189
          %v5277 = vunpack.c.l.b16 %v5190
          %v5278 = vunpack.c.h.b16 %v5190
          %v5279 = vunpack.c.l.b16 %v5191
          %v5280 = vpack.c.b16 %v5235, %v5232
          %v5281 = vpack.c.b16 %v5236, %v5233
          %v5282 = vpack.c.b16 %v5237, %v5234
          %v5283 = vpack.c.b16 %v5241, %v5238
          %v5284 = vpack.c.b16 %v5242, %v5239
          %v5285 = vpack.c.b16 %v5243, %v5240
          %v5286 = vpack.c.b16 %v5247, %v5244
          %v5287 = vpack.c.b16 %v5248, %v5245
          %v5288 = vpack.c.b16 %v5249, %v5246
          %v5289 = vpack.c.b16 %v5253, %v5250
          %v5290 = vpack.c.b16 %v5254, %v5251
          %v5291 = vpack.c.b16 %v5255, %v5252
          %v5292 = vpack.c.b16 %v5259, %v5256
          %v5293 = vpack.c.b16 %v5260, %v5257
          %v5294 = vpack.c.b16 %v5261, %v5258
          %v5295 = vpack.c.b16 %v5265, %v5262
          %v5296 = vpack.c.b16 %v5266, %v5263
          %v5297 = vpack.c.b16 %v5267, %v5264
          %v5298 = vpack.c.b16 %v5271, %v5268
          %v5299 = vpack.c.b16 %v5272, %v5269
          %v5300 = vpack.c.b16 %v5273, %v5270
          %v5301 = vpack.c.b16 %v5277, %v5274
          %v5302 = vpack.c.b16 %v5278, %v5275
          %v5303 = vpack.c.b16 %v5279, %v5276
          %5328 = vmatpush.bf16.msra.mxu0 %v5301
          %5329 = vmatpush.bf16.msra.mxu0 %v5298
          %5330 = vmatpush.bf16.msra.mxu0 %v5295
          %5331 = vmatpush.bf16.msra.mxu0 %v5292
          %5332 = vmatpush.bf16.msra.mxu0 %v5289
          %5333 = vmatpush.bf16.msra.mxu0 %v5286
          %5334 = vmatpush.bf16.msra.mxu0 %v5283
          %5335 = vmatpush.bf16.msra.mxu0 %v5280
          %5336 = vmatmul.bf16.gmra.mxu0 %v5152
          %v5337 = vpop.f32.mrf.mxu0
          %v5338 = vadd.f32 %v5194, %v5337
          %v5339 = vpop.f32.mrf.mxu0
          %v5340 = vadd.f32 %v5194, %v5339
          %5341 = vmatmul.bf16.gmra.mxu0 %v5153
          %v5342 = vpop.f32.mrf.mxu0
          %v5343 = vadd.f32 %v5194, %v5342
          %v5344 = vpop.f32.mrf.mxu0
          %v5345 = vadd.f32 %v5194, %v5344
          %5346 = vmatmul.bf16.gmra.mxu0 %v5154
          %v5347 = vpop.f32.mrf.mxu0
          %v5348 = vadd.f32 %v5194, %v5347
          %v5349 = vpop.f32.mrf.mxu0
          %v5350 = vadd.f32 %v5194, %v5349
          %5351 = vmatmul.bf16.gmra.mxu0 %v5155
          %v5352 = vpop.f32.mrf.mxu0
          %v5353 = vadd.f32 %v5194, %v5352
          %v5354 = vpop.f32.mrf.mxu0
          %v5355 = vadd.f32 %v5194, %v5354
          %5356 = vmatmul.bf16.gmra.mxu0 %v5156
          %v5357 = vpop.f32.mrf.mxu0
          %v5358 = vadd.f32 %v5194, %v5357
          %v5359 = vpop.f32.mrf.mxu0
          %v5360 = vadd.f32 %v5194, %v5359
          %5361 = vmatmul.bf16.gmra.mxu0 %v5157
          %v5362 = vpop.f32.mrf.mxu0
          %v5363 = vadd.f32 %v5194, %v5362
          %v5364 = vpop.f32.mrf.mxu0
          %v5365 = vadd.f32 %v5194, %v5364
          %5366 = vmatmul.bf16.gmra.mxu0 %v5158
          %v5367 = vpop.f32.mrf.mxu0
          %v5368 = vadd.f32 %v5194, %v5367
          %v5369 = vpop.f32.mrf.mxu0
          %v5370 = vadd.f32 %v5194, %v5369
          %5371 = vmatmul.bf16.gmra.mxu0 %v5159
          %v5372 = vpop.f32.mrf.mxu0
          %v5373 = vadd.f32 %v5194, %v5372
          %v5374 = vpop.f32.mrf.mxu0
          %v5375 = vadd.f32 %v5194, %v5374
          %5376 = vdwg.mxu0
          %5377 = vmatpush.bf16.msra.mxu0 %v5302
          %5378 = vmatpush.bf16.msra.mxu0 %v5299
          %5379 = vmatpush.bf16.msra.mxu0 %v5296
          %5380 = vmatpush.bf16.msra.mxu0 %v5293
          %5381 = vmatpush.bf16.msra.mxu0 %v5290
          %5382 = vmatpush.bf16.msra.mxu0 %v5287
          %5383 = vmatpush.bf16.msra.mxu0 %v5284
          %5384 = vmatpush.bf16.msra.mxu0 %v5281
          %5385 = vmatmul.bf16.gmra.mxu0 %v5152
          %v5386 = vpop.f32.mrf.mxu0
          %v5387 = vadd.f32 %v5195, %v5386
          %v5388 = vpop.f32.mrf.mxu0
          %v5389 = vadd.f32 %v5195, %v5388
          %5390 = vmatmul.bf16.gmra.mxu0 %v5153
          %v5391 = vpop.f32.mrf.mxu0
          %v5392 = vadd.f32 %v5195, %v5391
          %v5393 = vpop.f32.mrf.mxu0
          %v5394 = vadd.f32 %v5195, %v5393
          %5395 = vmatmul.bf16.gmra.mxu0 %v5154
          %v5396 = vpop.f32.mrf.mxu0
          %v5397 = vadd.f32 %v5195, %v5396
          %v5398 = vpop.f32.mrf.mxu0
          %v5399 = vadd.f32 %v5195, %v5398
          %5400 = vmatmul.bf16.gmra.mxu0 %v5155
          %v5401 = vpop.f32.mrf.mxu0
          %v5402 = vadd.f32 %v5195, %v5401
          %v5403 = vpop.f32.mrf.mxu0
          %v5404 = vadd.f32 %v5195, %v5403
          %5405 = vmatmul.bf16.gmra.mxu0 %v5156
          %v5406 = vpop.f32.mrf.mxu0
          %v5407 = vadd.f32 %v5195, %v5406
          %v5408 = vpop.f32.mrf.mxu0
          %v5409 = vadd.f32 %v5195, %v5408
          %5410 = vmatmul.bf16.gmra.mxu0 %v5157
          %v5411 = vpop.f32.mrf.mxu0
          %v5412 = vadd.f32 %v5195, %v5411
          %v5413 = vpop.f32.mrf.mxu0
          %v5414 = vadd.f32 %v5195, %v5413
          %5415 = vmatmul.bf16.gmra.mxu0 %v5158
          %v5416 = vpop.f32.mrf.mxu0
          %v5417 = vadd.f32 %v5195, %v5416
          %v5418 = vpop.f32.mrf.mxu0
          %v5419 = vadd.f32 %v5195, %v5418
          %5420 = vmatmul.bf16.gmra.mxu0 %v5159
          %v5421 = vpop.f32.mrf.mxu0
          %v5422 = vadd.f32 %v5195, %v5421
          %v5423 = vpop.f32.mrf.mxu0
          %v5424 = vadd.f32 %v5195, %v5423
          %5425 = vdwg.mxu0
          %5426 = vmatpush.bf16.msra.mxu0 %v5303
          %5427 = vmatpush.bf16.msra.mxu0 %v5300
          %5428 = vmatpush.bf16.msra.mxu0 %v5297
          %5429 = vmatpush.bf16.msra.mxu0 %v5294
          %5430 = vmatpush.bf16.msra.mxu0 %v5291
          %5431 = vmatpush.bf16.msra.mxu0 %v5288
          %5432 = vmatpush.bf16.msra.mxu0 %v5285
          %5433 = vmatpush.bf16.msra.mxu0 %v5282
          %5434 = vmatmul.bf16.gmra.mxu0 %v5152
          %v5435 = vpop.f32.mrf.mxu0
          %v5436 = vadd.f32 %v5196, %v5435
          %v5437 = vpop.f32.mrf.mxu0
          %v5438 = vadd.f32 %v5196, %v5437
          %5439 = vmatmul.bf16.gmra.mxu0 %v5153
          %v5440 = vpop.f32.mrf.mxu0
          %v5441 = vadd.f32 %v5196, %v5440
          %v5442 = vpop.f32.mrf.mxu0
          %v5443 = vadd.f32 %v5196, %v5442
          %5444 = vmatmul.bf16.gmra.mxu0 %v5154
          %v5445 = vpop.f32.mrf.mxu0
          %v5446 = vadd.f32 %v5196, %v5445
          %v5447 = vpop.f32.mrf.mxu0
          %v5448 = vadd.f32 %v5196, %v5447
          %5449 = vmatmul.bf16.gmra.mxu0 %v5155
          %v5450 = vpop.f32.mrf.mxu0
          %v5451 = vadd.f32 %v5196, %v5450
          %v5452 = vpop.f32.mrf.mxu0
          %v5453 = vadd.f32 %v5196, %v5452
          %5454 = vmatmul.bf16.gmra.mxu0 %v5156
          %v5455 = vpop.f32.mrf.mxu0
          %v5456 = vadd.f32 %v5196, %v5455
          %v5457 = vpop.f32.mrf.mxu0
          %v5458 = vadd.f32 %v5196, %v5457
          %5459 = vmatmul.bf16.gmra.mxu0 %v5157
          %v5460 = vpop.f32.mrf.mxu0
          %v5461 = vadd.f32 %v5196, %v5460
          %v5462 = vpop.f32.mrf.mxu0
          %v5463 = vadd.f32 %v5196, %v5462
          %5464 = vmatmul.bf16.gmra.mxu0 %v5158
          %v5465 = vpop.f32.mrf.mxu0
          %v5466 = vadd.f32 %v5196, %v5465
          %v5467 = vpop.f32.mrf.mxu0
          %v5468 = vadd.f32 %v5196, %v5467
          %5469 = vmatmul.bf16.gmra.mxu0 %v5159
          %v5470 = vpop.f32.mrf.mxu0
          %v5471 = vadd.f32 %v5196, %v5470
          %v5472 = vpop.f32.mrf.mxu0
          %v5473 = vadd.f32 %v5196, %v5472
          %5474 = vdwg.mxu0
          %v5475 = vmul.f32 %v3918, %v3967
          %v5476 = vmul.f32 %v3920, %v3969
          %v5477 = vmul.f32 %v3923, %v3972
          %v5478 = vmul.f32 %v3925, %v3974
          %v5479 = vmul.f32 %v3928, %v3977
          %v5480 = vmul.f32 %v3930, %v3979
          %v5481 = vmul.f32 %v3933, %v3982
          %v5482 = vmul.f32 %v3935, %v3984
          %v5483 = vmul.f32 %v3938, %v3987
          %v5484 = vmul.f32 %v3940, %v3989
          %v5485 = vmul.f32 %v3943, %v3992
          %v5486 = vmul.f32 %v3945, %v3994
          %v5487 = vmul.f32 %v3948, %v3997
          %v5488 = vmul.f32 %v3950, %v3999
          %v5489 = vmul.f32 %v3953, %v4002
          %v5490 = vmul.f32 %v3955, %v4004
          %v5491 = vmul.f32 %v4048, %v4097
          %v5492 = vmul.f32 %v4050, %v4099
          %v5493 = vmul.f32 %v4053, %v4102
          %v5494 = vmul.f32 %v4055, %v4104
          %v5495 = vmul.f32 %v4058, %v4107
          %v5496 = vmul.f32 %v4060, %v4109
          %v5497 = vmul.f32 %v4063, %v4112
          %v5498 = vmul.f32 %v4065, %v4114
          %v5499 = vmul.f32 %v4068, %v4117
          %v5500 = vmul.f32 %v4070, %v4119
          %v5501 = vmul.f32 %v4073, %v4122
          %v5502 = vmul.f32 %v4075, %v4124
          %v5503 = vmul.f32 %v4078, %v4127
          %v5504 = vmul.f32 %v4080, %v4129
          %v5505 = vmul.f32 %v4083, %v4132
          %v5506 = vmul.f32 %v4085, %v4134
          %v5507 = vadd.f32 %v5475, %v5491
          %v5508 = vadd.f32 %v5476, %v5492
          %v5509 = vadd.f32 %v5477, %v5493
          %v5510 = vadd.f32 %v5478, %v5494
          %v5511 = vadd.f32 %v5479, %v5495
          %v5512 = vadd.f32 %v5480, %v5496
          %v5513 = vadd.f32 %v5481, %v5497
          %v5514 = vadd.f32 %v5482, %v5498
          %v5515 = vadd.f32 %v5483, %v5499
          %v5516 = vadd.f32 %v5484, %v5500
          %v5517 = vadd.f32 %v5485, %v5501
          %v5518 = vadd.f32 %v5486, %v5502
          %v5519 = vadd.f32 %v5487, %v5503
          %v5520 = vadd.f32 %v5488, %v5504
          %v5521 = vadd.f32 %v5489, %v5505
          %v5522 = vadd.f32 %v5490, %v5506
          %v5523 = vmul.f32 %v4194, %v4243
          %v5524 = vmul.f32 %v4196, %v4245
          %v5525 = vmul.f32 %v4199, %v4248
          %v5526 = vmul.f32 %v4201, %v4250
          %v5527 = vmul.f32 %v4204, %v4253
          %v5528 = vmul.f32 %v4206, %v4255
          %v5529 = vmul.f32 %v4209, %v4258
          %v5530 = vmul.f32 %v4211, %v4260
          %v5531 = vmul.f32 %v4214, %v4263
          %v5532 = vmul.f32 %v4216, %v4265
          %v5533 = vmul.f32 %v4219, %v4268
          %v5534 = vmul.f32 %v4221, %v4270
          %v5535 = vmul.f32 %v4224, %v4273
          %v5536 = vmul.f32 %v4226, %v4275
          %v5537 = vmul.f32 %v4229, %v4278
          %v5538 = vmul.f32 %v4231, %v4280
          %v5539 = vadd.f32 %v5507, %v5523
          %v5540 = vadd.f32 %v5508, %v5524
          %v5541 = vadd.f32 %v5509, %v5525
          %v5542 = vadd.f32 %v5510, %v5526
          %v5543 = vadd.f32 %v5511, %v5527
          %v5544 = vadd.f32 %v5512, %v5528
          %v5545 = vadd.f32 %v5513, %v5529
          %v5546 = vadd.f32 %v5514, %v5530
          %v5547 = vadd.f32 %v5515, %v5531
          %v5548 = vadd.f32 %v5516, %v5532
          %v5549 = vadd.f32 %v5517, %v5533
          %v5550 = vadd.f32 %v5518, %v5534
          %v5551 = vadd.f32 %v5519, %v5535
          %v5552 = vadd.f32 %v5520, %v5536
          %v5553 = vadd.f32 %v5521, %v5537
          %v5554 = vadd.f32 %v5522, %v5538
          %v5555 = vadd.f32 %v3620, %v5338
          %v5556 = vadd.f32 %v3621, %v5340
          %v5557 = vadd.f32 %v3622, %v5343
          %v5558 = vadd.f32 %v3623, %v5345
          %v5559 = vadd.f32 %v3624, %v5348
          %v5560 = vadd.f32 %v3625, %v5350
          %v5561 = vadd.f32 %v3626, %v5353
          %v5562 = vadd.f32 %v3627, %v5355
          %v5563 = vadd.f32 %v3628, %v5358
          %v5564 = vadd.f32 %v3629, %v5360
          %v5565 = vadd.f32 %v3630, %v5363
          %v5566 = vadd.f32 %v3631, %v5365
          %v5567 = vadd.f32 %v3632, %v5368
          %v5568 = vadd.f32 %v3633, %v5370
          %v5569 = vadd.f32 %v3634, %v5373
          %v5570 = vadd.f32 %v3635, %v5375
          %v5571 = vmul.f32 %v5436, %v5539
          %v5572 = vmul.f32 %v5438, %v5540
          %v5573 = vmul.f32 %v5441, %v5541
          %v5574 = vmul.f32 %v5443, %v5542
          %v5575 = vmul.f32 %v5446, %v5543
          %v5576 = vmul.f32 %v5448, %v5544
          %v5577 = vmul.f32 %v5451, %v5545
          %v5578 = vmul.f32 %v5453, %v5546
          %v5579 = vmul.f32 %v5456, %v5547
          %v5580 = vmul.f32 %v5458, %v5548
          %v5581 = vmul.f32 %v5461, %v5549
          %v5582 = vmul.f32 %v5463, %v5550
          %v5583 = vmul.f32 %v5466, %v5551
          %v5584 = vmul.f32 %v5468, %v5552
          %v5585 = vmul.f32 %v5471, %v5553
          %v5586 = vmul.f32 %v5473, %v5554
          %v5587 = vadd.f32 %v5555, %v5571
          %v5588 = vadd.f32 %v5556, %v5572
          %v5589 = vadd.f32 %v5557, %v5573
          %v5590 = vadd.f32 %v5558, %v5574
          %v5591 = vadd.f32 %v5559, %v5575
          %v5592 = vadd.f32 %v5560, %v5576
          %v5593 = vadd.f32 %v5561, %v5577
          %v5594 = vadd.f32 %v5562, %v5578
          %v5595 = vadd.f32 %v5563, %v5579
          %v5596 = vadd.f32 %v5564, %v5580
          %v5597 = vadd.f32 %v5565, %v5581
          %v5598 = vadd.f32 %v5566, %v5582
          %v5599 = vadd.f32 %v5567, %v5583
          %v5600 = vadd.f32 %v5568, %v5584
          %v5601 = vadd.f32 %v5569, %v5585
          %v5602 = vadd.f32 %v5570, %v5586
          %5603 = vst [vmem:[#allocation2] sm:$0xff] %v5587
          %5604 = vst [vmem:[#allocation2 + $0x8] sm:$0xff] %v5588
          %5605 = vst [vmem:[#allocation2 + $0x10] sm:$0xff] %v5589
          %5606 = vst [vmem:[#allocation2 + $0x18] sm:$0xff] %v5590
          %5607 = vst [vmem:[#allocation2 + $0x20] sm:$0xff] %v5591
          %5608 = vst [vmem:[#allocation2 + $0x28] sm:$0xff] %v5592
          %5609 = vst [vmem:[#allocation2 + $0x30] sm:$0xff] %v5593
          %5610 = vst [vmem:[#allocation2 + $0x38] sm:$0xff] %v5594
          %5611 = vst [vmem:[#allocation2 + $0x40] sm:$0xff] %v5595
          %5612 = vst [vmem:[#allocation2 + $0x48] sm:$0xff] %v5596
          %5613 = vst [vmem:[#allocation2 + $0x50] sm:$0xff] %v5597
          %5614 = vst [vmem:[#allocation2 + $0x58] sm:$0xff] %v5598
          %5615 = vst [vmem:[#allocation2 + $0x60] sm:$0xff] %v5599
          %5616 = vst [vmem:[#allocation2 + $0x68] sm:$0xff] %v5600
          %5617 = vst [vmem:[#allocation2 + $0x70] sm:$0xff] %v5601
          %5618 = vst [vmem:[#allocation2 + $0x78] sm:$0xff] %v5602
          %v5619 = vmul.f32 %v5387, %v3967
          %v5620 = vmul.f32 %v5389, %v3969
          %v5621 = vmul.f32 %v5392, %v3972
          %v5622 = vmul.f32 %v5394, %v3974
          %v5623 = vmul.f32 %v5397, %v3977
          %v5624 = vmul.f32 %v5399, %v3979
          %v5625 = vmul.f32 %v5402, %v3982
          %v5626 = vmul.f32 %v5404, %v3984
          %v5627 = vmul.f32 %v5407, %v3987
          %v5628 = vmul.f32 %v5409, %v3989
          %v5629 = vmul.f32 %v5412, %v3992
          %v5630 = vmul.f32 %v5414, %v3994
          %v5631 = vmul.f32 %v5417, %v3997
          %v5632 = vmul.f32 %v5419, %v3999
          %v5633 = vmul.f32 %v5422, %v4002
          %v5634 = vmul.f32 %v5424, %v4004
          %v5635 = vmul.f32 %v5387, %v4097
          %v5636 = vmul.f32 %v5389, %v4099
          %v5637 = vmul.f32 %v5392, %v4102
          %v5638 = vmul.f32 %v5394, %v4104
          %v5639 = vmul.f32 %v5397, %v4107
          %v5640 = vmul.f32 %v5399, %v4109
          %v5641 = vmul.f32 %v5402, %v4112
          %v5642 = vmul.f32 %v5404, %v4114
          %v5643 = vmul.f32 %v5407, %v4117
          %v5644 = vmul.f32 %v5409, %v4119
          %v5645 = vmul.f32 %v5412, %v4122
          %v5646 = vmul.f32 %v5414, %v4124
          %v5647 = vmul.f32 %v5417, %v4127
          %v5648 = vmul.f32 %v5419, %v4129
          %v5649 = vmul.f32 %v5422, %v4132
          %v5650 = vmul.f32 %v5424, %v4134
          %v5651 = vmul.f32 %v5387, %v4243
          %v5652 = vmul.f32 %v5389, %v4245
          %v5653 = vmul.f32 %v5392, %v4248
          %v5654 = vmul.f32 %v5394, %v4250
          %v5655 = vmul.f32 %v5397, %v4253
          %v5656 = vmul.f32 %v5399, %v4255
          %v5657 = vmul.f32 %v5402, %v4258
          %v5658 = vmul.f32 %v5404, %v4260
          %v5659 = vmul.f32 %v5407, %v4263
          %v5660 = vmul.f32 %v5409, %v4265
          %v5661 = vmul.f32 %v5412, %v4268
          %v5662 = vmul.f32 %v5414, %v4270
          %v5663 = vmul.f32 %v5417, %v4273
          %v5664 = vmul.f32 %v5419, %v4275
          %v5665 = vmul.f32 %v5422, %v4278
          %v5666 = vmul.f32 %v5424, %v4280
          %v5667 = vadd.f32 %v3684, %v5619
          %v5668 = vadd.f32 %v3685, %v5635
          %v5669 = vadd.f32 %v3686, %v5651
          %v5670 = vadd.f32 %v3687, %v5620
          %v5671 = vadd.f32 %v3688, %v5636
          %v5672 = vadd.f32 %v3689, %v5652
          %v5673 = vadd.f32 %v3690, %v5621
          %v5674 = vadd.f32 %v3691, %v5637
          %v5675 = vadd.f32 %v3692, %v5653
          %v5676 = vadd.f32 %v3693, %v5622
          %v5677 = vadd.f32 %v3694, %v5638
          %v5678 = vadd.f32 %v3695, %v5654
          %v5679 = vadd.f32 %v3696, %v5623
          %v5680 = vadd.f32 %v3697, %v5639
          %v5681 = vadd.f32 %v3698, %v5655
          %v5682 = vadd.f32 %v3699, %v5624
          %v5683 = vadd.f32 %v3700, %v5640
          %v5684 = vadd.f32 %v3701, %v5656
          %v5685 = vadd.f32 %v3702, %v5625
          %v5686 = vadd.f32 %v3703, %v5641
          %v5687 = vadd.f32 %v3704, %v5657
          %v5688 = vadd.f32 %v3705, %v5626
          %v5689 = vadd.f32 %v3706, %v5642
          %v5690 = vadd.f32 %v3707, %v5658
          %v5691 = vadd.f32 %v3708, %v5627
          %v5692 = vadd.f32 %v3709, %v5643
          %v5693 = vadd.f32 %v3710, %v5659
          %v5694 = vadd.f32 %v3711, %v5628
          %v5695 = vadd.f32 %v3712, %v5644
          %v5696 = vadd.f32 %v3713, %v5660
          %v5697 = vadd.f32 %v3714, %v5629
          %v5698 = vadd.f32 %v3715, %v5645
          %v5699 = vadd.f32 %v3716, %v5661
          %v5700 = vadd.f32 %v3717, %v5630
          %v5701 = vadd.f32 %v3718, %v5646
          %v5702 = vadd.f32 %v3719, %v5662
          %v5703 = vadd.f32 %v3720, %v5631
          %v5704 = vadd.f32 %v3721, %v5647
          %v5705 = vadd.f32 %v3722, %v5663
          %v5706 = vadd.f32 %v3723, %v5632
          %v5707 = vadd.f32 %v3724, %v5648
          %v5708 = vadd.f32 %v3725, %v5664
          %v5709 = vadd.f32 %v3726, %v5633
          %v5710 = vadd.f32 %v3727, %v5649
          %v5711 = vadd.f32 %v3728, %v5665
          %v5712 = vadd.f32 %v3729, %v5634
          %v5713 = vadd.f32 %v3730, %v5650
          %v5714 = vadd.f32 %v3731, %v5666
          %5715 = vst [vmem:[#allocation3] sm:$0xff] %v5667
          %5716 = vst [vmem:[#allocation3 + $0x8] sm:$0xff] %v5668
          %5717 = vst [vmem:[#allocation3 + $0x10] sm:$0xff] %v5669
          %5718 = vst [vmem:[#allocation3 + $0x18] sm:$0xff] %v5670
          %5719 = vst [vmem:[#allocation3 + $0x20] sm:$0xff] %v5671
          %5720 = vst [vmem:[#allocation3 + $0x28] sm:$0xff] %v5672
          %5721 = vst [vmem:[#allocation3 + $0x30] sm:$0xff] %v5673
          %5722 = vst [vmem:[#allocation3 + $0x38] sm:$0xff] %v5674
          %5723 = vst [vmem:[#allocation3 + $0x40] sm:$0xff] %v5675
          %5724 = vst [vmem:[#allocation3 + $0x48] sm:$0xff] %v5676
          %5725 = vst [vmem:[#allocation3 + $0x50] sm:$0xff] %v5677
          %5726 = vst [vmem:[#allocation3 + $0x58] sm:$0xff] %v5678
          %5727 = vst [vmem:[#allocation3 + $0x60] sm:$0xff] %v5679
          %5728 = vst [vmem:[#allocation3 + $0x68] sm:$0xff] %v5680
          %5729 = vst [vmem:[#allocation3 + $0x70] sm:$0xff] %v5681
          %5730 = vst [vmem:[#allocation3 + $0x78] sm:$0xff] %v5682
          %5731 = vst [vmem:[#allocation3 + $0x80] sm:$0xff] %v5683
          %5732 = vst [vmem:[#allocation3 + $0x88] sm:$0xff] %v5684
          %5733 = vst [vmem:[#allocation3 + $0x90] sm:$0xff] %v5685
          %5734 = vst [vmem:[#allocation3 + $0x98] sm:$0xff] %v5686
          %5735 = vst [vmem:[#allocation3 + $0xa0] sm:$0xff] %v5687
          %5736 = vst [vmem:[#allocation3 + $0xa8] sm:$0xff] %v5688
          %5737 = vst [vmem:[#allocation3 + $0xb0] sm:$0xff] %v5689
          %5738 = vst [vmem:[#allocation3 + $0xb8] sm:$0xff] %v5690
          %5739 = vst [vmem:[#allocation3 + $0xc0] sm:$0xff] %v5691
          %5740 = vst [vmem:[#allocation3 + $0xc8] sm:$0xff] %v5692
          %5741 = vst [vmem:[#allocation3 + $0xd0] sm:$0xff] %v5693
          %5742 = vst [vmem:[#allocation3 + $0xd8] sm:$0xff] %v5694
          %5743 = vst [vmem:[#allocation3 + $0xe0] sm:$0xff] %v5695
          %5744 = vst [vmem:[#allocation3 + $0xe8] sm:$0xff] %v5696
          %5745 = vst [vmem:[#allocation3 + $0xf0] sm:$0xff] %v5697
          %5746 = vst [vmem:[#allocation3 + $0xf8] sm:$0xff] %v5698
          %5747 = vst [vmem:[#allocation3 + $0x100] sm:$0xff] %v5699
          %5748 = vst [vmem:[#allocation3 + $0x108] sm:$0xff] %v5700
          %5749 = vst [vmem:[#allocation3 + $0x110] sm:$0xff] %v5701
          %5750 = vst [vmem:[#allocation3 + $0x118] sm:$0xff] %v5702
          %5751 = vst [vmem:[#allocation3 + $0x120] sm:$0xff] %v5703
          %5752 = vst [vmem:[#allocation3 + $0x128] sm:$0xff] %v5704
          %5753 = vst [vmem:[#allocation3 + $0x130] sm:$0xff] %v5705
          %5754 = vst [vmem:[#allocation3 + $0x138] sm:$0xff] %v5706
          %5755 = vst [vmem:[#allocation3 + $0x140] sm:$0xff] %v5707
          %5756 = vst [vmem:[#allocation3 + $0x148] sm:$0xff] %v5708
          %5757 = vst [vmem:[#allocation3 + $0x150] sm:$0xff] %v5709
          %5758 = vst [vmem:[#allocation3 + $0x158] sm:$0xff] %v5710
          %5759 = vst [vmem:[#allocation3 + $0x160] sm:$0xff] %v5711
          %5760 = vst [vmem:[#allocation3 + $0x168] sm:$0xff] %v5712
          %5761 = vst [vmem:[#allocation3 + $0x170] sm:$0xff] %v5713
          %5762 = vst [vmem:[#allocation3 + $0x178] sm:$0xff] %v5714
          %v5763 = vpack.c.bf16 %v5668, %v5667
          %v5764 = vpack.c.bf16 %v5669, %v5669
          %v5765 = vpack.c.bf16 %v5671, %v5670
          %v5766 = vpack.c.bf16 %v5672, %v5672
          %v5767 = vpack.c.bf16 %v5674, %v5673
          %v5768 = vpack.c.bf16 %v5675, %v5675
          %v5769 = vpack.c.bf16 %v5677, %v5676
          %v5770 = vpack.c.bf16 %v5678, %v5678
          %v5771 = vpack.c.bf16 %v5680, %v5679
          %v5772 = vpack.c.bf16 %v5681, %v5681
          %v5773 = vpack.c.bf16 %v5683, %v5682
          %v5774 = vpack.c.bf16 %v5684, %v5684
          %v5775 = vpack.c.bf16 %v5686, %v5685
          %v5776 = vpack.c.bf16 %v5687, %v5687
          %v5777 = vpack.c.bf16 %v5689, %v5688
          %v5778 = vpack.c.bf16 %v5690, %v5690
          %v5779 = vpack.c.bf16 %v5692, %v5691
          %v5780 = vpack.c.bf16 %v5693, %v5693
          %v5781 = vpack.c.bf16 %v5695, %v5694
          %v5782 = vpack.c.bf16 %v5696, %v5696
          %v5783 = vpack.c.bf16 %v5698, %v5697
          %v5784 = vpack.c.bf16 %v5699, %v5699
          %v5785 = vpack.c.bf16 %v5701, %v5700
          %v5786 = vpack.c.bf16 %v5702, %v5702
          %v5787 = vpack.c.bf16 %v5704, %v5703
          %v5788 = vpack.c.bf16 %v5705, %v5705
          %v5789 = vpack.c.bf16 %v5707, %v5706
          %v5790 = vpack.c.bf16 %v5708, %v5708
          %v5791 = vpack.c.bf16 %v5710, %v5709
          %v5792 = vpack.c.bf16 %v5711, %v5711
          %v5793 = vpack.c.bf16 %v5713, %v5712
          %v5794 = vpack.c.bf16 %v5714, %v5714
          %5795 = vst [vmem:[#allocation4 + $0xc] sm:$0xff] %v5763
          %5796 = vst [vmem:[#allocation4 + $0x14] sm:$0xf] %v5764
          %5797 = vst [vmem:[#allocation4 + $0x24] sm:$0xff] %v5765
          %5798 = vst [vmem:[#allocation4 + $0x2c] sm:$0xf] %v5766
          %5799 = vst [vmem:[#allocation4 + $0x3c] sm:$0xff] %v5767
          %5800 = vst [vmem:[#allocation4 + $0x44] sm:$0xf] %v5768
          %5801 = vst [vmem:[#allocation4 + $0x54] sm:$0xff] %v5769
          %5802 = vst [vmem:[#allocation4 + $0x5c] sm:$0xf] %v5770
          %5803 = vst [vmem:[#allocation4 + $0x6c] sm:$0xff] %v5771
          %5804 = vst [vmem:[#allocation4 + $0x74] sm:$0xf] %v5772
          %5805 = vst [vmem:[#allocation4 + $0x84] sm:$0xff] %v5773
          %5806 = vst [vmem:[#allocation4 + $0x8c] sm:$0xf] %v5774
          %5807 = vst [vmem:[#allocation4 + $0x9c] sm:$0xff] %v5775
          %5808 = vst [vmem:[#allocation4 + $0xa4] sm:$0xf] %v5776
          %5809 = vst [vmem:[#allocation4 + $0xb4] sm:$0xff] %v5777
          %5810 = vst [vmem:[#allocation4 + $0xbc] sm:$0xf] %v5778
          %5811 = vst [vmem:[#allocation4 + $0xcc] sm:$0xff] %v5779
          %5812 = vst [vmem:[#allocation4 + $0xd4] sm:$0xf] %v5780
          %5813 = vst [vmem:[#allocation4 + $0xe4] sm:$0xff] %v5781
          %5814 = vst [vmem:[#allocation4 + $0xec] sm:$0xf] %v5782
          %5815 = vst [vmem:[#allocation4 + $0xfc] sm:$0xff] %v5783
          %5816 = vst [vmem:[#allocation4 + $0x104] sm:$0xf] %v5784
          %5817 = vst [vmem:[#allocation4 + $0x114] sm:$0xff] %v5785
          %5818 = vst [vmem:[#allocation4 + $0x11c] sm:$0xf] %v5786
          %5819 = vst [vmem:[#allocation4 + $0x12c] sm:$0xff] %v5787
          %5820 = vst [vmem:[#allocation4 + $0x134] sm:$0xf] %v5788
          %5821 = vst [vmem:[#allocation4 + $0x144] sm:$0xff] %v5789
          %5822 = vst [vmem:[#allocation4 + $0x14c] sm:$0xf] %v5790
          %5823 = vst [vmem:[#allocation4 + $0x15c] sm:$0xff] %v5791
          %5824 = vst [vmem:[#allocation4 + $0x164] sm:$0xf] %v5792
          %5825 = vst [vmem:[#allocation4 + $0x174] sm:$0xff] %v5793
          %5826 = vst [vmem:[#allocation4 + $0x17c] sm:$0xf] %v5794
        $region144: #{tpu_custom_call.1} parent=79 // pred_fallthru
          _
        %p5827 = scmp.eq.s32.totalorder %s50, 1
        %p5828 = pnand %p5827, %p3536
        %p5829 = pneg %p5828
        // Predicated region
        $region145: #{tpu_custom_call.1} parent=79 // pred_check
          _
        $region146: #{tpu_custom_call.1} parent=79 // pred_check_branch
          %5831 = sbr.rel (%p5828) target = $region148
        $region147: #{tpu_custom_call.1} parent=79 // pred_region
          %v5832 = vld [vmem:[#allocation2] sm:$0xff]
          %v5833 = vld [vmem:[#allocation2 + $0x8] sm:$0xff]
          %v5834 = vld [vmem:[#allocation2 + $0x10] sm:$0xff]
          %v5835 = vld [vmem:[#allocation2 + $0x18] sm:$0xff]
          %v5836 = vld [vmem:[#allocation2 + $0x20] sm:$0xff]
          %v5837 = vld [vmem:[#allocation2 + $0x28] sm:$0xff]
          %v5838 = vld [vmem:[#allocation2 + $0x30] sm:$0xff]
          %v5839 = vld [vmem:[#allocation2 + $0x38] sm:$0xff]
          %v5840 = vld [vmem:[#allocation2 + $0x40] sm:$0xff]
          %v5841 = vld [vmem:[#allocation2 + $0x48] sm:$0xff]
          %v5842 = vld [vmem:[#allocation2 + $0x50] sm:$0xff]
          %v5843 = vld [vmem:[#allocation2 + $0x58] sm:$0xff]
          %v5844 = vld [vmem:[#allocation2 + $0x60] sm:$0xff]
          %v5845 = vld [vmem:[#allocation2 + $0x68] sm:$0xff]
          %v5846 = vld [vmem:[#allocation2 + $0x70] sm:$0xff]
          %v5847 = vld [vmem:[#allocation2 + $0x78] sm:$0xff]
          %5848 = vst [vmem:[#allocation27] sm:$0xff] %v5832
          %5849 = vst [vmem:[#allocation27 + $0x8] sm:$0xff] %v5833
          %5850 = vst [vmem:[#allocation27 + $0x10] sm:$0xff] %v5834
          %5851 = vst [vmem:[#allocation27 + $0x18] sm:$0xff] %v5835
          %5852 = vst [vmem:[#allocation27 + $0x20] sm:$0xff] %v5836
          %5853 = vst [vmem:[#allocation27 + $0x28] sm:$0xff] %v5837
          %5854 = vst [vmem:[#allocation27 + $0x30] sm:$0xff] %v5838
          %5855 = vst [vmem:[#allocation27 + $0x38] sm:$0xff] %v5839
          %5856 = vst [vmem:[#allocation27 + $0x40] sm:$0xff] %v5840
          %5857 = vst [vmem:[#allocation27 + $0x48] sm:$0xff] %v5841
          %5858 = vst [vmem:[#allocation27 + $0x50] sm:$0xff] %v5842
          %5859 = vst [vmem:[#allocation27 + $0x58] sm:$0xff] %v5843
          %5860 = vst [vmem:[#allocation27 + $0x60] sm:$0xff] %v5844
          %5861 = vst [vmem:[#allocation27 + $0x68] sm:$0xff] %v5845
          %5862 = vst [vmem:[#allocation27 + $0x70] sm:$0xff] %v5846
          %5863 = vst [vmem:[#allocation27 + $0x78] sm:$0xff] %v5847
        $region148: #{tpu_custom_call.1} parent=79 // pred_fallthru
          _
        // Predicated region
        $region149: #{tpu_custom_call.1} parent=79 // pred_check
          %p5864 = pneg %p458
        $region150: #{tpu_custom_call.1} parent=79 // pred_check_branch
          %5866 = sbr.rel (%p5864) target = $region152
        $region151: #{tpu_custom_call.1} parent=79 // pred_region
          %5868 = vsyncadd [#allocation8], 0
          %s5869 = sshll.u32 [#allocation27], 4
          %s5870 = int_to_ptr.vmem [resolvable:$true] %s5869
          %s5871 = sshll.u32 %s15, 4
          %s5872 = int_to_ptr.hbm [resolvable:$true] %s5871
          %5877 = dma.vmem_to_hbm [thread:$0]  %s5870, 2048, %s5872, [#allocation8], 128, 128, 8
        $region152: #{tpu_custom_call.1} parent=79 // pred_fallthru
          _
        // Predicated region
        $region153: #{tpu_custom_call.1} parent=79 // pred_check
          %p5878 = pneg %p458
        $region154: #{tpu_custom_call.1} parent=79 // pred_check_branch
          %5880 = sbr.rel (%p5878) target = $region156
        $region155: #{tpu_custom_call.1} parent=79 // pred_region
          %5882 = dma.done [#allocation8], 2048
        $region156: #{tpu_custom_call.1} parent=79 // pred_fallthru
          _
      $region80: #{tpu_custom_call.1} parent=5 // pred_fallthru
        _
      %p5883 = scmp.le.s32.totalorder 2, %s41
      // Predicated region
      $region157: #{tpu_custom_call.1} parent=5 // pred_check
        %p5884 = pneg %p5883
      $region158: #{tpu_custom_call.1} parent=5 // pred_check_branch
        %5886 = sbr.rel (%p5884) target = $region160
      $region159: #{tpu_custom_call.1} parent=5 // pred_region
        %s5887 = ssub.s32 %s41, 2
      $region160: #{tpu_custom_call.1} parent=5 // pred_fallthru
        _
    $region6: #{tpu_custom_call.1} parent=1 // loop_footer
      %s45 = sadd.s32 1, %s41
    $region7: #{tpu_custom_call.1} parent=1 // loop_footer_branch
      %40 = sbr.rel target = $region3
    $region8: #{tpu_custom_call.1} parent=1 // loop_exit
      _
    %5888 = vsyncpa [#allocation7], 1
    %s5889 = scalar_lea.sflag [#allocation7], 1
    %5890 = vsyncpa %s5889, 1
    %5891 = vsyncpa [#allocation10], 1
    %s5892 = scalar_lea.sflag [#allocation10], 1
    %5893 = vsyncpa %s5892, 1
    %5894 = vsyncpa [#allocation13], 1
    %s5895 = scalar_lea.sflag [#allocation13], 1
    %5896 = vsyncpa %s5895, 1
    %5897 = vsyncpa [#allocation16], 1
    %s5898 = scalar_lea.sflag [#allocation16], 1
    %5899 = vsyncpa %s5898, 1
    %5900 = vsyncpa [#allocation19], 1
    %s5901 = scalar_lea.sflag [#allocation19], 1
    %5902 = vsyncpa %s5901, 1
    %5903 = vsyncpa [#allocation22], 1
    %s5904 = scalar_lea.sflag [#allocation22], 1
    %5905 = vsyncpa %s5904, 1
    %5906 = vsyncpa [#allocation25], 1
    %s5907 = scalar_lea.sflag [#allocation25], 1
    %5908 = vsyncpa %s5907, 1
    %5909 = vsyncpa [#allocation8], 1
    %s5910 = scalar_lea.sflag [#allocation8], 1
    %5911 = vsyncpa %s5910, 1

</llo_original>
